<compile_context>
chip_gen: v7x
topology: tpu7x:2x2x1
jax: 0.10.0
libtpu: 0.0.40
codegen_flags: <defaults>
</compile_context>

<pallas_src>
import functools

import numpy as np
import jax
import jax.numpy as jnp
from jax import lax
from jax.experimental import pallas as pl
from jax.experimental.pallas import tpu as pltpu

# "minus infinity" for max-pool boundary handling. Safe because post-BN activations
# are O(1); would only break if gamma/beta were scaled towards 1e30.
NEG = -1e30


# ----------------------------------------------------------------------------
# exact (erf-based) GELU, as used by nn.GELU() default
# ----------------------------------------------------------------------------
def _gelu_exact(x):
    # erf via Abramowitz–Stegun 7.1.26 (only exp / mul / add — always lowerable)
    z = x * 0.7071067811865476
    az = jnp.abs(z)
    t = 1.0 / (1.0 + 0.3275911 * az)
    poly = t * (0.254829592 + t * (-0.284496736 + t * (1.421413741
            + t * (-1.453152027 + t * 1.061405429))))
    erf_az = 1.0 - poly * jnp.exp(-az * az)
    erf_z = jnp.where(z >= 0.0, erf_az, -erf_az)
    return 0.5 * x * (1.0 + erf_z)


# ----------------------------------------------------------------------------
# Host-built 0/1 selection matrices for MaxPool2d(3, stride=2, padding=1).
# Out-of-range picks are all-zero rows/cols and are masked to NEG in-kernel.
# ----------------------------------------------------------------------------
def _pool_row_sel(B, Lv, Hout):
    """(3*B*Hout, B*Lv) = [center; up; down]; picks rows 2i, 2i-1, 2i+1 per batch block."""
    BH, n = B * Hout, B * Lv
    c = np.zeros((BH, n), np.float32)
    u = np.zeros((BH, n), np.float32)
    d = np.zeros((BH, n), np.float32)
    for b in range(B):
        for i in range(Hout):
            r, base = b * Hout + i, b * Lv
            c[r, base + 2 * i] = 1.0
            if 2 * i - 1 >= 0:
                u[r, base + 2 * i - 1] = 1.0
            if 2 * i + 1 < Lv:
                d[r, base + 2 * i + 1] = 1.0
    return jnp.asarray(np.concatenate([c, u, d], axis=0))


def _pool_col_sel(C, Wout):
    """(C, 3*Wout) = [center | left | right]; picks cols 2j, 2j-1, 2j+1. bf16 (0/1 exact)."""
    e = np.zeros((C, Wout), np.float32)
    lf = np.zeros((C, Wout), np.float32)
    rt = np.zeros((C, Wout), np.float32)
    for j in range(Wout):
        e[2 * j, j] = 1.0
        if 2 * j - 1 >= 0:
            lf[2 * j - 1, j] = 1.0
        if 2 * j + 1 < C:
            rt[2 * j + 1, j] = 1.0
    return jnp.asarray(np.concatenate([e, lf, rt], axis=1), dtype=jnp.bfloat16)


# ----------------------------------------------------------------------------
# The single fused kernel.
# ----------------------------------------------------------------------------
def _tvqa_kernel(xq_ref, xa_ref, xv_ref,
                 wq_ref, bq_ref, wa_ref, ba_ref, wv_ref, bv_ref,
                 wc_ref, bc_ref, g_ref, bt_ref,
                 rsel_ref, csel_ref,
                 w1_ref, b1_ref, w2_ref, b2_ref, wcls_ref, bcls_ref,
                 o_ref, *, B, A, Lq, La, Lv, Hout, Wout):
    f32 = jnp.float32
    bf16 = jnp.bfloat16
    H = wq_ref.shape[1]               # hidden_proj_dim
    Cout = wc_ref.shape[1]

    # ---- projections (Linear + exact GELU); bf16 MXU inputs, f32 accumulation
    qh = _gelu_exact(jnp.dot(xq_ref[...].astype(bf16), wq_ref[...],
                             preferred_element_type=f32) + bq_ref[...])       # (B*Lq, H)
    ah = _gelu_exact(jnp.dot(xa_ref[...].astype(bf16), wa_ref[...],
                             preferred_element_type=f32) + ba_ref[...])       # (A*B*La, H)
    v = _gelu_exact(jnp.dot(xv_ref[...].astype(bf16), wv_ref[...],
                            preferred_element_type=f32) + bv_ref[...])        # (B*Lv, H)

    # ---- Conv1d(H -> Cout, k=3, stride=1, pad=1) as ONE im2col matmul over the batch
    n = B * Lv
    zrow = jnp.zeros((1, H), f32)
    v_prev = jnp.concatenate([zrow, v[:n - 1, :]], axis=0)   # row r holds v[r-1]
    v_next = jnp.concatenate([v[1:, :], zrow], axis=0)       # row r holds v[r+1]
    row = lax.broadcasted_iota(jnp.int32, (n, 1), 0)
    first = row == 0
    last = row == Lv - 1
    for b in range(1, B):
        first = jnp.logical_or(first, row == b * Lv)
        last = jnp.logical_or(last, row == b * Lv + Lv - 1)
    v_prev = jnp.where(first, 0.0, v_prev)                   # per-batch zero padding
    v_next = jnp.where(last, 0.0, v_next)
    im2col = jnp.concatenate([v_prev, v, v_next], axis=1).astype(bf16)        # (B*Lv, 3H)
    y = jnp.dot(im2col, wc_ref[...], preferred_element_type=f32) + bc_ref[...]  # (B*Lv, Cout)

    # ---- BatchNorm1d training-mode batch stats (two-pass, biased var) + LeakyReLU(0.01)
    cnt = float(B * Lv)
    mean = jnp.sum(y, axis=0, keepdims=True) / cnt
    var = jnp.sum((y - mean) ** 2, axis=0, keepdims=True) / cnt
    scale = g_ref[...] * lax.rsqrt(var + 1e-5)
    shift = bt_ref[...] - mean * scale
    yl = y * scale + shift
    yl = jnp.where(yl >= 0.0, yl, 0.01 * yl)                 # (B*Lv, Cout)

    # ---- MaxPool2d(3, stride=2, padding=1) over the (Lv, Cout) plane of each batch
    BH = B * Hout
    # rows: window picks {2i-1, 2i, 2i+1} for every (b, i) via ONE selection matmul
    rp3 = jnp.dot(rsel_ref[...], yl, preferred_element_type=f32)              # (3*BH, Cout)
    ctr = rp3[0:BH, :]
    up = rp3[BH:2 * BH, :]
    dn = rp3[2 * BH:3 * BH, :]
    rr = lax.broadcasted_iota(jnp.int32, (BH, 1), 0)
    top = rr == 0
    for b in range(1, B):
        top = jnp.logical_or(top, rr == b * Hout)
    up = jnp.where(top, NEG, up)                             # no row above row 0 of a batch
    if 2 * (Hout - 1) + 1 >= Lv:                             # last "down" pick OOB?
        bot = rr == Hout - 1
        for b in range(1, B):
            bot = jnp.logical_or(bot, rr == b * Hout + Hout - 1)
        dn = jnp.where(bot, NEG, dn)
    rp = jnp.maximum(jnp.maximum(ctr, up), dn)               # (BH, Cout)

    # cols: window picks {2j-1, 2j, 2j+1} via ONE selection matmul (bf16 inputs, f32 acc)
    cp3 = jnp.dot(rp.astype(bf16), csel_ref[...], preferred_element_type=f32)  # (BH, 3*Wout)
    ee = cp3[:, 0:Wout]
    lf = cp3[:, Wout:2 * Wout]
    rt = cp3[:, 2 * Wout:3 * Wout]
    jj = lax.broadcasted_iota(jnp.int32, (BH, Wout), 1)
    lf = jnp.where(jj == 0, NEG, lf)                         # no col left of col 0
    if 2 * (Wout - 1) + 1 >= Cout:                           # last "right" pick OOB?
        rt = jnp.where(jj == Wout - 1, NEG, rt)
    pooled = jnp.maximum(jnp.maximum(ee, lf), rt)            # (BH, Wout), Wout == H

    # ---- MLP tail.  torch.cat is along the sequence axis and torch.max(dim=1) is a
    # per-feature max over tokens, so  max(MLP(cat(q, a_i, pooled)))
    #   = max( max over q tokens, max over a_i tokens, max over pooled tokens ):
    # the q / pooled branches are shared by all A answers -> run the MLP once on the
    # stacked [q tokens ; pooled tokens ; answer tokens] matrix.
    x_mlp = jnp.concatenate([qh, pooled, ah], axis=0).astype(bf16)   # (B*Lq + BH + A*B*La, H)
    t = _gelu_exact(jnp.dot(x_mlp, w1_ref[...], preferred_element_type=f32) + b1_ref[...])
    t = _gelu_exact(jnp.dot(t.astype(bf16), w2_ref[...],
                            preferred_element_type=f32) + b2_ref[...])        # (rows, att)

    off_v = B * Lq
    off_a = off_v + BH
    mqv = []
    for b in range(B):
        mq = jnp.max(t[b * Lq:(b + 1) * Lq, :], axis=0, keepdims=True)
        mv = jnp.max(t[off_v + b * Hout:off_v + (b + 1) * Hout, :], axis=0, keepdims=True)
        mqv.append(jnp.maximum(mq, mv))
    rows = []
    for i in range(A):
        for b in range(B):
            s = off_a + (i * B + b) * La
            ma = jnp.max(t[s:s + La, :], axis=0, keepdims=True)
            rows.append(jnp.maximum(mqv[b], ma))
    m = jnp.concatenate(rows, axis=0)                                         # (A*B, att)
    o_ref[...] = jnp.sum(m * wcls_ref[...], axis=1, keepdims=True) + bcls_ref[...]


# ----------------------------------------------------------------------------
# One-time parameter preparation (per perf review: no per-forward weight casts).
# ----------------------------------------------------------------------------
def prepare_params(p):
    H = p["wq"].shape[1]
    Cout = p["wc"].shape[2]
    return dict(
        wq=p["wq"].astype(jnp.bfloat16), bq=p["bq"],
        wa=p["wa"].astype(jnp.bfloat16), ba=p["ba"],
        wv=p["wv"].astype(jnp.bfloat16), bv=p["bv"],
        wc=p["wc"].reshape(3 * H, Cout).astype(jnp.bfloat16), bc=p["bc"],
        gamma=p["gamma"], beta=p["beta"],
        w1=p["w1"].astype(jnp.bfloat16), b1=p["b1"],
        w2=p["w2"].astype(jnp.bfloat16), b2=p["b2"],
        wcls=jnp.transpose(p["wcls"]), bcls=p["bcls"],
    )


# ----------------------------------------------------------------------------
# full forward: ONE pallas_call
# ----------------------------------------------------------------------------
def tvqa_forward(kp, question, answers, vid):
    B, Lq, qd = question.shape
    A, _, La, ad = answers.shape
    _, Lv, vd = vid.shape
    H = kp["wq"].shape[1]                  # hidden_proj_dim = 256
    Cout = kp["wc"].shape[1]               # 512
    att2 = kp["w1"].shape[1]
    att = kp["w2"].shape[1]

    Hout = (Lv + 2 - 3) // 2 + 1           # MaxPool2d(3, stride=2, padding=1)
    Wout = (Cout + 2 - 3) // 2 + 1
    assert Wout == H, "pooled channel width must equal hidden_proj_dim"

    xq = question.reshape(B * Lq, qd)
    xa = answers.reshape(A * B * La, ad)
    xv = vid.reshape(B * Lv, vd)

    rsel = _pool_row_sel(B, Lv, Hout)      # (3*B*Hout, B*Lv) f32 (tiny)
    csel = _pool_col_sel(Cout, Wout)       # (Cout, 3*Wout)   bf16 (exact 0/1 values)

    def fs(shape):                         # full-array BlockSpec (all operands are 2-D)
        return pl.BlockSpec(shape, lambda i: (0, 0))

    kernel = functools.partial(_tvqa_kernel, B=B, A=A, Lq=Lq, La=La, Lv=Lv,
                               Hout=Hout, Wout=Wout)
    out = pl.pallas_call(
        kernel,
        out_shape=jax.ShapeDtypeStruct((A * B, 1), jnp.float32),
        grid=(1,),
        in_specs=[
            fs((B * Lq, qd)), fs((A * B * La, ad)), fs((B * Lv, vd)),
            fs((qd, H)), fs((1, H)),
            fs((ad, H)), fs((1, H)),
            fs((vd, H)), fs((1, H)),
            fs((3 * H, Cout)), fs((1, Cout)), fs((1, Cout)), fs((1, Cout)),
            fs((3 * B * Hout, B * Lv)), fs((Cout, 3 * Wout)),
            fs((H, att2)), fs((1, att2)),
            fs((att2, att)), fs((1, att)),
            fs((1, att)), fs((1, 1)),
        ],
        out_specs=fs((A * B, 1)),
        compiler_params=pltpu.CompilerParams(dimension_semantics=("arbitrary",)),
    )(xq, xa, xv,
      kp["wq"], kp["bq"], kp["wa"], kp["ba"], kp["wv"], kp["bv"],
      kp["wc"], kp["bc"], kp["gamma"], kp["beta"],
      rsel, csel,
      kp["w1"], kp["b1"], kp["w2"], kp["b2"], kp["wcls"], kp["bcls"])

    return out.reshape(A, B).T             # (B, num_ans), answer order a1..a5


# ----------------------------------------------------------------------------
# pure-JAX reference (mirrors the PyTorch forward) for a correctness check
# ----------------------------------------------------------------------------
def reference_forward(p, question, answers, vid):
    gelu = lambda t: jax.nn.gelu(t, approximate=False)
    q = gelu(question @ p["wq"] + p["bq"])
    a = gelu(answers @ p["wa"] + p["ba"])
    v = gelu(vid @ p["wv"] + p["bv"])
    B, Lv, _ = v.shape
    vp = jnp.pad(v, ((0, 0), (1, 1), (0, 0)))
    y = sum(vp[:, k:k + Lv, :] @ p["wc"][k] for k in range(3)) + p["bc"]
    mean = jnp.mean(y, axis=(0, 1))
    var = jnp.var(y, axis=(0, 1))
    yn = (y - mean) / jnp.sqrt(var + 1e-5) * p["gamma"] + p["beta"]
    yl = jnp.where(yn >= 0, yn, 0.01 * yn)
    pooled = lax.reduce_window(yl, -jnp.inf, lax.max,
                               window_dimensions=(1, 3, 3),
                               window_strides=(1, 2, 2),
                               padding=((0, 0), (1, 1), (1, 1)))
    A = answers.shape[0]
    qb = jnp.broadcast_to(q[None], (A,) + q.shape)
    vb = jnp.broadcast_to(pooled[None], (A,) + pooled.shape)
    qav = jnp.concatenate([qb, a, vb], axis=2)
    h = gelu(qav @ p["w1"] + p["b1"])
    h = gelu(h @ p["w2"] + p["b2"])
    m = jnp.max(h, axis=2)
    scores = m @ p["wcls"] + p["bcls"]
    return scores[..., 0].T


# ----------------------------------------------------------------------------
if __name__ == "__main__":
    B, Lq, La, Lv = 2, 8, 8, 16
    q_dim, a_dim, vid_dim = 768, 768, 2048
    H, att, Cout = 256, 64, 512

    keys = iter(jax.random.split(jax.random.PRNGKey(0), 32))

    def lin_init(fin, fout):
        w = jax.random.normal(next(keys), (fin, fout), jnp.float32) / np.sqrt(fin)
        b = 0.01 * jax.random.normal(next(keys), (1, fout), jnp.float32)
        return w, b

    wq, bq = lin_init(q_dim, H)
    wa, ba = lin_init(a_dim, H)
    wv, bv = lin_init(vid_dim, H)
    wc = jax.random.normal(next(keys), (3, H, Cout), jnp.float32) / np.sqrt(3 * H)
    bc = 0.01 * jax.random.normal(next(keys), (1, Cout), jnp.float32)
    w1, b1 = lin_init(H, 2 * att)
    w2, b2 = lin_init(2 * att, att)
    wcls, bcls = lin_init(att, 1)

    params = dict(wq=wq, bq=bq, wa=wa, ba=ba, wv=wv, bv=bv, wc=wc, bc=bc,
                  gamma=jnp.ones((1, Cout), jnp.float32),   # BatchNorm default init
                  beta=jnp.zeros((1, Cout), jnp.float32),
                  w1=w1, b1=b1, w2=w2, b2=b2, wcls=wcls, bcls=bcls)
    kparams = prepare_params(params)       # one-time bf16 / layout prep (outside jit)

    question = jax.random.normal(next(keys), (B, Lq, q_dim), jnp.float32)
    answers = jax.random.normal(next(keys), (5, B, La, a_dim), jnp.float32)  # a1..a5 stacked
    vid = jax.random.normal(next(keys), (B, Lv, vid_dim), jnp.float32)

    fwd = jax.jit(tvqa_forward)
    logits = jax.block_until_ready(fwd(kparams, question, answers, vid))
    ref = jax.block_until_ready(reference_forward(params, question, answers, vid))

    assert logits.shape == (B, 5), logits.shape
    if not np.allclose(np.asarray(logits), np.asarray(ref), rtol=5e-2, atol=5e-2):
        raise AssertionError(f"mismatch:\nkernel={np.asarray(logits)}\nref={np.asarray(ref)}")
    print("KERNEL_OK")
</pallas_src>

<mosaic_0001>
module attributes {stable_mosaic.version = 11 : i64} {
  func.func @_tvqa_kernel(%arg0: i32, %arg1: memref<16x768xf32, #tpu.memory_space<vmem>>, %arg2: memref<80x768xf32, #tpu.memory_space<vmem>>, %arg3: memref<32x2048xf32, #tpu.memory_space<vmem>>, %arg4: memref<768x256xbf16, #tpu.memory_space<vmem>>, %arg5: memref<1x256xf32, #tpu.memory_space<vmem>>, %arg6: memref<768x256xbf16, #tpu.memory_space<vmem>>, %arg7: memref<1x256xf32, #tpu.memory_space<vmem>>, %arg8: memref<2048x256xbf16, #tpu.memory_space<vmem>>, %arg9: memref<1x256xf32, #tpu.memory_space<vmem>>, %arg10: memref<768x512xbf16, #tpu.memory_space<vmem>>, %arg11: memref<1x512xf32, #tpu.memory_space<vmem>>, %arg12: memref<1x512xf32, #tpu.memory_space<vmem>>, %arg13: memref<1x512xf32, #tpu.memory_space<vmem>>, %arg14: memref<48x32xf32, #tpu.memory_space<vmem>>, %arg15: memref<512x768xbf16, #tpu.memory_space<vmem>>, %arg16: memref<256x128xbf16, #tpu.memory_space<vmem>>, %arg17: memref<1x128xf32, #tpu.memory_space<vmem>>, %arg18: memref<128x64xbf16, #tpu.memory_space<vmem>>, %arg19: memref<1x64xf32, #tpu.memory_space<vmem>>, %arg20: memref<1x64xf32, #tpu.memory_space<vmem>>, %arg21: memref<1x1xf32, #tpu.memory_space<vmem>>, %arg22: memref<10x1xf32, #tpu.memory_space<vmem>>) attributes {dimension_semantics = [#tpu.dimension_semantics<arbitrary>], iteration_bounds = array<i64: 1>, scalar_prefetch = 0 : i64, scratch_operands = 0 : i64, tpu.core_type = #tpu.core_type<tc>, window_params = [{pipeline_mode = #tpu.pipeline_mode<synchronous>, transform_indices = @transform_0, window_bounds = array<i64: 16, 768>}, {pipeline_mode = #tpu.pipeline_mode<synchronous>, transform_indices = @transform_1, window_bounds = array<i64: 80, 768>}, {pipeline_mode = #tpu.pipeline_mode<synchronous>, transform_indices = @transform_2, window_bounds = array<i64: 32, 2048>}, {pipeline_mode = #tpu.pipeline_mode<synchronous>, transform_indices = @transform_3, window_bounds = array<i64: 768, 256>}, {pipeline_mode = #tpu.pipeline_mode<synchronous>, transform_indices = @transform_4, window_bounds = array<i64: 1, 256>}, {pipeline_mode = #tpu.pipeline_mode<synchronous>, transform_indices = @transform_5, window_bounds = array<i64: 768, 256>}, {pipeline_mode = #tpu.pipeline_mode<synchronous>, transform_indices = @transform_6, window_bounds = array<i64: 1, 256>}, {pipeline_mode = #tpu.pipeline_mode<synchronous>, transform_indices = @transform_7, window_bounds = array<i64: 2048, 256>}, {pipeline_mode = #tpu.pipeline_mode<synchronous>, transform_indices = @transform_8, window_bounds = array<i64: 1, 256>}, {pipeline_mode = #tpu.pipeline_mode<synchronous>, transform_indices = @transform_9, window_bounds = array<i64: 768, 512>}, {pipeline_mode = #tpu.pipeline_mode<synchronous>, transform_indices = @transform_10, window_bounds = array<i64: 1, 512>}, {pipeline_mode = #tpu.pipeline_mode<synchronous>, transform_indices = @transform_11, window_bounds = array<i64: 1, 512>}, {pipeline_mode = #tpu.pipeline_mode<synchronous>, transform_indices = @transform_12, window_bounds = array<i64: 1, 512>}, {pipeline_mode = #tpu.pipeline_mode<synchronous>, transform_indices = @transform_13, window_bounds = array<i64: 48, 32>}, {pipeline_mode = #tpu.pipeline_mode<synchronous>, transform_indices = @transform_14, window_bounds = array<i64: 512, 768>}, {pipeline_mode = #tpu.pipeline_mode<synchronous>, transform_indices = @transform_15, window_bounds = array<i64: 256, 128>}, {pipeline_mode = #tpu.pipeline_mode<synchronous>, transform_indices = @transform_16, window_bounds = array<i64: 1, 128>}, {pipeline_mode = #tpu.pipeline_mode<synchronous>, transform_indices = @transform_17, window_bounds = array<i64: 128, 64>}, {pipeline_mode = #tpu.pipeline_mode<synchronous>, transform_indices = @transform_18, window_bounds = array<i64: 1, 64>}, {pipeline_mode = #tpu.pipeline_mode<synchronous>, transform_indices = @transform_19, window_bounds = array<i64: 1, 64>}, {pipeline_mode = #tpu.pipeline_mode<synchronous>, transform_indices = @transform_20, window_bounds = array<i64: 1, 1>}, {pipeline_mode = #tpu.pipeline_mode<synchronous>, transform_indices = @transform_21, window_bounds = array<i64: 10, 1>}]} {
    %c0 = arith.constant 0 : index
    %c0_0 = arith.constant 0 : index
    %0 = vector.load %arg1[%c0, %c0_0] : memref<16x768xf32, #tpu.memory_space<vmem>>, vector<16x768xf32>
    %1 = arith.truncf %0 : vector<16x768xf32> to vector<16x768xbf16>
    %c0_1 = arith.constant 0 : index
    %c0_2 = arith.constant 0 : index
    %2 = vector.load %arg4[%c0_1, %c0_2] : memref<768x256xbf16, #tpu.memory_space<vmem>>, vector<768x256xbf16>
    %cst = arith.constant dense<0.000000e+00> : vector<16x256xf32>
    %3 = tpu.matmul %1, %2, %cst {dimension_numbers = #tpu.dot_dimension_numbers<[1], [0], [0], [1], [0, 0, 1, 1], [], []>} : vector<16x768xbf16>, vector<768x256xbf16>, vector<16x256xf32> -> vector<16x256xf32>
    %c0_3 = arith.constant 0 : index
    %c0_4 = arith.constant 0 : index
    %4 = vector.load %arg5[%c0_3, %c0_4] : memref<1x256xf32, #tpu.memory_space<vmem>>, vector<1x256xf32>
    %5 = vector.broadcast %4 : vector<1x256xf32> to vector<16x256xf32>
    %6 = arith.addf %3, %5 : vector<16x256xf32>
    %cst_5 = arith.constant 0.707106769 : f32
    %7 = vector.broadcast %cst_5 : f32 to vector<16x256xf32>
    %8 = arith.mulf %6, %7 : vector<16x256xf32>
    %9 = math.absf %8 : vector<16x256xf32>
    %cst_6 = arith.constant 0.327591091 : f32
    %10 = vector.broadcast %cst_6 : f32 to vector<16x256xf32>
    %11 = arith.mulf %10, %9 : vector<16x256xf32>
    %cst_7 = arith.constant 1.000000e+00 : f32
    %12 = vector.broadcast %cst_7 : f32 to vector<16x256xf32>
    %13 = arith.addf %12, %11 : vector<16x256xf32>
    %cst_8 = arith.constant 1.000000e+00 : f32
    %14 = vector.broadcast %cst_8 : f32 to vector<16x256xf32>
    %15 = arith.divf %14, %13 : vector<16x256xf32>
    %cst_9 = arith.constant 1.06140542 : f32
    %16 = vector.broadcast %cst_9 : f32 to vector<16x256xf32>
    %17 = arith.mulf %15, %16 : vector<16x256xf32>
    %cst_10 = arith.constant -1.45315206 : f32
    %18 = vector.broadcast %cst_10 : f32 to vector<16x256xf32>
    %19 = arith.addf %18, %17 : vector<16x256xf32>
    %20 = arith.mulf %15, %19 : vector<16x256xf32>
    %cst_11 = arith.constant 1.42141378 : f32
    %21 = vector.broadcast %cst_11 : f32 to vector<16x256xf32>
    %22 = arith.addf %21, %20 : vector<16x256xf32>
    %23 = arith.mulf %15, %22 : vector<16x256xf32>
    %cst_12 = arith.constant -0.284496725 : f32
    %24 = vector.broadcast %cst_12 : f32 to vector<16x256xf32>
    %25 = arith.addf %24, %23 : vector<16x256xf32>
    %26 = arith.mulf %15, %25 : vector<16x256xf32>
    %cst_13 = arith.constant 0.254829586 : f32
    %27 = vector.broadcast %cst_13 : f32 to vector<16x256xf32>
    %28 = arith.addf %27, %26 : vector<16x256xf32>
    %29 = arith.mulf %15, %28 : vector<16x256xf32>
    %cst_14 = arith.constant 0.000000e+00 : f32
    %30 = vector.broadcast %cst_14 : f32 to vector<16x256xf32>
    %31 = arith.subf %30, %9 : vector<16x256xf32>
    %32 = arith.mulf %31, %9 : vector<16x256xf32>
    %33 = math.exp %32 : vector<16x256xf32>
    %34 = arith.mulf %29, %33 : vector<16x256xf32>
    %cst_15 = arith.constant 1.000000e+00 : f32
    %35 = vector.broadcast %cst_15 : f32 to vector<16x256xf32>
    %36 = arith.subf %35, %34 : vector<16x256xf32>
    %cst_16 = arith.constant 0.000000e+00 : f32
    %37 = vector.broadcast %cst_16 : f32 to vector<16x256xf32>
    %38 = arith.cmpf oge, %8, %37 : vector<16x256xf32>
    %cst_17 = arith.constant 0.000000e+00 : f32
    %39 = vector.broadcast %cst_17 : f32 to vector<16x256xf32>
    %40 = arith.subf %39, %36 : vector<16x256xf32>
    %41 = arith.select %38, %36, %40 : vector<16x256xi1>, vector<16x256xf32>
    %cst_18 = arith.constant 5.000000e-01 : f32
    %42 = vector.broadcast %cst_18 : f32 to vector<16x256xf32>
    %43 = arith.mulf %42, %6 : vector<16x256xf32>
    %cst_19 = arith.constant 1.000000e+00 : f32
    %44 = vector.broadcast %cst_19 : f32 to vector<16x256xf32>
    %45 = arith.addf %44, %41 : vector<16x256xf32>
    %46 = arith.mulf %43, %45 : vector<16x256xf32>
    %c0_20 = arith.constant 0 : index
    %c0_21 = arith.constant 0 : index
    %47 = vector.load %arg2[%c0_20, %c0_21] : memref<80x768xf32, #tpu.memory_space<vmem>>, vector<80x768xf32>
    %48 = arith.truncf %47 : vector<80x768xf32> to vector<80x768xbf16>
    %c0_22 = arith.constant 0 : index
    %c0_23 = arith.constant 0 : index
    %49 = vector.load %arg6[%c0_22, %c0_23] : memref<768x256xbf16, #tpu.memory_space<vmem>>, vector<768x256xbf16>
    %cst_24 = arith.constant dense<0.000000e+00> : vector<80x256xf32>
    %50 = tpu.matmul %48, %49, %cst_24 {dimension_numbers = #tpu.dot_dimension_numbers<[1], [0], [0], [1], [0, 0, 1, 1], [], []>} : vector<80x768xbf16>, vector<768x256xbf16>, vector<80x256xf32> -> vector<80x256xf32>
    %c0_25 = arith.constant 0 : index
    %c0_26 = arith.constant 0 : index
    %51 = vector.load %arg7[%c0_25, %c0_26] : memref<1x256xf32, #tpu.memory_space<vmem>>, vector<1x256xf32>
    %52 = vector.broadcast %51 : vector<1x256xf32> to vector<80x256xf32>
    %53 = arith.addf %50, %52 : vector<80x256xf32>
    %cst_27 = arith.constant 0.707106769 : f32
    %54 = vector.broadcast %cst_27 : f32 to vector<80x256xf32>
    %55 = arith.mulf %53, %54 : vector<80x256xf32>
    %56 = math.absf %55 : vector<80x256xf32>
    %cst_28 = arith.constant 0.327591091 : f32
    %57 = vector.broadcast %cst_28 : f32 to vector<80x256xf32>
    %58 = arith.mulf %57, %56 : vector<80x256xf32>
    %cst_29 = arith.constant 1.000000e+00 : f32
    %59 = vector.broadcast %cst_29 : f32 to vector<80x256xf32>
    %60 = arith.addf %59, %58 : vector<80x256xf32>
    %cst_30 = arith.constant 1.000000e+00 : f32
    %61 = vector.broadcast %cst_30 : f32 to vector<80x256xf32>
    %62 = arith.divf %61, %60 : vector<80x256xf32>
    %cst_31 = arith.constant 1.06140542 : f32
    %63 = vector.broadcast %cst_31 : f32 to vector<80x256xf32>
    %64 = arith.mulf %62, %63 : vector<80x256xf32>
    %cst_32 = arith.constant -1.45315206 : f32
    %65 = vector.broadcast %cst_32 : f32 to vector<80x256xf32>
    %66 = arith.addf %65, %64 : vector<80x256xf32>
    %67 = arith.mulf %62, %66 : vector<80x256xf32>
    %cst_33 = arith.constant 1.42141378 : f32
    %68 = vector.broadcast %cst_33 : f32 to vector<80x256xf32>
    %69 = arith.addf %68, %67 : vector<80x256xf32>
    %70 = arith.mulf %62, %69 : vector<80x256xf32>
    %cst_34 = arith.constant -0.284496725 : f32
    %71 = vector.broadcast %cst_34 : f32 to vector<80x256xf32>
    %72 = arith.addf %71, %70 : vector<80x256xf32>
    %73 = arith.mulf %62, %72 : vector<80x256xf32>
    %cst_35 = arith.constant 0.254829586 : f32
    %74 = vector.broadcast %cst_35 : f32 to vector<80x256xf32>
    %75 = arith.addf %74, %73 : vector<80x256xf32>
    %76 = arith.mulf %62, %75 : vector<80x256xf32>
    %cst_36 = arith.constant 0.000000e+00 : f32
    %77 = vector.broadcast %cst_36 : f32 to vector<80x256xf32>
    %78 = arith.subf %77, %56 : vector<80x256xf32>
    %79 = arith.mulf %78, %56 : vector<80x256xf32>
    %80 = math.exp %79 : vector<80x256xf32>
    %81 = arith.mulf %76, %80 : vector<80x256xf32>
    %cst_37 = arith.constant 1.000000e+00 : f32
    %82 = vector.broadcast %cst_37 : f32 to vector<80x256xf32>
    %83 = arith.subf %82, %81 : vector<80x256xf32>
    %cst_38 = arith.constant 0.000000e+00 : f32
    %84 = vector.broadcast %cst_38 : f32 to vector<80x256xf32>
    %85 = arith.cmpf oge, %55, %84 : vector<80x256xf32>
    %cst_39 = arith.constant 0.000000e+00 : f32
    %86 = vector.broadcast %cst_39 : f32 to vector<80x256xf32>
    %87 = arith.subf %86, %83 : vector<80x256xf32>
    %88 = arith.select %85, %83, %87 : vector<80x256xi1>, vector<80x256xf32>
    %cst_40 = arith.constant 5.000000e-01 : f32
    %89 = vector.broadcast %cst_40 : f32 to vector<80x256xf32>
    %90 = arith.mulf %89, %53 : vector<80x256xf32>
    %cst_41 = arith.constant 1.000000e+00 : f32
    %91 = vector.broadcast %cst_41 : f32 to vector<80x256xf32>
    %92 = arith.addf %91, %88 : vector<80x256xf32>
    %93 = arith.mulf %90, %92 : vector<80x256xf32>
    %c0_42 = arith.constant 0 : index
    %c0_43 = arith.constant 0 : index
    %94 = vector.load %arg3[%c0_42, %c0_43] : memref<32x2048xf32, #tpu.memory_space<vmem>>, vector<32x2048xf32>
    %95 = arith.truncf %94 : vector<32x2048xf32> to vector<32x2048xbf16>
    %c0_44 = arith.constant 0 : index
    %c0_45 = arith.constant 0 : index
    %96 = vector.load %arg8[%c0_44, %c0_45] : memref<2048x256xbf16, #tpu.memory_space<vmem>>, vector<2048x256xbf16>
    %cst_46 = arith.constant dense<0.000000e+00> : vector<32x256xf32>
    %97 = tpu.matmul %95, %96, %cst_46 {dimension_numbers = #tpu.dot_dimension_numbers<[1], [0], [0], [1], [0, 0, 1, 1], [], []>} : vector<32x2048xbf16>, vector<2048x256xbf16>, vector<32x256xf32> -> vector<32x256xf32>
    %c0_47 = arith.constant 0 : index
    %c0_48 = arith.constant 0 : index
    %98 = vector.load %arg9[%c0_47, %c0_48] : memref<1x256xf32, #tpu.memory_space<vmem>>, vector<1x256xf32>
    %99 = vector.broadcast %98 : vector<1x256xf32> to vector<32x256xf32>
    %100 = arith.addf %97, %99 : vector<32x256xf32>
    %cst_49 = arith.constant 0.707106769 : f32
    %101 = vector.broadcast %cst_49 : f32 to vector<32x256xf32>
    %102 = arith.mulf %100, %101 : vector<32x256xf32>
    %103 = math.absf %102 : vector<32x256xf32>
    %cst_50 = arith.constant 0.327591091 : f32
    %104 = vector.broadcast %cst_50 : f32 to vector<32x256xf32>
    %105 = arith.mulf %104, %103 : vector<32x256xf32>
    %cst_51 = arith.constant 1.000000e+00 : f32
    %106 = vector.broadcast %cst_51 : f32 to vector<32x256xf32>
    %107 = arith.addf %106, %105 : vector<32x256xf32>
    %cst_52 = arith.constant 1.000000e+00 : f32
    %108 = vector.broadcast %cst_52 : f32 to vector<32x256xf32>
    %109 = arith.divf %108, %107 : vector<32x256xf32>
    %cst_53 = arith.constant 1.06140542 : f32
    %110 = vector.broadcast %cst_53 : f32 to vector<32x256xf32>
    %111 = arith.mulf %109, %110 : vector<32x256xf32>
    %cst_54 = arith.constant -1.45315206 : f32
    %112 = vector.broadcast %cst_54 : f32 to vector<32x256xf32>
    %113 = arith.addf %112, %111 : vector<32x256xf32>
    %114 = arith.mulf %109, %113 : vector<32x256xf32>
    %cst_55 = arith.constant 1.42141378 : f32
    %115 = vector.broadcast %cst_55 : f32 to vector<32x256xf32>
    %116 = arith.addf %115, %114 : vector<32x256xf32>
    %117 = arith.mulf %109, %116 : vector<32x256xf32>
    %cst_56 = arith.constant -0.284496725 : f32
    %118 = vector.broadcast %cst_56 : f32 to vector<32x256xf32>
    %119 = arith.addf %118, %117 : vector<32x256xf32>
    %120 = arith.mulf %109, %119 : vector<32x256xf32>
    %cst_57 = arith.constant 0.254829586 : f32
    %121 = vector.broadcast %cst_57 : f32 to vector<32x256xf32>
    %122 = arith.addf %121, %120 : vector<32x256xf32>
    %123 = arith.mulf %109, %122 : vector<32x256xf32>
    %cst_58 = arith.constant 0.000000e+00 : f32
    %124 = vector.broadcast %cst_58 : f32 to vector<32x256xf32>
    %125 = arith.subf %124, %103 : vector<32x256xf32>
    %126 = arith.mulf %125, %103 : vector<32x256xf32>
    %127 = math.exp %126 : vector<32x256xf32>
    %128 = arith.mulf %123, %127 : vector<32x256xf32>
    %cst_59 = arith.constant 1.000000e+00 : f32
    %129 = vector.broadcast %cst_59 : f32 to vector<32x256xf32>
    %130 = arith.subf %129, %128 : vector<32x256xf32>
    %cst_60 = arith.constant 0.000000e+00 : f32
    %131 = vector.broadcast %cst_60 : f32 to vector<32x256xf32>
    %132 = arith.cmpf oge, %102, %131 : vector<32x256xf32>
    %cst_61 = arith.constant 0.000000e+00 : f32
    %133 = vector.broadcast %cst_61 : f32 to vector<32x256xf32>
    %134 = arith.subf %133, %130 : vector<32x256xf32>
    %135 = arith.select %132, %130, %134 : vector<32x256xi1>, vector<32x256xf32>
    %cst_62 = arith.constant 5.000000e-01 : f32
    %136 = vector.broadcast %cst_62 : f32 to vector<32x256xf32>
    %137 = arith.mulf %136, %100 : vector<32x256xf32>
    %cst_63 = arith.constant 1.000000e+00 : f32
    %138 = vector.broadcast %cst_63 : f32 to vector<32x256xf32>
    %139 = arith.addf %138, %135 : vector<32x256xf32>
    %140 = arith.mulf %137, %139 : vector<32x256xf32>
    %cst_64 = arith.constant 0.000000e+00 : f32
    %141 = vector.broadcast %cst_64 : f32 to vector<1x256xf32>
    %142 = vector.extract_strided_slice %140 {offsets = [0, 0], sizes = [31, 256], strides = [1, 1]} : vector<32x256xf32> to vector<31x256xf32>
    %143 = tpu.concatenate %141, %142 in 0 : vector<1x256xf32>, vector<31x256xf32> -> vector<32x256xf32>
    %144 = vector.extract_strided_slice %140 {offsets = [1, 0], sizes = [31, 256], strides = [1, 1]} : vector<32x256xf32> to vector<31x256xf32>
    %145 = tpu.concatenate %144, %141 in 0 : vector<31x256xf32>, vector<1x256xf32> -> vector<32x256xf32>
    %146 = tpu.iota {dimensions = array<i32: 0>} : vector<32x1xi32>
    %c0_i32 = arith.constant 0 : i32
    %147 = vector.broadcast %c0_i32 : i32 to vector<32x1xi32>
    %148 = arith.cmpi eq, %146, %147 : vector<32x1xi32>
    %c15_i32 = arith.constant 15 : i32
    %149 = vector.broadcast %c15_i32 : i32 to vector<32x1xi32>
    %150 = arith.cmpi eq, %146, %149 : vector<32x1xi32>
    %c16_i32 = arith.constant 16 : i32
    %151 = vector.broadcast %c16_i32 : i32 to vector<32x1xi32>
    %152 = arith.cmpi eq, %146, %151 : vector<32x1xi32>
    %153 = arith.ori %148, %152 : vector<32x1xi1>
    %c31_i32 = arith.constant 31 : i32
    %154 = vector.broadcast %c31_i32 : i32 to vector<32x1xi32>
    %155 = arith.cmpi eq, %146, %154 : vector<32x1xi32>
    %156 = arith.ori %150, %155 : vector<32x1xi1>
    %cst_65 = arith.constant 0.000000e+00 : f32
    %157 = vector.shape_cast %153 : vector<32x1xi1> to vector<32x1xi1>
    %158 = vector.broadcast %157 : vector<32x1xi1> to vector<32x256xi1>
    %159 = vector.broadcast %cst_65 : f32 to vector<32x256xf32>
    %160 = arith.select %158, %159, %143 : vector<32x256xi1>, vector<32x256xf32>
    %cst_66 = arith.constant 0.000000e+00 : f32
    %161 = vector.shape_cast %156 : vector<32x1xi1> to vector<32x1xi1>
    %162 = vector.broadcast %161 : vector<32x1xi1> to vector<32x256xi1>
    %163 = vector.broadcast %cst_66 : f32 to vector<32x256xf32>
    %164 = arith.select %162, %163, %145 : vector<32x256xi1>, vector<32x256xf32>
    %165 = tpu.concatenate %160, %140, %164 in 1 : vector<32x256xf32>, vector<32x256xf32>, vector<32x256xf32> -> vector<32x768xf32>
    %166 = arith.truncf %165 : vector<32x768xf32> to vector<32x768xbf16>
    %c0_67 = arith.constant 0 : index
    %c0_68 = arith.constant 0 : index
    %167 = vector.load %arg10[%c0_67, %c0_68] : memref<768x512xbf16, #tpu.memory_space<vmem>>, vector<768x512xbf16>
    %cst_69 = arith.constant dense<0.000000e+00> : vector<32x512xf32>
    %168 = tpu.matmul %166, %167, %cst_69 {dimension_numbers = #tpu.dot_dimension_numbers<[1], [0], [0], [1], [0, 0, 1, 1], [], []>} : vector<32x768xbf16>, vector<768x512xbf16>, vector<32x512xf32> -> vector<32x512xf32>
    %c0_70 = arith.constant 0 : index
    %c0_71 = arith.constant 0 : index
    %169 = vector.load %arg11[%c0_70, %c0_71] : memref<1x512xf32, #tpu.memory_space<vmem>>, vector<1x512xf32>
    %170 = vector.broadcast %169 : vector<1x512xf32> to vector<32x512xf32>
    %171 = arith.addf %168, %170 : vector<32x512xf32>
    %cst_72 = arith.constant dense<0.000000e+00> : vector<512xf32>
    %172 = vector.multi_reduction <add>, %171, %cst_72 [0] : vector<32x512xf32> to vector<512xf32>
    %173 = vector.shape_cast %172 : vector<512xf32> to vector<1x512xf32>
    %cst_73 = arith.constant 3.200000e+01 : f32
    %174 = vector.broadcast %cst_73 : f32 to vector<1x512xf32>
    %175 = arith.divf %173, %174 : vector<1x512xf32>
    %176 = vector.broadcast %175 : vector<1x512xf32> to vector<32x512xf32>
    %177 = arith.subf %171, %176 : vector<32x512xf32>
    %178 = arith.mulf %177, %177 : vector<32x512xf32>
    %cst_74 = arith.constant dense<0.000000e+00> : vector<512xf32>
    %179 = vector.multi_reduction <add>, %178, %cst_74 [0] : vector<32x512xf32> to vector<512xf32>
    %180 = vector.shape_cast %179 : vector<512xf32> to vector<1x512xf32>
    %cst_75 = arith.constant 3.200000e+01 : f32
    %181 = vector.broadcast %cst_75 : f32 to vector<1x512xf32>
    %182 = arith.divf %180, %181 : vector<1x512xf32>
    %c0_76 = arith.constant 0 : index
    %c0_77 = arith.constant 0 : index
    %183 = vector.load %arg12[%c0_76, %c0_77] : memref<1x512xf32, #tpu.memory_space<vmem>>, vector<1x512xf32>
    %cst_78 = arith.constant 9.99999974E-6 : f32
    %184 = vector.broadcast %cst_78 : f32 to vector<1x512xf32>
    %185 = arith.addf %182, %184 : vector<1x512xf32>
    %186 = math.rsqrt %185 : vector<1x512xf32>
    %187 = arith.mulf %183, %186 : vector<1x512xf32>
    %c0_79 = arith.constant 0 : index
    %c0_80 = arith.constant 0 : index
    %188 = vector.load %arg13[%c0_79, %c0_80] : memref<1x512xf32, #tpu.memory_space<vmem>>, vector<1x512xf32>
    %189 = arith.mulf %175, %187 : vector<1x512xf32>
    %190 = arith.subf %188, %189 : vector<1x512xf32>
    %191 = vector.broadcast %187 : vector<1x512xf32> to vector<32x512xf32>
    %192 = arith.mulf %171, %191 : vector<32x512xf32>
    %193 = vector.broadcast %190 : vector<1x512xf32> to vector<32x512xf32>
    %194 = arith.addf %192, %193 : vector<32x512xf32>
    %cst_81 = arith.constant 0.000000e+00 : f32
    %195 = vector.broadcast %cst_81 : f32 to vector<32x512xf32>
    %196 = arith.cmpf oge, %194, %195 : vector<32x512xf32>
    %cst_82 = arith.constant 0.00999999977 : f32
    %197 = vector.broadcast %cst_82 : f32 to vector<32x512xf32>
    %198 = arith.mulf %197, %194 : vector<32x512xf32>
    %199 = arith.select %196, %194, %198 : vector<32x512xi1>, vector<32x512xf32>
    %c0_83 = arith.constant 0 : index
    %c0_84 = arith.constant 0 : index
    %200 = vector.load %arg14[%c0_83, %c0_84] : memref<48x32xf32, #tpu.memory_space<vmem>>, vector<48x32xf32>
    %cst_85 = arith.constant dense<0.000000e+00> : vector<48x512xf32>
    %201 = tpu.matmul %200, %199, %cst_85 {dimension_numbers = #tpu.dot_dimension_numbers<[1], [0], [0], [1], [0, 0, 1, 1], [], []>} : vector<48x32xf32>, vector<32x512xf32>, vector<48x512xf32> -> vector<48x512xf32>
    %202 = vector.extract_strided_slice %201 {offsets = [0, 0], sizes = [16, 512], strides = [1, 1]} : vector<48x512xf32> to vector<16x512xf32>
    %203 = vector.extract_strided_slice %201 {offsets = [16, 0], sizes = [16, 512], strides = [1, 1]} : vector<48x512xf32> to vector<16x512xf32>
    %204 = vector.extract_strided_slice %201 {offsets = [32, 0], sizes = [16, 512], strides = [1, 1]} : vector<48x512xf32> to vector<16x512xf32>
    %205 = tpu.iota {dimensions = array<i32: 0>} : vector<16x1xi32>
    %c0_i32_86 = arith.constant 0 : i32
    %206 = vector.broadcast %c0_i32_86 : i32 to vector<16x1xi32>
    %207 = arith.cmpi eq, %205, %206 : vector<16x1xi32>
    %c8_i32 = arith.constant 8 : i32
    %208 = vector.broadcast %c8_i32 : i32 to vector<16x1xi32>
    %209 = arith.cmpi eq, %205, %208 : vector<16x1xi32>
    %210 = arith.ori %207, %209 : vector<16x1xi1>
    %cst_87 = arith.constant -1.000000e+30 : f32
    %211 = vector.shape_cast %210 : vector<16x1xi1> to vector<16x1xi1>
    %212 = vector.broadcast %211 : vector<16x1xi1> to vector<16x512xi1>
    %213 = vector.broadcast %cst_87 : f32 to vector<16x512xf32>
    %214 = arith.select %212, %213, %203 : vector<16x512xi1>, vector<16x512xf32>
    %215 = arith.maximumf %202, %214 : vector<16x512xf32>
    %216 = arith.maximumf %215, %204 : vector<16x512xf32>
    %217 = arith.truncf %216 : vector<16x512xf32> to vector<16x512xbf16>
    %c0_88 = arith.constant 0 : index
    %c0_89 = arith.constant 0 : index
    %218 = vector.load %arg15[%c0_88, %c0_89] : memref<512x768xbf16, #tpu.memory_space<vmem>>, vector<512x768xbf16>
    %cst_90 = arith.constant dense<0.000000e+00> : vector<16x768xf32>
    %219 = tpu.matmul %217, %218, %cst_90 {dimension_numbers = #tpu.dot_dimension_numbers<[1], [0], [0], [1], [0, 0, 1, 1], [], []>} : vector<16x512xbf16>, vector<512x768xbf16>, vector<16x768xf32> -> vector<16x768xf32>
    %220 = vector.extract_strided_slice %219 {offsets = [0, 0], sizes = [16, 256], strides = [1, 1]} : vector<16x768xf32> to vector<16x256xf32>
    %221 = vector.extract_strided_slice %219 {offsets = [0, 256], sizes = [16, 256], strides = [1, 1]} : vector<16x768xf32> to vector<16x256xf32>
    %222 = vector.extract_strided_slice %219 {offsets = [0, 512], sizes = [16, 256], strides = [1, 1]} : vector<16x768xf32> to vector<16x256xf32>
    %223 = tpu.iota {dimensions = array<i32: 1>} : vector<16x256xi32>
    %c0_i32_91 = arith.constant 0 : i32
    %224 = vector.broadcast %c0_i32_91 : i32 to vector<16x256xi32>
    %225 = arith.cmpi eq, %223, %224 : vector<16x256xi32>
    %cst_92 = arith.constant -1.000000e+30 : f32
    %226 = vector.broadcast %cst_92 : f32 to vector<16x256xf32>
    %227 = arith.select %225, %226, %221 : vector<16x256xi1>, vector<16x256xf32>
    %228 = arith.maximumf %220, %227 : vector<16x256xf32>
    %229 = arith.maximumf %228, %222 : vector<16x256xf32>
    %230 = tpu.concatenate %46, %229, %93 in 0 : vector<16x256xf32>, vector<16x256xf32>, vector<80x256xf32> -> vector<112x256xf32>
    %231 = arith.truncf %230 : vector<112x256xf32> to vector<112x256xbf16>
    %c0_93 = arith.constant 0 : index
    %c0_94 = arith.constant 0 : index
    %232 = vector.load %arg16[%c0_93, %c0_94] : memref<256x128xbf16, #tpu.memory_space<vmem>>, vector<256x128xbf16>
    %cst_95 = arith.constant dense<0.000000e+00> : vector<112x128xf32>
    %233 = tpu.matmul %231, %232, %cst_95 {dimension_numbers = #tpu.dot_dimension_numbers<[1], [0], [0], [1], [0, 0, 1, 1], [], []>} : vector<112x256xbf16>, vector<256x128xbf16>, vector<112x128xf32> -> vector<112x128xf32>
    %c0_96 = arith.constant 0 : index
    %c0_97 = arith.constant 0 : index
    %234 = vector.load %arg17[%c0_96, %c0_97] : memref<1x128xf32, #tpu.memory_space<vmem>>, vector<1x128xf32>
    %235 = vector.broadcast %234 : vector<1x128xf32> to vector<112x128xf32>
    %236 = arith.addf %233, %235 : vector<112x128xf32>
    %cst_98 = arith.constant 0.707106769 : f32
    %237 = vector.broadcast %cst_98 : f32 to vector<112x128xf32>
    %238 = arith.mulf %236, %237 : vector<112x128xf32>
    %239 = math.absf %238 : vector<112x128xf32>
    %cst_99 = arith.constant 0.327591091 : f32
    %240 = vector.broadcast %cst_99 : f32 to vector<112x128xf32>
    %241 = arith.mulf %240, %239 : vector<112x128xf32>
    %cst_100 = arith.constant 1.000000e+00 : f32
    %242 = vector.broadcast %cst_100 : f32 to vector<112x128xf32>
    %243 = arith.addf %242, %241 : vector<112x128xf32>
    %cst_101 = arith.constant 1.000000e+00 : f32
    %244 = vector.broadcast %cst_101 : f32 to vector<112x128xf32>
    %245 = arith.divf %244, %243 : vector<112x128xf32>
    %cst_102 = arith.constant 1.06140542 : f32
    %246 = vector.broadcast %cst_102 : f32 to vector<112x128xf32>
    %247 = arith.mulf %245, %246 : vector<112x128xf32>
    %cst_103 = arith.constant -1.45315206 : f32
    %248 = vector.broadcast %cst_103 : f32 to vector<112x128xf32>
    %249 = arith.addf %248, %247 : vector<112x128xf32>
    %250 = arith.mulf %245, %249 : vector<112x128xf32>
    %cst_104 = arith.constant 1.42141378 : f32
    %251 = vector.broadcast %cst_104 : f32 to vector<112x128xf32>
    %252 = arith.addf %251, %250 : vector<112x128xf32>
    %253 = arith.mulf %245, %252 : vector<112x128xf32>
    %cst_105 = arith.constant -0.284496725 : f32
    %254 = vector.broadcast %cst_105 : f32 to vector<112x128xf32>
    %255 = arith.addf %254, %253 : vector<112x128xf32>
    %256 = arith.mulf %245, %255 : vector<112x128xf32>
    %cst_106 = arith.constant 0.254829586 : f32
    %257 = vector.broadcast %cst_106 : f32 to vector<112x128xf32>
    %258 = arith.addf %257, %256 : vector<112x128xf32>
    %259 = arith.mulf %245, %258 : vector<112x128xf32>
    %cst_107 = arith.constant 0.000000e+00 : f32
    %260 = vector.broadcast %cst_107 : f32 to vector<112x128xf32>
    %261 = arith.subf %260, %239 : vector<112x128xf32>
    %262 = arith.mulf %261, %239 : vector<112x128xf32>
    %263 = math.exp %262 : vector<112x128xf32>
    %264 = arith.mulf %259, %263 : vector<112x128xf32>
    %cst_108 = arith.constant 1.000000e+00 : f32
    %265 = vector.broadcast %cst_108 : f32 to vector<112x128xf32>
    %266 = arith.subf %265, %264 : vector<112x128xf32>
    %cst_109 = arith.constant 0.000000e+00 : f32
    %267 = vector.broadcast %cst_109 : f32 to vector<112x128xf32>
    %268 = arith.cmpf oge, %238, %267 : vector<112x128xf32>
    %cst_110 = arith.constant 0.000000e+00 : f32
    %269 = vector.broadcast %cst_110 : f32 to vector<112x128xf32>
    %270 = arith.subf %269, %266 : vector<112x128xf32>
    %271 = arith.select %268, %266, %270 : vector<112x128xi1>, vector<112x128xf32>
    %cst_111 = arith.constant 5.000000e-01 : f32
    %272 = vector.broadcast %cst_111 : f32 to vector<112x128xf32>
    %273 = arith.mulf %272, %236 : vector<112x128xf32>
    %cst_112 = arith.constant 1.000000e+00 : f32
    %274 = vector.broadcast %cst_112 : f32 to vector<112x128xf32>
    %275 = arith.addf %274, %271 : vector<112x128xf32>
    %276 = arith.mulf %273, %275 : vector<112x128xf32>
    %277 = arith.truncf %276 : vector<112x128xf32> to vector<112x128xbf16>
    %c0_113 = arith.constant 0 : index
    %c0_114 = arith.constant 0 : index
    %278 = vector.load %arg18[%c0_113, %c0_114] : memref<128x64xbf16, #tpu.memory_space<vmem>>, vector<128x64xbf16>
    %cst_115 = arith.constant dense<0.000000e+00> : vector<112x64xf32>
    %279 = tpu.matmul %277, %278, %cst_115 {dimension_numbers = #tpu.dot_dimension_numbers<[1], [0], [0], [1], [0, 0, 1, 1], [], []>} : vector<112x128xbf16>, vector<128x64xbf16>, vector<112x64xf32> -> vector<112x64xf32>
    %c0_116 = arith.constant 0 : index
    %c0_117 = arith.constant 0 : index
    %280 = vector.load %arg19[%c0_116, %c0_117] : memref<1x64xf32, #tpu.memory_space<vmem>>, vector<1x64xf32>
    %281 = vector.broadcast %280 : vector<1x64xf32> to vector<112x64xf32>
    %282 = arith.addf %279, %281 : vector<112x64xf32>
    %cst_118 = arith.constant 0.707106769 : f32
    %283 = vector.broadcast %cst_118 : f32 to vector<112x64xf32>
    %284 = arith.mulf %282, %283 : vector<112x64xf32>
    %285 = math.absf %284 : vector<112x64xf32>
    %cst_119 = arith.constant 0.327591091 : f32
    %286 = vector.broadcast %cst_119 : f32 to vector<112x64xf32>
    %287 = arith.mulf %286, %285 : vector<112x64xf32>
    %cst_120 = arith.constant 1.000000e+00 : f32
    %288 = vector.broadcast %cst_120 : f32 to vector<112x64xf32>
    %289 = arith.addf %288, %287 : vector<112x64xf32>
    %cst_121 = arith.constant 1.000000e+00 : f32
    %290 = vector.broadcast %cst_121 : f32 to vector<112x64xf32>
    %291 = arith.divf %290, %289 : vector<112x64xf32>
    %cst_122 = arith.constant 1.06140542 : f32
    %292 = vector.broadcast %cst_122 : f32 to vector<112x64xf32>
    %293 = arith.mulf %291, %292 : vector<112x64xf32>
    %cst_123 = arith.constant -1.45315206 : f32
    %294 = vector.broadcast %cst_123 : f32 to vector<112x64xf32>
    %295 = arith.addf %294, %293 : vector<112x64xf32>
    %296 = arith.mulf %291, %295 : vector<112x64xf32>
    %cst_124 = arith.constant 1.42141378 : f32
    %297 = vector.broadcast %cst_124 : f32 to vector<112x64xf32>
    %298 = arith.addf %297, %296 : vector<112x64xf32>
    %299 = arith.mulf %291, %298 : vector<112x64xf32>
    %cst_125 = arith.constant -0.284496725 : f32
    %300 = vector.broadcast %cst_125 : f32 to vector<112x64xf32>
    %301 = arith.addf %300, %299 : vector<112x64xf32>
    %302 = arith.mulf %291, %301 : vector<112x64xf32>
    %cst_126 = arith.constant 0.254829586 : f32
    %303 = vector.broadcast %cst_126 : f32 to vector<112x64xf32>
    %304 = arith.addf %303, %302 : vector<112x64xf32>
    %305 = arith.mulf %291, %304 : vector<112x64xf32>
    %cst_127 = arith.constant 0.000000e+00 : f32
    %306 = vector.broadcast %cst_127 : f32 to vector<112x64xf32>
    %307 = arith.subf %306, %285 : vector<112x64xf32>
    %308 = arith.mulf %307, %285 : vector<112x64xf32>
    %309 = math.exp %308 : vector<112x64xf32>
    %310 = arith.mulf %305, %309 : vector<112x64xf32>
    %cst_128 = arith.constant 1.000000e+00 : f32
    %311 = vector.broadcast %cst_128 : f32 to vector<112x64xf32>
    %312 = arith.subf %311, %310 : vector<112x64xf32>
    %cst_129 = arith.constant 0.000000e+00 : f32
    %313 = vector.broadcast %cst_129 : f32 to vector<112x64xf32>
    %314 = arith.cmpf oge, %284, %313 : vector<112x64xf32>
    %cst_130 = arith.constant 0.000000e+00 : f32
    %315 = vector.broadcast %cst_130 : f32 to vector<112x64xf32>
    %316 = arith.subf %315, %312 : vector<112x64xf32>
    %317 = arith.select %314, %312, %316 : vector<112x64xi1>, vector<112x64xf32>
    %cst_131 = arith.constant 5.000000e-01 : f32
    %318 = vector.broadcast %cst_131 : f32 to vector<112x64xf32>
    %319 = arith.mulf %318, %282 : vector<112x64xf32>
    %cst_132 = arith.constant 1.000000e+00 : f32
    %320 = vector.broadcast %cst_132 : f32 to vector<112x64xf32>
    %321 = arith.addf %320, %317 : vector<112x64xf32>
    %322 = arith.mulf %319, %321 : vector<112x64xf32>
    %323 = vector.extract_strided_slice %322 {offsets = [0, 0], sizes = [8, 64], strides = [1, 1]} : vector<112x64xf32> to vector<8x64xf32>
    %cst_133 = arith.constant dense<0xFF800000> : vector<64xf32>
    %324 = vector.multi_reduction <maximumf>, %323, %cst_133 [0] : vector<8x64xf32> to vector<64xf32>
    %325 = vector.shape_cast %324 : vector<64xf32> to vector<1x64xf32>
    %326 = vector.extract_strided_slice %322 {offsets = [16, 0], sizes = [8, 64], strides = [1, 1]} : vector<112x64xf32> to vector<8x64xf32>
    %cst_134 = arith.constant dense<0xFF800000> : vector<64xf32>
    %327 = vector.multi_reduction <maximumf>, %326, %cst_134 [0] : vector<8x64xf32> to vector<64xf32>
    %328 = vector.shape_cast %327 : vector<64xf32> to vector<1x64xf32>
    %329 = arith.maximumf %325, %328 : vector<1x64xf32>
    %330 = vector.extract_strided_slice %322 {offsets = [8, 0], sizes = [8, 64], strides = [1, 1]} : vector<112x64xf32> to vector<8x64xf32>
    %cst_135 = arith.constant dense<0xFF800000> : vector<64xf32>
    %331 = vector.multi_reduction <maximumf>, %330, %cst_135 [0] : vector<8x64xf32> to vector<64xf32>
    %332 = vector.shape_cast %331 : vector<64xf32> to vector<1x64xf32>
    %333 = vector.extract_strided_slice %322 {offsets = [24, 0], sizes = [8, 64], strides = [1, 1]} : vector<112x64xf32> to vector<8x64xf32>
    %cst_136 = arith.constant dense<0xFF800000> : vector<64xf32>
    %334 = vector.multi_reduction <maximumf>, %333, %cst_136 [0] : vector<8x64xf32> to vector<64xf32>
    %335 = vector.shape_cast %334 : vector<64xf32> to vector<1x64xf32>
    %336 = arith.maximumf %332, %335 : vector<1x64xf32>
    %337 = vector.extract_strided_slice %322 {offsets = [32, 0], sizes = [8, 64], strides = [1, 1]} : vector<112x64xf32> to vector<8x64xf32>
    %cst_137 = arith.constant dense<0xFF800000> : vector<64xf32>
    %338 = vector.multi_reduction <maximumf>, %337, %cst_137 [0] : vector<8x64xf32> to vector<64xf32>
    %339 = vector.shape_cast %338 : vector<64xf32> to vector<1x64xf32>
    %340 = arith.maximumf %329, %339 : vector<1x64xf32>
    %341 = vector.extract_strided_slice %322 {offsets = [40, 0], sizes = [8, 64], strides = [1, 1]} : vector<112x64xf32> to vector<8x64xf32>
    %cst_138 = arith.constant dense<0xFF800000> : vector<64xf32>
    %342 = vector.multi_reduction <maximumf>, %341, %cst_138 [0] : vector<8x64xf32> to vector<64xf32>
    %343 = vector.shape_cast %342 : vector<64xf32> to vector<1x64xf32>
    %344 = arith.maximumf %336, %343 : vector<1x64xf32>
    %345 = vector.extract_strided_slice %322 {offsets = [48, 0], sizes = [8, 64], strides = [1, 1]} : vector<112x64xf32> to vector<8x64xf32>
    %cst_139 = arith.constant dense<0xFF800000> : vector<64xf32>
    %346 = vector.multi_reduction <maximumf>, %345, %cst_139 [0] : vector<8x64xf32> to vector<64xf32>
    %347 = vector.shape_cast %346 : vector<64xf32> to vector<1x64xf32>
    %348 = arith.maximumf %329, %347 : vector<1x64xf32>
    %349 = vector.extract_strided_slice %322 {offsets = [56, 0], sizes = [8, 64], strides = [1, 1]} : vector<112x64xf32> to vector<8x64xf32>
    %cst_140 = arith.constant dense<0xFF800000> : vector<64xf32>
    %350 = vector.multi_reduction <maximumf>, %349, %cst_140 [0] : vector<8x64xf32> to vector<64xf32>
    %351 = vector.shape_cast %350 : vector<64xf32> to vector<1x64xf32>
    %352 = arith.maximumf %336, %351 : vector<1x64xf32>
    %353 = vector.extract_strided_slice %322 {offsets = [64, 0], sizes = [8, 64], strides = [1, 1]} : vector<112x64xf32> to vector<8x64xf32>
    %cst_141 = arith.constant dense<0xFF800000> : vector<64xf32>
    %354 = vector.multi_reduction <maximumf>, %353, %cst_141 [0] : vector<8x64xf32> to vector<64xf32>
    %355 = vector.shape_cast %354 : vector<64xf32> to vector<1x64xf32>
    %356 = arith.maximumf %329, %355 : vector<1x64xf32>
    %357 = vector.extract_strided_slice %322 {offsets = [72, 0], sizes = [8, 64], strides = [1, 1]} : vector<112x64xf32> to vector<8x64xf32>
    %cst_142 = arith.constant dense<0xFF800000> : vector<64xf32>
    %358 = vector.multi_reduction <maximumf>, %357, %cst_142 [0] : vector<8x64xf32> to vector<64xf32>
    %359 = vector.shape_cast %358 : vector<64xf32> to vector<1x64xf32>
    %360 = arith.maximumf %336, %359 : vector<1x64xf32>
    %361 = vector.extract_strided_slice %322 {offsets = [80, 0], sizes = [8, 64], strides = [1, 1]} : vector<112x64xf32> to vector<8x64xf32>
    %cst_143 = arith.constant dense<0xFF800000> : vector<64xf32>
    %362 = vector.multi_reduction <maximumf>, %361, %cst_143 [0] : vector<8x64xf32> to vector<64xf32>
    %363 = vector.shape_cast %362 : vector<64xf32> to vector<1x64xf32>
    %364 = arith.maximumf %329, %363 : vector<1x64xf32>
    %365 = vector.extract_strided_slice %322 {offsets = [88, 0], sizes = [8, 64], strides = [1, 1]} : vector<112x64xf32> to vector<8x64xf32>
    %cst_144 = arith.constant dense<0xFF800000> : vector<64xf32>
    %366 = vector.multi_reduction <maximumf>, %365, %cst_144 [0] : vector<8x64xf32> to vector<64xf32>
    %367 = vector.shape_cast %366 : vector<64xf32> to vector<1x64xf32>
    %368 = arith.maximumf %336, %367 : vector<1x64xf32>
    %369 = vector.extract_strided_slice %322 {offsets = [96, 0], sizes = [8, 64], strides = [1, 1]} : vector<112x64xf32> to vector<8x64xf32>
    %cst_145 = arith.constant dense<0xFF800000> : vector<64xf32>
    %370 = vector.multi_reduction <maximumf>, %369, %cst_145 [0] : vector<8x64xf32> to vector<64xf32>
    %371 = vector.shape_cast %370 : vector<64xf32> to vector<1x64xf32>
    %372 = arith.maximumf %329, %371 : vector<1x64xf32>
    %373 = vector.extract_strided_slice %322 {offsets = [104, 0], sizes = [8, 64], strides = [1, 1]} : vector<112x64xf32> to vector<8x64xf32>
    %cst_146 = arith.constant dense<0xFF800000> : vector<64xf32>
    %374 = vector.multi_reduction <maximumf>, %373, %cst_146 [0] : vector<8x64xf32> to vector<64xf32>
    %375 = vector.shape_cast %374 : vector<64xf32> to vector<1x64xf32>
    %376 = arith.maximumf %336, %375 : vector<1x64xf32>
    %377 = tpu.concatenate %340, %344, %348, %352, %356, %360, %364, %368, %372, %376 in 0 : vector<1x64xf32>, vector<1x64xf32>, vector<1x64xf32>, vector<1x64xf32>, vector<1x64xf32>, vector<1x64xf32>, vector<1x64xf32>, vector<1x64xf32>, vector<1x64xf32>, vector<1x64xf32> -> vector<10x64xf32>
    %c0_147 = arith.constant 0 : index
    %c0_148 = arith.constant 0 : index
    %378 = vector.load %arg20[%c0_147, %c0_148] : memref<1x64xf32, #tpu.memory_space<vmem>>, vector<1x64xf32>
    %379 = vector.broadcast %378 : vector<1x64xf32> to vector<10x64xf32>
    %380 = arith.mulf %377, %379 : vector<10x64xf32>
    %cst_149 = arith.constant dense<0.000000e+00> : vector<10xf32>
    %381 = vector.multi_reduction <add>, %380, %cst_149 [1] : vector<10x64xf32> to vector<10xf32>
    %382 = vector.shape_cast %381 : vector<10xf32> to vector<10x1xf32>
    %c0_150 = arith.constant 0 : index
    %c0_151 = arith.constant 0 : index
    %383 = vector.load %arg21[%c0_150, %c0_151] : memref<1x1xf32, #tpu.memory_space<vmem>>, vector<1x1xf32>
    %384 = vector.broadcast %383 : vector<1x1xf32> to vector<10x1xf32>
    %385 = arith.addf %382, %384 : vector<10x1xf32>
    %c0_152 = arith.constant 0 : index
    %c0_153 = arith.constant 0 : index
    %386 = vector.load %arg22[%c0_152, %c0_153] : memref<10x1xf32, #tpu.memory_space<vmem>>, vector<10x1xf32>
    tpu.vector_store %arg22[%c0_152, %c0_153], %385 {strides = array<i32>} : memref<10x1xf32, #tpu.memory_space<vmem>>, vector<10x1xf32>,
    return
  }
  func.func @transform_0(%arg0: i32) -> (i32, i32) {
    %c0_i32 = arith.constant 0 : i32
    %c0_i32_0 = arith.constant 0 : i32
    %c0_i32_1 = arith.constant 0 : i32
    return %c0_i32, %c0_i32_0 : i32, i32
  }
  func.func @transform_1(%arg0: i32) -> (i32, i32) {
    %c0_i32 = arith.constant 0 : i32
    %c0_i32_0 = arith.constant 0 : i32
    %c0_i32_1 = arith.constant 0 : i32
    return %c0_i32, %c0_i32_0 : i32, i32
  }
  func.func @transform_2(%arg0: i32) -> (i32, i32) {
    %c0_i32 = arith.constant 0 : i32
    %c0_i32_0 = arith.constant 0 : i32
    %c0_i32_1 = arith.constant 0 : i32
    return %c0_i32, %c0_i32_0 : i32, i32
  }
  func.func @transform_3(%arg0: i32) -> (i32, i32) {
    %c0_i32 = arith.constant 0 : i32
    %c0_i32_0 = arith.constant 0 : i32
    %c0_i32_1 = arith.constant 0 : i32
    return %c0_i32, %c0_i32_0 : i32, i32
  }
  func.func @transform_4(%arg0: i32) -> (i32, i32) {
    %c0_i32 = arith.constant 0 : i32
    %c0_i32_0 = arith.constant 0 : i32
    %c0_i32_1 = arith.constant 0 : i32
    return %c0_i32, %c0_i32_0 : i32, i32
  }
  func.func @transform_5(%arg0: i32) -> (i32, i32) {
    %c0_i32 = arith.constant 0 : i32
    %c0_i32_0 = arith.constant 0 : i32
    %c0_i32_1 = arith.constant 0 : i32
    return %c0_i32, %c0_i32_0 : i32, i32
  }
  func.func @transform_6(%arg0: i32) -> (i32, i32) {
    %c0_i32 = arith.constant 0 : i32
    %c0_i32_0 = arith.constant 0 : i32
    %c0_i32_1 = arith.constant 0 : i32
    return %c0_i32, %c0_i32_0 : i32, i32
  }
  func.func @transform_7(%arg0: i32) -> (i32, i32) {
    %c0_i32 = arith.constant 0 : i32
    %c0_i32_0 = arith.constant 0 : i32
    %c0_i32_1 = arith.constant 0 : i32
    return %c0_i32, %c0_i32_0 : i32, i32
  }
  func.func @transform_8(%arg0: i32) -> (i32, i32) {
    %c0_i32 = arith.constant 0 : i32
    %c0_i32_0 = arith.constant 0 : i32
    %c0_i32_1 = arith.constant 0 : i32
    return %c0_i32, %c0_i32_0 : i32, i32
  }
  func.func @transform_9(%arg0: i32) -> (i32, i32) {
    %c0_i32 = arith.constant 0 : i32
    %c0_i32_0 = arith.constant 0 : i32
    %c0_i32_1 = arith.constant 0 : i32
    return %c0_i32, %c0_i32_0 : i32, i32
  }
  func.func @transform_10(%arg0: i32) -> (i32, i32) {
    %c0_i32 = arith.constant 0 : i32
    %c0_i32_0 = arith.constant 0 : i32
    %c0_i32_1 = arith.constant 0 : i32
    return %c0_i32, %c0_i32_0 : i32, i32
  }
  func.func @transform_11(%arg0: i32) -> (i32, i32) {
    %c0_i32 = arith.constant 0 : i32
    %c0_i32_0 = arith.constant 0 : i32
    %c0_i32_1 = arith.constant 0 : i32
    return %c0_i32, %c0_i32_0 : i32, i32
  }
  func.func @transform_12(%arg0: i32) -> (i32, i32) {
    %c0_i32 = arith.constant 0 : i32
    %c0_i32_0 = arith.constant 0 : i32
    %c0_i32_1 = arith.constant 0 : i32
    return %c0_i32, %c0_i32_0 : i32, i32
  }
  func.func @transform_13(%arg0: i32) -> (i32, i32) {
    %c0_i32 = arith.constant 0 : i32
    %c0_i32_0 = arith.constant 0 : i32
    %c0_i32_1 = arith.constant 0 : i32
    return %c0_i32, %c0_i32_0 : i32, i32
  }
  func.func @transform_14(%arg0: i32) -> (i32, i32) {
    %c0_i32 = arith.constant 0 : i32
    %c0_i32_0 = arith.constant 0 : i32
    %c0_i32_1 = arith.constant 0 : i32
    return %c0_i32, %c0_i32_0 : i32, i32
  }
  func.func @transform_15(%arg0: i32) -> (i32, i32) {
    %c0_i32 = arith.constant 0 : i32
    %c0_i32_0 = arith.constant 0 : i32
    %c0_i32_1 = arith.constant 0 : i32
    return %c0_i32, %c0_i32_0 : i32, i32
  }
  func.func @transform_16(%arg0: i32) -> (i32, i32) {
    %c0_i32 = arith.constant 0 : i32
    %c0_i32_0 = arith.constant 0 : i32
    %c0_i32_1 = arith.constant 0 : i32
    return %c0_i32, %c0_i32_0 : i32, i32
  }
  func.func @transform_17(%arg0: i32) -> (i32, i32) {
    %c0_i32 = arith.constant 0 : i32
    %c0_i32_0 = arith.constant 0 : i32
    %c0_i32_1 = arith.constant 0 : i32
    return %c0_i32, %c0_i32_0 : i32, i32
  }
  func.func @transform_18(%arg0: i32) -> (i32, i32) {
    %c0_i32 = arith.constant 0 : i32
    %c0_i32_0 = arith.constant 0 : i32
    %c0_i32_1 = arith.constant 0 : i32
    return %c0_i32, %c0_i32_0 : i32, i32
  }
  func.func @transform_19(%arg0: i32) -> (i32, i32) {
    %c0_i32 = arith.constant 0 : i32
    %c0_i32_0 = arith.constant 0 : i32
    %c0_i32_1 = arith.constant 0 : i32
    return %c0_i32, %c0_i32_0 : i32, i32
  }
  func.func @transform_20(%arg0: i32) -> (i32, i32) {
    %c0_i32 = arith.constant 0 : i32
    %c0_i32_0 = arith.constant 0 : i32
    %c0_i32_1 = arith.constant 0 : i32
    return %c0_i32, %c0_i32_0 : i32, i32
  }
  func.func @transform_21(%arg0: i32) -> (i32, i32) {
    %c0_i32 = arith.constant 0 : i32
    %c0_i32_0 = arith.constant 0 : i32
    %c0_i32_1 = arith.constant 0 : i32
    return %c0_i32, %c0_i32_0 : i32, i32
  }
}

</mosaic_0001>

<llo_original>
// kernel: tvqa_forward.1
$region0: #{tvqa_forward.1}
  #allocation0 [shape = 'u32[]', space=smem, size = 0x4, offset = 0x4, fixed_abs, tag = 'smem constant byte address 0x4 - core index']
  #allocation1 [shape = 'u32[144,128]{1,0:T(1,128)}', space=vmem, size = 0x12000, scoped, tag = 'internal scratch']
  #allocation2 [shape = 'f32[1,1]{1,0:T(1,128)S(1)}', space=vmem, size = 0x200, scoped, tag = 'scoped memory for tvqa_forward.1']
  %s0 = inlined_call_operand.vmem [shape: f32[16,768], index: 0, kind: input, shape index: {}]
  %s1 = inlined_call_operand.hbm [shape: f32[80,768], index: 1, kind: input, shape index: {}]
  %s2 = inlined_call_operand.hbm [shape: f32[32,2048], index: 2, kind: input, shape index: {}]
  %s3 = inlined_call_operand.vmem [shape: bf16[768,256], index: 3, kind: input, shape index: {}]
  %s4 = inlined_call_operand.vmem [shape: f32[1,256], index: 4, kind: input, shape index: {}]
  %s5 = inlined_call_operand.hbm [shape: bf16[768,256], index: 5, kind: input, shape index: {}]
  %s6 = inlined_call_operand.vmem [shape: f32[1,256], index: 6, kind: input, shape index: {}]
  %s7 = inlined_call_operand.vmem [shape: bf16[2048,256], index: 7, kind: input, shape index: {}]
  %s8 = inlined_call_operand.vmem [shape: f32[1,256], index: 8, kind: input, shape index: {}]
  %s9 = inlined_call_operand.hbm [shape: bf16[768,512], index: 9, kind: input, shape index: {}]
  %s10 = inlined_call_operand.vmem [shape: f32[1,512], index: 10, kind: input, shape index: {}]
  %s11 = inlined_call_operand.vmem [shape: f32[1,512], index: 11, kind: input, shape index: {}]
  %s12 = inlined_call_operand.vmem [shape: f32[1,512], index: 12, kind: input, shape index: {}]
  %s13 = inlined_call_operand.vmem [shape: f32[48,32], index: 13, kind: input, shape index: {}]
  %s14 = inlined_call_operand.vmem [shape: bf16[512,768], index: 14, kind: input, shape index: {}]
  %s15 = inlined_call_operand.vmem [shape: bf16[256,128], index: 15, kind: input, shape index: {}]
  %s16 = inlined_call_operand.vmem [shape: f32[1,128], index: 16, kind: input, shape index: {}]
  %s17 = inlined_call_operand.vmem [shape: bf16[128,64], index: 17, kind: input, shape index: {}]
  %s18 = inlined_call_operand.vmem [shape: f32[1,64], index: 18, kind: input, shape index: {}]
  %s19 = inlined_call_operand.vmem [shape: f32[1,64], index: 19, kind: input, shape index: {}]
  %s20 = inlined_call_operand.<no memory space> [shape: f32[1,1], index: 20, kind: input, shape index: {}]
  %s21 = inlined_call_operand.vmem [shape: f32[10,1], index: 21, kind: output, shape index: {}]
  %s22 = sld [smem:[#allocation0]]
  $region110: #{tvqa_forward.1} parent=0
    _
  %s24 = ssub.s32 1, %s22
  %s25 = scalar_select 0, %s24, %s22
  %v26 = vstv %s20
  %27 = vst [vmem:[#allocation2] sm:$0x1] %v26
  $region1: #{tvqa_forward.1} parent=0
    #allocation3 [shape = 'u8[245760]{0}', space=vmem, size = 0x3c000, scoped, tag = 'input window, operand 1, single buffered']
    #allocation4 [shape = 's32[1]{0}', space=sflag, size = 0x4, scoped, tag = 'scoped memory for tvqa_forward.1']
    #allocation5 [shape = 'u8[262144]{0}', space=vmem, size = 0x40000, scoped, tag = 'input window, operand 2, single buffered']
    #allocation6 [shape = 's32[1]{0}', space=sflag, size = 0x4, scoped, tag = 'scoped memory for tvqa_forward.1']
    #allocation7 [shape = 'u8[393216]{0}', space=vmem, size = 0x60000, scoped, tag = 'input window, operand 5, single buffered']
    #allocation8 [shape = 'u8[786432]{0}', space=vmem, size = 0xc0000, scoped, tag = 'input window, operand 9, single buffered']
    #allocation9 [shape = 's32[1]{0}', space=sflag, size = 0x4, scoped, tag = 'scoped memory for tvqa_forward.1']
    %28 = vsyncpa [#allocation4], 0
    %29 = vsyncpa [#allocation6], 0
    %30 = vsyncpa [#allocation9], 0
    // Predicated region
    $region2: #{tvqa_forward.1} parent=1 // pred_check
      _
    $region3: #{tvqa_forward.1} parent=1 // pred_check_branch
      %32 = sbr.rel (0) target = $region5
    $region4: #{tvqa_forward.1} parent=1 // pred_region
      _
    $region5: #{tvqa_forward.1} parent=1 // pred_fallthru
      _
    // Predicated region
    $region6: #{tvqa_forward.1} parent=1 // pred_check
      _
    $region7: #{tvqa_forward.1} parent=1 // pred_check_branch
      %34 = sbr.rel (0) target = $region9
    $region8: #{tvqa_forward.1} parent=1 // pred_region
      %s36 = ssub.s32 7680, 7680
      %37 = vsyncadd [#allocation4], %s36
      %s38 = sshll.u32 [#allocation3], 4
      %s39 = int_to_ptr.vmem [resolvable:$true] %s38
      %44 = dma.hbm_to_vmem [thread:$0]  %s1, 7680, %s39, [#allocation4], 768, 768, 48
    $region9: #{tvqa_forward.1} parent=1 // pred_fallthru
      _
    // Predicated region
    $region10: #{tvqa_forward.1} parent=1 // pred_check
      _
    $region11: #{tvqa_forward.1} parent=1 // pred_check_branch
      %46 = sbr.rel (0) target = $region13
    $region12: #{tvqa_forward.1} parent=1 // pred_region
      %s48 = ssub.s32 8192, 8192
      %49 = vsyncadd [#allocation6], %s48
      %s50 = sshll.u32 [#allocation5], 4
      %s51 = int_to_ptr.vmem [resolvable:$true] %s50
      %56 = dma.hbm_to_vmem [thread:$0]  %s2, 8192, %s51, [#allocation6], 2048, 2048, 128
    $region13: #{tvqa_forward.1} parent=1 // pred_fallthru
      _
    // Predicated region
    $region14: #{tvqa_forward.1} parent=1 // pred_check
      _
    $region15: #{tvqa_forward.1} parent=1 // pred_check_branch
      %58 = sbr.rel (0) target = $region17
    $region16: #{tvqa_forward.1} parent=1 // pred_region
      _
    $region17: #{tvqa_forward.1} parent=1 // pred_fallthru
      _
    // Predicated region
    $region18: #{tvqa_forward.1} parent=1 // pred_check
      _
    $region19: #{tvqa_forward.1} parent=1 // pred_check_branch
      %60 = sbr.rel (0) target = $region21
    $region20: #{tvqa_forward.1} parent=1 // pred_region
      _
    $region21: #{tvqa_forward.1} parent=1 // pred_fallthru
      _
    // Predicated region
    $region22: #{tvqa_forward.1} parent=1 // pred_check
      _
    $region23: #{tvqa_forward.1} parent=1 // pred_check_branch
      %62 = sbr.rel (0) target = $region25
    $region24: #{tvqa_forward.1} parent=1 // pred_region
      %s64 = ssub.s32 12288, 12288
      %65 = vsyncadd [#allocation6], %s64
      %s66 = sshll.u32 [#allocation7], 4
      %s67 = int_to_ptr.vmem [resolvable:$true] %s66
      %72 = dma.hbm_to_vmem [thread:$0]  %s5, 12288, %s67, [#allocation6], 128, 128, 8
    $region25: #{tvqa_forward.1} parent=1 // pred_fallthru
      _
    // Predicated region
    $region26: #{tvqa_forward.1} parent=1 // pred_check
      _
    $region27: #{tvqa_forward.1} parent=1 // pred_check_branch
      %74 = sbr.rel (0) target = $region29
    $region28: #{tvqa_forward.1} parent=1 // pred_region
      _
    $region29: #{tvqa_forward.1} parent=1 // pred_fallthru
      _
    // Predicated region
    $region30: #{tvqa_forward.1} parent=1 // pred_check
      _
    $region31: #{tvqa_forward.1} parent=1 // pred_check_branch
      %76 = sbr.rel (0) target = $region33
    $region32: #{tvqa_forward.1} parent=1 // pred_region
      _
    $region33: #{tvqa_forward.1} parent=1 // pred_fallthru
      _
    // Predicated region
    $region34: #{tvqa_forward.1} parent=1 // pred_check
      _
    $region35: #{tvqa_forward.1} parent=1 // pred_check_branch
      %78 = sbr.rel (0) target = $region37
    $region36: #{tvqa_forward.1} parent=1 // pred_region
      _
    $region37: #{tvqa_forward.1} parent=1 // pred_fallthru
      _
    // Predicated region
    $region38: #{tvqa_forward.1} parent=1 // pred_check
      _
    $region39: #{tvqa_forward.1} parent=1 // pred_check_branch
      %80 = sbr.rel (0) target = $region41
    $region40: #{tvqa_forward.1} parent=1 // pred_region
      %s82 = ssub.s32 24576, 24576
      %83 = vsyncadd [#allocation9], %s82
      %s84 = sshll.u32 [#allocation8], 4
      %s85 = int_to_ptr.vmem [resolvable:$true] %s84
      %90 = dma.hbm_to_vmem [thread:$0]  %s9, 24576, %s85, [#allocation9], 256, 256, 16
    $region41: #{tvqa_forward.1} parent=1 // pred_fallthru
      _
    // Predicated region
    $region42: #{tvqa_forward.1} parent=1 // pred_check
      _
    $region43: #{tvqa_forward.1} parent=1 // pred_check_branch
      %92 = sbr.rel (0) target = $region45
    $region44: #{tvqa_forward.1} parent=1 // pred_region
      _
    $region45: #{tvqa_forward.1} parent=1 // pred_fallthru
      _
    // Predicated region
    $region46: #{tvqa_forward.1} parent=1 // pred_check
      _
    $region47: #{tvqa_forward.1} parent=1 // pred_check_branch
      %94 = sbr.rel (0) target = $region49
    $region48: #{tvqa_forward.1} parent=1 // pred_region
      _
    $region49: #{tvqa_forward.1} parent=1 // pred_fallthru
      _
    // Predicated region
    $region50: #{tvqa_forward.1} parent=1 // pred_check
      _
    $region51: #{tvqa_forward.1} parent=1 // pred_check_branch
      %96 = sbr.rel (0) target = $region53
    $region52: #{tvqa_forward.1} parent=1 // pred_region
      _
    $region53: #{tvqa_forward.1} parent=1 // pred_fallthru
      _
    // Predicated region
    $region54: #{tvqa_forward.1} parent=1 // pred_check
      _
    $region55: #{tvqa_forward.1} parent=1 // pred_check_branch
      %98 = sbr.rel (0) target = $region57
    $region56: #{tvqa_forward.1} parent=1 // pred_region
      _
    $region57: #{tvqa_forward.1} parent=1 // pred_fallthru
      _
    // Predicated region
    $region58: #{tvqa_forward.1} parent=1 // pred_check
      _
    $region59: #{tvqa_forward.1} parent=1 // pred_check_branch
      %100 = sbr.rel (0) target = $region61
    $region60: #{tvqa_forward.1} parent=1 // pred_region
      _
    $region61: #{tvqa_forward.1} parent=1 // pred_fallthru
      _
    // Predicated region
    $region62: #{tvqa_forward.1} parent=1 // pred_check
      _
    $region63: #{tvqa_forward.1} parent=1 // pred_check_branch
      %102 = sbr.rel (0) target = $region65
    $region64: #{tvqa_forward.1} parent=1 // pred_region
      _
    $region65: #{tvqa_forward.1} parent=1 // pred_fallthru
      _
    // Predicated region
    $region66: #{tvqa_forward.1} parent=1 // pred_check
      _
    $region67: #{tvqa_forward.1} parent=1 // pred_check_branch
      %104 = sbr.rel (0) target = $region69
    $region68: #{tvqa_forward.1} parent=1 // pred_region
      _
    $region69: #{tvqa_forward.1} parent=1 // pred_fallthru
      _
    // Predicated region
    $region70: #{tvqa_forward.1} parent=1 // pred_check
      _
    $region71: #{tvqa_forward.1} parent=1 // pred_check_branch
      %106 = sbr.rel (0) target = $region73
    $region72: #{tvqa_forward.1} parent=1 // pred_region
      _
    $region73: #{tvqa_forward.1} parent=1 // pred_fallthru
      _
    // Predicated region
    $region74: #{tvqa_forward.1} parent=1 // pred_check
      _
    $region75: #{tvqa_forward.1} parent=1 // pred_check_branch
      %108 = sbr.rel (0) target = $region77
    $region76: #{tvqa_forward.1} parent=1 // pred_region
      _
    $region77: #{tvqa_forward.1} parent=1 // pred_fallthru
      _
    // Predicated region
    $region78: #{tvqa_forward.1} parent=1 // pred_check
      _
    $region79: #{tvqa_forward.1} parent=1 // pred_check_branch
      %110 = sbr.rel (0) target = $region81
    $region80: #{tvqa_forward.1} parent=1 // pred_region
      _
    $region81: #{tvqa_forward.1} parent=1 // pred_fallthru
      _
    // Predicated region
    $region82: #{tvqa_forward.1} parent=1 // pred_check
      _
    $region83: #{tvqa_forward.1} parent=1 // pred_check_branch
      %112 = sbr.rel (0) target = $region85
    $region84: #{tvqa_forward.1} parent=1 // pred_region
      _
    $region85: #{tvqa_forward.1} parent=1 // pred_fallthru
      _
    // Predicated region
    $region86: #{tvqa_forward.1} parent=1 // pred_check
      _
    $region87: #{tvqa_forward.1} parent=1 // pred_check_branch
      %114 = sbr.rel (0) target = $region89
    $region88: #{tvqa_forward.1} parent=1 // pred_region
      %115 = dma.done [#allocation4], 7680
    $region89: #{tvqa_forward.1} parent=1 // pred_fallthru
      _
    // Predicated region
    $region90: #{tvqa_forward.1} parent=1 // pred_check
      _
    $region91: #{tvqa_forward.1} parent=1 // pred_check_branch
      %117 = sbr.rel (0) target = $region93
    $region92: #{tvqa_forward.1} parent=1 // pred_region
      %118 = dma.done [#allocation6], 8192
    $region93: #{tvqa_forward.1} parent=1 // pred_fallthru
      _
    // Predicated region
    $region94: #{tvqa_forward.1} parent=1 // pred_check
      _
    $region95: #{tvqa_forward.1} parent=1 // pred_check_branch
      %120 = sbr.rel (0) target = $region97
    $region96: #{tvqa_forward.1} parent=1 // pred_region
      %121 = dma.done [#allocation6], 12288
    $region97: #{tvqa_forward.1} parent=1 // pred_fallthru
      _
    // Predicated region
    $region98: #{tvqa_forward.1} parent=1 // pred_check
      _
    $region99: #{tvqa_forward.1} parent=1 // pred_check_branch
      %123 = sbr.rel (0) target = $region101
    $region100: #{tvqa_forward.1} parent=1 // pred_region
      %124 = dma.done [#allocation9], 24576
    $region101: #{tvqa_forward.1} parent=1 // pred_fallthru
      _
    %v126 = vld [vmem:[%s0] sm:$0xff]
    %v127 = vld [vmem:[%s0 + $0x8] sm:$0xff]
    %v128 = vld [vmem:[%s0 + $0x10] sm:$0xff]
    %v129 = vld [vmem:[%s0 + $0x18] sm:$0xff]
    %v130 = vld [vmem:[%s0 + $0x20] sm:$0xff]
    %v131 = vld [vmem:[%s0 + $0x28] sm:$0xff]
    %v132 = vld [vmem:[%s0 + $0x30] sm:$0xff]
    %v133 = vld [vmem:[%s0 + $0x38] sm:$0xff]
    %v134 = vld [vmem:[%s0 + $0x40] sm:$0xff]
    %v135 = vld [vmem:[%s0 + $0x48] sm:$0xff]
    %v136 = vld [vmem:[%s0 + $0x50] sm:$0xff]
    %v137 = vld [vmem:[%s0 + $0x58] sm:$0xff]
    %v138 = vpack.c.bf16 %v132, %v126
    %v139 = vpack.c.bf16 %v133, %v127
    %v140 = vpack.c.bf16 %v134, %v128
    %v141 = vpack.c.bf16 %v135, %v129
    %v142 = vpack.c.bf16 %v136, %v130
    %v143 = vpack.c.bf16 %v137, %v131
    %v144 = vld [vmem:[%s3] sm:$0xff]
    %v145 = vld [vmem:[%s3 + $0x8] sm:$0xff]
    %v146 = vld [vmem:[%s3 + $0x10] sm:$0xff]
    %v147 = vld [vmem:[%s3 + $0x18] sm:$0xff]
    %v148 = vld [vmem:[%s3 + $0x20] sm:$0xff]
    %v149 = vld [vmem:[%s3 + $0x28] sm:$0xff]
    %v150 = vld [vmem:[%s3 + $0x30] sm:$0xff]
    %v151 = vld [vmem:[%s3 + $0x38] sm:$0xff]
    %v152 = vld [vmem:[%s3 + $0x40] sm:$0xff]
    %v153 = vld [vmem:[%s3 + $0x48] sm:$0xff]
    %v154 = vld [vmem:[%s3 + $0x50] sm:$0xff]
    %v155 = vld [vmem:[%s3 + $0x58] sm:$0xff]
    %v156 = vld [vmem:[%s3 + $0x60] sm:$0xff]
    %v157 = vld [vmem:[%s3 + $0x68] sm:$0xff]
    %v158 = vld [vmem:[%s3 + $0x70] sm:$0xff]
    %v159 = vld [vmem:[%s3 + $0x78] sm:$0xff]
    %v160 = vld [vmem:[%s3 + $0x80] sm:$0xff]
    %v161 = vld [vmem:[%s3 + $0x88] sm:$0xff]
    %v162 = vld [vmem:[%s3 + $0x90] sm:$0xff]
    %v163 = vld [vmem:[%s3 + $0x98] sm:$0xff]
    %v164 = vld [vmem:[%s3 + $0xa0] sm:$0xff]
    %v165 = vld [vmem:[%s3 + $0xa8] sm:$0xff]
    %v166 = vld [vmem:[%s3 + $0xb0] sm:$0xff]
    %v167 = vld [vmem:[%s3 + $0xb8] sm:$0xff]
    %v168 = vld [vmem:[%s3 + $0xc0] sm:$0xff]
    %v169 = vld [vmem:[%s3 + $0xc8] sm:$0xff]
    %v170 = vld [vmem:[%s3 + $0xd0] sm:$0xff]
    %v171 = vld [vmem:[%s3 + $0xd8] sm:$0xff]
    %v172 = vld [vmem:[%s3 + $0xe0] sm:$0xff]
    %v173 = vld [vmem:[%s3 + $0xe8] sm:$0xff]
    %v174 = vld [vmem:[%s3 + $0xf0] sm:$0xff]
    %v175 = vld [vmem:[%s3 + $0xf8] sm:$0xff]
    %v176 = vld [vmem:[%s3 + $0x100] sm:$0xff]
    %v177 = vld [vmem:[%s3 + $0x108] sm:$0xff]
    %v178 = vld [vmem:[%s3 + $0x110] sm:$0xff]
    %v179 = vld [vmem:[%s3 + $0x118] sm:$0xff]
    %v180 = vld [vmem:[%s3 + $0x120] sm:$0xff]
    %v181 = vld [vmem:[%s3 + $0x128] sm:$0xff]
    %v182 = vld [vmem:[%s3 + $0x130] sm:$0xff]
    %v183 = vld [vmem:[%s3 + $0x138] sm:$0xff]
    %v184 = vld [vmem:[%s3 + $0x140] sm:$0xff]
    %v185 = vld [vmem:[%s3 + $0x148] sm:$0xff]
    %v186 = vld [vmem:[%s3 + $0x150] sm:$0xff]
    %v187 = vld [vmem:[%s3 + $0x158] sm:$0xff]
    %v188 = vld [vmem:[%s3 + $0x160] sm:$0xff]
    %v189 = vld [vmem:[%s3 + $0x168] sm:$0xff]
    %v190 = vld [vmem:[%s3 + $0x170] sm:$0xff]
    %v191 = vld [vmem:[%s3 + $0x178] sm:$0xff]
    %v192 = vld [vmem:[%s3 + $0x180] sm:$0xff]
    %v193 = vld [vmem:[%s3 + $0x188] sm:$0xff]
    %v194 = vld [vmem:[%s3 + $0x190] sm:$0xff]
    %v195 = vld [vmem:[%s3 + $0x198] sm:$0xff]
    %v196 = vld [vmem:[%s3 + $0x1a0] sm:$0xff]
    %v197 = vld [vmem:[%s3 + $0x1a8] sm:$0xff]
    %v198 = vld [vmem:[%s3 + $0x1b0] sm:$0xff]
    %v199 = vld [vmem:[%s3 + $0x1b8] sm:$0xff]
    %v200 = vld [vmem:[%s3 + $0x1c0] sm:$0xff]
    %v201 = vld [vmem:[%s3 + $0x1c8] sm:$0xff]
    %v202 = vld [vmem:[%s3 + $0x1d0] sm:$0xff]
    %v203 = vld [vmem:[%s3 + $0x1d8] sm:$0xff]
    %v204 = vld [vmem:[%s3 + $0x1e0] sm:$0xff]
    %v205 = vld [vmem:[%s3 + $0x1e8] sm:$0xff]
    %v206 = vld [vmem:[%s3 + $0x1f0] sm:$0xff]
    %v207 = vld [vmem:[%s3 + $0x1f8] sm:$0xff]
    %v208 = vld [vmem:[%s3 + $0x200] sm:$0xff]
    %v209 = vld [vmem:[%s3 + $0x208] sm:$0xff]
    %v210 = vld [vmem:[%s3 + $0x210] sm:$0xff]
    %v211 = vld [vmem:[%s3 + $0x218] sm:$0xff]
    %v212 = vld [vmem:[%s3 + $0x220] sm:$0xff]
    %v213 = vld [vmem:[%s3 + $0x228] sm:$0xff]
    %v214 = vld [vmem:[%s3 + $0x230] sm:$0xff]
    %v215 = vld [vmem:[%s3 + $0x238] sm:$0xff]
    %v216 = vld [vmem:[%s3 + $0x240] sm:$0xff]
    %v217 = vld [vmem:[%s3 + $0x248] sm:$0xff]
    %v218 = vld [vmem:[%s3 + $0x250] sm:$0xff]
    %v219 = vld [vmem:[%s3 + $0x258] sm:$0xff]
    %v220 = vld [vmem:[%s3 + $0x260] sm:$0xff]
    %v221 = vld [vmem:[%s3 + $0x268] sm:$0xff]
    %v222 = vld [vmem:[%s3 + $0x270] sm:$0xff]
    %v223 = vld [vmem:[%s3 + $0x278] sm:$0xff]
    %v224 = vld [vmem:[%s3 + $0x280] sm:$0xff]
    %v225 = vld [vmem:[%s3 + $0x288] sm:$0xff]
    %v226 = vld [vmem:[%s3 + $0x290] sm:$0xff]
    %v227 = vld [vmem:[%s3 + $0x298] sm:$0xff]
    %v228 = vld [vmem:[%s3 + $0x2a0] sm:$0xff]
    %v229 = vld [vmem:[%s3 + $0x2a8] sm:$0xff]
    %v230 = vld [vmem:[%s3 + $0x2b0] sm:$0xff]
    %v231 = vld [vmem:[%s3 + $0x2b8] sm:$0xff]
    %v232 = vld [vmem:[%s3 + $0x2c0] sm:$0xff]
    %v233 = vld [vmem:[%s3 + $0x2c8] sm:$0xff]
    %v234 = vld [vmem:[%s3 + $0x2d0] sm:$0xff]
    %v235 = vld [vmem:[%s3 + $0x2d8] sm:$0xff]
    %v236 = vld [vmem:[%s3 + $0x2e0] sm:$0xff]
    %v237 = vld [vmem:[%s3 + $0x2e8] sm:$0xff]
    %v238 = vld [vmem:[%s3 + $0x2f0] sm:$0xff]
    %v239 = vld [vmem:[%s3 + $0x2f8] sm:$0xff]
    %v240 = vld [vmem:[%s4] sm:$0x3]
    %v242 = vlaneseq
    %v243 = vshrl.u32 %v242, 7
    %v244 = vsub.s32 0, %v243
    %v245 = vrot.slane %v240, %v244
    %v246 = vlaneseq
    %v247 = vshrl.u32 %v246, 7
    %v248 = vsub.s32 1, %v247
    %v249 = vrot.slane %v240, %v248
    %v348 = vunpack.c.l.b16 %v144
    %v349 = vunpack.c.h.b16 %v144
    %v350 = vunpack.c.l.b16 %v145
    %v351 = vunpack.c.h.b16 %v145
    %v352 = vunpack.c.l.b16 %v146
    %v353 = vunpack.c.h.b16 %v146
    %v354 = vunpack.c.l.b16 %v147
    %v355 = vunpack.c.h.b16 %v147
    %v356 = vunpack.c.l.b16 %v148
    %v357 = vunpack.c.h.b16 %v148
    %v358 = vunpack.c.l.b16 %v149
    %v359 = vunpack.c.h.b16 %v149
    %v360 = vunpack.c.l.b16 %v150
    %v361 = vunpack.c.h.b16 %v150
    %v362 = vunpack.c.l.b16 %v151
    %v363 = vunpack.c.h.b16 %v151
    %v364 = vunpack.c.l.b16 %v152
    %v365 = vunpack.c.h.b16 %v152
    %v366 = vunpack.c.l.b16 %v153
    %v367 = vunpack.c.h.b16 %v153
    %v368 = vunpack.c.l.b16 %v154
    %v369 = vunpack.c.h.b16 %v154
    %v370 = vunpack.c.l.b16 %v155
    %v371 = vunpack.c.h.b16 %v155
    %v372 = vunpack.c.l.b16 %v156
    %v373 = vunpack.c.h.b16 %v156
    %v374 = vunpack.c.l.b16 %v157
    %v375 = vunpack.c.h.b16 %v157
    %v376 = vunpack.c.l.b16 %v158
    %v377 = vunpack.c.h.b16 %v158
    %v378 = vunpack.c.l.b16 %v159
    %v379 = vunpack.c.h.b16 %v159
    %v380 = vunpack.c.l.b16 %v160
    %v381 = vunpack.c.h.b16 %v160
    %v382 = vunpack.c.l.b16 %v161
    %v383 = vunpack.c.h.b16 %v161
    %v384 = vunpack.c.l.b16 %v162
    %v385 = vunpack.c.h.b16 %v162
    %v386 = vunpack.c.l.b16 %v163
    %v387 = vunpack.c.h.b16 %v163
    %v388 = vunpack.c.l.b16 %v164
    %v389 = vunpack.c.h.b16 %v164
    %v390 = vunpack.c.l.b16 %v165
    %v391 = vunpack.c.h.b16 %v165
    %v392 = vunpack.c.l.b16 %v166
    %v393 = vunpack.c.h.b16 %v166
    %v394 = vunpack.c.l.b16 %v167
    %v395 = vunpack.c.h.b16 %v167
    %v396 = vunpack.c.l.b16 %v168
    %v397 = vunpack.c.h.b16 %v168
    %v398 = vunpack.c.l.b16 %v169
    %v399 = vunpack.c.h.b16 %v169
    %v400 = vunpack.c.l.b16 %v170
    %v401 = vunpack.c.h.b16 %v170
    %v402 = vunpack.c.l.b16 %v171
    %v403 = vunpack.c.h.b16 %v171
    %v404 = vunpack.c.l.b16 %v172
    %v405 = vunpack.c.h.b16 %v172
    %v406 = vunpack.c.l.b16 %v173
    %v407 = vunpack.c.h.b16 %v173
    %v408 = vunpack.c.l.b16 %v174
    %v409 = vunpack.c.h.b16 %v174
    %v410 = vunpack.c.l.b16 %v175
    %v411 = vunpack.c.h.b16 %v175
    %v412 = vunpack.c.l.b16 %v176
    %v413 = vunpack.c.h.b16 %v176
    %v414 = vunpack.c.l.b16 %v177
    %v415 = vunpack.c.h.b16 %v177
    %v416 = vunpack.c.l.b16 %v178
    %v417 = vunpack.c.h.b16 %v178
    %v418 = vunpack.c.l.b16 %v179
    %v419 = vunpack.c.h.b16 %v179
    %v420 = vunpack.c.l.b16 %v180
    %v421 = vunpack.c.h.b16 %v180
    %v422 = vunpack.c.l.b16 %v181
    %v423 = vunpack.c.h.b16 %v181
    %v424 = vunpack.c.l.b16 %v182
    %v425 = vunpack.c.h.b16 %v182
    %v426 = vunpack.c.l.b16 %v183
    %v427 = vunpack.c.h.b16 %v183
    %v428 = vunpack.c.l.b16 %v184
    %v429 = vunpack.c.h.b16 %v184
    %v430 = vunpack.c.l.b16 %v185
    %v431 = vunpack.c.h.b16 %v185
    %v432 = vunpack.c.l.b16 %v186
    %v433 = vunpack.c.h.b16 %v186
    %v434 = vunpack.c.l.b16 %v187
    %v435 = vunpack.c.h.b16 %v187
    %v436 = vunpack.c.l.b16 %v188
    %v437 = vunpack.c.h.b16 %v188
    %v438 = vunpack.c.l.b16 %v189
    %v439 = vunpack.c.h.b16 %v189
    %v440 = vunpack.c.l.b16 %v190
    %v441 = vunpack.c.h.b16 %v190
    %v442 = vunpack.c.l.b16 %v191
    %v443 = vunpack.c.h.b16 %v191
    %v444 = vunpack.c.l.b16 %v192
    %v445 = vunpack.c.h.b16 %v192
    %v446 = vunpack.c.l.b16 %v193
    %v447 = vunpack.c.h.b16 %v193
    %v448 = vunpack.c.l.b16 %v194
    %v449 = vunpack.c.h.b16 %v194
    %v450 = vunpack.c.l.b16 %v195
    %v451 = vunpack.c.h.b16 %v195
    %v452 = vunpack.c.l.b16 %v196
    %v453 = vunpack.c.h.b16 %v196
    %v454 = vunpack.c.l.b16 %v197
    %v455 = vunpack.c.h.b16 %v197
    %v456 = vunpack.c.l.b16 %v198
    %v457 = vunpack.c.h.b16 %v198
    %v458 = vunpack.c.l.b16 %v199
    %v459 = vunpack.c.h.b16 %v199
    %v460 = vunpack.c.l.b16 %v200
    %v461 = vunpack.c.h.b16 %v200
    %v462 = vunpack.c.l.b16 %v201
    %v463 = vunpack.c.h.b16 %v201
    %v464 = vunpack.c.l.b16 %v202
    %v465 = vunpack.c.h.b16 %v202
    %v466 = vunpack.c.l.b16 %v203
    %v467 = vunpack.c.h.b16 %v203
    %v468 = vunpack.c.l.b16 %v204
    %v469 = vunpack.c.h.b16 %v204
    %v470 = vunpack.c.l.b16 %v205
    %v471 = vunpack.c.h.b16 %v205
    %v472 = vunpack.c.l.b16 %v206
    %v473 = vunpack.c.h.b16 %v206
    %v474 = vunpack.c.l.b16 %v207
    %v475 = vunpack.c.h.b16 %v207
    %v476 = vunpack.c.l.b16 %v208
    %v477 = vunpack.c.h.b16 %v208
    %v478 = vunpack.c.l.b16 %v209
    %v479 = vunpack.c.h.b16 %v209
    %v480 = vunpack.c.l.b16 %v210
    %v481 = vunpack.c.h.b16 %v210
    %v482 = vunpack.c.l.b16 %v211
    %v483 = vunpack.c.h.b16 %v211
    %v484 = vunpack.c.l.b16 %v212
    %v485 = vunpack.c.h.b16 %v212
    %v486 = vunpack.c.l.b16 %v213
    %v487 = vunpack.c.h.b16 %v213
    %v488 = vunpack.c.l.b16 %v214
    %v489 = vunpack.c.h.b16 %v214
    %v490 = vunpack.c.l.b16 %v215
    %v491 = vunpack.c.h.b16 %v215
    %v492 = vunpack.c.l.b16 %v216
    %v493 = vunpack.c.h.b16 %v216
    %v494 = vunpack.c.l.b16 %v217
    %v495 = vunpack.c.h.b16 %v217
    %v496 = vunpack.c.l.b16 %v218
    %v497 = vunpack.c.h.b16 %v218
    %v498 = vunpack.c.l.b16 %v219
    %v499 = vunpack.c.h.b16 %v219
    %v500 = vunpack.c.l.b16 %v220
    %v501 = vunpack.c.h.b16 %v220
    %v502 = vunpack.c.l.b16 %v221
    %v503 = vunpack.c.h.b16 %v221
    %v504 = vunpack.c.l.b16 %v222
    %v505 = vunpack.c.h.b16 %v222
    %v506 = vunpack.c.l.b16 %v223
    %v507 = vunpack.c.h.b16 %v223
    %v508 = vunpack.c.l.b16 %v224
    %v509 = vunpack.c.h.b16 %v224
    %v510 = vunpack.c.l.b16 %v225
    %v511 = vunpack.c.h.b16 %v225
    %v512 = vunpack.c.l.b16 %v226
    %v513 = vunpack.c.h.b16 %v226
    %v514 = vunpack.c.l.b16 %v227
    %v515 = vunpack.c.h.b16 %v227
    %v516 = vunpack.c.l.b16 %v228
    %v517 = vunpack.c.h.b16 %v228
    %v518 = vunpack.c.l.b16 %v229
    %v519 = vunpack.c.h.b16 %v229
    %v520 = vunpack.c.l.b16 %v230
    %v521 = vunpack.c.h.b16 %v230
    %v522 = vunpack.c.l.b16 %v231
    %v523 = vunpack.c.h.b16 %v231
    %v524 = vunpack.c.l.b16 %v232
    %v525 = vunpack.c.h.b16 %v232
    %v526 = vunpack.c.l.b16 %v233
    %v527 = vunpack.c.h.b16 %v233
    %v528 = vunpack.c.l.b16 %v234
    %v529 = vunpack.c.h.b16 %v234
    %v530 = vunpack.c.l.b16 %v235
    %v531 = vunpack.c.h.b16 %v235
    %v532 = vunpack.c.l.b16 %v236
    %v533 = vunpack.c.h.b16 %v236
    %v534 = vunpack.c.l.b16 %v237
    %v535 = vunpack.c.h.b16 %v237
    %v536 = vunpack.c.l.b16 %v238
    %v537 = vunpack.c.h.b16 %v238
    %v538 = vunpack.c.l.b16 %v239
    %v539 = vunpack.c.h.b16 %v239
    %v540 = vpack.c.b16 %v350, %v348
    %v541 = vpack.c.b16 %v351, %v349
    %v542 = vpack.c.b16 %v354, %v352
    %v543 = vpack.c.b16 %v355, %v353
    %v544 = vpack.c.b16 %v358, %v356
    %v545 = vpack.c.b16 %v359, %v357
    %v546 = vpack.c.b16 %v362, %v360
    %v547 = vpack.c.b16 %v363, %v361
    %v548 = vpack.c.b16 %v366, %v364
    %v549 = vpack.c.b16 %v367, %v365
    %v550 = vpack.c.b16 %v370, %v368
    %v551 = vpack.c.b16 %v371, %v369
    %v552 = vpack.c.b16 %v374, %v372
    %v553 = vpack.c.b16 %v375, %v373
    %v554 = vpack.c.b16 %v378, %v376
    %v555 = vpack.c.b16 %v379, %v377
    %v556 = vpack.c.b16 %v382, %v380
    %v557 = vpack.c.b16 %v383, %v381
    %v558 = vpack.c.b16 %v386, %v384
    %v559 = vpack.c.b16 %v387, %v385
    %v560 = vpack.c.b16 %v390, %v388
    %v561 = vpack.c.b16 %v391, %v389
    %v562 = vpack.c.b16 %v394, %v392
    %v563 = vpack.c.b16 %v395, %v393
    %v564 = vpack.c.b16 %v398, %v396
    %v565 = vpack.c.b16 %v399, %v397
    %v566 = vpack.c.b16 %v402, %v400
    %v567 = vpack.c.b16 %v403, %v401
    %v568 = vpack.c.b16 %v406, %v404
    %v569 = vpack.c.b16 %v407, %v405
    %v570 = vpack.c.b16 %v410, %v408
    %v571 = vpack.c.b16 %v411, %v409
    %v572 = vpack.c.b16 %v414, %v412
    %v573 = vpack.c.b16 %v415, %v413
    %v574 = vpack.c.b16 %v418, %v416
    %v575 = vpack.c.b16 %v419, %v417
    %v576 = vpack.c.b16 %v422, %v420
    %v577 = vpack.c.b16 %v423, %v421
    %v578 = vpack.c.b16 %v426, %v424
    %v579 = vpack.c.b16 %v427, %v425
    %v580 = vpack.c.b16 %v430, %v428
    %v581 = vpack.c.b16 %v431, %v429
    %v582 = vpack.c.b16 %v434, %v432
    %v583 = vpack.c.b16 %v435, %v433
    %v584 = vpack.c.b16 %v438, %v436
    %v585 = vpack.c.b16 %v439, %v437
    %v586 = vpack.c.b16 %v442, %v440
    %v587 = vpack.c.b16 %v443, %v441
    %v588 = vpack.c.b16 %v446, %v444
    %v589 = vpack.c.b16 %v447, %v445
    %v590 = vpack.c.b16 %v450, %v448
    %v591 = vpack.c.b16 %v451, %v449
    %v592 = vpack.c.b16 %v454, %v452
    %v593 = vpack.c.b16 %v455, %v453
    %v594 = vpack.c.b16 %v458, %v456
    %v595 = vpack.c.b16 %v459, %v457
    %v596 = vpack.c.b16 %v462, %v460
    %v597 = vpack.c.b16 %v463, %v461
    %v598 = vpack.c.b16 %v466, %v464
    %v599 = vpack.c.b16 %v467, %v465
    %v600 = vpack.c.b16 %v470, %v468
    %v601 = vpack.c.b16 %v471, %v469
    %v602 = vpack.c.b16 %v474, %v472
    %v603 = vpack.c.b16 %v475, %v473
    %v604 = vpack.c.b16 %v478, %v476
    %v605 = vpack.c.b16 %v479, %v477
    %v606 = vpack.c.b16 %v482, %v480
    %v607 = vpack.c.b16 %v483, %v481
    %v608 = vpack.c.b16 %v486, %v484
    %v609 = vpack.c.b16 %v487, %v485
    %v610 = vpack.c.b16 %v490, %v488
    %v611 = vpack.c.b16 %v491, %v489
    %v612 = vpack.c.b16 %v494, %v492
    %v613 = vpack.c.b16 %v495, %v493
    %v614 = vpack.c.b16 %v498, %v496
    %v615 = vpack.c.b16 %v499, %v497
    %v616 = vpack.c.b16 %v502, %v500
    %v617 = vpack.c.b16 %v503, %v501
    %v618 = vpack.c.b16 %v506, %v504
    %v619 = vpack.c.b16 %v507, %v505
    %v620 = vpack.c.b16 %v510, %v508
    %v621 = vpack.c.b16 %v511, %v509
    %v622 = vpack.c.b16 %v514, %v512
    %v623 = vpack.c.b16 %v515, %v513
    %v624 = vpack.c.b16 %v518, %v516
    %v625 = vpack.c.b16 %v519, %v517
    %v626 = vpack.c.b16 %v522, %v520
    %v627 = vpack.c.b16 %v523, %v521
    %v628 = vpack.c.b16 %v526, %v524
    %v629 = vpack.c.b16 %v527, %v525
    %v630 = vpack.c.b16 %v530, %v528
    %v631 = vpack.c.b16 %v531, %v529
    %v632 = vpack.c.b16 %v534, %v532
    %v633 = vpack.c.b16 %v535, %v533
    %v634 = vpack.c.b16 %v538, %v536
    %v635 = vpack.c.b16 %v539, %v537
    %732 = vmatprep.subr.bf16.mxu0 %v541
    %733 = vmatpush1.bf16.msra.mxu0 %v540
    %734 = vmatprep.subr.bf16.mxu0 %v543
    %735 = vmatpush1.bf16.msra.mxu0 %v542
    %736 = vmatprep.subr.bf16.mxu0 %v545
    %737 = vmatpush1.bf16.msra.mxu0 %v544
    %738 = vmatprep.subr.bf16.mxu0 %v547
    %739 = vmatpush1.bf16.msra.mxu0 %v546
    %740 = vmatprep.subr.bf16.mxu0 %v549
    %741 = vmatpush1.bf16.msra.mxu0 %v548
    %742 = vmatprep.subr.bf16.mxu0 %v551
    %743 = vmatpush1.bf16.msra.mxu0 %v550
    %744 = vmatprep.subr.bf16.mxu0 %v553
    %745 = vmatpush1.bf16.msra.mxu0 %v552
    %746 = vmatprep.subr.bf16.mxu0 %v555
    %747 = vmatpush1.bf16.msra.mxu0 %v554
    %748 = vmatprep.subr.bf16.mxu0 %v557
    %749 = vmatpush1.bf16.msra.mxu0 %v556
    %750 = vmatprep.subr.bf16.mxu0 %v559
    %751 = vmatpush1.bf16.msra.mxu0 %v558
    %752 = vmatprep.subr.bf16.mxu0 %v561
    %753 = vmatpush1.bf16.msra.mxu0 %v560
    %754 = vmatprep.subr.bf16.mxu0 %v563
    %755 = vmatpush1.bf16.msra.mxu0 %v562
    %756 = vmatprep.subr.bf16.mxu0 %v565
    %757 = vmatpush1.bf16.msra.mxu0 %v564
    %758 = vmatprep.subr.bf16.mxu0 %v567
    %759 = vmatpush1.bf16.msra.mxu0 %v566
    %760 = vmatprep.subr.bf16.mxu0 %v569
    %761 = vmatpush1.bf16.msra.mxu0 %v568
    %762 = vmatprep.subr.bf16.mxu0 %v571
    %763 = vmatpush1.bf16.msra.mxu0 %v570
    %764 = vmatprep.mubr.bf16.mxu0 %v139
    %765 = vmatmul.mubr.bf16.gmra.mrb[0].mxu0 %v138
    %v766 = vpop.f32.mrb[0].mxu0
    %v767 = vadd.f32 %v245, %v766
    %v768 = vpop.f32.mrb[0].mxu0
    %v769 = vadd.f32 %v249, %v768
    %v770 = vpop.f32.mrb[0].mxu0
    %v771 = vadd.f32 %v245, %v770
    %v772 = vpop.f32.mrb[0].mxu0
    %v773 = vadd.f32 %v249, %v772
    %774 = vdwg.mxu0
    %775 = vmatprep.subr.bf16.mxu0 %v573
    %776 = vmatpush1.bf16.msra.mxu0 %v572
    %777 = vmatprep.subr.bf16.mxu0 %v575
    %778 = vmatpush1.bf16.msra.mxu0 %v574
    %779 = vmatprep.subr.bf16.mxu0 %v577
    %780 = vmatpush1.bf16.msra.mxu0 %v576
    %781 = vmatprep.subr.bf16.mxu0 %v579
    %782 = vmatpush1.bf16.msra.mxu0 %v578
    %783 = vmatprep.subr.bf16.mxu0 %v581
    %784 = vmatpush1.bf16.msra.mxu0 %v580
    %785 = vmatprep.subr.bf16.mxu0 %v583
    %786 = vmatpush1.bf16.msra.mxu0 %v582
    %787 = vmatprep.subr.bf16.mxu0 %v585
    %788 = vmatpush1.bf16.msra.mxu0 %v584
    %789 = vmatprep.subr.bf16.mxu0 %v587
    %790 = vmatpush1.bf16.msra.mxu0 %v586
    %791 = vmatprep.subr.bf16.mxu0 %v589
    %792 = vmatpush1.bf16.msra.mxu0 %v588
    %793 = vmatprep.subr.bf16.mxu0 %v591
    %794 = vmatpush1.bf16.msra.mxu0 %v590
    %795 = vmatprep.subr.bf16.mxu0 %v593
    %796 = vmatpush1.bf16.msra.mxu0 %v592
    %797 = vmatprep.subr.bf16.mxu0 %v595
    %798 = vmatpush1.bf16.msra.mxu0 %v594
    %799 = vmatprep.subr.bf16.mxu0 %v597
    %800 = vmatpush1.bf16.msra.mxu0 %v596
    %801 = vmatprep.subr.bf16.mxu0 %v599
    %802 = vmatpush1.bf16.msra.mxu0 %v598
    %803 = vmatprep.subr.bf16.mxu0 %v601
    %804 = vmatpush1.bf16.msra.mxu0 %v600
    %805 = vmatprep.subr.bf16.mxu0 %v603
    %806 = vmatpush1.bf16.msra.mxu0 %v602
    %807 = vmatprep.mubr.bf16.mxu0 %v141
    %808 = vmatmul.mubr.bf16.gmra.mrb[0].mxu0 %v140
    %v809 = vpop.f32.mrb[0].mxu0
    %v810 = vadd.f32 %v767, %v809
    %v811 = vpop.f32.mrb[0].mxu0
    %v812 = vadd.f32 %v769, %v811
    %v813 = vpop.f32.mrb[0].mxu0
    %v814 = vadd.f32 %v771, %v813
    %v815 = vpop.f32.mrb[0].mxu0
    %v816 = vadd.f32 %v773, %v815
    %817 = vdwg.mxu0
    %818 = vmatprep.subr.bf16.mxu0 %v605
    %819 = vmatpush1.bf16.msra.mxu0 %v604
    %820 = vmatprep.subr.bf16.mxu0 %v607
    %821 = vmatpush1.bf16.msra.mxu0 %v606
    %822 = vmatprep.subr.bf16.mxu0 %v609
    %823 = vmatpush1.bf16.msra.mxu0 %v608
    %824 = vmatprep.subr.bf16.mxu0 %v611
    %825 = vmatpush1.bf16.msra.mxu0 %v610
    %826 = vmatprep.subr.bf16.mxu0 %v613
    %827 = vmatpush1.bf16.msra.mxu0 %v612
    %828 = vmatprep.subr.bf16.mxu0 %v615
    %829 = vmatpush1.bf16.msra.mxu0 %v614
    %830 = vmatprep.subr.bf16.mxu0 %v617
    %831 = vmatpush1.bf16.msra.mxu0 %v616
    %832 = vmatprep.subr.bf16.mxu0 %v619
    %833 = vmatpush1.bf16.msra.mxu0 %v618
    %834 = vmatprep.subr.bf16.mxu0 %v621
    %835 = vmatpush1.bf16.msra.mxu0 %v620
    %836 = vmatprep.subr.bf16.mxu0 %v623
    %837 = vmatpush1.bf16.msra.mxu0 %v622
    %838 = vmatprep.subr.bf16.mxu0 %v625
    %839 = vmatpush1.bf16.msra.mxu0 %v624
    %840 = vmatprep.subr.bf16.mxu0 %v627
    %841 = vmatpush1.bf16.msra.mxu0 %v626
    %842 = vmatprep.subr.bf16.mxu0 %v629
    %843 = vmatpush1.bf16.msra.mxu0 %v628
    %844 = vmatprep.subr.bf16.mxu0 %v631
    %845 = vmatpush1.bf16.msra.mxu0 %v630
    %846 = vmatprep.subr.bf16.mxu0 %v633
    %847 = vmatpush1.bf16.msra.mxu0 %v632
    %848 = vmatprep.subr.bf16.mxu0 %v635
    %849 = vmatpush1.bf16.msra.mxu0 %v634
    %850 = vmatprep.mubr.bf16.mxu0 %v143
    %851 = vmatmul.mubr.bf16.gmra.mrb[0].mxu0 %v142
    %v852 = vpop.f32.mrb[0].mxu0
    %v853 = vadd.f32 %v810, %v852
    %v854 = vpop.f32.mrb[0].mxu0
    %v855 = vadd.f32 %v812, %v854
    %v856 = vpop.f32.mrb[0].mxu0
    %v857 = vadd.f32 %v814, %v856
    %v858 = vpop.f32.mrb[0].mxu0
    %v859 = vadd.f32 %v816, %v858
    %860 = vdwg.mxu0
    %v861 = vmul.f32 %v853, 0.70710677
    %v862 = vmul.f32 %v855, 0.70710677
    %v863 = vmul.f32 %v857, 0.70710677
    %v864 = vmul.f32 %v859, 0.70710677
    %v865 = vand.u32 2147483647, %v861
    %v866 = vand.u32 2147483647, %v862
    %v867 = vand.u32 2147483647, %v863
    %v868 = vand.u32 2147483647, %v864
    %v869 = vmul.f32 %v865, 0.3275911
    %v870 = vmul.f32 %v866, 0.3275911
    %v871 = vmul.f32 %v867, 0.3275911
    %v872 = vmul.f32 %v868, 0.3275911
    %v873 = vadd.f32 %v869, 1.0
    %v874 = vadd.f32 %v870, 1.0
    %v875 = vadd.f32 %v871, 1.0
    %v876 = vadd.f32 %v872, 1.0
    %v877 = vrcp.pop %v873
    %v878 = vmul.f32 1.0, %v877
    %v879 = vrcp.pop %v874
    %v880 = vmul.f32 1.0, %v879
    %v881 = vrcp.pop %v875
    %v882 = vmul.f32 1.0, %v881
    %v883 = vrcp.pop %v876
    %v884 = vmul.f32 1.0, %v883
    %v885 = vmul.f32 %v878, 1.0614054
    %v886 = vmul.f32 %v880, 1.0614054
    %v887 = vmul.f32 %v882, 1.0614054
    %v888 = vmul.f32 %v884, 1.0614054
    %v889 = vadd.f32 %v885, -1.4531521
    %v890 = vadd.f32 %v886, -1.4531521
    %v891 = vadd.f32 %v887, -1.4531521
    %v892 = vadd.f32 %v888, -1.4531521
    %v893 = vmul.f32 %v878, %v889
    %v894 = vmul.f32 %v880, %v890
    %v895 = vmul.f32 %v882, %v891
    %v896 = vmul.f32 %v884, %v892
    %v897 = vadd.f32 %v893, 1.4214138
    %v898 = vadd.f32 %v894, 1.4214138
    %v899 = vadd.f32 %v895, 1.4214138
    %v900 = vadd.f32 %v896, 1.4214138
    %v901 = vmul.f32 %v878, %v897
    %v902 = vmul.f32 %v880, %v898
    %v903 = vmul.f32 %v882, %v899
    %v904 = vmul.f32 %v884, %v900
    %v905 = vadd.f32 %v901, -0.28449672
    %v906 = vadd.f32 %v902, -0.28449672
    %v907 = vadd.f32 %v903, -0.28449672
    %v908 = vadd.f32 %v904, -0.28449672
    %v909 = vmul.f32 %v878, %v905
    %v910 = vmul.f32 %v880, %v906
    %v911 = vmul.f32 %v882, %v907
    %v912 = vmul.f32 %v884, %v908
    %v913 = vadd.f32 %v909, 0.2548296
    %v914 = vadd.f32 %v910, 0.2548296
    %v915 = vadd.f32 %v911, 0.2548296
    %v916 = vadd.f32 %v912, 0.2548296
    %v917 = vmul.f32 %v878, %v913
    %v918 = vmul.f32 %v880, %v914
    %v919 = vmul.f32 %v882, %v915
    %v920 = vmul.f32 %v884, %v916
    %v921 = vsub.f32 0.0, %v865
    %v922 = vsub.f32 0.0, %v866
    %v923 = vsub.f32 0.0, %v867
    %v924 = vsub.f32 0.0, %v868
    %v925 = vmul.f32 %v921, %v865
    %v926 = vmul.f32 %v922, %v866
    %v927 = vmul.f32 %v923, %v867
    %v928 = vmul.f32 %v924, %v868
    %v929 = vmul.f32 %v925, 1.442695
    %v930 = vpow.pop %v929
    %v931 = vmul.f32 %v926, 1.442695
    %v932 = vpow.pop %v931
    %v933 = vmul.f32 %v927, 1.442695
    %v934 = vpow.pop %v933
    %v935 = vmul.f32 %v928, 1.442695
    %v936 = vpow.pop %v935
    %v937 = vmul.f32 %v917, %v930
    %v938 = vmul.f32 %v918, %v932
    %v939 = vmul.f32 %v919, %v934
    %v940 = vmul.f32 %v920, %v936
    %v941 = vsub.f32 1.0, %v937
    %v942 = vsub.f32 1.0, %v938
    %v943 = vsub.f32 1.0, %v939
    %v944 = vsub.f32 1.0, %v940
    %vm945 = vcmp.ge.f32.partialorder %v861, 0.0
    %vm946 = vcmp.ge.f32.partialorder %v862, 0.0
    %vm947 = vcmp.ge.f32.partialorder %v863, 0.0
    %vm948 = vcmp.ge.f32.partialorder %v864, 0.0
    %v949 = vsub.f32 0.0, %v941
    %v950 = vsub.f32 0.0, %v942
    %v951 = vsub.f32 0.0, %v943
    %v952 = vsub.f32 0.0, %v944
    %v953 = vsel %vm945, %v941, %v949
    %v954 = vsel %vm946, %v942, %v950
    %v955 = vsel %vm947, %v943, %v951
    %v956 = vsel %vm948, %v944, %v952
    %v957 = vmul.f32 %v853, 0.5
    %v958 = vmul.f32 %v855, 0.5
    %v959 = vmul.f32 %v857, 0.5
    %v960 = vmul.f32 %v859, 0.5
    %v961 = vadd.f32 %v953, 1.0
    %v962 = vadd.f32 %v954, 1.0
    %v963 = vadd.f32 %v955, 1.0
    %v964 = vadd.f32 %v956, 1.0
    %v965 = vmul.f32 %v957, %v961
    %v966 = vmul.f32 %v958, %v962
    %v967 = vmul.f32 %v959, %v963
    %v968 = vmul.f32 %v960, %v964
    %v969 = vld [vmem:[#allocation3] sm:$0xff]
    %v970 = vld [vmem:[#allocation3 + $0x8] sm:$0xff]
    %v971 = vld [vmem:[#allocation3 + $0x10] sm:$0xff]
    %v972 = vld [vmem:[#allocation3 + $0x18] sm:$0xff]
    %v973 = vld [vmem:[#allocation3 + $0x20] sm:$0xff]
    %v974 = vld [vmem:[#allocation3 + $0x28] sm:$0xff]
    %v975 = vld [vmem:[#allocation3 + $0x30] sm:$0xff]
    %v976 = vld [vmem:[#allocation3 + $0x38] sm:$0xff]
    %v977 = vld [vmem:[#allocation3 + $0x40] sm:$0xff]
    %v978 = vld [vmem:[#allocation3 + $0x48] sm:$0xff]
    %v979 = vld [vmem:[#allocation3 + $0x50] sm:$0xff]
    %v980 = vld [vmem:[#allocation3 + $0x58] sm:$0xff]
    %v981 = vld [vmem:[#allocation3 + $0x60] sm:$0xff]
    %v982 = vld [vmem:[#allocation3 + $0x68] sm:$0xff]
    %v983 = vld [vmem:[#allocation3 + $0x70] sm:$0xff]
    %v984 = vld [vmem:[#allocation3 + $0x78] sm:$0xff]
    %v985 = vld [vmem:[#allocation3 + $0x80] sm:$0xff]
    %v986 = vld [vmem:[#allocation3 + $0x88] sm:$0xff]
    %v987 = vld [vmem:[#allocation3 + $0x90] sm:$0xff]
    %v988 = vld [vmem:[#allocation3 + $0x98] sm:$0xff]
    %v989 = vld [vmem:[#allocation3 + $0xa0] sm:$0xff]
    %v990 = vld [vmem:[#allocation3 + $0xa8] sm:$0xff]
    %v991 = vld [vmem:[#allocation3 + $0xb0] sm:$0xff]
    %v992 = vld [vmem:[#allocation3 + $0xb8] sm:$0xff]
    %v993 = vld [vmem:[#allocation3 + $0xc0] sm:$0xff]
    %v994 = vld [vmem:[#allocation3 + $0xc8] sm:$0xff]
    %v995 = vld [vmem:[#allocation3 + $0xd0] sm:$0xff]
    %v996 = vld [vmem:[#allocation3 + $0xd8] sm:$0xff]
    %v997 = vld [vmem:[#allocation3 + $0xe0] sm:$0xff]
    %v998 = vld [vmem:[#allocation3 + $0xe8] sm:$0xff]
    %v999 = vld [vmem:[#allocation3 + $0xf0] sm:$0xff]
    %v1000 = vld [vmem:[#allocation3 + $0xf8] sm:$0xff]
    %v1001 = vld [vmem:[#allocation3 + $0x100] sm:$0xff]
    %v1002 = vld [vmem:[#allocation3 + $0x108] sm:$0xff]
    %v1003 = vld [vmem:[#allocation3 + $0x110] sm:$0xff]
    %v1004 = vld [vmem:[#allocation3 + $0x118] sm:$0xff]
    %v1005 = vld [vmem:[#allocation3 + $0x120] sm:$0xff]
    %v1006 = vld [vmem:[#allocation3 + $0x128] sm:$0xff]
    %v1007 = vld [vmem:[#allocation3 + $0x130] sm:$0xff]
    %v1008 = vld [vmem:[#allocation3 + $0x138] sm:$0xff]
    %v1009 = vld [vmem:[#allocation3 + $0x140] sm:$0xff]
    %v1010 = vld [vmem:[#allocation3 + $0x148] sm:$0xff]
    %v1011 = vld [vmem:[#allocation3 + $0x150] sm:$0xff]
    %v1012 = vld [vmem:[#allocation3 + $0x158] sm:$0xff]
    %v1013 = vld [vmem:[#allocation3 + $0x160] sm:$0xff]
    %v1014 = vld [vmem:[#allocation3 + $0x168] sm:$0xff]
    %v1015 = vld [vmem:[#allocation3 + $0x170] sm:$0xff]
    %v1016 = vld [vmem:[#allocation3 + $0x178] sm:$0xff]
    %v1017 = vld [vmem:[#allocation3 + $0x180] sm:$0xff]
    %v1018 = vld [vmem:[#allocation3 + $0x188] sm:$0xff]
    %v1019 = vld [vmem:[#allocation3 + $0x190] sm:$0xff]
    %v1020 = vld [vmem:[#allocation3 + $0x198] sm:$0xff]
    %v1021 = vld [vmem:[#allocation3 + $0x1a0] sm:$0xff]
    %v1022 = vld [vmem:[#allocation3 + $0x1a8] sm:$0xff]
    %v1023 = vld [vmem:[#allocation3 + $0x1b0] sm:$0xff]
    %v1024 = vld [vmem:[#allocation3 + $0x1b8] sm:$0xff]
    %v1025 = vld [vmem:[#allocation3 + $0x1c0] sm:$0xff]
    %v1026 = vld [vmem:[#allocation3 + $0x1c8] sm:$0xff]
    %v1027 = vld [vmem:[#allocation3 + $0x1d0] sm:$0xff]
    %v1028 = vld [vmem:[#allocation3 + $0x1d8] sm:$0xff]
    %v1029 = vpack.c.bf16 %v975, %v969
    %v1030 = vpack.c.bf16 %v976, %v970
    %v1031 = vpack.c.bf16 %v977, %v971
    %v1032 = vpack.c.bf16 %v978, %v972
    %v1033 = vpack.c.bf16 %v979, %v973
    %v1034 = vpack.c.bf16 %v980, %v974
    %v1035 = vpack.c.bf16 %v987, %v981
    %v1036 = vpack.c.bf16 %v988, %v982
    %v1037 = vpack.c.bf16 %v989, %v983
    %v1038 = vpack.c.bf16 %v990, %v984
    %v1039 = vpack.c.bf16 %v991, %v985
    %v1040 = vpack.c.bf16 %v992, %v986
    %v1041 = vpack.c.bf16 %v999, %v993
    %v1042 = vpack.c.bf16 %v1000, %v994
    %v1043 = vpack.c.bf16 %v1001, %v995
    %v1044 = vpack.c.bf16 %v1002, %v996
    %v1045 = vpack.c.bf16 %v1003, %v997
    %v1046 = vpack.c.bf16 %v1004, %v998
    %v1047 = vpack.c.bf16 %v1011, %v1005
    %v1048 = vpack.c.bf16 %v1012, %v1006
    %v1049 = vpack.c.bf16 %v1013, %v1007
    %v1050 = vpack.c.bf16 %v1014, %v1008
    %v1051 = vpack.c.bf16 %v1015, %v1009
    %v1052 = vpack.c.bf16 %v1016, %v1010
    %v1053 = vpack.c.bf16 %v1023, %v1017
    %v1054 = vpack.c.bf16 %v1024, %v1018
    %v1055 = vpack.c.bf16 %v1025, %v1019
    %v1056 = vpack.c.bf16 %v1026, %v1020
    %v1057 = vpack.c.bf16 %v1027, %v1021
    %v1058 = vpack.c.bf16 %v1028, %v1022
    %v1059 = vld [vmem:[#allocation7] sm:$0xff]
    %v1060 = vld [vmem:[#allocation7 + $0x8] sm:$0xff]
    %v1061 = vld [vmem:[#allocation7 + $0x10] sm:$0xff]
    %v1062 = vld [vmem:[#allocation7 + $0x18] sm:$0xff]
    %v1063 = vld [vmem:[#allocation7 + $0x20] sm:$0xff]
    %v1064 = vld [vmem:[#allocation7 + $0x28] sm:$0xff]
    %v1065 = vld [vmem:[#allocation7 + $0x30] sm:$0xff]
    %v1066 = vld [vmem:[#allocation7 + $0x38] sm:$0xff]
    %v1067 = vld [vmem:[#allocation7 + $0x40] sm:$0xff]
    %v1068 = vld [vmem:[#allocation7 + $0x48] sm:$0xff]
    %v1069 = vld [vmem:[#allocation7 + $0x50] sm:$0xff]
    %v1070 = vld [vmem:[#allocation7 + $0x58] sm:$0xff]
    %v1071 = vld [vmem:[#allocation7 + $0x60] sm:$0xff]
    %v1072 = vld [vmem:[#allocation7 + $0x68] sm:$0xff]
    %v1073 = vld [vmem:[#allocation7 + $0x70] sm:$0xff]
    %v1074 = vld [vmem:[#allocation7 + $0x78] sm:$0xff]
    %v1075 = vld [vmem:[#allocation7 + $0x80] sm:$0xff]
    %v1076 = vld [vmem:[#allocation7 + $0x88] sm:$0xff]
    %v1077 = vld [vmem:[#allocation7 + $0x90] sm:$0xff]
    %v1078 = vld [vmem:[#allocation7 + $0x98] sm:$0xff]
    %v1079 = vld [vmem:[#allocation7 + $0xa0] sm:$0xff]
    %v1080 = vld [vmem:[#allocation7 + $0xa8] sm:$0xff]
    %v1081 = vld [vmem:[#allocation7 + $0xb0] sm:$0xff]
    %v1082 = vld [vmem:[#allocation7 + $0xb8] sm:$0xff]
    %v1083 = vld [vmem:[#allocation7 + $0xc0] sm:$0xff]
    %v1084 = vld [vmem:[#allocation7 + $0xc8] sm:$0xff]
    %v1085 = vld [vmem:[#allocation7 + $0xd0] sm:$0xff]
    %v1086 = vld [vmem:[#allocation7 + $0xd8] sm:$0xff]
    %v1087 = vld [vmem:[#allocation7 + $0xe0] sm:$0xff]
    %v1088 = vld [vmem:[#allocation7 + $0xe8] sm:$0xff]
    %v1089 = vld [vmem:[#allocation7 + $0xf0] sm:$0xff]
    %v1090 = vld [vmem:[#allocation7 + $0xf8] sm:$0xff]
    %v1091 = vld [vmem:[#allocation7 + $0x100] sm:$0xff]
    %v1092 = vld [vmem:[#allocation7 + $0x108] sm:$0xff]
    %v1093 = vld [vmem:[#allocation7 + $0x110] sm:$0xff]
    %v1094 = vld [vmem:[#allocation7 + $0x118] sm:$0xff]
    %v1095 = vld [vmem:[#allocation7 + $0x120] sm:$0xff]
    %v1096 = vld [vmem:[#allocation7 + $0x128] sm:$0xff]
    %v1097 = vld [vmem:[#allocation7 + $0x130] sm:$0xff]
    %v1098 = vld [vmem:[#allocation7 + $0x138] sm:$0xff]
    %v1099 = vld [vmem:[#allocation7 + $0x140] sm:$0xff]
    %v1100 = vld [vmem:[#allocation7 + $0x148] sm:$0xff]
    %v1101 = vld [vmem:[#allocation7 + $0x150] sm:$0xff]
    %v1102 = vld [vmem:[#allocation7 + $0x158] sm:$0xff]
    %v1103 = vld [vmem:[#allocation7 + $0x160] sm:$0xff]
    %v1104 = vld [vmem:[#allocation7 + $0x168] sm:$0xff]
    %v1105 = vld [vmem:[#allocation7 + $0x170] sm:$0xff]
    %v1106 = vld [vmem:[#allocation7 + $0x178] sm:$0xff]
    %v1107 = vld [vmem:[#allocation7 + $0x180] sm:$0xff]
    %v1108 = vld [vmem:[#allocation7 + $0x188] sm:$0xff]
    %v1109 = vld [vmem:[#allocation7 + $0x190] sm:$0xff]
    %v1110 = vld [vmem:[#allocation7 + $0x198] sm:$0xff]
    %v1111 = vld [vmem:[#allocation7 + $0x1a0] sm:$0xff]
    %v1112 = vld [vmem:[#allocation7 + $0x1a8] sm:$0xff]
    %v1113 = vld [vmem:[#allocation7 + $0x1b0] sm:$0xff]
    %v1114 = vld [vmem:[#allocation7 + $0x1b8] sm:$0xff]
    %v1115 = vld [vmem:[#allocation7 + $0x1c0] sm:$0xff]
    %v1116 = vld [vmem:[#allocation7 + $0x1c8] sm:$0xff]
    %v1117 = vld [vmem:[#allocation7 + $0x1d0] sm:$0xff]
    %v1118 = vld [vmem:[#allocation7 + $0x1d8] sm:$0xff]
    %v1119 = vld [vmem:[#allocation7 + $0x1e0] sm:$0xff]
    %v1120 = vld [vmem:[#allocation7 + $0x1e8] sm:$0xff]
    %v1121 = vld [vmem:[#allocation7 + $0x1f0] sm:$0xff]
    %v1122 = vld [vmem:[#allocation7 + $0x1f8] sm:$0xff]
    %v1123 = vld [vmem:[#allocation7 + $0x200] sm:$0xff]
    %v1124 = vld [vmem:[#allocation7 + $0x208] sm:$0xff]
    %v1125 = vld [vmem:[#allocation7 + $0x210] sm:$0xff]
    %v1126 = vld [vmem:[#allocation7 + $0x218] sm:$0xff]
    %v1127 = vld [vmem:[#allocation7 + $0x220] sm:$0xff]
    %v1128 = vld [vmem:[#allocation7 + $0x228] sm:$0xff]
    %v1129 = vld [vmem:[#allocation7 + $0x230] sm:$0xff]
    %v1130 = vld [vmem:[#allocation7 + $0x238] sm:$0xff]
    %v1131 = vld [vmem:[#allocation7 + $0x240] sm:$0xff]
    %v1132 = vld [vmem:[#allocation7 + $0x248] sm:$0xff]
    %v1133 = vld [vmem:[#allocation7 + $0x250] sm:$0xff]
    %v1134 = vld [vmem:[#allocation7 + $0x258] sm:$0xff]
    %v1135 = vld [vmem:[#allocation7 + $0x260] sm:$0xff]
    %v1136 = vld [vmem:[#allocation7 + $0x268] sm:$0xff]
    %v1137 = vld [vmem:[#allocation7 + $0x270] sm:$0xff]
    %v1138 = vld [vmem:[#allocation7 + $0x278] sm:$0xff]
    %v1139 = vld [vmem:[#allocation7 + $0x280] sm:$0xff]
    %v1140 = vld [vmem:[#allocation7 + $0x288] sm:$0xff]
    %v1141 = vld [vmem:[#allocation7 + $0x290] sm:$0xff]
    %v1142 = vld [vmem:[#allocation7 + $0x298] sm:$0xff]
    %v1143 = vld [vmem:[#allocation7 + $0x2a0] sm:$0xff]
    %v1144 = vld [vmem:[#allocation7 + $0x2a8] sm:$0xff]
    %v1145 = vld [vmem:[#allocation7 + $0x2b0] sm:$0xff]
    %v1146 = vld [vmem:[#allocation7 + $0x2b8] sm:$0xff]
    %v1147 = vld [vmem:[#allocation7 + $0x2c0] sm:$0xff]
    %v1148 = vld [vmem:[#allocation7 + $0x2c8] sm:$0xff]
    %v1149 = vld [vmem:[#allocation7 + $0x2d0] sm:$0xff]
    %v1150 = vld [vmem:[#allocation7 + $0x2d8] sm:$0xff]
    %v1151 = vld [vmem:[#allocation7 + $0x2e0] sm:$0xff]
    %v1152 = vld [vmem:[#allocation7 + $0x2e8] sm:$0xff]
    %v1153 = vld [vmem:[#allocation7 + $0x2f0] sm:$0xff]
    %v1154 = vld [vmem:[#allocation7 + $0x2f8] sm:$0xff]
    %v1155 = vld [vmem:[%s6] sm:$0x3]
    %v1157 = vlaneseq
    %v1158 = vshrl.u32 %v1157, 7
    %v1159 = vsub.s32 0, %v1158
    %v1160 = vrot.slane %v1155, %v1159
    %v1161 = vlaneseq
    %v1162 = vshrl.u32 %v1161, 7
    %v1163 = vsub.s32 1, %v1162
    %v1164 = vrot.slane %v1155, %v1163
    %v1263 = vunpack.c.l.b16 %v1059
    %v1264 = vunpack.c.h.b16 %v1059
    %v1265 = vunpack.c.l.b16 %v1060
    %v1266 = vunpack.c.h.b16 %v1060
    %v1267 = vunpack.c.l.b16 %v1061
    %v1268 = vunpack.c.h.b16 %v1061
    %v1269 = vunpack.c.l.b16 %v1062
    %v1270 = vunpack.c.h.b16 %v1062
    %v1271 = vunpack.c.l.b16 %v1063
    %v1272 = vunpack.c.h.b16 %v1063
    %v1273 = vunpack.c.l.b16 %v1064
    %v1274 = vunpack.c.h.b16 %v1064
    %v1275 = vunpack.c.l.b16 %v1065
    %v1276 = vunpack.c.h.b16 %v1065
    %v1277 = vunpack.c.l.b16 %v1066
    %v1278 = vunpack.c.h.b16 %v1066
    %v1279 = vunpack.c.l.b16 %v1067
    %v1280 = vunpack.c.h.b16 %v1067
    %v1281 = vunpack.c.l.b16 %v1068
    %v1282 = vunpack.c.h.b16 %v1068
    %v1283 = vunpack.c.l.b16 %v1069
    %v1284 = vunpack.c.h.b16 %v1069
    %v1285 = vunpack.c.l.b16 %v1070
    %v1286 = vunpack.c.h.b16 %v1070
    %v1287 = vunpack.c.l.b16 %v1071
    %v1288 = vunpack.c.h.b16 %v1071
    %v1289 = vunpack.c.l.b16 %v1072
    %v1290 = vunpack.c.h.b16 %v1072
    %v1291 = vunpack.c.l.b16 %v1073
    %v1292 = vunpack.c.h.b16 %v1073
    %v1293 = vunpack.c.l.b16 %v1074
    %v1294 = vunpack.c.h.b16 %v1074
    %v1295 = vunpack.c.l.b16 %v1075
    %v1296 = vunpack.c.h.b16 %v1075
    %v1297 = vunpack.c.l.b16 %v1076
    %v1298 = vunpack.c.h.b16 %v1076
    %v1299 = vunpack.c.l.b16 %v1077
    %v1300 = vunpack.c.h.b16 %v1077
    %v1301 = vunpack.c.l.b16 %v1078
    %v1302 = vunpack.c.h.b16 %v1078
    %v1303 = vunpack.c.l.b16 %v1079
    %v1304 = vunpack.c.h.b16 %v1079
    %v1305 = vunpack.c.l.b16 %v1080
    %v1306 = vunpack.c.h.b16 %v1080
    %v1307 = vunpack.c.l.b16 %v1081
    %v1308 = vunpack.c.h.b16 %v1081
    %v1309 = vunpack.c.l.b16 %v1082
    %v1310 = vunpack.c.h.b16 %v1082
    %v1311 = vunpack.c.l.b16 %v1083
    %v1312 = vunpack.c.h.b16 %v1083
    %v1313 = vunpack.c.l.b16 %v1084
    %v1314 = vunpack.c.h.b16 %v1084
    %v1315 = vunpack.c.l.b16 %v1085
    %v1316 = vunpack.c.h.b16 %v1085
    %v1317 = vunpack.c.l.b16 %v1086
    %v1318 = vunpack.c.h.b16 %v1086
    %v1319 = vunpack.c.l.b16 %v1087
    %v1320 = vunpack.c.h.b16 %v1087
    %v1321 = vunpack.c.l.b16 %v1088
    %v1322 = vunpack.c.h.b16 %v1088
    %v1323 = vunpack.c.l.b16 %v1089
    %v1324 = vunpack.c.h.b16 %v1089
    %v1325 = vunpack.c.l.b16 %v1090
    %v1326 = vunpack.c.h.b16 %v1090
    %v1327 = vunpack.c.l.b16 %v1091
    %v1328 = vunpack.c.h.b16 %v1091
    %v1329 = vunpack.c.l.b16 %v1092
    %v1330 = vunpack.c.h.b16 %v1092
    %v1331 = vunpack.c.l.b16 %v1093
    %v1332 = vunpack.c.h.b16 %v1093
    %v1333 = vunpack.c.l.b16 %v1094
    %v1334 = vunpack.c.h.b16 %v1094
    %v1335 = vunpack.c.l.b16 %v1095
    %v1336 = vunpack.c.h.b16 %v1095
    %v1337 = vunpack.c.l.b16 %v1096
    %v1338 = vunpack.c.h.b16 %v1096
    %v1339 = vunpack.c.l.b16 %v1097
    %v1340 = vunpack.c.h.b16 %v1097
    %v1341 = vunpack.c.l.b16 %v1098
    %v1342 = vunpack.c.h.b16 %v1098
    %v1343 = vunpack.c.l.b16 %v1099
    %v1344 = vunpack.c.h.b16 %v1099
    %v1345 = vunpack.c.l.b16 %v1100
    %v1346 = vunpack.c.h.b16 %v1100
    %v1347 = vunpack.c.l.b16 %v1101
    %v1348 = vunpack.c.h.b16 %v1101
    %v1349 = vunpack.c.l.b16 %v1102
    %v1350 = vunpack.c.h.b16 %v1102
    %v1351 = vunpack.c.l.b16 %v1103
    %v1352 = vunpack.c.h.b16 %v1103
    %v1353 = vunpack.c.l.b16 %v1104
    %v1354 = vunpack.c.h.b16 %v1104
    %v1355 = vunpack.c.l.b16 %v1105
    %v1356 = vunpack.c.h.b16 %v1105
    %v1357 = vunpack.c.l.b16 %v1106
    %v1358 = vunpack.c.h.b16 %v1106
    %v1359 = vunpack.c.l.b16 %v1107
    %v1360 = vunpack.c.h.b16 %v1107
    %v1361 = vunpack.c.l.b16 %v1108
    %v1362 = vunpack.c.h.b16 %v1108
    %v1363 = vunpack.c.l.b16 %v1109
    %v1364 = vunpack.c.h.b16 %v1109
    %v1365 = vunpack.c.l.b16 %v1110
    %v1366 = vunpack.c.h.b16 %v1110
    %v1367 = vunpack.c.l.b16 %v1111
    %v1368 = vunpack.c.h.b16 %v1111
    %v1369 = vunpack.c.l.b16 %v1112
    %v1370 = vunpack.c.h.b16 %v1112
    %v1371 = vunpack.c.l.b16 %v1113
    %v1372 = vunpack.c.h.b16 %v1113
    %v1373 = vunpack.c.l.b16 %v1114
    %v1374 = vunpack.c.h.b16 %v1114
    %v1375 = vunpack.c.l.b16 %v1115
    %v1376 = vunpack.c.h.b16 %v1115
    %v1377 = vunpack.c.l.b16 %v1116
    %v1378 = vunpack.c.h.b16 %v1116
    %v1379 = vunpack.c.l.b16 %v1117
    %v1380 = vunpack.c.h.b16 %v1117
    %v1381 = vunpack.c.l.b16 %v1118
    %v1382 = vunpack.c.h.b16 %v1118
    %v1383 = vunpack.c.l.b16 %v1119
    %v1384 = vunpack.c.h.b16 %v1119
    %v1385 = vunpack.c.l.b16 %v1120
    %v1386 = vunpack.c.h.b16 %v1120
    %v1387 = vunpack.c.l.b16 %v1121
    %v1388 = vunpack.c.h.b16 %v1121
    %v1389 = vunpack.c.l.b16 %v1122
    %v1390 = vunpack.c.h.b16 %v1122
    %v1391 = vunpack.c.l.b16 %v1123
    %v1392 = vunpack.c.h.b16 %v1123
    %v1393 = vunpack.c.l.b16 %v1124
    %v1394 = vunpack.c.h.b16 %v1124
    %v1395 = vunpack.c.l.b16 %v1125
    %v1396 = vunpack.c.h.b16 %v1125
    %v1397 = vunpack.c.l.b16 %v1126
    %v1398 = vunpack.c.h.b16 %v1126
    %v1399 = vunpack.c.l.b16 %v1127
    %v1400 = vunpack.c.h.b16 %v1127
    %v1401 = vunpack.c.l.b16 %v1128
    %v1402 = vunpack.c.h.b16 %v1128
    %v1403 = vunpack.c.l.b16 %v1129
    %v1404 = vunpack.c.h.b16 %v1129
    %v1405 = vunpack.c.l.b16 %v1130
    %v1406 = vunpack.c.h.b16 %v1130
    %v1407 = vunpack.c.l.b16 %v1131
    %v1408 = vunpack.c.h.b16 %v1131
    %v1409 = vunpack.c.l.b16 %v1132
    %v1410 = vunpack.c.h.b16 %v1132
    %v1411 = vunpack.c.l.b16 %v1133
    %v1412 = vunpack.c.h.b16 %v1133
    %v1413 = vunpack.c.l.b16 %v1134
    %v1414 = vunpack.c.h.b16 %v1134
    %v1415 = vunpack.c.l.b16 %v1135
    %v1416 = vunpack.c.h.b16 %v1135
    %v1417 = vunpack.c.l.b16 %v1136
    %v1418 = vunpack.c.h.b16 %v1136
    %v1419 = vunpack.c.l.b16 %v1137
    %v1420 = vunpack.c.h.b16 %v1137
    %v1421 = vunpack.c.l.b16 %v1138
    %v1422 = vunpack.c.h.b16 %v1138
    %v1423 = vunpack.c.l.b16 %v1139
    %v1424 = vunpack.c.h.b16 %v1139
    %v1425 = vunpack.c.l.b16 %v1140
    %v1426 = vunpack.c.h.b16 %v1140
    %v1427 = vunpack.c.l.b16 %v1141
    %v1428 = vunpack.c.h.b16 %v1141
    %v1429 = vunpack.c.l.b16 %v1142
    %v1430 = vunpack.c.h.b16 %v1142
    %v1431 = vunpack.c.l.b16 %v1143
    %v1432 = vunpack.c.h.b16 %v1143
    %v1433 = vunpack.c.l.b16 %v1144
    %v1434 = vunpack.c.h.b16 %v1144
    %v1435 = vunpack.c.l.b16 %v1145
    %v1436 = vunpack.c.h.b16 %v1145
    %v1437 = vunpack.c.l.b16 %v1146
    %v1438 = vunpack.c.h.b16 %v1146
    %v1439 = vunpack.c.l.b16 %v1147
    %v1440 = vunpack.c.h.b16 %v1147
    %v1441 = vunpack.c.l.b16 %v1148
    %v1442 = vunpack.c.h.b16 %v1148
    %v1443 = vunpack.c.l.b16 %v1149
    %v1444 = vunpack.c.h.b16 %v1149
    %v1445 = vunpack.c.l.b16 %v1150
    %v1446 = vunpack.c.h.b16 %v1150
    %v1447 = vunpack.c.l.b16 %v1151
    %v1448 = vunpack.c.h.b16 %v1151
    %v1449 = vunpack.c.l.b16 %v1152
    %v1450 = vunpack.c.h.b16 %v1152
    %v1451 = vunpack.c.l.b16 %v1153
    %v1452 = vunpack.c.h.b16 %v1153
    %v1453 = vunpack.c.l.b16 %v1154
    %v1454 = vunpack.c.h.b16 %v1154
    %v1455 = vpack.c.b16 %v1265, %v1263
    %v1456 = vpack.c.b16 %v1266, %v1264
    %v1457 = vpack.c.b16 %v1269, %v1267
    %v1458 = vpack.c.b16 %v1270, %v1268
    %v1459 = vpack.c.b16 %v1273, %v1271
    %v1460 = vpack.c.b16 %v1274, %v1272
    %v1461 = vpack.c.b16 %v1277, %v1275
    %v1462 = vpack.c.b16 %v1278, %v1276
    %v1463 = vpack.c.b16 %v1281, %v1279
    %v1464 = vpack.c.b16 %v1282, %v1280
    %v1465 = vpack.c.b16 %v1285, %v1283
    %v1466 = vpack.c.b16 %v1286, %v1284
    %v1467 = vpack.c.b16 %v1289, %v1287
    %v1468 = vpack.c.b16 %v1290, %v1288
    %v1469 = vpack.c.b16 %v1293, %v1291
    %v1470 = vpack.c.b16 %v1294, %v1292
    %v1471 = vpack.c.b16 %v1297, %v1295
    %v1472 = vpack.c.b16 %v1298, %v1296
    %v1473 = vpack.c.b16 %v1301, %v1299
    %v1474 = vpack.c.b16 %v1302, %v1300
    %v1475 = vpack.c.b16 %v1305, %v1303
    %v1476 = vpack.c.b16 %v1306, %v1304
    %v1477 = vpack.c.b16 %v1309, %v1307
    %v1478 = vpack.c.b16 %v1310, %v1308
    %v1479 = vpack.c.b16 %v1313, %v1311
    %v1480 = vpack.c.b16 %v1314, %v1312
    %v1481 = vpack.c.b16 %v1317, %v1315
    %v1482 = vpack.c.b16 %v1318, %v1316
    %v1483 = vpack.c.b16 %v1321, %v1319
    %v1484 = vpack.c.b16 %v1322, %v1320
    %v1485 = vpack.c.b16 %v1325, %v1323
    %v1486 = vpack.c.b16 %v1326, %v1324
    %v1487 = vpack.c.b16 %v1329, %v1327
    %v1488 = vpack.c.b16 %v1330, %v1328
    %v1489 = vpack.c.b16 %v1333, %v1331
    %v1490 = vpack.c.b16 %v1334, %v1332
    %v1491 = vpack.c.b16 %v1337, %v1335
    %v1492 = vpack.c.b16 %v1338, %v1336
    %v1493 = vpack.c.b16 %v1341, %v1339
    %v1494 = vpack.c.b16 %v1342, %v1340
    %v1495 = vpack.c.b16 %v1345, %v1343
    %v1496 = vpack.c.b16 %v1346, %v1344
    %v1497 = vpack.c.b16 %v1349, %v1347
    %v1498 = vpack.c.b16 %v1350, %v1348
    %v1499 = vpack.c.b16 %v1353, %v1351
    %v1500 = vpack.c.b16 %v1354, %v1352
    %v1501 = vpack.c.b16 %v1357, %v1355
    %v1502 = vpack.c.b16 %v1358, %v1356
    %v1503 = vpack.c.b16 %v1361, %v1359
    %v1504 = vpack.c.b16 %v1362, %v1360
    %v1505 = vpack.c.b16 %v1365, %v1363
    %v1506 = vpack.c.b16 %v1366, %v1364
    %v1507 = vpack.c.b16 %v1369, %v1367
    %v1508 = vpack.c.b16 %v1370, %v1368
    %v1509 = vpack.c.b16 %v1373, %v1371
    %v1510 = vpack.c.b16 %v1374, %v1372
    %v1511 = vpack.c.b16 %v1377, %v1375
    %v1512 = vpack.c.b16 %v1378, %v1376
    %v1513 = vpack.c.b16 %v1381, %v1379
    %v1514 = vpack.c.b16 %v1382, %v1380
    %v1515 = vpack.c.b16 %v1385, %v1383
    %v1516 = vpack.c.b16 %v1386, %v1384
    %v1517 = vpack.c.b16 %v1389, %v1387
    %v1518 = vpack.c.b16 %v1390, %v1388
    %v1519 = vpack.c.b16 %v1393, %v1391
    %v1520 = vpack.c.b16 %v1394, %v1392
    %v1521 = vpack.c.b16 %v1397, %v1395
    %v1522 = vpack.c.b16 %v1398, %v1396
    %v1523 = vpack.c.b16 %v1401, %v1399
    %v1524 = vpack.c.b16 %v1402, %v1400
    %v1525 = vpack.c.b16 %v1405, %v1403
    %v1526 = vpack.c.b16 %v1406, %v1404
    %v1527 = vpack.c.b16 %v1409, %v1407
    %v1528 = vpack.c.b16 %v1410, %v1408
    %v1529 = vpack.c.b16 %v1413, %v1411
    %v1530 = vpack.c.b16 %v1414, %v1412
    %v1531 = vpack.c.b16 %v1417, %v1415
    %v1532 = vpack.c.b16 %v1418, %v1416
    %v1533 = vpack.c.b16 %v1421, %v1419
    %v1534 = vpack.c.b16 %v1422, %v1420
    %v1535 = vpack.c.b16 %v1425, %v1423
    %v1536 = vpack.c.b16 %v1426, %v1424
    %v1537 = vpack.c.b16 %v1429, %v1427
    %v1538 = vpack.c.b16 %v1430, %v1428
    %v1539 = vpack.c.b16 %v1433, %v1431
    %v1540 = vpack.c.b16 %v1434, %v1432
    %v1541 = vpack.c.b16 %v1437, %v1435
    %v1542 = vpack.c.b16 %v1438, %v1436
    %v1543 = vpack.c.b16 %v1441, %v1439
    %v1544 = vpack.c.b16 %v1442, %v1440
    %v1545 = vpack.c.b16 %v1445, %v1443
    %v1546 = vpack.c.b16 %v1446, %v1444
    %v1547 = vpack.c.b16 %v1449, %v1447
    %v1548 = vpack.c.b16 %v1450, %v1448
    %v1549 = vpack.c.b16 %v1453, %v1451
    %v1550 = vpack.c.b16 %v1454, %v1452
    %1647 = vmatprep.subr.bf16.mxu0 %v1456
    %1648 = vmatpush1.bf16.msra.mxu0 %v1455
    %1649 = vmatprep.subr.bf16.mxu0 %v1458
    %1650 = vmatpush1.bf16.msra.mxu0 %v1457
    %1651 = vmatprep.subr.bf16.mxu0 %v1460
    %1652 = vmatpush1.bf16.msra.mxu0 %v1459
    %1653 = vmatprep.subr.bf16.mxu0 %v1462
    %1654 = vmatpush1.bf16.msra.mxu0 %v1461
    %1655 = vmatprep.subr.bf16.mxu0 %v1464
    %1656 = vmatpush1.bf16.msra.mxu0 %v1463
    %1657 = vmatprep.subr.bf16.mxu0 %v1466
    %1658 = vmatpush1.bf16.msra.mxu0 %v1465
    %1659 = vmatprep.subr.bf16.mxu0 %v1468
    %1660 = vmatpush1.bf16.msra.mxu0 %v1467
    %1661 = vmatprep.subr.bf16.mxu0 %v1470
    %1662 = vmatpush1.bf16.msra.mxu0 %v1469
    %1663 = vmatprep.subr.bf16.mxu0 %v1472
    %1664 = vmatpush1.bf16.msra.mxu0 %v1471
    %1665 = vmatprep.subr.bf16.mxu0 %v1474
    %1666 = vmatpush1.bf16.msra.mxu0 %v1473
    %1667 = vmatprep.subr.bf16.mxu0 %v1476
    %1668 = vmatpush1.bf16.msra.mxu0 %v1475
    %1669 = vmatprep.subr.bf16.mxu0 %v1478
    %1670 = vmatpush1.bf16.msra.mxu0 %v1477
    %1671 = vmatprep.subr.bf16.mxu0 %v1480
    %1672 = vmatpush1.bf16.msra.mxu0 %v1479
    %1673 = vmatprep.subr.bf16.mxu0 %v1482
    %1674 = vmatpush1.bf16.msra.mxu0 %v1481
    %1675 = vmatprep.subr.bf16.mxu0 %v1484
    %1676 = vmatpush1.bf16.msra.mxu0 %v1483
    %1677 = vmatprep.subr.bf16.mxu0 %v1486
    %1678 = vmatpush1.bf16.msra.mxu0 %v1485
    %1679 = vmatprep.mubr.bf16.mxu0 %v1030
    %1680 = vmatmul.mubr.bf16.gmra.mrb[0].mxu0 %v1029
    %v1681 = vpop.f32.mrb[0].mxu0
    %v1682 = vadd.f32 %v1160, %v1681
    %v1683 = vpop.f32.mrb[0].mxu0
    %v1684 = vadd.f32 %v1164, %v1683
    %v1685 = vpop.f32.mrb[0].mxu0
    %v1686 = vadd.f32 %v1160, %v1685
    %v1687 = vpop.f32.mrb[0].mxu0
    %v1688 = vadd.f32 %v1164, %v1687
    %1689 = vmatprep.mubr.bf16.mxu0 %v1036
    %1690 = vmatmul.mubr.bf16.gmra.mrb[0].mxu0 %v1035
    %v1691 = vpop.f32.mrb[0].mxu0
    %v1692 = vadd.f32 %v1160, %v1691
    %v1693 = vpop.f32.mrb[0].mxu0
    %v1694 = vadd.f32 %v1164, %v1693
    %v1695 = vpop.f32.mrb[0].mxu0
    %v1696 = vadd.f32 %v1160, %v1695
    %v1697 = vpop.f32.mrb[0].mxu0
    %v1698 = vadd.f32 %v1164, %v1697
    %1699 = vmatprep.mubr.bf16.mxu0 %v1042
    %1700 = vmatmul.mubr.bf16.gmra.mrb[0].mxu0 %v1041
    %v1701 = vpop.f32.mrb[0].mxu0
    %v1702 = vadd.f32 %v1160, %v1701
    %v1703 = vpop.f32.mrb[0].mxu0
    %v1704 = vadd.f32 %v1164, %v1703
    %v1705 = vpop.f32.mrb[0].mxu0
    %v1706 = vadd.f32 %v1160, %v1705
    %v1707 = vpop.f32.mrb[0].mxu0
    %v1708 = vadd.f32 %v1164, %v1707
    %1709 = vmatprep.mubr.bf16.mxu0 %v1048
    %1710 = vmatmul.mubr.bf16.gmra.mrb[0].mxu0 %v1047
    %v1711 = vpop.f32.mrb[0].mxu0
    %v1712 = vadd.f32 %v1160, %v1711
    %v1713 = vpop.f32.mrb[0].mxu0
    %v1714 = vadd.f32 %v1164, %v1713
    %v1715 = vpop.f32.mrb[0].mxu0
    %v1716 = vadd.f32 %v1160, %v1715
    %v1717 = vpop.f32.mrb[0].mxu0
    %v1718 = vadd.f32 %v1164, %v1717
    %1719 = vmatprep.mubr.bf16.mxu0 %v1054
    %1720 = vmatmul.mubr.bf16.gmra.mrb[0].mxu0 %v1053
    %v1721 = vpop.f32.mrb[0].mxu0
    %v1722 = vadd.f32 %v1160, %v1721
    %v1723 = vpop.f32.mrb[0].mxu0
    %v1724 = vadd.f32 %v1164, %v1723
    %v1725 = vpop.f32.mrb[0].mxu0
    %v1726 = vadd.f32 %v1160, %v1725
    %v1727 = vpop.f32.mrb[0].mxu0
    %v1728 = vadd.f32 %v1164, %v1727
    %1729 = vdwg.mxu0
    %1730 = vmatprep.subr.bf16.mxu0 %v1488
    %1731 = vmatpush1.bf16.msra.mxu0 %v1487
    %1732 = vmatprep.subr.bf16.mxu0 %v1490
    %1733 = vmatpush1.bf16.msra.mxu0 %v1489
    %1734 = vmatprep.subr.bf16.mxu0 %v1492
    %1735 = vmatpush1.bf16.msra.mxu0 %v1491
    %1736 = vmatprep.subr.bf16.mxu0 %v1494
    %1737 = vmatpush1.bf16.msra.mxu0 %v1493
    %1738 = vmatprep.subr.bf16.mxu0 %v1496
    %1739 = vmatpush1.bf16.msra.mxu0 %v1495
    %1740 = vmatprep.subr.bf16.mxu0 %v1498
    %1741 = vmatpush1.bf16.msra.mxu0 %v1497
    %1742 = vmatprep.subr.bf16.mxu0 %v1500
    %1743 = vmatpush1.bf16.msra.mxu0 %v1499
    %1744 = vmatprep.subr.bf16.mxu0 %v1502
    %1745 = vmatpush1.bf16.msra.mxu0 %v1501
    %1746 = vmatprep.subr.bf16.mxu0 %v1504
    %1747 = vmatpush1.bf16.msra.mxu0 %v1503
    %1748 = vmatprep.subr.bf16.mxu0 %v1506
    %1749 = vmatpush1.bf16.msra.mxu0 %v1505
    %1750 = vmatprep.subr.bf16.mxu0 %v1508
    %1751 = vmatpush1.bf16.msra.mxu0 %v1507
    %1752 = vmatprep.subr.bf16.mxu0 %v1510
    %1753 = vmatpush1.bf16.msra.mxu0 %v1509
    %1754 = vmatprep.subr.bf16.mxu0 %v1512
    %1755 = vmatpush1.bf16.msra.mxu0 %v1511
    %1756 = vmatprep.subr.bf16.mxu0 %v1514
    %1757 = vmatpush1.bf16.msra.mxu0 %v1513
    %1758 = vmatprep.subr.bf16.mxu0 %v1516
    %1759 = vmatpush1.bf16.msra.mxu0 %v1515
    %1760 = vmatprep.subr.bf16.mxu0 %v1518
    %1761 = vmatpush1.bf16.msra.mxu0 %v1517
    %1762 = vmatprep.mubr.bf16.mxu0 %v1032
    %1763 = vmatmul.mubr.bf16.gmra.mrb[0].mxu0 %v1031
    %v1764 = vpop.f32.mrb[0].mxu0
    %v1765 = vadd.f32 %v1682, %v1764
    %v1766 = vpop.f32.mrb[0].mxu0
    %v1767 = vadd.f32 %v1684, %v1766
    %v1768 = vpop.f32.mrb[0].mxu0
    %v1769 = vadd.f32 %v1686, %v1768
    %v1770 = vpop.f32.mrb[0].mxu0
    %v1771 = vadd.f32 %v1688, %v1770
    %1772 = vmatprep.mubr.bf16.mxu0 %v1038
    %1773 = vmatmul.mubr.bf16.gmra.mrb[0].mxu0 %v1037
    %v1774 = vpop.f32.mrb[0].mxu0
    %v1775 = vadd.f32 %v1692, %v1774
    %v1776 = vpop.f32.mrb[0].mxu0
    %v1777 = vadd.f32 %v1694, %v1776
    %v1778 = vpop.f32.mrb[0].mxu0
    %v1779 = vadd.f32 %v1696, %v1778
    %v1780 = vpop.f32.mrb[0].mxu0
    %v1781 = vadd.f32 %v1698, %v1780
    %1782 = vmatprep.mubr.bf16.mxu0 %v1044
    %1783 = vmatmul.mubr.bf16.gmra.mrb[0].mxu0 %v1043
    %v1784 = vpop.f32.mrb[0].mxu0
    %v1785 = vadd.f32 %v1702, %v1784
    %v1786 = vpop.f32.mrb[0].mxu0
    %v1787 = vadd.f32 %v1704, %v1786
    %v1788 = vpop.f32.mrb[0].mxu0
    %v1789 = vadd.f32 %v1706, %v1788
    %v1790 = vpop.f32.mrb[0].mxu0
    %v1791 = vadd.f32 %v1708, %v1790
    %1792 = vmatprep.mubr.bf16.mxu0 %v1050
    %1793 = vmatmul.mubr.bf16.gmra.mrb[0].mxu0 %v1049
    %v1794 = vpop.f32.mrb[0].mxu0
    %v1795 = vadd.f32 %v1712, %v1794
    %v1796 = vpop.f32.mrb[0].mxu0
    %v1797 = vadd.f32 %v1714, %v1796
    %v1798 = vpop.f32.mrb[0].mxu0
    %v1799 = vadd.f32 %v1716, %v1798
    %v1800 = vpop.f32.mrb[0].mxu0
    %v1801 = vadd.f32 %v1718, %v1800
    %1802 = vmatprep.mubr.bf16.mxu0 %v1056
    %1803 = vmatmul.mubr.bf16.gmra.mrb[0].mxu0 %v1055
    %v1804 = vpop.f32.mrb[0].mxu0
    %v1805 = vadd.f32 %v1722, %v1804
    %v1806 = vpop.f32.mrb[0].mxu0
    %v1807 = vadd.f32 %v1724, %v1806
    %v1808 = vpop.f32.mrb[0].mxu0
    %v1809 = vadd.f32 %v1726, %v1808
    %v1810 = vpop.f32.mrb[0].mxu0
    %v1811 = vadd.f32 %v1728, %v1810
    %1812 = vdwg.mxu0
    %1813 = vmatprep.subr.bf16.mxu0 %v1520
    %1814 = vmatpush1.bf16.msra.mxu0 %v1519
    %1815 = vmatprep.subr.bf16.mxu0 %v1522
    %1816 = vmatpush1.bf16.msra.mxu0 %v1521
    %1817 = vmatprep.subr.bf16.mxu0 %v1524
    %1818 = vmatpush1.bf16.msra.mxu0 %v1523
    %1819 = vmatprep.subr.bf16.mxu0 %v1526
    %1820 = vmatpush1.bf16.msra.mxu0 %v1525
    %1821 = vmatprep.subr.bf16.mxu0 %v1528
    %1822 = vmatpush1.bf16.msra.mxu0 %v1527
    %1823 = vmatprep.subr.bf16.mxu0 %v1530
    %1824 = vmatpush1.bf16.msra.mxu0 %v1529
    %1825 = vmatprep.subr.bf16.mxu0 %v1532
    %1826 = vmatpush1.bf16.msra.mxu0 %v1531
    %1827 = vmatprep.subr.bf16.mxu0 %v1534
    %1828 = vmatpush1.bf16.msra.mxu0 %v1533
    %1829 = vmatprep.subr.bf16.mxu0 %v1536
    %1830 = vmatpush1.bf16.msra.mxu0 %v1535
    %1831 = vmatprep.subr.bf16.mxu0 %v1538
    %1832 = vmatpush1.bf16.msra.mxu0 %v1537
    %1833 = vmatprep.subr.bf16.mxu0 %v1540
    %1834 = vmatpush1.bf16.msra.mxu0 %v1539
    %1835 = vmatprep.subr.bf16.mxu0 %v1542
    %1836 = vmatpush1.bf16.msra.mxu0 %v1541
    %1837 = vmatprep.subr.bf16.mxu0 %v1544
    %1838 = vmatpush1.bf16.msra.mxu0 %v1543
    %1839 = vmatprep.subr.bf16.mxu0 %v1546
    %1840 = vmatpush1.bf16.msra.mxu0 %v1545
    %1841 = vmatprep.subr.bf16.mxu0 %v1548
    %1842 = vmatpush1.bf16.msra.mxu0 %v1547
    %1843 = vmatprep.subr.bf16.mxu0 %v1550
    %1844 = vmatpush1.bf16.msra.mxu0 %v1549
    %1845 = vmatprep.mubr.bf16.mxu0 %v1034
    %1846 = vmatmul.mubr.bf16.gmra.mrb[0].mxu0 %v1033
    %v1847 = vpop.f32.mrb[0].mxu0
    %v1848 = vadd.f32 %v1765, %v1847
    %v1849 = vpop.f32.mrb[0].mxu0
    %v1850 = vadd.f32 %v1767, %v1849
    %v1851 = vpop.f32.mrb[0].mxu0
    %v1852 = vadd.f32 %v1769, %v1851
    %v1853 = vpop.f32.mrb[0].mxu0
    %v1854 = vadd.f32 %v1771, %v1853
    %1855 = vmatprep.mubr.bf16.mxu0 %v1040
    %1856 = vmatmul.mubr.bf16.gmra.mrb[0].mxu0 %v1039
    %v1857 = vpop.f32.mrb[0].mxu0
    %v1858 = vadd.f32 %v1775, %v1857
    %v1859 = vpop.f32.mrb[0].mxu0
    %v1860 = vadd.f32 %v1777, %v1859
    %v1861 = vpop.f32.mrb[0].mxu0
    %v1862 = vadd.f32 %v1779, %v1861
    %v1863 = vpop.f32.mrb[0].mxu0
    %v1864 = vadd.f32 %v1781, %v1863
    %1865 = vmatprep.mubr.bf16.mxu0 %v1046
    %1866 = vmatmul.mubr.bf16.gmra.mrb[0].mxu0 %v1045
    %v1867 = vpop.f32.mrb[0].mxu0
    %v1868 = vadd.f32 %v1785, %v1867
    %v1869 = vpop.f32.mrb[0].mxu0
    %v1870 = vadd.f32 %v1787, %v1869
    %v1871 = vpop.f32.mrb[0].mxu0
    %v1872 = vadd.f32 %v1789, %v1871
    %v1873 = vpop.f32.mrb[0].mxu0
    %v1874 = vadd.f32 %v1791, %v1873
    %1875 = vmatprep.mubr.bf16.mxu0 %v1052
    %1876 = vmatmul.mubr.bf16.gmra.mrb[0].mxu0 %v1051
    %v1877 = vpop.f32.mrb[0].mxu0
    %v1878 = vadd.f32 %v1795, %v1877
    %v1879 = vpop.f32.mrb[0].mxu0
    %v1880 = vadd.f32 %v1797, %v1879
    %v1881 = vpop.f32.mrb[0].mxu0
    %v1882 = vadd.f32 %v1799, %v1881
    %v1883 = vpop.f32.mrb[0].mxu0
    %v1884 = vadd.f32 %v1801, %v1883
    %1885 = vmatprep.mubr.bf16.mxu0 %v1058
    %1886 = vmatmul.mubr.bf16.gmra.mrb[0].mxu0 %v1057
    %v1887 = vpop.f32.mrb[0].mxu0
    %v1888 = vadd.f32 %v1805, %v1887
    %v1889 = vpop.f32.mrb[0].mxu0
    %v1890 = vadd.f32 %v1807, %v1889
    %v1891 = vpop.f32.mrb[0].mxu0
    %v1892 = vadd.f32 %v1809, %v1891
    %v1893 = vpop.f32.mrb[0].mxu0
    %v1894 = vadd.f32 %v1811, %v1893
    %1895 = vdwg.mxu0
    %v1896 = vmul.f32 %v1848, 0.70710677
    %v1897 = vmul.f32 %v1850, 0.70710677
    %v1898 = vmul.f32 %v1852, 0.70710677
    %v1899 = vmul.f32 %v1854, 0.70710677
    %v1900 = vmul.f32 %v1858, 0.70710677
    %v1901 = vmul.f32 %v1860, 0.70710677
    %v1902 = vmul.f32 %v1862, 0.70710677
    %v1903 = vmul.f32 %v1864, 0.70710677
    %v1904 = vmul.f32 %v1868, 0.70710677
    %v1905 = vmul.f32 %v1870, 0.70710677
    %v1906 = vmul.f32 %v1872, 0.70710677
    %v1907 = vmul.f32 %v1874, 0.70710677
    %v1908 = vmul.f32 %v1878, 0.70710677
    %v1909 = vmul.f32 %v1880, 0.70710677
    %v1910 = vmul.f32 %v1882, 0.70710677
    %v1911 = vmul.f32 %v1884, 0.70710677
    %v1912 = vmul.f32 %v1888, 0.70710677
    %v1913 = vmul.f32 %v1890, 0.70710677
    %v1914 = vmul.f32 %v1892, 0.70710677
    %v1915 = vmul.f32 %v1894, 0.70710677
    %v1916 = vand.u32 2147483647, %v1896
    %v1917 = vand.u32 2147483647, %v1897
    %v1918 = vand.u32 2147483647, %v1898
    %v1919 = vand.u32 2147483647, %v1899
    %v1920 = vand.u32 2147483647, %v1900
    %v1921 = vand.u32 2147483647, %v1901
    %v1922 = vand.u32 2147483647, %v1902
    %v1923 = vand.u32 2147483647, %v1903
    %v1924 = vand.u32 2147483647, %v1904
    %v1925 = vand.u32 2147483647, %v1905
    %v1926 = vand.u32 2147483647, %v1906
    %v1927 = vand.u32 2147483647, %v1907
    %v1928 = vand.u32 2147483647, %v1908
    %v1929 = vand.u32 2147483647, %v1909
    %v1930 = vand.u32 2147483647, %v1910
    %v1931 = vand.u32 2147483647, %v1911
    %v1932 = vand.u32 2147483647, %v1912
    %v1933 = vand.u32 2147483647, %v1913
    %v1934 = vand.u32 2147483647, %v1914
    %v1935 = vand.u32 2147483647, %v1915
    %v1936 = vmul.f32 %v1916, 0.3275911
    %v1937 = vmul.f32 %v1917, 0.3275911
    %v1938 = vmul.f32 %v1918, 0.3275911
    %v1939 = vmul.f32 %v1919, 0.3275911
    %v1940 = vmul.f32 %v1920, 0.3275911
    %v1941 = vmul.f32 %v1921, 0.3275911
    %v1942 = vmul.f32 %v1922, 0.3275911
    %v1943 = vmul.f32 %v1923, 0.3275911
    %v1944 = vmul.f32 %v1924, 0.3275911
    %v1945 = vmul.f32 %v1925, 0.3275911
    %v1946 = vmul.f32 %v1926, 0.3275911
    %v1947 = vmul.f32 %v1927, 0.3275911
    %v1948 = vmul.f32 %v1928, 0.3275911
    %v1949 = vmul.f32 %v1929, 0.3275911
    %v1950 = vmul.f32 %v1930, 0.3275911
    %v1951 = vmul.f32 %v1931, 0.3275911
    %v1952 = vmul.f32 %v1932, 0.3275911
    %v1953 = vmul.f32 %v1933, 0.3275911
    %v1954 = vmul.f32 %v1934, 0.3275911
    %v1955 = vmul.f32 %v1935, 0.3275911
    %v1956 = vadd.f32 %v1936, 1.0
    %v1957 = vadd.f32 %v1937, 1.0
    %v1958 = vadd.f32 %v1938, 1.0
    %v1959 = vadd.f32 %v1939, 1.0
    %v1960 = vadd.f32 %v1940, 1.0
    %v1961 = vadd.f32 %v1941, 1.0
    %v1962 = vadd.f32 %v1942, 1.0
    %v1963 = vadd.f32 %v1943, 1.0
    %v1964 = vadd.f32 %v1944, 1.0
    %v1965 = vadd.f32 %v1945, 1.0
    %v1966 = vadd.f32 %v1946, 1.0
    %v1967 = vadd.f32 %v1947, 1.0
    %v1968 = vadd.f32 %v1948, 1.0
    %v1969 = vadd.f32 %v1949, 1.0
    %v1970 = vadd.f32 %v1950, 1.0
    %v1971 = vadd.f32 %v1951, 1.0
    %v1972 = vadd.f32 %v1952, 1.0
    %v1973 = vadd.f32 %v1953, 1.0
    %v1974 = vadd.f32 %v1954, 1.0
    %v1975 = vadd.f32 %v1955, 1.0
    %v1976 = vrcp.pop %v1956
    %v1977 = vmul.f32 1.0, %v1976
    %v1978 = vrcp.pop %v1957
    %v1979 = vmul.f32 1.0, %v1978
    %v1980 = vrcp.pop %v1958
    %v1981 = vmul.f32 1.0, %v1980
    %v1982 = vrcp.pop %v1959
    %v1983 = vmul.f32 1.0, %v1982
    %v1984 = vrcp.pop %v1960
    %v1985 = vmul.f32 1.0, %v1984
    %v1986 = vrcp.pop %v1961
    %v1987 = vmul.f32 1.0, %v1986
    %v1988 = vrcp.pop %v1962
    %v1989 = vmul.f32 1.0, %v1988
    %v1990 = vrcp.pop %v1963
    %v1991 = vmul.f32 1.0, %v1990
    %v1992 = vrcp.pop %v1964
    %v1993 = vmul.f32 1.0, %v1992
    %v1994 = vrcp.pop %v1965
    %v1995 = vmul.f32 1.0, %v1994
    %v1996 = vrcp.pop %v1966
    %v1997 = vmul.f32 1.0, %v1996
    %v1998 = vrcp.pop %v1967
    %v1999 = vmul.f32 1.0, %v1998
    %v2000 = vrcp.pop %v1968
    %v2001 = vmul.f32 1.0, %v2000
    %v2002 = vrcp.pop %v1969
    %v2003 = vmul.f32 1.0, %v2002
    %v2004 = vrcp.pop %v1970
    %v2005 = vmul.f32 1.0, %v2004
    %v2006 = vrcp.pop %v1971
    %v2007 = vmul.f32 1.0, %v2006
    %v2008 = vrcp.pop %v1972
    %v2009 = vmul.f32 1.0, %v2008
    %v2010 = vrcp.pop %v1973
    %v2011 = vmul.f32 1.0, %v2010
    %v2012 = vrcp.pop %v1974
    %v2013 = vmul.f32 1.0, %v2012
    %v2014 = vrcp.pop %v1975
    %v2015 = vmul.f32 1.0, %v2014
    %v2016 = vmul.f32 %v1977, 1.0614054
    %v2017 = vmul.f32 %v1979, 1.0614054
    %v2018 = vmul.f32 %v1981, 1.0614054
    %v2019 = vmul.f32 %v1983, 1.0614054
    %v2020 = vmul.f32 %v1985, 1.0614054
    %v2021 = vmul.f32 %v1987, 1.0614054
    %v2022 = vmul.f32 %v1989, 1.0614054
    %v2023 = vmul.f32 %v1991, 1.0614054
    %v2024 = vmul.f32 %v1993, 1.0614054
    %v2025 = vmul.f32 %v1995, 1.0614054
    %v2026 = vmul.f32 %v1997, 1.0614054
    %v2027 = vmul.f32 %v1999, 1.0614054
    %v2028 = vmul.f32 %v2001, 1.0614054
    %v2029 = vmul.f32 %v2003, 1.0614054
    %v2030 = vmul.f32 %v2005, 1.0614054
    %v2031 = vmul.f32 %v2007, 1.0614054
    %v2032 = vmul.f32 %v2009, 1.0614054
    %v2033 = vmul.f32 %v2011, 1.0614054
    %v2034 = vmul.f32 %v2013, 1.0614054
    %v2035 = vmul.f32 %v2015, 1.0614054
    %v2036 = vadd.f32 %v2016, -1.4531521
    %v2037 = vadd.f32 %v2017, -1.4531521
    %v2038 = vadd.f32 %v2018, -1.4531521
    %v2039 = vadd.f32 %v2019, -1.4531521
    %v2040 = vadd.f32 %v2020, -1.4531521
    %v2041 = vadd.f32 %v2021, -1.4531521
    %v2042 = vadd.f32 %v2022, -1.4531521
    %v2043 = vadd.f32 %v2023, -1.4531521
    %v2044 = vadd.f32 %v2024, -1.4531521
    %v2045 = vadd.f32 %v2025, -1.4531521
    %v2046 = vadd.f32 %v2026, -1.4531521
    %v2047 = vadd.f32 %v2027, -1.4531521
    %v2048 = vadd.f32 %v2028, -1.4531521
    %v2049 = vadd.f32 %v2029, -1.4531521
    %v2050 = vadd.f32 %v2030, -1.4531521
    %v2051 = vadd.f32 %v2031, -1.4531521
    %v2052 = vadd.f32 %v2032, -1.4531521
    %v2053 = vadd.f32 %v2033, -1.4531521
    %v2054 = vadd.f32 %v2034, -1.4531521
    %v2055 = vadd.f32 %v2035, -1.4531521
    %v2056 = vmul.f32 %v1977, %v2036
    %v2057 = vmul.f32 %v1979, %v2037
    %v2058 = vmul.f32 %v1981, %v2038
    %v2059 = vmul.f32 %v1983, %v2039
    %v2060 = vmul.f32 %v1985, %v2040
    %v2061 = vmul.f32 %v1987, %v2041
    %v2062 = vmul.f32 %v1989, %v2042
    %v2063 = vmul.f32 %v1991, %v2043
    %v2064 = vmul.f32 %v1993, %v2044
    %v2065 = vmul.f32 %v1995, %v2045
    %v2066 = vmul.f32 %v1997, %v2046
    %v2067 = vmul.f32 %v1999, %v2047
    %v2068 = vmul.f32 %v2001, %v2048
    %v2069 = vmul.f32 %v2003, %v2049
    %v2070 = vmul.f32 %v2005, %v2050
    %v2071 = vmul.f32 %v2007, %v2051
    %v2072 = vmul.f32 %v2009, %v2052
    %v2073 = vmul.f32 %v2011, %v2053
    %v2074 = vmul.f32 %v2013, %v2054
    %v2075 = vmul.f32 %v2015, %v2055
    %v2076 = vadd.f32 %v2056, 1.4214138
    %v2077 = vadd.f32 %v2057, 1.4214138
    %v2078 = vadd.f32 %v2058, 1.4214138
    %v2079 = vadd.f32 %v2059, 1.4214138
    %v2080 = vadd.f32 %v2060, 1.4214138
    %v2081 = vadd.f32 %v2061, 1.4214138
    %v2082 = vadd.f32 %v2062, 1.4214138
    %v2083 = vadd.f32 %v2063, 1.4214138
    %v2084 = vadd.f32 %v2064, 1.4214138
    %v2085 = vadd.f32 %v2065, 1.4214138
    %v2086 = vadd.f32 %v2066, 1.4214138
    %v2087 = vadd.f32 %v2067, 1.4214138
    %v2088 = vadd.f32 %v2068, 1.4214138
    %v2089 = vadd.f32 %v2069, 1.4214138
    %v2090 = vadd.f32 %v2070, 1.4214138
    %v2091 = vadd.f32 %v2071, 1.4214138
    %v2092 = vadd.f32 %v2072, 1.4214138
    %v2093 = vadd.f32 %v2073, 1.4214138
    %v2094 = vadd.f32 %v2074, 1.4214138
    %v2095 = vadd.f32 %v2075, 1.4214138
    %v2096 = vmul.f32 %v1977, %v2076
    %v2097 = vmul.f32 %v1979, %v2077
    %v2098 = vmul.f32 %v1981, %v2078
    %v2099 = vmul.f32 %v1983, %v2079
    %v2100 = vmul.f32 %v1985, %v2080
    %v2101 = vmul.f32 %v1987, %v2081
    %v2102 = vmul.f32 %v1989, %v2082
    %v2103 = vmul.f32 %v1991, %v2083
    %v2104 = vmul.f32 %v1993, %v2084
    %v2105 = vmul.f32 %v1995, %v2085
    %v2106 = vmul.f32 %v1997, %v2086
    %v2107 = vmul.f32 %v1999, %v2087
    %v2108 = vmul.f32 %v2001, %v2088
    %v2109 = vmul.f32 %v2003, %v2089
    %v2110 = vmul.f32 %v2005, %v2090
    %v2111 = vmul.f32 %v2007, %v2091
    %v2112 = vmul.f32 %v2009, %v2092
    %v2113 = vmul.f32 %v2011, %v2093
    %v2114 = vmul.f32 %v2013, %v2094
    %v2115 = vmul.f32 %v2015, %v2095
    %v2116 = vadd.f32 %v2096, -0.28449672
    %v2117 = vadd.f32 %v2097, -0.28449672
    %v2118 = vadd.f32 %v2098, -0.28449672
    %v2119 = vadd.f32 %v2099, -0.28449672
    %v2120 = vadd.f32 %v2100, -0.28449672
    %v2121 = vadd.f32 %v2101, -0.28449672
    %v2122 = vadd.f32 %v2102, -0.28449672
    %v2123 = vadd.f32 %v2103, -0.28449672
    %v2124 = vadd.f32 %v2104, -0.28449672
    %v2125 = vadd.f32 %v2105, -0.28449672
    %v2126 = vadd.f32 %v2106, -0.28449672
    %v2127 = vadd.f32 %v2107, -0.28449672
    %v2128 = vadd.f32 %v2108, -0.28449672
    %v2129 = vadd.f32 %v2109, -0.28449672
    %v2130 = vadd.f32 %v2110, -0.28449672
    %v2131 = vadd.f32 %v2111, -0.28449672
    %v2132 = vadd.f32 %v2112, -0.28449672
    %v2133 = vadd.f32 %v2113, -0.28449672
    %v2134 = vadd.f32 %v2114, -0.28449672
    %v2135 = vadd.f32 %v2115, -0.28449672
    %v2136 = vmul.f32 %v1977, %v2116
    %v2137 = vmul.f32 %v1979, %v2117
    %v2138 = vmul.f32 %v1981, %v2118
    %v2139 = vmul.f32 %v1983, %v2119
    %v2140 = vmul.f32 %v1985, %v2120
    %v2141 = vmul.f32 %v1987, %v2121
    %v2142 = vmul.f32 %v1989, %v2122
    %v2143 = vmul.f32 %v1991, %v2123
    %v2144 = vmul.f32 %v1993, %v2124
    %v2145 = vmul.f32 %v1995, %v2125
    %v2146 = vmul.f32 %v1997, %v2126
    %v2147 = vmul.f32 %v1999, %v2127
    %v2148 = vmul.f32 %v2001, %v2128
    %v2149 = vmul.f32 %v2003, %v2129
    %v2150 = vmul.f32 %v2005, %v2130
    %v2151 = vmul.f32 %v2007, %v2131
    %v2152 = vmul.f32 %v2009, %v2132
    %v2153 = vmul.f32 %v2011, %v2133
    %v2154 = vmul.f32 %v2013, %v2134
    %v2155 = vmul.f32 %v2015, %v2135
    %v2156 = vadd.f32 %v2136, 0.2548296
    %v2157 = vadd.f32 %v2137, 0.2548296
    %v2158 = vadd.f32 %v2138, 0.2548296
    %v2159 = vadd.f32 %v2139, 0.2548296
    %v2160 = vadd.f32 %v2140, 0.2548296
    %v2161 = vadd.f32 %v2141, 0.2548296
    %v2162 = vadd.f32 %v2142, 0.2548296
    %v2163 = vadd.f32 %v2143, 0.2548296
    %v2164 = vadd.f32 %v2144, 0.2548296
    %v2165 = vadd.f32 %v2145, 0.2548296
    %v2166 = vadd.f32 %v2146, 0.2548296
    %v2167 = vadd.f32 %v2147, 0.2548296
    %v2168 = vadd.f32 %v2148, 0.2548296
    %v2169 = vadd.f32 %v2149, 0.2548296
    %v2170 = vadd.f32 %v2150, 0.2548296
    %v2171 = vadd.f32 %v2151, 0.2548296
    %v2172 = vadd.f32 %v2152, 0.2548296
    %v2173 = vadd.f32 %v2153, 0.2548296
    %v2174 = vadd.f32 %v2154, 0.2548296
    %v2175 = vadd.f32 %v2155, 0.2548296
    %v2176 = vmul.f32 %v1977, %v2156
    %v2177 = vmul.f32 %v1979, %v2157
    %v2178 = vmul.f32 %v1981, %v2158
    %v2179 = vmul.f32 %v1983, %v2159
    %v2180 = vmul.f32 %v1985, %v2160
    %v2181 = vmul.f32 %v1987, %v2161
    %v2182 = vmul.f32 %v1989, %v2162
    %v2183 = vmul.f32 %v1991, %v2163
    %v2184 = vmul.f32 %v1993, %v2164
    %v2185 = vmul.f32 %v1995, %v2165
    %v2186 = vmul.f32 %v1997, %v2166
    %v2187 = vmul.f32 %v1999, %v2167
    %v2188 = vmul.f32 %v2001, %v2168
    %v2189 = vmul.f32 %v2003, %v2169
    %v2190 = vmul.f32 %v2005, %v2170
    %v2191 = vmul.f32 %v2007, %v2171
    %v2192 = vmul.f32 %v2009, %v2172
    %v2193 = vmul.f32 %v2011, %v2173
    %v2194 = vmul.f32 %v2013, %v2174
    %v2195 = vmul.f32 %v2015, %v2175
    %v2196 = vsub.f32 0.0, %v1916
    %v2197 = vsub.f32 0.0, %v1917
    %v2198 = vsub.f32 0.0, %v1918
    %v2199 = vsub.f32 0.0, %v1919
    %v2200 = vsub.f32 0.0, %v1920
    %v2201 = vsub.f32 0.0, %v1921
    %v2202 = vsub.f32 0.0, %v1922
    %v2203 = vsub.f32 0.0, %v1923
    %v2204 = vsub.f32 0.0, %v1924
    %v2205 = vsub.f32 0.0, %v1925
    %v2206 = vsub.f32 0.0, %v1926
    %v2207 = vsub.f32 0.0, %v1927
    %v2208 = vsub.f32 0.0, %v1928
    %v2209 = vsub.f32 0.0, %v1929
    %v2210 = vsub.f32 0.0, %v1930
    %v2211 = vsub.f32 0.0, %v1931
    %v2212 = vsub.f32 0.0, %v1932
    %v2213 = vsub.f32 0.0, %v1933
    %v2214 = vsub.f32 0.0, %v1934
    %v2215 = vsub.f32 0.0, %v1935
    %v2216 = vmul.f32 %v2196, %v1916
    %v2217 = vmul.f32 %v2197, %v1917
    %v2218 = vmul.f32 %v2198, %v1918
    %v2219 = vmul.f32 %v2199, %v1919
    %v2220 = vmul.f32 %v2200, %v1920
    %v2221 = vmul.f32 %v2201, %v1921
    %v2222 = vmul.f32 %v2202, %v1922
    %v2223 = vmul.f32 %v2203, %v1923
    %v2224 = vmul.f32 %v2204, %v1924
    %v2225 = vmul.f32 %v2205, %v1925
    %v2226 = vmul.f32 %v2206, %v1926
    %v2227 = vmul.f32 %v2207, %v1927
    %v2228 = vmul.f32 %v2208, %v1928
    %v2229 = vmul.f32 %v2209, %v1929
    %v2230 = vmul.f32 %v2210, %v1930
    %v2231 = vmul.f32 %v2211, %v1931
    %v2232 = vmul.f32 %v2212, %v1932
    %v2233 = vmul.f32 %v2213, %v1933
    %v2234 = vmul.f32 %v2214, %v1934
    %v2235 = vmul.f32 %v2215, %v1935
    %v2236 = vmul.f32 %v2216, 1.442695
    %v2237 = vpow.pop %v2236
    %v2238 = vmul.f32 %v2217, 1.442695
    %v2239 = vpow.pop %v2238
    %v2240 = vmul.f32 %v2218, 1.442695
    %v2241 = vpow.pop %v2240
    %v2242 = vmul.f32 %v2219, 1.442695
    %v2243 = vpow.pop %v2242
    %v2244 = vmul.f32 %v2220, 1.442695
    %v2245 = vpow.pop %v2244
    %v2246 = vmul.f32 %v2221, 1.442695
    %v2247 = vpow.pop %v2246
    %v2248 = vmul.f32 %v2222, 1.442695
    %v2249 = vpow.pop %v2248
    %v2250 = vmul.f32 %v2223, 1.442695
    %v2251 = vpow.pop %v2250
    %v2252 = vmul.f32 %v2224, 1.442695
    %v2253 = vpow.pop %v2252
    %v2254 = vmul.f32 %v2225, 1.442695
    %v2255 = vpow.pop %v2254
    %v2256 = vmul.f32 %v2226, 1.442695
    %v2257 = vpow.pop %v2256
    %v2258 = vmul.f32 %v2227, 1.442695
    %v2259 = vpow.pop %v2258
    %v2260 = vmul.f32 %v2228, 1.442695
    %v2261 = vpow.pop %v2260
    %v2262 = vmul.f32 %v2229, 1.442695
    %v2263 = vpow.pop %v2262
    %v2264 = vmul.f32 %v2230, 1.442695
    %v2265 = vpow.pop %v2264
    %v2266 = vmul.f32 %v2231, 1.442695
    %v2267 = vpow.pop %v2266
    %v2268 = vmul.f32 %v2232, 1.442695
    %v2269 = vpow.pop %v2268
    %v2270 = vmul.f32 %v2233, 1.442695
    %v2271 = vpow.pop %v2270
    %v2272 = vmul.f32 %v2234, 1.442695
    %v2273 = vpow.pop %v2272
    %v2274 = vmul.f32 %v2235, 1.442695
    %v2275 = vpow.pop %v2274
    %v2276 = vmul.f32 %v2176, %v2237
    %v2277 = vmul.f32 %v2177, %v2239
    %v2278 = vmul.f32 %v2178, %v2241
    %v2279 = vmul.f32 %v2179, %v2243
    %v2280 = vmul.f32 %v2180, %v2245
    %v2281 = vmul.f32 %v2181, %v2247
    %v2282 = vmul.f32 %v2182, %v2249
    %v2283 = vmul.f32 %v2183, %v2251
    %v2284 = vmul.f32 %v2184, %v2253
    %v2285 = vmul.f32 %v2185, %v2255
    %v2286 = vmul.f32 %v2186, %v2257
    %v2287 = vmul.f32 %v2187, %v2259
    %v2288 = vmul.f32 %v2188, %v2261
    %v2289 = vmul.f32 %v2189, %v2263
    %v2290 = vmul.f32 %v2190, %v2265
    %v2291 = vmul.f32 %v2191, %v2267
    %v2292 = vmul.f32 %v2192, %v2269
    %v2293 = vmul.f32 %v2193, %v2271
    %v2294 = vmul.f32 %v2194, %v2273
    %v2295 = vmul.f32 %v2195, %v2275
    %v2296 = vsub.f32 1.0, %v2276
    %v2297 = vsub.f32 1.0, %v2277
    %v2298 = vsub.f32 1.0, %v2278
    %v2299 = vsub.f32 1.0, %v2279
    %v2300 = vsub.f32 1.0, %v2280
    %v2301 = vsub.f32 1.0, %v2281
    %v2302 = vsub.f32 1.0, %v2282
    %v2303 = vsub.f32 1.0, %v2283
    %v2304 = vsub.f32 1.0, %v2284
    %v2305 = vsub.f32 1.0, %v2285
    %v2306 = vsub.f32 1.0, %v2286
    %v2307 = vsub.f32 1.0, %v2287
    %v2308 = vsub.f32 1.0, %v2288
    %v2309 = vsub.f32 1.0, %v2289
    %v2310 = vsub.f32 1.0, %v2290
    %v2311 = vsub.f32 1.0, %v2291
    %v2312 = vsub.f32 1.0, %v2292
    %v2313 = vsub.f32 1.0, %v2293
    %v2314 = vsub.f32 1.0, %v2294
    %v2315 = vsub.f32 1.0, %v2295
    %vm2316 = vcmp.ge.f32.partialorder %v1896, 0.0
    %vm2317 = vcmp.ge.f32.partialorder %v1897, 0.0
    %vm2318 = vcmp.ge.f32.partialorder %v1898, 0.0
    %vm2319 = vcmp.ge.f32.partialorder %v1899, 0.0
    %vm2320 = vcmp.ge.f32.partialorder %v1900, 0.0
    %vm2321 = vcmp.ge.f32.partialorder %v1901, 0.0
    %vm2322 = vcmp.ge.f32.partialorder %v1902, 0.0
    %vm2323 = vcmp.ge.f32.partialorder %v1903, 0.0
    %vm2324 = vcmp.ge.f32.partialorder %v1904, 0.0
    %vm2325 = vcmp.ge.f32.partialorder %v1905, 0.0
    %vm2326 = vcmp.ge.f32.partialorder %v1906, 0.0
    %vm2327 = vcmp.ge.f32.partialorder %v1907, 0.0
    %vm2328 = vcmp.ge.f32.partialorder %v1908, 0.0
    %vm2329 = vcmp.ge.f32.partialorder %v1909, 0.0
    %vm2330 = vcmp.ge.f32.partialorder %v1910, 0.0
    %vm2331 = vcmp.ge.f32.partialorder %v1911, 0.0
    %vm2332 = vcmp.ge.f32.partialorder %v1912, 0.0
    %vm2333 = vcmp.ge.f32.partialorder %v1913, 0.0
    %vm2334 = vcmp.ge.f32.partialorder %v1914, 0.0
    %vm2335 = vcmp.ge.f32.partialorder %v1915, 0.0
    %v2336 = vsub.f32 0.0, %v2296
    %v2337 = vsub.f32 0.0, %v2297
    %v2338 = vsub.f32 0.0, %v2298
    %v2339 = vsub.f32 0.0, %v2299
    %v2340 = vsub.f32 0.0, %v2300
    %v2341 = vsub.f32 0.0, %v2301
    %v2342 = vsub.f32 0.0, %v2302
    %v2343 = vsub.f32 0.0, %v2303
    %v2344 = vsub.f32 0.0, %v2304
    %v2345 = vsub.f32 0.0, %v2305
    %v2346 = vsub.f32 0.0, %v2306
    %v2347 = vsub.f32 0.0, %v2307
    %v2348 = vsub.f32 0.0, %v2308
    %v2349 = vsub.f32 0.0, %v2309
    %v2350 = vsub.f32 0.0, %v2310
    %v2351 = vsub.f32 0.0, %v2311
    %v2352 = vsub.f32 0.0, %v2312
    %v2353 = vsub.f32 0.0, %v2313
    %v2354 = vsub.f32 0.0, %v2314
    %v2355 = vsub.f32 0.0, %v2315
    %v2356 = vsel %vm2316, %v2296, %v2336
    %v2357 = vsel %vm2317, %v2297, %v2337
    %v2358 = vsel %vm2318, %v2298, %v2338
    %v2359 = vsel %vm2319, %v2299, %v2339
    %v2360 = vsel %vm2320, %v2300, %v2340
    %v2361 = vsel %vm2321, %v2301, %v2341
    %v2362 = vsel %vm2322, %v2302, %v2342
    %v2363 = vsel %vm2323, %v2303, %v2343
    %v2364 = vsel %vm2324, %v2304, %v2344
    %v2365 = vsel %vm2325, %v2305, %v2345
    %v2366 = vsel %vm2326, %v2306, %v2346
    %v2367 = vsel %vm2327, %v2307, %v2347
    %v2368 = vsel %vm2328, %v2308, %v2348
    %v2369 = vsel %vm2329, %v2309, %v2349
    %v2370 = vsel %vm2330, %v2310, %v2350
    %v2371 = vsel %vm2331, %v2311, %v2351
    %v2372 = vsel %vm2332, %v2312, %v2352
    %v2373 = vsel %vm2333, %v2313, %v2353
    %v2374 = vsel %vm2334, %v2314, %v2354
    %v2375 = vsel %vm2335, %v2315, %v2355
    %v2376 = vmul.f32 %v1848, 0.5
    %v2377 = vmul.f32 %v1850, 0.5
    %v2378 = vmul.f32 %v1852, 0.5
    %v2379 = vmul.f32 %v1854, 0.5
    %v2380 = vmul.f32 %v1858, 0.5
    %v2381 = vmul.f32 %v1860, 0.5
    %v2382 = vmul.f32 %v1862, 0.5
    %v2383 = vmul.f32 %v1864, 0.5
    %v2384 = vmul.f32 %v1868, 0.5
    %v2385 = vmul.f32 %v1870, 0.5
    %v2386 = vmul.f32 %v1872, 0.5
    %v2387 = vmul.f32 %v1874, 0.5
    %v2388 = vmul.f32 %v1878, 0.5
    %v2389 = vmul.f32 %v1880, 0.5
    %v2390 = vmul.f32 %v1882, 0.5
    %v2391 = vmul.f32 %v1884, 0.5
    %v2392 = vmul.f32 %v1888, 0.5
    %v2393 = vmul.f32 %v1890, 0.5
    %v2394 = vmul.f32 %v1892, 0.5
    %v2395 = vmul.f32 %v1894, 0.5
    %v2396 = vadd.f32 %v2356, 1.0
    %v2397 = vadd.f32 %v2357, 1.0
    %v2398 = vadd.f32 %v2358, 1.0
    %v2399 = vadd.f32 %v2359, 1.0
    %v2400 = vadd.f32 %v2360, 1.0
    %v2401 = vadd.f32 %v2361, 1.0
    %v2402 = vadd.f32 %v2362, 1.0
    %v2403 = vadd.f32 %v2363, 1.0
    %v2404 = vadd.f32 %v2364, 1.0
    %v2405 = vadd.f32 %v2365, 1.0
    %v2406 = vadd.f32 %v2366, 1.0
    %v2407 = vadd.f32 %v2367, 1.0
    %v2408 = vadd.f32 %v2368, 1.0
    %v2409 = vadd.f32 %v2369, 1.0
    %v2410 = vadd.f32 %v2370, 1.0
    %v2411 = vadd.f32 %v2371, 1.0
    %v2412 = vadd.f32 %v2372, 1.0
    %v2413 = vadd.f32 %v2373, 1.0
    %v2414 = vadd.f32 %v2374, 1.0
    %v2415 = vadd.f32 %v2375, 1.0
    %v2416 = vmul.f32 %v2376, %v2396
    %v2417 = vmul.f32 %v2377, %v2397
    %v2418 = vmul.f32 %v2378, %v2398
    %v2419 = vmul.f32 %v2379, %v2399
    %v2420 = vmul.f32 %v2380, %v2400
    %v2421 = vmul.f32 %v2381, %v2401
    %v2422 = vmul.f32 %v2382, %v2402
    %v2423 = vmul.f32 %v2383, %v2403
    %v2424 = vmul.f32 %v2384, %v2404
    %v2425 = vmul.f32 %v2385, %v2405
    %v2426 = vmul.f32 %v2386, %v2406
    %v2427 = vmul.f32 %v2387, %v2407
    %v2428 = vmul.f32 %v2388, %v2408
    %v2429 = vmul.f32 %v2389, %v2409
    %v2430 = vmul.f32 %v2390, %v2410
    %v2431 = vmul.f32 %v2391, %v2411
    %v2432 = vmul.f32 %v2392, %v2412
    %v2433 = vmul.f32 %v2393, %v2413
    %v2434 = vmul.f32 %v2394, %v2414
    %v2435 = vmul.f32 %v2395, %v2415
    %v2436 = vld [vmem:[#allocation5] sm:$0xff]
    %v2437 = vld [vmem:[#allocation5 + $0x8] sm:$0xff]
    %v2438 = vld [vmem:[#allocation5 + $0x10] sm:$0xff]
    %v2439 = vld [vmem:[#allocation5 + $0x18] sm:$0xff]
    %v2440 = vld [vmem:[#allocation5 + $0x20] sm:$0xff]
    %v2441 = vld [vmem:[#allocation5 + $0x28] sm:$0xff]
    %v2442 = vld [vmem:[#allocation5 + $0x30] sm:$0xff]
    %v2443 = vld [vmem:[#allocation5 + $0x38] sm:$0xff]
    %v2444 = vld [vmem:[#allocation5 + $0x40] sm:$0xff]
    %v2445 = vld [vmem:[#allocation5 + $0x48] sm:$0xff]
    %v2446 = vld [vmem:[#allocation5 + $0x50] sm:$0xff]
    %v2447 = vld [vmem:[#allocation5 + $0x58] sm:$0xff]
    %v2448 = vld [vmem:[#allocation5 + $0x60] sm:$0xff]
    %v2449 = vld [vmem:[#allocation5 + $0x68] sm:$0xff]
    %v2450 = vld [vmem:[#allocation5 + $0x70] sm:$0xff]
    %v2451 = vld [vmem:[#allocation5 + $0x78] sm:$0xff]
    %v2452 = vld [vmem:[#allocation5 + $0x80] sm:$0xff]
    %v2453 = vld [vmem:[#allocation5 + $0x88] sm:$0xff]
    %v2454 = vld [vmem:[#allocation5 + $0x90] sm:$0xff]
    %v2455 = vld [vmem:[#allocation5 + $0x98] sm:$0xff]
    %v2456 = vld [vmem:[#allocation5 + $0xa0] sm:$0xff]
    %v2457 = vld [vmem:[#allocation5 + $0xa8] sm:$0xff]
    %v2458 = vld [vmem:[#allocation5 + $0xb0] sm:$0xff]
    %v2459 = vld [vmem:[#allocation5 + $0xb8] sm:$0xff]
    %v2460 = vld [vmem:[#allocation5 + $0xc0] sm:$0xff]
    %v2461 = vld [vmem:[#allocation5 + $0xc8] sm:$0xff]
    %v2462 = vld [vmem:[#allocation5 + $0xd0] sm:$0xff]
    %v2463 = vld [vmem:[#allocation5 + $0xd8] sm:$0xff]
    %v2464 = vld [vmem:[#allocation5 + $0xe0] sm:$0xff]
    %v2465 = vld [vmem:[#allocation5 + $0xe8] sm:$0xff]
    %v2466 = vld [vmem:[#allocation5 + $0xf0] sm:$0xff]
    %v2467 = vld [vmem:[#allocation5 + $0xf8] sm:$0xff]
    %v2468 = vld [vmem:[#allocation5 + $0x100] sm:$0xff]
    %v2469 = vld [vmem:[#allocation5 + $0x108] sm:$0xff]
    %v2470 = vld [vmem:[#allocation5 + $0x110] sm:$0xff]
    %v2471 = vld [vmem:[#allocation5 + $0x118] sm:$0xff]
    %v2472 = vld [vmem:[#allocation5 + $0x120] sm:$0xff]
    %v2473 = vld [vmem:[#allocation5 + $0x128] sm:$0xff]
    %v2474 = vld [vmem:[#allocation5 + $0x130] sm:$0xff]
    %v2475 = vld [vmem:[#allocation5 + $0x138] sm:$0xff]
    %v2476 = vld [vmem:[#allocation5 + $0x140] sm:$0xff]
    %v2477 = vld [vmem:[#allocation5 + $0x148] sm:$0xff]
    %v2478 = vld [vmem:[#allocation5 + $0x150] sm:$0xff]
    %v2479 = vld [vmem:[#allocation5 + $0x158] sm:$0xff]
    %v2480 = vld [vmem:[#allocation5 + $0x160] sm:$0xff]
    %v2481 = vld [vmem:[#allocation5 + $0x168] sm:$0xff]
    %v2482 = vld [vmem:[#allocation5 + $0x170] sm:$0xff]
    %v2483 = vld [vmem:[#allocation5 + $0x178] sm:$0xff]
    %v2484 = vld [vmem:[#allocation5 + $0x180] sm:$0xff]
    %v2485 = vld [vmem:[#allocation5 + $0x188] sm:$0xff]
    %v2486 = vld [vmem:[#allocation5 + $0x190] sm:$0xff]
    %v2487 = vld [vmem:[#allocation5 + $0x198] sm:$0xff]
    %v2488 = vld [vmem:[#allocation5 + $0x1a0] sm:$0xff]
    %v2489 = vld [vmem:[#allocation5 + $0x1a8] sm:$0xff]
    %v2490 = vld [vmem:[#allocation5 + $0x1b0] sm:$0xff]
    %v2491 = vld [vmem:[#allocation5 + $0x1b8] sm:$0xff]
    %v2492 = vld [vmem:[#allocation5 + $0x1c0] sm:$0xff]
    %v2493 = vld [vmem:[#allocation5 + $0x1c8] sm:$0xff]
    %v2494 = vld [vmem:[#allocation5 + $0x1d0] sm:$0xff]
    %v2495 = vld [vmem:[#allocation5 + $0x1d8] sm:$0xff]
    %v2496 = vld [vmem:[#allocation5 + $0x1e0] sm:$0xff]
    %v2497 = vld [vmem:[#allocation5 + $0x1e8] sm:$0xff]
    %v2498 = vld [vmem:[#allocation5 + $0x1f0] sm:$0xff]
    %v2499 = vld [vmem:[#allocation5 + $0x1f8] sm:$0xff]
    %v2500 = vpack.c.bf16 %v2452, %v2436
    %v2501 = vpack.c.bf16 %v2453, %v2437
    %v2502 = vpack.c.bf16 %v2454, %v2438
    %v2503 = vpack.c.bf16 %v2455, %v2439
    %v2504 = vpack.c.bf16 %v2456, %v2440
    %v2505 = vpack.c.bf16 %v2457, %v2441
    %v2506 = vpack.c.bf16 %v2458, %v2442
    %v2507 = vpack.c.bf16 %v2459, %v2443
    %v2508 = vpack.c.bf16 %v2460, %v2444
    %v2509 = vpack.c.bf16 %v2461, %v2445
    %v2510 = vpack.c.bf16 %v2462, %v2446
    %v2511 = vpack.c.bf16 %v2463, %v2447
    %v2512 = vpack.c.bf16 %v2464, %v2448
    %v2513 = vpack.c.bf16 %v2465, %v2449
    %v2514 = vpack.c.bf16 %v2466, %v2450
    %v2515 = vpack.c.bf16 %v2467, %v2451
    %v2516 = vpack.c.bf16 %v2484, %v2468
    %v2517 = vpack.c.bf16 %v2485, %v2469
    %v2518 = vpack.c.bf16 %v2486, %v2470
    %v2519 = vpack.c.bf16 %v2487, %v2471
    %v2520 = vpack.c.bf16 %v2488, %v2472
    %v2521 = vpack.c.bf16 %v2489, %v2473
    %v2522 = vpack.c.bf16 %v2490, %v2474
    %v2523 = vpack.c.bf16 %v2491, %v2475
    %v2524 = vpack.c.bf16 %v2492, %v2476
    %v2525 = vpack.c.bf16 %v2493, %v2477
    %v2526 = vpack.c.bf16 %v2494, %v2478
    %v2527 = vpack.c.bf16 %v2495, %v2479
    %v2528 = vpack.c.bf16 %v2496, %v2480
    %v2529 = vpack.c.bf16 %v2497, %v2481
    %v2530 = vpack.c.bf16 %v2498, %v2482
    %v2531 = vpack.c.bf16 %v2499, %v2483
    %v2532 = vld [vmem:[%s7] sm:$0xff]
    %v2533 = vld [vmem:[%s7 + $0x8] sm:$0xff]
    %v2534 = vld [vmem:[%s7 + $0x10] sm:$0xff]
    %v2535 = vld [vmem:[%s7 + $0x18] sm:$0xff]
    %v2536 = vld [vmem:[%s7 + $0x20] sm:$0xff]
    %v2537 = vld [vmem:[%s7 + $0x28] sm:$0xff]
    %v2538 = vld [vmem:[%s7 + $0x30] sm:$0xff]
    %v2539 = vld [vmem:[%s7 + $0x38] sm:$0xff]
    %v2540 = vld [vmem:[%s7 + $0x40] sm:$0xff]
    %v2541 = vld [vmem:[%s7 + $0x48] sm:$0xff]
    %v2542 = vld [vmem:[%s7 + $0x50] sm:$0xff]
    %v2543 = vld [vmem:[%s7 + $0x58] sm:$0xff]
    %v2544 = vld [vmem:[%s7 + $0x60] sm:$0xff]
    %v2545 = vld [vmem:[%s7 + $0x68] sm:$0xff]
    %v2546 = vld [vmem:[%s7 + $0x70] sm:$0xff]
    %v2547 = vld [vmem:[%s7 + $0x78] sm:$0xff]
    %v2548 = vld [vmem:[%s7 + $0x80] sm:$0xff]
    %v2549 = vld [vmem:[%s7 + $0x88] sm:$0xff]
    %v2550 = vld [vmem:[%s7 + $0x90] sm:$0xff]
    %v2551 = vld [vmem:[%s7 + $0x98] sm:$0xff]
    %v2552 = vld [vmem:[%s7 + $0xa0] sm:$0xff]
    %v2553 = vld [vmem:[%s7 + $0xa8] sm:$0xff]
    %v2554 = vld [vmem:[%s7 + $0xb0] sm:$0xff]
    %v2555 = vld [vmem:[%s7 + $0xb8] sm:$0xff]
    %v2556 = vld [vmem:[%s7 + $0xc0] sm:$0xff]
    %v2557 = vld [vmem:[%s7 + $0xc8] sm:$0xff]
    %v2558 = vld [vmem:[%s7 + $0xd0] sm:$0xff]
    %v2559 = vld [vmem:[%s7 + $0xd8] sm:$0xff]
    %v2560 = vld [vmem:[%s7 + $0xe0] sm:$0xff]
    %v2561 = vld [vmem:[%s7 + $0xe8] sm:$0xff]
    %v2562 = vld [vmem:[%s7 + $0xf0] sm:$0xff]
    %v2563 = vld [vmem:[%s7 + $0xf8] sm:$0xff]
    %v2564 = vld [vmem:[%s7 + $0x100] sm:$0xff]
    %v2565 = vld [vmem:[%s7 + $0x108] sm:$0xff]
    %v2566 = vld [vmem:[%s7 + $0x110] sm:$0xff]
    %v2567 = vld [vmem:[%s7 + $0x118] sm:$0xff]
    %v2568 = vld [vmem:[%s7 + $0x120] sm:$0xff]
    %v2569 = vld [vmem:[%s7 + $0x128] sm:$0xff]
    %v2570 = vld [vmem:[%s7 + $0x130] sm:$0xff]
    %v2571 = vld [vmem:[%s7 + $0x138] sm:$0xff]
    %v2572 = vld [vmem:[%s7 + $0x140] sm:$0xff]
    %v2573 = vld [vmem:[%s7 + $0x148] sm:$0xff]
    %v2574 = vld [vmem:[%s7 + $0x150] sm:$0xff]
    %v2575 = vld [vmem:[%s7 + $0x158] sm:$0xff]
    %v2576 = vld [vmem:[%s7 + $0x160] sm:$0xff]
    %v2577 = vld [vmem:[%s7 + $0x168] sm:$0xff]
    %v2578 = vld [vmem:[%s7 + $0x170] sm:$0xff]
    %v2579 = vld [vmem:[%s7 + $0x178] sm:$0xff]
    %v2580 = vld [vmem:[%s7 + $0x180] sm:$0xff]
    %v2581 = vld [vmem:[%s7 + $0x188] sm:$0xff]
    %v2582 = vld [vmem:[%s7 + $0x190] sm:$0xff]
    %v2583 = vld [vmem:[%s7 + $0x198] sm:$0xff]
    %v2584 = vld [vmem:[%s7 + $0x1a0] sm:$0xff]
    %v2585 = vld [vmem:[%s7 + $0x1a8] sm:$0xff]
    %v2586 = vld [vmem:[%s7 + $0x1b0] sm:$0xff]
    %v2587 = vld [vmem:[%s7 + $0x1b8] sm:$0xff]
    %v2588 = vld [vmem:[%s7 + $0x1c0] sm:$0xff]
    %v2589 = vld [vmem:[%s7 + $0x1c8] sm:$0xff]
    %v2590 = vld [vmem:[%s7 + $0x1d0] sm:$0xff]
    %v2591 = vld [vmem:[%s7 + $0x1d8] sm:$0xff]
    %v2592 = vld [vmem:[%s7 + $0x1e0] sm:$0xff]
    %v2593 = vld [vmem:[%s7 + $0x1e8] sm:$0xff]
    %v2594 = vld [vmem:[%s7 + $0x1f0] sm:$0xff]
    %v2595 = vld [vmem:[%s7 + $0x1f8] sm:$0xff]
    %v2596 = vld [vmem:[%s7 + $0x200] sm:$0xff]
    %v2597 = vld [vmem:[%s7 + $0x208] sm:$0xff]
    %v2598 = vld [vmem:[%s7 + $0x210] sm:$0xff]
    %v2599 = vld [vmem:[%s7 + $0x218] sm:$0xff]
    %v2600 = vld [vmem:[%s7 + $0x220] sm:$0xff]
    %v2601 = vld [vmem:[%s7 + $0x228] sm:$0xff]
    %v2602 = vld [vmem:[%s7 + $0x230] sm:$0xff]
    %v2603 = vld [vmem:[%s7 + $0x238] sm:$0xff]
    %v2604 = vld [vmem:[%s7 + $0x240] sm:$0xff]
    %v2605 = vld [vmem:[%s7 + $0x248] sm:$0xff]
    %v2606 = vld [vmem:[%s7 + $0x250] sm:$0xff]
    %v2607 = vld [vmem:[%s7 + $0x258] sm:$0xff]
    %v2608 = vld [vmem:[%s7 + $0x260] sm:$0xff]
    %v2609 = vld [vmem:[%s7 + $0x268] sm:$0xff]
    %v2610 = vld [vmem:[%s7 + $0x270] sm:$0xff]
    %v2611 = vld [vmem:[%s7 + $0x278] sm:$0xff]
    %v2612 = vld [vmem:[%s7 + $0x280] sm:$0xff]
    %v2613 = vld [vmem:[%s7 + $0x288] sm:$0xff]
    %v2614 = vld [vmem:[%s7 + $0x290] sm:$0xff]
    %v2615 = vld [vmem:[%s7 + $0x298] sm:$0xff]
    %v2616 = vld [vmem:[%s7 + $0x2a0] sm:$0xff]
    %v2617 = vld [vmem:[%s7 + $0x2a8] sm:$0xff]
    %v2618 = vld [vmem:[%s7 + $0x2b0] sm:$0xff]
    %v2619 = vld [vmem:[%s7 + $0x2b8] sm:$0xff]
    %v2620 = vld [vmem:[%s7 + $0x2c0] sm:$0xff]
    %v2621 = vld [vmem:[%s7 + $0x2c8] sm:$0xff]
    %v2622 = vld [vmem:[%s7 + $0x2d0] sm:$0xff]
    %v2623 = vld [vmem:[%s7 + $0x2d8] sm:$0xff]
    %v2624 = vld [vmem:[%s7 + $0x2e0] sm:$0xff]
    %v2625 = vld [vmem:[%s7 + $0x2e8] sm:$0xff]
    %v2626 = vld [vmem:[%s7 + $0x2f0] sm:$0xff]
    %v2627 = vld [vmem:[%s7 + $0x2f8] sm:$0xff]
    %v2628 = vld [vmem:[%s7 + $0x300] sm:$0xff]
    %v2629 = vld [vmem:[%s7 + $0x308] sm:$0xff]
    %v2630 = vld [vmem:[%s7 + $0x310] sm:$0xff]
    %v2631 = vld [vmem:[%s7 + $0x318] sm:$0xff]
    %v2632 = vld [vmem:[%s7 + $0x320] sm:$0xff]
    %v2633 = vld [vmem:[%s7 + $0x328] sm:$0xff]
    %v2634 = vld [vmem:[%s7 + $0x330] sm:$0xff]
    %v2635 = vld [vmem:[%s7 + $0x338] sm:$0xff]
    %v2636 = vld [vmem:[%s7 + $0x340] sm:$0xff]
    %v2637 = vld [vmem:[%s7 + $0x348] sm:$0xff]
    %v2638 = vld [vmem:[%s7 + $0x350] sm:$0xff]
    %v2639 = vld [vmem:[%s7 + $0x358] sm:$0xff]
    %v2640 = vld [vmem:[%s7 + $0x360] sm:$0xff]
    %v2641 = vld [vmem:[%s7 + $0x368] sm:$0xff]
    %v2642 = vld [vmem:[%s7 + $0x370] sm:$0xff]
    %v2643 = vld [vmem:[%s7 + $0x378] sm:$0xff]
    %v2644 = vld [vmem:[%s7 + $0x380] sm:$0xff]
    %v2645 = vld [vmem:[%s7 + $0x388] sm:$0xff]
    %v2646 = vld [vmem:[%s7 + $0x390] sm:$0xff]
    %v2647 = vld [vmem:[%s7 + $0x398] sm:$0xff]
    %v2648 = vld [vmem:[%s7 + $0x3a0] sm:$0xff]
    %v2649 = vld [vmem:[%s7 + $0x3a8] sm:$0xff]
    %v2650 = vld [vmem:[%s7 + $0x3b0] sm:$0xff]
    %v2651 = vld [vmem:[%s7 + $0x3b8] sm:$0xff]
    %v2652 = vld [vmem:[%s7 + $0x3c0] sm:$0xff]
    %v2653 = vld [vmem:[%s7 + $0x3c8] sm:$0xff]
    %v2654 = vld [vmem:[%s7 + $0x3d0] sm:$0xff]
    %v2655 = vld [vmem:[%s7 + $0x3d8] sm:$0xff]
    %v2656 = vld [vmem:[%s7 + $0x3e0] sm:$0xff]
    %v2657 = vld [vmem:[%s7 + $0x3e8] sm:$0xff]
    %v2658 = vld [vmem:[%s7 + $0x3f0] sm:$0xff]
    %v2659 = vld [vmem:[%s7 + $0x3f8] sm:$0xff]
    %v2660 = vld [vmem:[%s7 + $0x400] sm:$0xff]
    %v2661 = vld [vmem:[%s7 + $0x408] sm:$0xff]
    %v2662 = vld [vmem:[%s7 + $0x410] sm:$0xff]
    %v2663 = vld [vmem:[%s7 + $0x418] sm:$0xff]
    %v2664 = vld [vmem:[%s7 + $0x420] sm:$0xff]
    %v2665 = vld [vmem:[%s7 + $0x428] sm:$0xff]
    %v2666 = vld [vmem:[%s7 + $0x430] sm:$0xff]
    %v2667 = vld [vmem:[%s7 + $0x438] sm:$0xff]
    %v2668 = vld [vmem:[%s7 + $0x440] sm:$0xff]
    %v2669 = vld [vmem:[%s7 + $0x448] sm:$0xff]
    %v2670 = vld [vmem:[%s7 + $0x450] sm:$0xff]
    %v2671 = vld [vmem:[%s7 + $0x458] sm:$0xff]
    %v2672 = vld [vmem:[%s7 + $0x460] sm:$0xff]
    %v2673 = vld [vmem:[%s7 + $0x468] sm:$0xff]
    %v2674 = vld [vmem:[%s7 + $0x470] sm:$0xff]
    %v2675 = vld [vmem:[%s7 + $0x478] sm:$0xff]
    %v2676 = vld [vmem:[%s7 + $0x480] sm:$0xff]
    %v2677 = vld [vmem:[%s7 + $0x488] sm:$0xff]
    %v2678 = vld [vmem:[%s7 + $0x490] sm:$0xff]
    %v2679 = vld [vmem:[%s7 + $0x498] sm:$0xff]
    %v2680 = vld [vmem:[%s7 + $0x4a0] sm:$0xff]
    %v2681 = vld [vmem:[%s7 + $0x4a8] sm:$0xff]
    %v2682 = vld [vmem:[%s7 + $0x4b0] sm:$0xff]
    %v2683 = vld [vmem:[%s7 + $0x4b8] sm:$0xff]
    %v2684 = vld [vmem:[%s7 + $0x4c0] sm:$0xff]
    %v2685 = vld [vmem:[%s7 + $0x4c8] sm:$0xff]
    %v2686 = vld [vmem:[%s7 + $0x4d0] sm:$0xff]
    %v2687 = vld [vmem:[%s7 + $0x4d8] sm:$0xff]
    %v2688 = vld [vmem:[%s7 + $0x4e0] sm:$0xff]
    %v2689 = vld [vmem:[%s7 + $0x4e8] sm:$0xff]
    %v2690 = vld [vmem:[%s7 + $0x4f0] sm:$0xff]
    %v2691 = vld [vmem:[%s7 + $0x4f8] sm:$0xff]
    %v2692 = vld [vmem:[%s7 + $0x500] sm:$0xff]
    %v2693 = vld [vmem:[%s7 + $0x508] sm:$0xff]
    %v2694 = vld [vmem:[%s7 + $0x510] sm:$0xff]
    %v2695 = vld [vmem:[%s7 + $0x518] sm:$0xff]
    %v2696 = vld [vmem:[%s7 + $0x520] sm:$0xff]
    %v2697 = vld [vmem:[%s7 + $0x528] sm:$0xff]
    %v2698 = vld [vmem:[%s7 + $0x530] sm:$0xff]
    %v2699 = vld [vmem:[%s7 + $0x538] sm:$0xff]
    %v2700 = vld [vmem:[%s7 + $0x540] sm:$0xff]
    %v2701 = vld [vmem:[%s7 + $0x548] sm:$0xff]
    %v2702 = vld [vmem:[%s7 + $0x550] sm:$0xff]
    %v2703 = vld [vmem:[%s7 + $0x558] sm:$0xff]
    %v2704 = vld [vmem:[%s7 + $0x560] sm:$0xff]
    %v2705 = vld [vmem:[%s7 + $0x568] sm:$0xff]
    %v2706 = vld [vmem:[%s7 + $0x570] sm:$0xff]
    %v2707 = vld [vmem:[%s7 + $0x578] sm:$0xff]
    %v2708 = vld [vmem:[%s7 + $0x580] sm:$0xff]
    %v2709 = vld [vmem:[%s7 + $0x588] sm:$0xff]
    %v2710 = vld [vmem:[%s7 + $0x590] sm:$0xff]
    %v2711 = vld [vmem:[%s7 + $0x598] sm:$0xff]
    %v2712 = vld [vmem:[%s7 + $0x5a0] sm:$0xff]
    %v2713 = vld [vmem:[%s7 + $0x5a8] sm:$0xff]
    %v2714 = vld [vmem:[%s7 + $0x5b0] sm:$0xff]
    %v2715 = vld [vmem:[%s7 + $0x5b8] sm:$0xff]
    %v2716 = vld [vmem:[%s7 + $0x5c0] sm:$0xff]
    %v2717 = vld [vmem:[%s7 + $0x5c8] sm:$0xff]
    %v2718 = vld [vmem:[%s7 + $0x5d0] sm:$0xff]
    %v2719 = vld [vmem:[%s7 + $0x5d8] sm:$0xff]
    %v2720 = vld [vmem:[%s7 + $0x5e0] sm:$0xff]
    %v2721 = vld [vmem:[%s7 + $0x5e8] sm:$0xff]
    %v2722 = vld [vmem:[%s7 + $0x5f0] sm:$0xff]
    %v2723 = vld [vmem:[%s7 + $0x5f8] sm:$0xff]
    %v2724 = vld [vmem:[%s7 + $0x600] sm:$0xff]
    %v2725 = vld [vmem:[%s7 + $0x608] sm:$0xff]
    %v2726 = vld [vmem:[%s7 + $0x610] sm:$0xff]
    %v2727 = vld [vmem:[%s7 + $0x618] sm:$0xff]
    %v2728 = vld [vmem:[%s7 + $0x620] sm:$0xff]
    %v2729 = vld [vmem:[%s7 + $0x628] sm:$0xff]
    %v2730 = vld [vmem:[%s7 + $0x630] sm:$0xff]
    %v2731 = vld [vmem:[%s7 + $0x638] sm:$0xff]
    %v2732 = vld [vmem:[%s7 + $0x640] sm:$0xff]
    %v2733 = vld [vmem:[%s7 + $0x648] sm:$0xff]
    %v2734 = vld [vmem:[%s7 + $0x650] sm:$0xff]
    %v2735 = vld [vmem:[%s7 + $0x658] sm:$0xff]
    %v2736 = vld [vmem:[%s7 + $0x660] sm:$0xff]
    %v2737 = vld [vmem:[%s7 + $0x668] sm:$0xff]
    %v2738 = vld [vmem:[%s7 + $0x670] sm:$0xff]
    %v2739 = vld [vmem:[%s7 + $0x678] sm:$0xff]
    %v2740 = vld [vmem:[%s7 + $0x680] sm:$0xff]
    %v2741 = vld [vmem:[%s7 + $0x688] sm:$0xff]
    %v2742 = vld [vmem:[%s7 + $0x690] sm:$0xff]
    %v2743 = vld [vmem:[%s7 + $0x698] sm:$0xff]
    %v2744 = vld [vmem:[%s7 + $0x6a0] sm:$0xff]
    %v2745 = vld [vmem:[%s7 + $0x6a8] sm:$0xff]
    %v2746 = vld [vmem:[%s7 + $0x6b0] sm:$0xff]
    %v2747 = vld [vmem:[%s7 + $0x6b8] sm:$0xff]
    %v2748 = vld [vmem:[%s7 + $0x6c0] sm:$0xff]
    %v2749 = vld [vmem:[%s7 + $0x6c8] sm:$0xff]
    %v2750 = vld [vmem:[%s7 + $0x6d0] sm:$0xff]
    %v2751 = vld [vmem:[%s7 + $0x6d8] sm:$0xff]
    %v2752 = vld [vmem:[%s7 + $0x6e0] sm:$0xff]
    %v2753 = vld [vmem:[%s7 + $0x6e8] sm:$0xff]
    %v2754 = vld [vmem:[%s7 + $0x6f0] sm:$0xff]
    %v2755 = vld [vmem:[%s7 + $0x6f8] sm:$0xff]
    %v2756 = vld [vmem:[%s7 + $0x700] sm:$0xff]
    %v2757 = vld [vmem:[%s7 + $0x708] sm:$0xff]
    %v2758 = vld [vmem:[%s7 + $0x710] sm:$0xff]
    %v2759 = vld [vmem:[%s7 + $0x718] sm:$0xff]
    %v2760 = vld [vmem:[%s7 + $0x720] sm:$0xff]
    %v2761 = vld [vmem:[%s7 + $0x728] sm:$0xff]
    %v2762 = vld [vmem:[%s7 + $0x730] sm:$0xff]
    %v2763 = vld [vmem:[%s7 + $0x738] sm:$0xff]
    %v2764 = vld [vmem:[%s7 + $0x740] sm:$0xff]
    %v2765 = vld [vmem:[%s7 + $0x748] sm:$0xff]
    %v2766 = vld [vmem:[%s7 + $0x750] sm:$0xff]
    %v2767 = vld [vmem:[%s7 + $0x758] sm:$0xff]
    %v2768 = vld [vmem:[%s7 + $0x760] sm:$0xff]
    %v2769 = vld [vmem:[%s7 + $0x768] sm:$0xff]
    %v2770 = vld [vmem:[%s7 + $0x770] sm:$0xff]
    %v2771 = vld [vmem:[%s7 + $0x778] sm:$0xff]
    %v2772 = vld [vmem:[%s7 + $0x780] sm:$0xff]
    %v2773 = vld [vmem:[%s7 + $0x788] sm:$0xff]
    %v2774 = vld [vmem:[%s7 + $0x790] sm:$0xff]
    %v2775 = vld [vmem:[%s7 + $0x798] sm:$0xff]
    %v2776 = vld [vmem:[%s7 + $0x7a0] sm:$0xff]
    %v2777 = vld [vmem:[%s7 + $0x7a8] sm:$0xff]
    %v2778 = vld [vmem:[%s7 + $0x7b0] sm:$0xff]
    %v2779 = vld [vmem:[%s7 + $0x7b8] sm:$0xff]
    %v2780 = vld [vmem:[%s7 + $0x7c0] sm:$0xff]
    %v2781 = vld [vmem:[%s7 + $0x7c8] sm:$0xff]
    %v2782 = vld [vmem:[%s7 + $0x7d0] sm:$0xff]
    %v2783 = vld [vmem:[%s7 + $0x7d8] sm:$0xff]
    %v2784 = vld [vmem:[%s7 + $0x7e0] sm:$0xff]
    %v2785 = vld [vmem:[%s7 + $0x7e8] sm:$0xff]
    %v2786 = vld [vmem:[%s7 + $0x7f0] sm:$0xff]
    %v2787 = vld [vmem:[%s7 + $0x7f8] sm:$0xff]
    %v2788 = vld [vmem:[%s8] sm:$0x3]
    %v2790 = vlaneseq
    %v2791 = vshrl.u32 %v2790, 7
    %v2792 = vsub.s32 0, %v2791
    %v2793 = vrot.slane %v2788, %v2792
    %v2794 = vlaneseq
    %v2795 = vshrl.u32 %v2794, 7
    %v2796 = vsub.s32 1, %v2795
    %v2797 = vrot.slane %v2788, %v2796
    %v3056 = vunpack.c.l.b16 %v2532
    %v3057 = vunpack.c.h.b16 %v2532
    %v3058 = vunpack.c.l.b16 %v2533
    %v3059 = vunpack.c.h.b16 %v2533
    %v3060 = vunpack.c.l.b16 %v2534
    %v3061 = vunpack.c.h.b16 %v2534
    %v3062 = vunpack.c.l.b16 %v2535
    %v3063 = vunpack.c.h.b16 %v2535
    %v3064 = vunpack.c.l.b16 %v2536
    %v3065 = vunpack.c.h.b16 %v2536
    %v3066 = vunpack.c.l.b16 %v2537
    %v3067 = vunpack.c.h.b16 %v2537
    %v3068 = vunpack.c.l.b16 %v2538
    %v3069 = vunpack.c.h.b16 %v2538
    %v3070 = vunpack.c.l.b16 %v2539
    %v3071 = vunpack.c.h.b16 %v2539
    %v3072 = vunpack.c.l.b16 %v2540
    %v3073 = vunpack.c.h.b16 %v2540
    %v3074 = vunpack.c.l.b16 %v2541
    %v3075 = vunpack.c.h.b16 %v2541
    %v3076 = vunpack.c.l.b16 %v2542
    %v3077 = vunpack.c.h.b16 %v2542
    %v3078 = vunpack.c.l.b16 %v2543
    %v3079 = vunpack.c.h.b16 %v2543
    %v3080 = vunpack.c.l.b16 %v2544
    %v3081 = vunpack.c.h.b16 %v2544
    %v3082 = vunpack.c.l.b16 %v2545
    %v3083 = vunpack.c.h.b16 %v2545
    %v3084 = vunpack.c.l.b16 %v2546
    %v3085 = vunpack.c.h.b16 %v2546
    %v3086 = vunpack.c.l.b16 %v2547
    %v3087 = vunpack.c.h.b16 %v2547
    %v3088 = vunpack.c.l.b16 %v2548
    %v3089 = vunpack.c.h.b16 %v2548
    %v3090 = vunpack.c.l.b16 %v2549
    %v3091 = vunpack.c.h.b16 %v2549
    %v3092 = vunpack.c.l.b16 %v2550
    %v3093 = vunpack.c.h.b16 %v2550
    %v3094 = vunpack.c.l.b16 %v2551
    %v3095 = vunpack.c.h.b16 %v2551
    %v3096 = vunpack.c.l.b16 %v2552
    %v3097 = vunpack.c.h.b16 %v2552
    %v3098 = vunpack.c.l.b16 %v2553
    %v3099 = vunpack.c.h.b16 %v2553
    %v3100 = vunpack.c.l.b16 %v2554
    %v3101 = vunpack.c.h.b16 %v2554
    %v3102 = vunpack.c.l.b16 %v2555
    %v3103 = vunpack.c.h.b16 %v2555
    %v3104 = vunpack.c.l.b16 %v2556
    %v3105 = vunpack.c.h.b16 %v2556
    %v3106 = vunpack.c.l.b16 %v2557
    %v3107 = vunpack.c.h.b16 %v2557
    %v3108 = vunpack.c.l.b16 %v2558
    %v3109 = vunpack.c.h.b16 %v2558
    %v3110 = vunpack.c.l.b16 %v2559
    %v3111 = vunpack.c.h.b16 %v2559
    %v3112 = vunpack.c.l.b16 %v2560
    %v3113 = vunpack.c.h.b16 %v2560
    %v3114 = vunpack.c.l.b16 %v2561
    %v3115 = vunpack.c.h.b16 %v2561
    %v3116 = vunpack.c.l.b16 %v2562
    %v3117 = vunpack.c.h.b16 %v2562
    %v3118 = vunpack.c.l.b16 %v2563
    %v3119 = vunpack.c.h.b16 %v2563
    %v3120 = vunpack.c.l.b16 %v2564
    %v3121 = vunpack.c.h.b16 %v2564
    %v3122 = vunpack.c.l.b16 %v2565
    %v3123 = vunpack.c.h.b16 %v2565
    %v3124 = vunpack.c.l.b16 %v2566
    %v3125 = vunpack.c.h.b16 %v2566
    %v3126 = vunpack.c.l.b16 %v2567
    %v3127 = vunpack.c.h.b16 %v2567
    %v3128 = vunpack.c.l.b16 %v2568
    %v3129 = vunpack.c.h.b16 %v2568
    %v3130 = vunpack.c.l.b16 %v2569
    %v3131 = vunpack.c.h.b16 %v2569
    %v3132 = vunpack.c.l.b16 %v2570
    %v3133 = vunpack.c.h.b16 %v2570
    %v3134 = vunpack.c.l.b16 %v2571
    %v3135 = vunpack.c.h.b16 %v2571
    %v3136 = vunpack.c.l.b16 %v2572
    %v3137 = vunpack.c.h.b16 %v2572
    %v3138 = vunpack.c.l.b16 %v2573
    %v3139 = vunpack.c.h.b16 %v2573
    %v3140 = vunpack.c.l.b16 %v2574
    %v3141 = vunpack.c.h.b16 %v2574
    %v3142 = vunpack.c.l.b16 %v2575
    %v3143 = vunpack.c.h.b16 %v2575
    %v3144 = vunpack.c.l.b16 %v2576
    %v3145 = vunpack.c.h.b16 %v2576
    %v3146 = vunpack.c.l.b16 %v2577
    %v3147 = vunpack.c.h.b16 %v2577
    %v3148 = vunpack.c.l.b16 %v2578
    %v3149 = vunpack.c.h.b16 %v2578
    %v3150 = vunpack.c.l.b16 %v2579
    %v3151 = vunpack.c.h.b16 %v2579
    %v3152 = vunpack.c.l.b16 %v2580
    %v3153 = vunpack.c.h.b16 %v2580
    %v3154 = vunpack.c.l.b16 %v2581
    %v3155 = vunpack.c.h.b16 %v2581
    %v3156 = vunpack.c.l.b16 %v2582
    %v3157 = vunpack.c.h.b16 %v2582
    %v3158 = vunpack.c.l.b16 %v2583
    %v3159 = vunpack.c.h.b16 %v2583
    %v3160 = vunpack.c.l.b16 %v2584
    %v3161 = vunpack.c.h.b16 %v2584
    %v3162 = vunpack.c.l.b16 %v2585
    %v3163 = vunpack.c.h.b16 %v2585
    %v3164 = vunpack.c.l.b16 %v2586
    %v3165 = vunpack.c.h.b16 %v2586
    %v3166 = vunpack.c.l.b16 %v2587
    %v3167 = vunpack.c.h.b16 %v2587
    %v3168 = vunpack.c.l.b16 %v2588
    %v3169 = vunpack.c.h.b16 %v2588
    %v3170 = vunpack.c.l.b16 %v2589
    %v3171 = vunpack.c.h.b16 %v2589
    %v3172 = vunpack.c.l.b16 %v2590
    %v3173 = vunpack.c.h.b16 %v2590
    %v3174 = vunpack.c.l.b16 %v2591
    %v3175 = vunpack.c.h.b16 %v2591
    %v3176 = vunpack.c.l.b16 %v2592
    %v3177 = vunpack.c.h.b16 %v2592
    %v3178 = vunpack.c.l.b16 %v2593
    %v3179 = vunpack.c.h.b16 %v2593
    %v3180 = vunpack.c.l.b16 %v2594
    %v3181 = vunpack.c.h.b16 %v2594
    %v3182 = vunpack.c.l.b16 %v2595
    %v3183 = vunpack.c.h.b16 %v2595
    %v3184 = vunpack.c.l.b16 %v2596
    %v3185 = vunpack.c.h.b16 %v2596
    %v3186 = vunpack.c.l.b16 %v2597
    %v3187 = vunpack.c.h.b16 %v2597
    %v3188 = vunpack.c.l.b16 %v2598
    %v3189 = vunpack.c.h.b16 %v2598
    %v3190 = vunpack.c.l.b16 %v2599
    %v3191 = vunpack.c.h.b16 %v2599
    %v3192 = vunpack.c.l.b16 %v2600
    %v3193 = vunpack.c.h.b16 %v2600
    %v3194 = vunpack.c.l.b16 %v2601
    %v3195 = vunpack.c.h.b16 %v2601
    %v3196 = vunpack.c.l.b16 %v2602
    %v3197 = vunpack.c.h.b16 %v2602
    %v3198 = vunpack.c.l.b16 %v2603
    %v3199 = vunpack.c.h.b16 %v2603
    %v3200 = vunpack.c.l.b16 %v2604
    %v3201 = vunpack.c.h.b16 %v2604
    %v3202 = vunpack.c.l.b16 %v2605
    %v3203 = vunpack.c.h.b16 %v2605
    %v3204 = vunpack.c.l.b16 %v2606
    %v3205 = vunpack.c.h.b16 %v2606
    %v3206 = vunpack.c.l.b16 %v2607
    %v3207 = vunpack.c.h.b16 %v2607
    %v3208 = vunpack.c.l.b16 %v2608
    %v3209 = vunpack.c.h.b16 %v2608
    %v3210 = vunpack.c.l.b16 %v2609
    %v3211 = vunpack.c.h.b16 %v2609
    %v3212 = vunpack.c.l.b16 %v2610
    %v3213 = vunpack.c.h.b16 %v2610
    %v3214 = vunpack.c.l.b16 %v2611
    %v3215 = vunpack.c.h.b16 %v2611
    %v3216 = vunpack.c.l.b16 %v2612
    %v3217 = vunpack.c.h.b16 %v2612
    %v3218 = vunpack.c.l.b16 %v2613
    %v3219 = vunpack.c.h.b16 %v2613
    %v3220 = vunpack.c.l.b16 %v2614
    %v3221 = vunpack.c.h.b16 %v2614
    %v3222 = vunpack.c.l.b16 %v2615
    %v3223 = vunpack.c.h.b16 %v2615
    %v3224 = vunpack.c.l.b16 %v2616
    %v3225 = vunpack.c.h.b16 %v2616
    %v3226 = vunpack.c.l.b16 %v2617
    %v3227 = vunpack.c.h.b16 %v2617
    %v3228 = vunpack.c.l.b16 %v2618
    %v3229 = vunpack.c.h.b16 %v2618
    %v3230 = vunpack.c.l.b16 %v2619
    %v3231 = vunpack.c.h.b16 %v2619
    %v3232 = vunpack.c.l.b16 %v2620
    %v3233 = vunpack.c.h.b16 %v2620
    %v3234 = vunpack.c.l.b16 %v2621
    %v3235 = vunpack.c.h.b16 %v2621
    %v3236 = vunpack.c.l.b16 %v2622
    %v3237 = vunpack.c.h.b16 %v2622
    %v3238 = vunpack.c.l.b16 %v2623
    %v3239 = vunpack.c.h.b16 %v2623
    %v3240 = vunpack.c.l.b16 %v2624
    %v3241 = vunpack.c.h.b16 %v2624
    %v3242 = vunpack.c.l.b16 %v2625
    %v3243 = vunpack.c.h.b16 %v2625
    %v3244 = vunpack.c.l.b16 %v2626
    %v3245 = vunpack.c.h.b16 %v2626
    %v3246 = vunpack.c.l.b16 %v2627
    %v3247 = vunpack.c.h.b16 %v2627
    %v3248 = vunpack.c.l.b16 %v2628
    %v3249 = vunpack.c.h.b16 %v2628
    %v3250 = vunpack.c.l.b16 %v2629
    %v3251 = vunpack.c.h.b16 %v2629
    %v3252 = vunpack.c.l.b16 %v2630
    %v3253 = vunpack.c.h.b16 %v2630
    %v3254 = vunpack.c.l.b16 %v2631
    %v3255 = vunpack.c.h.b16 %v2631
    %v3256 = vunpack.c.l.b16 %v2632
    %v3257 = vunpack.c.h.b16 %v2632
    %v3258 = vunpack.c.l.b16 %v2633
    %v3259 = vunpack.c.h.b16 %v2633
    %v3260 = vunpack.c.l.b16 %v2634
    %v3261 = vunpack.c.h.b16 %v2634
    %v3262 = vunpack.c.l.b16 %v2635
    %v3263 = vunpack.c.h.b16 %v2635
    %v3264 = vunpack.c.l.b16 %v2636
    %v3265 = vunpack.c.h.b16 %v2636
    %v3266 = vunpack.c.l.b16 %v2637
    %v3267 = vunpack.c.h.b16 %v2637
    %v3268 = vunpack.c.l.b16 %v2638
    %v3269 = vunpack.c.h.b16 %v2638
    %v3270 = vunpack.c.l.b16 %v2639
    %v3271 = vunpack.c.h.b16 %v2639
    %v3272 = vunpack.c.l.b16 %v2640
    %v3273 = vunpack.c.h.b16 %v2640
    %v3274 = vunpack.c.l.b16 %v2641
    %v3275 = vunpack.c.h.b16 %v2641
    %v3276 = vunpack.c.l.b16 %v2642
    %v3277 = vunpack.c.h.b16 %v2642
    %v3278 = vunpack.c.l.b16 %v2643
    %v3279 = vunpack.c.h.b16 %v2643
    %v3280 = vunpack.c.l.b16 %v2644
    %v3281 = vunpack.c.h.b16 %v2644
    %v3282 = vunpack.c.l.b16 %v2645
    %v3283 = vunpack.c.h.b16 %v2645
    %v3284 = vunpack.c.l.b16 %v2646
    %v3285 = vunpack.c.h.b16 %v2646
    %v3286 = vunpack.c.l.b16 %v2647
    %v3287 = vunpack.c.h.b16 %v2647
    %v3288 = vunpack.c.l.b16 %v2648
    %v3289 = vunpack.c.h.b16 %v2648
    %v3290 = vunpack.c.l.b16 %v2649
    %v3291 = vunpack.c.h.b16 %v2649
    %v3292 = vunpack.c.l.b16 %v2650
    %v3293 = vunpack.c.h.b16 %v2650
    %v3294 = vunpack.c.l.b16 %v2651
    %v3295 = vunpack.c.h.b16 %v2651
    %v3296 = vunpack.c.l.b16 %v2652
    %v3297 = vunpack.c.h.b16 %v2652
    %v3298 = vunpack.c.l.b16 %v2653
    %v3299 = vunpack.c.h.b16 %v2653
    %v3300 = vunpack.c.l.b16 %v2654
    %v3301 = vunpack.c.h.b16 %v2654
    %v3302 = vunpack.c.l.b16 %v2655
    %v3303 = vunpack.c.h.b16 %v2655
    %v3304 = vunpack.c.l.b16 %v2656
    %v3305 = vunpack.c.h.b16 %v2656
    %v3306 = vunpack.c.l.b16 %v2657
    %v3307 = vunpack.c.h.b16 %v2657
    %v3308 = vunpack.c.l.b16 %v2658
    %v3309 = vunpack.c.h.b16 %v2658
    %v3310 = vunpack.c.l.b16 %v2659
    %v3311 = vunpack.c.h.b16 %v2659
    %v3312 = vunpack.c.l.b16 %v2660
    %v3313 = vunpack.c.h.b16 %v2660
    %v3314 = vunpack.c.l.b16 %v2661
    %v3315 = vunpack.c.h.b16 %v2661
    %v3316 = vunpack.c.l.b16 %v2662
    %v3317 = vunpack.c.h.b16 %v2662
    %v3318 = vunpack.c.l.b16 %v2663
    %v3319 = vunpack.c.h.b16 %v2663
    %v3320 = vunpack.c.l.b16 %v2664
    %v3321 = vunpack.c.h.b16 %v2664
    %v3322 = vunpack.c.l.b16 %v2665
    %v3323 = vunpack.c.h.b16 %v2665
    %v3324 = vunpack.c.l.b16 %v2666
    %v3325 = vunpack.c.h.b16 %v2666
    %v3326 = vunpack.c.l.b16 %v2667
    %v3327 = vunpack.c.h.b16 %v2667
    %v3328 = vunpack.c.l.b16 %v2668
    %v3329 = vunpack.c.h.b16 %v2668
    %v3330 = vunpack.c.l.b16 %v2669
    %v3331 = vunpack.c.h.b16 %v2669
    %v3332 = vunpack.c.l.b16 %v2670
    %v3333 = vunpack.c.h.b16 %v2670
    %v3334 = vunpack.c.l.b16 %v2671
    %v3335 = vunpack.c.h.b16 %v2671
    %v3336 = vunpack.c.l.b16 %v2672
    %v3337 = vunpack.c.h.b16 %v2672
    %v3338 = vunpack.c.l.b16 %v2673
    %v3339 = vunpack.c.h.b16 %v2673
    %v3340 = vunpack.c.l.b16 %v2674
    %v3341 = vunpack.c.h.b16 %v2674
    %v3342 = vunpack.c.l.b16 %v2675
    %v3343 = vunpack.c.h.b16 %v2675
    %v3344 = vunpack.c.l.b16 %v2676
    %v3345 = vunpack.c.h.b16 %v2676
    %v3346 = vunpack.c.l.b16 %v2677
    %v3347 = vunpack.c.h.b16 %v2677
    %v3348 = vunpack.c.l.b16 %v2678
    %v3349 = vunpack.c.h.b16 %v2678
    %v3350 = vunpack.c.l.b16 %v2679
    %v3351 = vunpack.c.h.b16 %v2679
    %v3352 = vunpack.c.l.b16 %v2680
    %v3353 = vunpack.c.h.b16 %v2680
    %v3354 = vunpack.c.l.b16 %v2681
    %v3355 = vunpack.c.h.b16 %v2681
    %v3356 = vunpack.c.l.b16 %v2682
    %v3357 = vunpack.c.h.b16 %v2682
    %v3358 = vunpack.c.l.b16 %v2683
    %v3359 = vunpack.c.h.b16 %v2683
    %v3360 = vunpack.c.l.b16 %v2684
    %v3361 = vunpack.c.h.b16 %v2684
    %v3362 = vunpack.c.l.b16 %v2685
    %v3363 = vunpack.c.h.b16 %v2685
    %v3364 = vunpack.c.l.b16 %v2686
    %v3365 = vunpack.c.h.b16 %v2686
    %v3366 = vunpack.c.l.b16 %v2687
    %v3367 = vunpack.c.h.b16 %v2687
    %v3368 = vunpack.c.l.b16 %v2688
    %v3369 = vunpack.c.h.b16 %v2688
    %v3370 = vunpack.c.l.b16 %v2689
    %v3371 = vunpack.c.h.b16 %v2689
    %v3372 = vunpack.c.l.b16 %v2690
    %v3373 = vunpack.c.h.b16 %v2690
    %v3374 = vunpack.c.l.b16 %v2691
    %v3375 = vunpack.c.h.b16 %v2691
    %v3376 = vunpack.c.l.b16 %v2692
    %v3377 = vunpack.c.h.b16 %v2692
    %v3378 = vunpack.c.l.b16 %v2693
    %v3379 = vunpack.c.h.b16 %v2693
    %v3380 = vunpack.c.l.b16 %v2694
    %v3381 = vunpack.c.h.b16 %v2694
    %v3382 = vunpack.c.l.b16 %v2695
    %v3383 = vunpack.c.h.b16 %v2695
    %v3384 = vunpack.c.l.b16 %v2696
    %v3385 = vunpack.c.h.b16 %v2696
    %v3386 = vunpack.c.l.b16 %v2697
    %v3387 = vunpack.c.h.b16 %v2697
    %v3388 = vunpack.c.l.b16 %v2698
    %v3389 = vunpack.c.h.b16 %v2698
    %v3390 = vunpack.c.l.b16 %v2699
    %v3391 = vunpack.c.h.b16 %v2699
    %v3392 = vunpack.c.l.b16 %v2700
    %v3393 = vunpack.c.h.b16 %v2700
    %v3394 = vunpack.c.l.b16 %v2701
    %v3395 = vunpack.c.h.b16 %v2701
    %v3396 = vunpack.c.l.b16 %v2702
    %v3397 = vunpack.c.h.b16 %v2702
    %v3398 = vunpack.c.l.b16 %v2703
    %v3399 = vunpack.c.h.b16 %v2703
    %v3400 = vunpack.c.l.b16 %v2704
    %v3401 = vunpack.c.h.b16 %v2704
    %v3402 = vunpack.c.l.b16 %v2705
    %v3403 = vunpack.c.h.b16 %v2705
    %v3404 = vunpack.c.l.b16 %v2706
    %v3405 = vunpack.c.h.b16 %v2706
    %v3406 = vunpack.c.l.b16 %v2707
    %v3407 = vunpack.c.h.b16 %v2707
    %v3408 = vunpack.c.l.b16 %v2708
    %v3409 = vunpack.c.h.b16 %v2708
    %v3410 = vunpack.c.l.b16 %v2709
    %v3411 = vunpack.c.h.b16 %v2709
    %v3412 = vunpack.c.l.b16 %v2710
    %v3413 = vunpack.c.h.b16 %v2710
    %v3414 = vunpack.c.l.b16 %v2711
    %v3415 = vunpack.c.h.b16 %v2711
    %v3416 = vunpack.c.l.b16 %v2712
    %v3417 = vunpack.c.h.b16 %v2712
    %v3418 = vunpack.c.l.b16 %v2713
    %v3419 = vunpack.c.h.b16 %v2713
    %v3420 = vunpack.c.l.b16 %v2714
    %v3421 = vunpack.c.h.b16 %v2714
    %v3422 = vunpack.c.l.b16 %v2715
    %v3423 = vunpack.c.h.b16 %v2715
    %v3424 = vunpack.c.l.b16 %v2716
    %v3425 = vunpack.c.h.b16 %v2716
    %v3426 = vunpack.c.l.b16 %v2717
    %v3427 = vunpack.c.h.b16 %v2717
    %v3428 = vunpack.c.l.b16 %v2718
    %v3429 = vunpack.c.h.b16 %v2718
    %v3430 = vunpack.c.l.b16 %v2719
    %v3431 = vunpack.c.h.b16 %v2719
    %v3432 = vunpack.c.l.b16 %v2720
    %v3433 = vunpack.c.h.b16 %v2720
    %v3434 = vunpack.c.l.b16 %v2721
    %v3435 = vunpack.c.h.b16 %v2721
    %v3436 = vunpack.c.l.b16 %v2722
    %v3437 = vunpack.c.h.b16 %v2722
    %v3438 = vunpack.c.l.b16 %v2723
    %v3439 = vunpack.c.h.b16 %v2723
    %v3440 = vunpack.c.l.b16 %v2724
    %v3441 = vunpack.c.h.b16 %v2724
    %v3442 = vunpack.c.l.b16 %v2725
    %v3443 = vunpack.c.h.b16 %v2725
    %v3444 = vunpack.c.l.b16 %v2726
    %v3445 = vunpack.c.h.b16 %v2726
    %v3446 = vunpack.c.l.b16 %v2727
    %v3447 = vunpack.c.h.b16 %v2727
    %v3448 = vunpack.c.l.b16 %v2728
    %v3449 = vunpack.c.h.b16 %v2728
    %v3450 = vunpack.c.l.b16 %v2729
    %v3451 = vunpack.c.h.b16 %v2729
    %v3452 = vunpack.c.l.b16 %v2730
    %v3453 = vunpack.c.h.b16 %v2730
    %v3454 = vunpack.c.l.b16 %v2731
    %v3455 = vunpack.c.h.b16 %v2731
    %v3456 = vunpack.c.l.b16 %v2732
    %v3457 = vunpack.c.h.b16 %v2732
    %v3458 = vunpack.c.l.b16 %v2733
    %v3459 = vunpack.c.h.b16 %v2733
    %v3460 = vunpack.c.l.b16 %v2734
    %v3461 = vunpack.c.h.b16 %v2734
    %v3462 = vunpack.c.l.b16 %v2735
    %v3463 = vunpack.c.h.b16 %v2735
    %v3464 = vunpack.c.l.b16 %v2736
    %v3465 = vunpack.c.h.b16 %v2736
    %v3466 = vunpack.c.l.b16 %v2737
    %v3467 = vunpack.c.h.b16 %v2737
    %v3468 = vunpack.c.l.b16 %v2738
    %v3469 = vunpack.c.h.b16 %v2738
    %v3470 = vunpack.c.l.b16 %v2739
    %v3471 = vunpack.c.h.b16 %v2739
    %v3472 = vunpack.c.l.b16 %v2740
    %v3473 = vunpack.c.h.b16 %v2740
    %v3474 = vunpack.c.l.b16 %v2741
    %v3475 = vunpack.c.h.b16 %v2741
    %v3476 = vunpack.c.l.b16 %v2742
    %v3477 = vunpack.c.h.b16 %v2742
    %v3478 = vunpack.c.l.b16 %v2743
    %v3479 = vunpack.c.h.b16 %v2743
    %v3480 = vunpack.c.l.b16 %v2744
    %v3481 = vunpack.c.h.b16 %v2744
    %v3482 = vunpack.c.l.b16 %v2745
    %v3483 = vunpack.c.h.b16 %v2745
    %v3484 = vunpack.c.l.b16 %v2746
    %v3485 = vunpack.c.h.b16 %v2746
    %v3486 = vunpack.c.l.b16 %v2747
    %v3487 = vunpack.c.h.b16 %v2747
    %v3488 = vunpack.c.l.b16 %v2748
    %v3489 = vunpack.c.h.b16 %v2748
    %v3490 = vunpack.c.l.b16 %v2749
    %v3491 = vunpack.c.h.b16 %v2749
    %v3492 = vunpack.c.l.b16 %v2750
    %v3493 = vunpack.c.h.b16 %v2750
    %v3494 = vunpack.c.l.b16 %v2751
    %v3495 = vunpack.c.h.b16 %v2751
    %v3496 = vunpack.c.l.b16 %v2752
    %v3497 = vunpack.c.h.b16 %v2752
    %v3498 = vunpack.c.l.b16 %v2753
    %v3499 = vunpack.c.h.b16 %v2753
    %v3500 = vunpack.c.l.b16 %v2754
    %v3501 = vunpack.c.h.b16 %v2754
    %v3502 = vunpack.c.l.b16 %v2755
    %v3503 = vunpack.c.h.b16 %v2755
    %v3504 = vunpack.c.l.b16 %v2756
    %v3505 = vunpack.c.h.b16 %v2756
    %v3506 = vunpack.c.l.b16 %v2757
    %v3507 = vunpack.c.h.b16 %v2757
    %v3508 = vunpack.c.l.b16 %v2758
    %v3509 = vunpack.c.h.b16 %v2758
    %v3510 = vunpack.c.l.b16 %v2759
    %v3511 = vunpack.c.h.b16 %v2759
    %v3512 = vunpack.c.l.b16 %v2760
    %v3513 = vunpack.c.h.b16 %v2760
    %v3514 = vunpack.c.l.b16 %v2761
    %v3515 = vunpack.c.h.b16 %v2761
    %v3516 = vunpack.c.l.b16 %v2762
    %v3517 = vunpack.c.h.b16 %v2762
    %v3518 = vunpack.c.l.b16 %v2763
    %v3519 = vunpack.c.h.b16 %v2763
    %v3520 = vunpack.c.l.b16 %v2764
    %v3521 = vunpack.c.h.b16 %v2764
    %v3522 = vunpack.c.l.b16 %v2765
    %v3523 = vunpack.c.h.b16 %v2765
    %v3524 = vunpack.c.l.b16 %v2766
    %v3525 = vunpack.c.h.b16 %v2766
    %v3526 = vunpack.c.l.b16 %v2767
    %v3527 = vunpack.c.h.b16 %v2767
    %v3528 = vunpack.c.l.b16 %v2768
    %v3529 = vunpack.c.h.b16 %v2768
    %v3530 = vunpack.c.l.b16 %v2769
    %v3531 = vunpack.c.h.b16 %v2769
    %v3532 = vunpack.c.l.b16 %v2770
    %v3533 = vunpack.c.h.b16 %v2770
    %v3534 = vunpack.c.l.b16 %v2771
    %v3535 = vunpack.c.h.b16 %v2771
    %v3536 = vunpack.c.l.b16 %v2772
    %v3537 = vunpack.c.h.b16 %v2772
    %v3538 = vunpack.c.l.b16 %v2773
    %v3539 = vunpack.c.h.b16 %v2773
    %v3540 = vunpack.c.l.b16 %v2774
    %v3541 = vunpack.c.h.b16 %v2774
    %v3542 = vunpack.c.l.b16 %v2775
    %v3543 = vunpack.c.h.b16 %v2775
    %v3544 = vunpack.c.l.b16 %v2776
    %v3545 = vunpack.c.h.b16 %v2776
    %v3546 = vunpack.c.l.b16 %v2777
    %v3547 = vunpack.c.h.b16 %v2777
    %v3548 = vunpack.c.l.b16 %v2778
    %v3549 = vunpack.c.h.b16 %v2778
    %v3550 = vunpack.c.l.b16 %v2779
    %v3551 = vunpack.c.h.b16 %v2779
    %v3552 = vunpack.c.l.b16 %v2780
    %v3553 = vunpack.c.h.b16 %v2780
    %v3554 = vunpack.c.l.b16 %v2781
    %v3555 = vunpack.c.h.b16 %v2781
    %v3556 = vunpack.c.l.b16 %v2782
    %v3557 = vunpack.c.h.b16 %v2782
    %v3558 = vunpack.c.l.b16 %v2783
    %v3559 = vunpack.c.h.b16 %v2783
    %v3560 = vunpack.c.l.b16 %v2784
    %v3561 = vunpack.c.h.b16 %v2784
    %v3562 = vunpack.c.l.b16 %v2785
    %v3563 = vunpack.c.h.b16 %v2785
    %v3564 = vunpack.c.l.b16 %v2786
    %v3565 = vunpack.c.h.b16 %v2786
    %v3566 = vunpack.c.l.b16 %v2787
    %v3567 = vunpack.c.h.b16 %v2787
    %v3568 = vpack.c.b16 %v3058, %v3056
    %v3569 = vpack.c.b16 %v3059, %v3057
    %v3570 = vpack.c.b16 %v3062, %v3060
    %v3571 = vpack.c.b16 %v3063, %v3061
    %v3572 = vpack.c.b16 %v3066, %v3064
    %v3573 = vpack.c.b16 %v3067, %v3065
    %v3574 = vpack.c.b16 %v3070, %v3068
    %v3575 = vpack.c.b16 %v3071, %v3069
    %v3576 = vpack.c.b16 %v3074, %v3072
    %v3577 = vpack.c.b16 %v3075, %v3073
    %v3578 = vpack.c.b16 %v3078, %v3076
    %v3579 = vpack.c.b16 %v3079, %v3077
    %v3580 = vpack.c.b16 %v3082, %v3080
    %v3581 = vpack.c.b16 %v3083, %v3081
    %v3582 = vpack.c.b16 %v3086, %v3084
    %v3583 = vpack.c.b16 %v3087, %v3085
    %v3584 = vpack.c.b16 %v3090, %v3088
    %v3585 = vpack.c.b16 %v3091, %v3089
    %v3586 = vpack.c.b16 %v3094, %v3092
    %v3587 = vpack.c.b16 %v3095, %v3093
    %v3588 = vpack.c.b16 %v3098, %v3096
    %v3589 = vpack.c.b16 %v3099, %v3097
    %v3590 = vpack.c.b16 %v3102, %v3100
    %v3591 = vpack.c.b16 %v3103, %v3101
    %v3592 = vpack.c.b16 %v3106, %v3104
    %v3593 = vpack.c.b16 %v3107, %v3105
    %v3594 = vpack.c.b16 %v3110, %v3108
    %v3595 = vpack.c.b16 %v3111, %v3109
    %v3596 = vpack.c.b16 %v3114, %v3112
    %v3597 = vpack.c.b16 %v3115, %v3113
    %v3598 = vpack.c.b16 %v3118, %v3116
    %v3599 = vpack.c.b16 %v3119, %v3117
    %v3600 = vpack.c.b16 %v3122, %v3120
    %v3601 = vpack.c.b16 %v3123, %v3121
    %v3602 = vpack.c.b16 %v3126, %v3124
    %v3603 = vpack.c.b16 %v3127, %v3125
    %v3604 = vpack.c.b16 %v3130, %v3128
    %v3605 = vpack.c.b16 %v3131, %v3129
    %v3606 = vpack.c.b16 %v3134, %v3132
    %v3607 = vpack.c.b16 %v3135, %v3133
    %v3608 = vpack.c.b16 %v3138, %v3136
    %v3609 = vpack.c.b16 %v3139, %v3137
    %v3610 = vpack.c.b16 %v3142, %v3140
    %v3611 = vpack.c.b16 %v3143, %v3141
    %v3612 = vpack.c.b16 %v3146, %v3144
    %v3613 = vpack.c.b16 %v3147, %v3145
    %v3614 = vpack.c.b16 %v3150, %v3148
    %v3615 = vpack.c.b16 %v3151, %v3149
    %v3616 = vpack.c.b16 %v3154, %v3152
    %v3617 = vpack.c.b16 %v3155, %v3153
    %v3618 = vpack.c.b16 %v3158, %v3156
    %v3619 = vpack.c.b16 %v3159, %v3157
    %v3620 = vpack.c.b16 %v3162, %v3160
    %v3621 = vpack.c.b16 %v3163, %v3161
    %v3622 = vpack.c.b16 %v3166, %v3164
    %v3623 = vpack.c.b16 %v3167, %v3165
    %v3624 = vpack.c.b16 %v3170, %v3168
    %v3625 = vpack.c.b16 %v3171, %v3169
    %v3626 = vpack.c.b16 %v3174, %v3172
    %v3627 = vpack.c.b16 %v3175, %v3173
    %v3628 = vpack.c.b16 %v3178, %v3176
    %v3629 = vpack.c.b16 %v3179, %v3177
    %v3630 = vpack.c.b16 %v3182, %v3180
    %v3631 = vpack.c.b16 %v3183, %v3181
    %v3632 = vpack.c.b16 %v3186, %v3184
    %v3633 = vpack.c.b16 %v3187, %v3185
    %v3634 = vpack.c.b16 %v3190, %v3188
    %v3635 = vpack.c.b16 %v3191, %v3189
    %v3636 = vpack.c.b16 %v3194, %v3192
    %v3637 = vpack.c.b16 %v3195, %v3193
    %v3638 = vpack.c.b16 %v3198, %v3196
    %v3639 = vpack.c.b16 %v3199, %v3197
    %v3640 = vpack.c.b16 %v3202, %v3200
    %v3641 = vpack.c.b16 %v3203, %v3201
    %v3642 = vpack.c.b16 %v3206, %v3204
    %v3643 = vpack.c.b16 %v3207, %v3205
    %v3644 = vpack.c.b16 %v3210, %v3208
    %v3645 = vpack.c.b16 %v3211, %v3209
    %v3646 = vpack.c.b16 %v3214, %v3212
    %v3647 = vpack.c.b16 %v3215, %v3213
    %v3648 = vpack.c.b16 %v3218, %v3216
    %v3649 = vpack.c.b16 %v3219, %v3217
    %v3650 = vpack.c.b16 %v3222, %v3220
    %v3651 = vpack.c.b16 %v3223, %v3221
    %v3652 = vpack.c.b16 %v3226, %v3224
    %v3653 = vpack.c.b16 %v3227, %v3225
    %v3654 = vpack.c.b16 %v3230, %v3228
    %v3655 = vpack.c.b16 %v3231, %v3229
    %v3656 = vpack.c.b16 %v3234, %v3232
    %v3657 = vpack.c.b16 %v3235, %v3233
    %v3658 = vpack.c.b16 %v3238, %v3236
    %v3659 = vpack.c.b16 %v3239, %v3237
    %v3660 = vpack.c.b16 %v3242, %v3240
    %v3661 = vpack.c.b16 %v3243, %v3241
    %v3662 = vpack.c.b16 %v3246, %v3244
    %v3663 = vpack.c.b16 %v3247, %v3245
    %v3664 = vpack.c.b16 %v3250, %v3248
    %v3665 = vpack.c.b16 %v3251, %v3249
    %v3666 = vpack.c.b16 %v3254, %v3252
    %v3667 = vpack.c.b16 %v3255, %v3253
    %v3668 = vpack.c.b16 %v3258, %v3256
    %v3669 = vpack.c.b16 %v3259, %v3257
    %v3670 = vpack.c.b16 %v3262, %v3260
    %v3671 = vpack.c.b16 %v3263, %v3261
    %v3672 = vpack.c.b16 %v3266, %v3264
    %v3673 = vpack.c.b16 %v3267, %v3265
    %v3674 = vpack.c.b16 %v3270, %v3268
    %v3675 = vpack.c.b16 %v3271, %v3269
    %v3676 = vpack.c.b16 %v3274, %v3272
    %v3677 = vpack.c.b16 %v3275, %v3273
    %v3678 = vpack.c.b16 %v3278, %v3276
    %v3679 = vpack.c.b16 %v3279, %v3277
    %v3680 = vpack.c.b16 %v3282, %v3280
    %v3681 = vpack.c.b16 %v3283, %v3281
    %v3682 = vpack.c.b16 %v3286, %v3284
    %v3683 = vpack.c.b16 %v3287, %v3285
    %v3684 = vpack.c.b16 %v3290, %v3288
    %v3685 = vpack.c.b16 %v3291, %v3289
    %v3686 = vpack.c.b16 %v3294, %v3292
    %v3687 = vpack.c.b16 %v3295, %v3293
    %v3688 = vpack.c.b16 %v3298, %v3296
    %v3689 = vpack.c.b16 %v3299, %v3297
    %v3690 = vpack.c.b16 %v3302, %v3300
    %v3691 = vpack.c.b16 %v3303, %v3301
    %v3692 = vpack.c.b16 %v3306, %v3304
    %v3693 = vpack.c.b16 %v3307, %v3305
    %v3694 = vpack.c.b16 %v3310, %v3308
    %v3695 = vpack.c.b16 %v3311, %v3309
    %v3696 = vpack.c.b16 %v3314, %v3312
    %v3697 = vpack.c.b16 %v3315, %v3313
    %v3698 = vpack.c.b16 %v3318, %v3316
    %v3699 = vpack.c.b16 %v3319, %v3317
    %v3700 = vpack.c.b16 %v3322, %v3320
    %v3701 = vpack.c.b16 %v3323, %v3321
    %v3702 = vpack.c.b16 %v3326, %v3324
    %v3703 = vpack.c.b16 %v3327, %v3325
    %v3704 = vpack.c.b16 %v3330, %v3328
    %v3705 = vpack.c.b16 %v3331, %v3329
    %v3706 = vpack.c.b16 %v3334, %v3332
    %v3707 = vpack.c.b16 %v3335, %v3333
    %v3708 = vpack.c.b16 %v3338, %v3336
    %v3709 = vpack.c.b16 %v3339, %v3337
    %v3710 = vpack.c.b16 %v3342, %v3340
    %v3711 = vpack.c.b16 %v3343, %v3341
    %v3712 = vpack.c.b16 %v3346, %v3344
    %v3713 = vpack.c.b16 %v3347, %v3345
    %v3714 = vpack.c.b16 %v3350, %v3348
    %v3715 = vpack.c.b16 %v3351, %v3349
    %v3716 = vpack.c.b16 %v3354, %v3352
    %v3717 = vpack.c.b16 %v3355, %v3353
    %v3718 = vpack.c.b16 %v3358, %v3356
    %v3719 = vpack.c.b16 %v3359, %v3357
    %v3720 = vpack.c.b16 %v3362, %v3360
    %v3721 = vpack.c.b16 %v3363, %v3361
    %v3722 = vpack.c.b16 %v3366, %v3364
    %v3723 = vpack.c.b16 %v3367, %v3365
    %v3724 = vpack.c.b16 %v3370, %v3368
    %v3725 = vpack.c.b16 %v3371, %v3369
    %v3726 = vpack.c.b16 %v3374, %v3372
    %v3727 = vpack.c.b16 %v3375, %v3373
    %v3728 = vpack.c.b16 %v3378, %v3376
    %v3729 = vpack.c.b16 %v3379, %v3377
    %v3730 = vpack.c.b16 %v3382, %v3380
    %v3731 = vpack.c.b16 %v3383, %v3381
    %v3732 = vpack.c.b16 %v3386, %v3384
    %v3733 = vpack.c.b16 %v3387, %v3385
    %v3734 = vpack.c.b16 %v3390, %v3388
    %v3735 = vpack.c.b16 %v3391, %v3389
    %v3736 = vpack.c.b16 %v3394, %v3392
    %v3737 = vpack.c.b16 %v3395, %v3393
    %v3738 = vpack.c.b16 %v3398, %v3396
    %v3739 = vpack.c.b16 %v3399, %v3397
    %v3740 = vpack.c.b16 %v3402, %v3400
    %v3741 = vpack.c.b16 %v3403, %v3401
    %v3742 = vpack.c.b16 %v3406, %v3404
    %v3743 = vpack.c.b16 %v3407, %v3405
    %v3744 = vpack.c.b16 %v3410, %v3408
    %v3745 = vpack.c.b16 %v3411, %v3409
    %v3746 = vpack.c.b16 %v3414, %v3412
    %v3747 = vpack.c.b16 %v3415, %v3413
    %v3748 = vpack.c.b16 %v3418, %v3416
    %v3749 = vpack.c.b16 %v3419, %v3417
    %v3750 = vpack.c.b16 %v3422, %v3420
    %v3751 = vpack.c.b16 %v3423, %v3421
    %v3752 = vpack.c.b16 %v3426, %v3424
    %v3753 = vpack.c.b16 %v3427, %v3425
    %v3754 = vpack.c.b16 %v3430, %v3428
    %v3755 = vpack.c.b16 %v3431, %v3429
    %v3756 = vpack.c.b16 %v3434, %v3432
    %v3757 = vpack.c.b16 %v3435, %v3433
    %v3758 = vpack.c.b16 %v3438, %v3436
    %v3759 = vpack.c.b16 %v3439, %v3437
    %v3760 = vpack.c.b16 %v3442, %v3440
    %v3761 = vpack.c.b16 %v3443, %v3441
    %v3762 = vpack.c.b16 %v3446, %v3444
    %v3763 = vpack.c.b16 %v3447, %v3445
    %v3764 = vpack.c.b16 %v3450, %v3448
    %v3765 = vpack.c.b16 %v3451, %v3449
    %v3766 = vpack.c.b16 %v3454, %v3452
    %v3767 = vpack.c.b16 %v3455, %v3453
    %v3768 = vpack.c.b16 %v3458, %v3456
    %v3769 = vpack.c.b16 %v3459, %v3457
    %v3770 = vpack.c.b16 %v3462, %v3460
    %v3771 = vpack.c.b16 %v3463, %v3461
    %v3772 = vpack.c.b16 %v3466, %v3464
    %v3773 = vpack.c.b16 %v3467, %v3465
    %v3774 = vpack.c.b16 %v3470, %v3468
    %v3775 = vpack.c.b16 %v3471, %v3469
    %v3776 = vpack.c.b16 %v3474, %v3472
    %v3777 = vpack.c.b16 %v3475, %v3473
    %v3778 = vpack.c.b16 %v3478, %v3476
    %v3779 = vpack.c.b16 %v3479, %v3477
    %v3780 = vpack.c.b16 %v3482, %v3480
    %v3781 = vpack.c.b16 %v3483, %v3481
    %v3782 = vpack.c.b16 %v3486, %v3484
    %v3783 = vpack.c.b16 %v3487, %v3485
    %v3784 = vpack.c.b16 %v3490, %v3488
    %v3785 = vpack.c.b16 %v3491, %v3489
    %v3786 = vpack.c.b16 %v3494, %v3492
    %v3787 = vpack.c.b16 %v3495, %v3493
    %v3788 = vpack.c.b16 %v3498, %v3496
    %v3789 = vpack.c.b16 %v3499, %v3497
    %v3790 = vpack.c.b16 %v3502, %v3500
    %v3791 = vpack.c.b16 %v3503, %v3501
    %v3792 = vpack.c.b16 %v3506, %v3504
    %v3793 = vpack.c.b16 %v3507, %v3505
    %v3794 = vpack.c.b16 %v3510, %v3508
    %v3795 = vpack.c.b16 %v3511, %v3509
    %v3796 = vpack.c.b16 %v3514, %v3512
    %v3797 = vpack.c.b16 %v3515, %v3513
    %v3798 = vpack.c.b16 %v3518, %v3516
    %v3799 = vpack.c.b16 %v3519, %v3517
    %v3800 = vpack.c.b16 %v3522, %v3520
    %v3801 = vpack.c.b16 %v3523, %v3521
    %v3802 = vpack.c.b16 %v3526, %v3524
    %v3803 = vpack.c.b16 %v3527, %v3525
    %v3804 = vpack.c.b16 %v3530, %v3528
    %v3805 = vpack.c.b16 %v3531, %v3529
    %v3806 = vpack.c.b16 %v3534, %v3532
    %v3807 = vpack.c.b16 %v3535, %v3533
    %v3808 = vpack.c.b16 %v3538, %v3536
    %v3809 = vpack.c.b16 %v3539, %v3537
    %v3810 = vpack.c.b16 %v3542, %v3540
    %v3811 = vpack.c.b16 %v3543, %v3541
    %v3812 = vpack.c.b16 %v3546, %v3544
    %v3813 = vpack.c.b16 %v3547, %v3545
    %v3814 = vpack.c.b16 %v3550, %v3548
    %v3815 = vpack.c.b16 %v3551, %v3549
    %v3816 = vpack.c.b16 %v3554, %v3552
    %v3817 = vpack.c.b16 %v3555, %v3553
    %v3818 = vpack.c.b16 %v3558, %v3556
    %v3819 = vpack.c.b16 %v3559, %v3557
    %v3820 = vpack.c.b16 %v3562, %v3560
    %v3821 = vpack.c.b16 %v3563, %v3561
    %v3822 = vpack.c.b16 %v3566, %v3564
    %v3823 = vpack.c.b16 %v3567, %v3565
    %4080 = vmatprep.subr.bf16.mxu0 %v3569
    %4081 = vmatpush1.bf16.msra.mxu0 %v3568
    %4082 = vmatprep.subr.bf16.mxu0 %v3571
    %4083 = vmatpush1.bf16.msra.mxu0 %v3570
    %4084 = vmatprep.subr.bf16.mxu0 %v3573
    %4085 = vmatpush1.bf16.msra.mxu0 %v3572
    %4086 = vmatprep.subr.bf16.mxu0 %v3575
    %4087 = vmatpush1.bf16.msra.mxu0 %v3574
    %4088 = vmatprep.subr.bf16.mxu0 %v3577
    %4089 = vmatpush1.bf16.msra.mxu0 %v3576
    %4090 = vmatprep.subr.bf16.mxu0 %v3579
    %4091 = vmatpush1.bf16.msra.mxu0 %v3578
    %4092 = vmatprep.subr.bf16.mxu0 %v3581
    %4093 = vmatpush1.bf16.msra.mxu0 %v3580
    %4094 = vmatprep.subr.bf16.mxu0 %v3583
    %4095 = vmatpush1.bf16.msra.mxu0 %v3582
    %4096 = vmatprep.subr.bf16.mxu0 %v3585
    %4097 = vmatpush1.bf16.msra.mxu0 %v3584
    %4098 = vmatprep.subr.bf16.mxu0 %v3587
    %4099 = vmatpush1.bf16.msra.mxu0 %v3586
    %4100 = vmatprep.subr.bf16.mxu0 %v3589
    %4101 = vmatpush1.bf16.msra.mxu0 %v3588
    %4102 = vmatprep.subr.bf16.mxu0 %v3591
    %4103 = vmatpush1.bf16.msra.mxu0 %v3590
    %4104 = vmatprep.subr.bf16.mxu0 %v3593
    %4105 = vmatpush1.bf16.msra.mxu0 %v3592
    %4106 = vmatprep.subr.bf16.mxu0 %v3595
    %4107 = vmatpush1.bf16.msra.mxu0 %v3594
    %4108 = vmatprep.subr.bf16.mxu0 %v3597
    %4109 = vmatpush1.bf16.msra.mxu0 %v3596
    %4110 = vmatprep.subr.bf16.mxu0 %v3599
    %4111 = vmatpush1.bf16.msra.mxu0 %v3598
    %4112 = vmatprep.mubr.bf16.mxu0 %v2501
    %4113 = vmatmul.mubr.bf16.gmra.mrb[0].mxu0 %v2500
    %v4114 = vpop.f32.mrb[0].mxu0
    %v4115 = vadd.f32 %v2793, %v4114
    %v4116 = vpop.f32.mrb[0].mxu0
    %v4117 = vadd.f32 %v2797, %v4116
    %v4118 = vpop.f32.mrb[0].mxu0
    %v4119 = vadd.f32 %v2793, %v4118
    %v4120 = vpop.f32.mrb[0].mxu0
    %v4121 = vadd.f32 %v2797, %v4120
    %4122 = vmatprep.mubr.bf16.mxu0 %v2517
    %4123 = vmatmul.mubr.bf16.gmra.mrb[0].mxu0 %v2516
    %v4124 = vpop.f32.mrb[0].mxu0
    %v4125 = vadd.f32 %v2793, %v4124
    %v4126 = vpop.f32.mrb[0].mxu0
    %v4127 = vadd.f32 %v2797, %v4126
    %v4128 = vpop.f32.mrb[0].mxu0
    %v4129 = vadd.f32 %v2793, %v4128
    %v4130 = vpop.f32.mrb[0].mxu0
    %v4131 = vadd.f32 %v2797, %v4130
    %4132 = vdwg.mxu0
    %4133 = vmatprep.subr.bf16.mxu0 %v3601
    %4134 = vmatpush1.bf16.msra.mxu0 %v3600
    %4135 = vmatprep.subr.bf16.mxu0 %v3603
    %4136 = vmatpush1.bf16.msra.mxu0 %v3602
    %4137 = vmatprep.subr.bf16.mxu0 %v3605
    %4138 = vmatpush1.bf16.msra.mxu0 %v3604
    %4139 = vmatprep.subr.bf16.mxu0 %v3607
    %4140 = vmatpush1.bf16.msra.mxu0 %v3606
    %4141 = vmatprep.subr.bf16.mxu0 %v3609
    %4142 = vmatpush1.bf16.msra.mxu0 %v3608
    %4143 = vmatprep.subr.bf16.mxu0 %v3611
    %4144 = vmatpush1.bf16.msra.mxu0 %v3610
    %4145 = vmatprep.subr.bf16.mxu0 %v3613
    %4146 = vmatpush1.bf16.msra.mxu0 %v3612
    %4147 = vmatprep.subr.bf16.mxu0 %v3615
    %4148 = vmatpush1.bf16.msra.mxu0 %v3614
    %4149 = vmatprep.subr.bf16.mxu0 %v3617
    %4150 = vmatpush1.bf16.msra.mxu0 %v3616
    %4151 = vmatprep.subr.bf16.mxu0 %v3619
    %4152 = vmatpush1.bf16.msra.mxu0 %v3618
    %4153 = vmatprep.subr.bf16.mxu0 %v3621
    %4154 = vmatpush1.bf16.msra.mxu0 %v3620
    %4155 = vmatprep.subr.bf16.mxu0 %v3623
    %4156 = vmatpush1.bf16.msra.mxu0 %v3622
    %4157 = vmatprep.subr.bf16.mxu0 %v3625
    %4158 = vmatpush1.bf16.msra.mxu0 %v3624
    %4159 = vmatprep.subr.bf16.mxu0 %v3627
    %4160 = vmatpush1.bf16.msra.mxu0 %v3626
    %4161 = vmatprep.subr.bf16.mxu0 %v3629
    %4162 = vmatpush1.bf16.msra.mxu0 %v3628
    %4163 = vmatprep.subr.bf16.mxu0 %v3631
    %4164 = vmatpush1.bf16.msra.mxu0 %v3630
    %4165 = vmatprep.mubr.bf16.mxu0 %v2503
    %4166 = vmatmul.mubr.bf16.gmra.mrb[0].mxu0 %v2502
    %v4167 = vpop.f32.mrb[0].mxu0
    %v4168 = vadd.f32 %v4115, %v4167
    %v4169 = vpop.f32.mrb[0].mxu0
    %v4170 = vadd.f32 %v4117, %v4169
    %v4171 = vpop.f32.mrb[0].mxu0
    %v4172 = vadd.f32 %v4119, %v4171
    %v4173 = vpop.f32.mrb[0].mxu0
    %v4174 = vadd.f32 %v4121, %v4173
    %4175 = vmatprep.mubr.bf16.mxu0 %v2519
    %4176 = vmatmul.mubr.bf16.gmra.mrb[0].mxu0 %v2518
    %v4177 = vpop.f32.mrb[0].mxu0
    %v4178 = vadd.f32 %v4125, %v4177
    %v4179 = vpop.f32.mrb[0].mxu0
    %v4180 = vadd.f32 %v4127, %v4179
    %v4181 = vpop.f32.mrb[0].mxu0
    %v4182 = vadd.f32 %v4129, %v4181
    %v4183 = vpop.f32.mrb[0].mxu0
    %v4184 = vadd.f32 %v4131, %v4183
    %4185 = vdwg.mxu0
    %4186 = vmatprep.subr.bf16.mxu0 %v3633
    %4187 = vmatpush1.bf16.msra.mxu0 %v3632
    %4188 = vmatprep.subr.bf16.mxu0 %v3635
    %4189 = vmatpush1.bf16.msra.mxu0 %v3634
    %4190 = vmatprep.subr.bf16.mxu0 %v3637
    %4191 = vmatpush1.bf16.msra.mxu0 %v3636
    %4192 = vmatprep.subr.bf16.mxu0 %v3639
    %4193 = vmatpush1.bf16.msra.mxu0 %v3638
    %4194 = vmatprep.subr.bf16.mxu0 %v3641
    %4195 = vmatpush1.bf16.msra.mxu0 %v3640
    %4196 = vmatprep.subr.bf16.mxu0 %v3643
    %4197 = vmatpush1.bf16.msra.mxu0 %v3642
    %4198 = vmatprep.subr.bf16.mxu0 %v3645
    %4199 = vmatpush1.bf16.msra.mxu0 %v3644
    %4200 = vmatprep.subr.bf16.mxu0 %v3647
    %4201 = vmatpush1.bf16.msra.mxu0 %v3646
    %4202 = vmatprep.subr.bf16.mxu0 %v3649
    %4203 = vmatpush1.bf16.msra.mxu0 %v3648
    %4204 = vmatprep.subr.bf16.mxu0 %v3651
    %4205 = vmatpush1.bf16.msra.mxu0 %v3650
    %4206 = vmatprep.subr.bf16.mxu0 %v3653
    %4207 = vmatpush1.bf16.msra.mxu0 %v3652
    %4208 = vmatprep.subr.bf16.mxu0 %v3655
    %4209 = vmatpush1.bf16.msra.mxu0 %v3654
    %4210 = vmatprep.subr.bf16.mxu0 %v3657
    %4211 = vmatpush1.bf16.msra.mxu0 %v3656
    %4212 = vmatprep.subr.bf16.mxu0 %v3659
    %4213 = vmatpush1.bf16.msra.mxu0 %v3658
    %4214 = vmatprep.subr.bf16.mxu0 %v3661
    %4215 = vmatpush1.bf16.msra.mxu0 %v3660
    %4216 = vmatprep.subr.bf16.mxu0 %v3663
    %4217 = vmatpush1.bf16.msra.mxu0 %v3662
    %4218 = vmatprep.mubr.bf16.mxu0 %v2505
    %4219 = vmatmul.mubr.bf16.gmra.mrb[0].mxu0 %v2504
    %v4220 = vpop.f32.mrb[0].mxu0
    %v4221 = vadd.f32 %v4168, %v4220
    %v4222 = vpop.f32.mrb[0].mxu0
    %v4223 = vadd.f32 %v4170, %v4222
    %v4224 = vpop.f32.mrb[0].mxu0
    %v4225 = vadd.f32 %v4172, %v4224
    %v4226 = vpop.f32.mrb[0].mxu0
    %v4227 = vadd.f32 %v4174, %v4226
    %4228 = vmatprep.mubr.bf16.mxu0 %v2521
    %4229 = vmatmul.mubr.bf16.gmra.mrb[0].mxu0 %v2520
    %v4230 = vpop.f32.mrb[0].mxu0
    %v4231 = vadd.f32 %v4178, %v4230
    %v4232 = vpop.f32.mrb[0].mxu0
    %v4233 = vadd.f32 %v4180, %v4232
    %v4234 = vpop.f32.mrb[0].mxu0
    %v4235 = vadd.f32 %v4182, %v4234
    %v4236 = vpop.f32.mrb[0].mxu0
    %v4237 = vadd.f32 %v4184, %v4236
    %4238 = vdwg.mxu0
    %4239 = vmatprep.subr.bf16.mxu0 %v3665
    %4240 = vmatpush1.bf16.msra.mxu0 %v3664
    %4241 = vmatprep.subr.bf16.mxu0 %v3667
    %4242 = vmatpush1.bf16.msra.mxu0 %v3666
    %4243 = vmatprep.subr.bf16.mxu0 %v3669
    %4244 = vmatpush1.bf16.msra.mxu0 %v3668
    %4245 = vmatprep.subr.bf16.mxu0 %v3671
    %4246 = vmatpush1.bf16.msra.mxu0 %v3670
    %4247 = vmatprep.subr.bf16.mxu0 %v3673
    %4248 = vmatpush1.bf16.msra.mxu0 %v3672
    %4249 = vmatprep.subr.bf16.mxu0 %v3675
    %4250 = vmatpush1.bf16.msra.mxu0 %v3674
    %4251 = vmatprep.subr.bf16.mxu0 %v3677
    %4252 = vmatpush1.bf16.msra.mxu0 %v3676
    %4253 = vmatprep.subr.bf16.mxu0 %v3679
    %4254 = vmatpush1.bf16.msra.mxu0 %v3678
    %4255 = vmatprep.subr.bf16.mxu0 %v3681
    %4256 = vmatpush1.bf16.msra.mxu0 %v3680
    %4257 = vmatprep.subr.bf16.mxu0 %v3683
    %4258 = vmatpush1.bf16.msra.mxu0 %v3682
    %4259 = vmatprep.subr.bf16.mxu0 %v3685
    %4260 = vmatpush1.bf16.msra.mxu0 %v3684
    %4261 = vmatprep.subr.bf16.mxu0 %v3687
    %4262 = vmatpush1.bf16.msra.mxu0 %v3686
    %4263 = vmatprep.subr.bf16.mxu0 %v3689
    %4264 = vmatpush1.bf16.msra.mxu0 %v3688
    %4265 = vmatprep.subr.bf16.mxu0 %v3691
    %4266 = vmatpush1.bf16.msra.mxu0 %v3690
    %4267 = vmatprep.subr.bf16.mxu0 %v3693
    %4268 = vmatpush1.bf16.msra.mxu0 %v3692
    %4269 = vmatprep.subr.bf16.mxu0 %v3695
    %4270 = vmatpush1.bf16.msra.mxu0 %v3694
    %4271 = vmatprep.mubr.bf16.mxu0 %v2507
    %4272 = vmatmul.mubr.bf16.gmra.mrb[0].mxu0 %v2506
    %v4273 = vpop.f32.mrb[0].mxu0
    %v4274 = vadd.f32 %v4221, %v4273
    %v4275 = vpop.f32.mrb[0].mxu0
    %v4276 = vadd.f32 %v4223, %v4275
    %v4277 = vpop.f32.mrb[0].mxu0
    %v4278 = vadd.f32 %v4225, %v4277
    %v4279 = vpop.f32.mrb[0].mxu0
    %v4280 = vadd.f32 %v4227, %v4279
    %4281 = vmatprep.mubr.bf16.mxu0 %v2523
    %4282 = vmatmul.mubr.bf16.gmra.mrb[0].mxu0 %v2522
    %v4283 = vpop.f32.mrb[0].mxu0
    %v4284 = vadd.f32 %v4231, %v4283
    %v4285 = vpop.f32.mrb[0].mxu0
    %v4286 = vadd.f32 %v4233, %v4285
    %v4287 = vpop.f32.mrb[0].mxu0
    %v4288 = vadd.f32 %v4235, %v4287
    %v4289 = vpop.f32.mrb[0].mxu0
    %v4290 = vadd.f32 %v4237, %v4289
    %4291 = vdwg.mxu0
    %4292 = vmatprep.subr.bf16.mxu0 %v3697
    %4293 = vmatpush1.bf16.msra.mxu0 %v3696
    %4294 = vmatprep.subr.bf16.mxu0 %v3699
    %4295 = vmatpush1.bf16.msra.mxu0 %v3698
    %4296 = vmatprep.subr.bf16.mxu0 %v3701
    %4297 = vmatpush1.bf16.msra.mxu0 %v3700
    %4298 = vmatprep.subr.bf16.mxu0 %v3703
    %4299 = vmatpush1.bf16.msra.mxu0 %v3702
    %4300 = vmatprep.subr.bf16.mxu0 %v3705
    %4301 = vmatpush1.bf16.msra.mxu0 %v3704
    %4302 = vmatprep.subr.bf16.mxu0 %v3707
    %4303 = vmatpush1.bf16.msra.mxu0 %v3706
    %4304 = vmatprep.subr.bf16.mxu0 %v3709
    %4305 = vmatpush1.bf16.msra.mxu0 %v3708
    %4306 = vmatprep.subr.bf16.mxu0 %v3711
    %4307 = vmatpush1.bf16.msra.mxu0 %v3710
    %4308 = vmatprep.subr.bf16.mxu0 %v3713
    %4309 = vmatpush1.bf16.msra.mxu0 %v3712
    %4310 = vmatprep.subr.bf16.mxu0 %v3715
    %4311 = vmatpush1.bf16.msra.mxu0 %v3714
    %4312 = vmatprep.subr.bf16.mxu0 %v3717
    %4313 = vmatpush1.bf16.msra.mxu0 %v3716
    %4314 = vmatprep.subr.bf16.mxu0 %v3719
    %4315 = vmatpush1.bf16.msra.mxu0 %v3718
    %4316 = vmatprep.subr.bf16.mxu0 %v3721
    %4317 = vmatpush1.bf16.msra.mxu0 %v3720
    %4318 = vmatprep.subr.bf16.mxu0 %v3723
    %4319 = vmatpush1.bf16.msra.mxu0 %v3722
    %4320 = vmatprep.subr.bf16.mxu0 %v3725
    %4321 = vmatpush1.bf16.msra.mxu0 %v3724
    %4322 = vmatprep.subr.bf16.mxu0 %v3727
    %4323 = vmatpush1.bf16.msra.mxu0 %v3726
    %4324 = vmatprep.mubr.bf16.mxu0 %v2509
    %4325 = vmatmul.mubr.bf16.gmra.mrb[0].mxu0 %v2508
    %v4326 = vpop.f32.mrb[0].mxu0
    %v4327 = vadd.f32 %v4274, %v4326
    %v4328 = vpop.f32.mrb[0].mxu0
    %v4329 = vadd.f32 %v4276, %v4328
    %v4330 = vpop.f32.mrb[0].mxu0
    %v4331 = vadd.f32 %v4278, %v4330
    %v4332 = vpop.f32.mrb[0].mxu0
    %v4333 = vadd.f32 %v4280, %v4332
    %4334 = vmatprep.mubr.bf16.mxu0 %v2525
    %4335 = vmatmul.mubr.bf16.gmra.mrb[0].mxu0 %v2524
    %v4336 = vpop.f32.mrb[0].mxu0
    %v4337 = vadd.f32 %v4284, %v4336
    %v4338 = vpop.f32.mrb[0].mxu0
    %v4339 = vadd.f32 %v4286, %v4338
    %v4340 = vpop.f32.mrb[0].mxu0
    %v4341 = vadd.f32 %v4288, %v4340
    %v4342 = vpop.f32.mrb[0].mxu0
    %v4343 = vadd.f32 %v4290, %v4342
    %4344 = vdwg.mxu0
    %4345 = vmatprep.subr.bf16.mxu0 %v3729
    %4346 = vmatpush1.bf16.msra.mxu0 %v3728
    %4347 = vmatprep.subr.bf16.mxu0 %v3731
    %4348 = vmatpush1.bf16.msra.mxu0 %v3730
    %4349 = vmatprep.subr.bf16.mxu0 %v3733
    %4350 = vmatpush1.bf16.msra.mxu0 %v3732
    %4351 = vmatprep.subr.bf16.mxu0 %v3735
    %4352 = vmatpush1.bf16.msra.mxu0 %v3734
    %4353 = vmatprep.subr.bf16.mxu0 %v3737
    %4354 = vmatpush1.bf16.msra.mxu0 %v3736
    %4355 = vmatprep.subr.bf16.mxu0 %v3739
    %4356 = vmatpush1.bf16.msra.mxu0 %v3738
    %4357 = vmatprep.subr.bf16.mxu0 %v3741
    %4358 = vmatpush1.bf16.msra.mxu0 %v3740
    %4359 = vmatprep.subr.bf16.mxu0 %v3743
    %4360 = vmatpush1.bf16.msra.mxu0 %v3742
    %4361 = vmatprep.subr.bf16.mxu0 %v3745
    %4362 = vmatpush1.bf16.msra.mxu0 %v3744
    %4363 = vmatprep.subr.bf16.mxu0 %v3747
    %4364 = vmatpush1.bf16.msra.mxu0 %v3746
    %4365 = vmatprep.subr.bf16.mxu0 %v3749
    %4366 = vmatpush1.bf16.msra.mxu0 %v3748
    %4367 = vmatprep.subr.bf16.mxu0 %v3751
    %4368 = vmatpush1.bf16.msra.mxu0 %v3750
    %4369 = vmatprep.subr.bf16.mxu0 %v3753
    %4370 = vmatpush1.bf16.msra.mxu0 %v3752
    %4371 = vmatprep.subr.bf16.mxu0 %v3755
    %4372 = vmatpush1.bf16.msra.mxu0 %v3754
    %4373 = vmatprep.subr.bf16.mxu0 %v3757
    %4374 = vmatpush1.bf16.msra.mxu0 %v3756
    %4375 = vmatprep.subr.bf16.mxu0 %v3759
    %4376 = vmatpush1.bf16.msra.mxu0 %v3758
    %4377 = vmatprep.mubr.bf16.mxu0 %v2511
    %4378 = vmatmul.mubr.bf16.gmra.mrb[0].mxu0 %v2510
    %v4379 = vpop.f32.mrb[0].mxu0
    %v4380 = vadd.f32 %v4327, %v4379
    %v4381 = vpop.f32.mrb[0].mxu0
    %v4382 = vadd.f32 %v4329, %v4381
    %v4383 = vpop.f32.mrb[0].mxu0
    %v4384 = vadd.f32 %v4331, %v4383
    %v4385 = vpop.f32.mrb[0].mxu0
    %v4386 = vadd.f32 %v4333, %v4385
    %4387 = vmatprep.mubr.bf16.mxu0 %v2527
    %4388 = vmatmul.mubr.bf16.gmra.mrb[0].mxu0 %v2526
    %v4389 = vpop.f32.mrb[0].mxu0
    %v4390 = vadd.f32 %v4337, %v4389
    %v4391 = vpop.f32.mrb[0].mxu0
    %v4392 = vadd.f32 %v4339, %v4391
    %v4393 = vpop.f32.mrb[0].mxu0
    %v4394 = vadd.f32 %v4341, %v4393
    %v4395 = vpop.f32.mrb[0].mxu0
    %v4396 = vadd.f32 %v4343, %v4395
    %4397 = vdwg.mxu0
    %4398 = vmatprep.subr.bf16.mxu0 %v3761
    %4399 = vmatpush1.bf16.msra.mxu0 %v3760
    %4400 = vmatprep.subr.bf16.mxu0 %v3763
    %4401 = vmatpush1.bf16.msra.mxu0 %v3762
    %4402 = vmatprep.subr.bf16.mxu0 %v3765
    %4403 = vmatpush1.bf16.msra.mxu0 %v3764
    %4404 = vmatprep.subr.bf16.mxu0 %v3767
    %4405 = vmatpush1.bf16.msra.mxu0 %v3766
    %4406 = vmatprep.subr.bf16.mxu0 %v3769
    %4407 = vmatpush1.bf16.msra.mxu0 %v3768
    %4408 = vmatprep.subr.bf16.mxu0 %v3771
    %4409 = vmatpush1.bf16.msra.mxu0 %v3770
    %4410 = vmatprep.subr.bf16.mxu0 %v3773
    %4411 = vmatpush1.bf16.msra.mxu0 %v3772
    %4412 = vmatprep.subr.bf16.mxu0 %v3775
    %4413 = vmatpush1.bf16.msra.mxu0 %v3774
    %4414 = vmatprep.subr.bf16.mxu0 %v3777
    %4415 = vmatpush1.bf16.msra.mxu0 %v3776
    %4416 = vmatprep.subr.bf16.mxu0 %v3779
    %4417 = vmatpush1.bf16.msra.mxu0 %v3778
    %4418 = vmatprep.subr.bf16.mxu0 %v3781
    %4419 = vmatpush1.bf16.msra.mxu0 %v3780
    %4420 = vmatprep.subr.bf16.mxu0 %v3783
    %4421 = vmatpush1.bf16.msra.mxu0 %v3782
    %4422 = vmatprep.subr.bf16.mxu0 %v3785
    %4423 = vmatpush1.bf16.msra.mxu0 %v3784
    %4424 = vmatprep.subr.bf16.mxu0 %v3787
    %4425 = vmatpush1.bf16.msra.mxu0 %v3786
    %4426 = vmatprep.subr.bf16.mxu0 %v3789
    %4427 = vmatpush1.bf16.msra.mxu0 %v3788
    %4428 = vmatprep.subr.bf16.mxu0 %v3791
    %4429 = vmatpush1.bf16.msra.mxu0 %v3790
    %4430 = vmatprep.mubr.bf16.mxu0 %v2513
    %4431 = vmatmul.mubr.bf16.gmra.mrb[0].mxu0 %v2512
    %v4432 = vpop.f32.mrb[0].mxu0
    %v4433 = vadd.f32 %v4380, %v4432
    %v4434 = vpop.f32.mrb[0].mxu0
    %v4435 = vadd.f32 %v4382, %v4434
    %v4436 = vpop.f32.mrb[0].mxu0
    %v4437 = vadd.f32 %v4384, %v4436
    %v4438 = vpop.f32.mrb[0].mxu0
    %v4439 = vadd.f32 %v4386, %v4438
    %4440 = vmatprep.mubr.bf16.mxu0 %v2529
    %4441 = vmatmul.mubr.bf16.gmra.mrb[0].mxu0 %v2528
    %v4442 = vpop.f32.mrb[0].mxu0
    %v4443 = vadd.f32 %v4390, %v4442
    %v4444 = vpop.f32.mrb[0].mxu0
    %v4445 = vadd.f32 %v4392, %v4444
    %v4446 = vpop.f32.mrb[0].mxu0
    %v4447 = vadd.f32 %v4394, %v4446
    %v4448 = vpop.f32.mrb[0].mxu0
    %v4449 = vadd.f32 %v4396, %v4448
    %4450 = vdwg.mxu0
    %4451 = vmatprep.subr.bf16.mxu0 %v3793
    %4452 = vmatpush1.bf16.msra.mxu0 %v3792
    %4453 = vmatprep.subr.bf16.mxu0 %v3795
    %4454 = vmatpush1.bf16.msra.mxu0 %v3794
    %4455 = vmatprep.subr.bf16.mxu0 %v3797
    %4456 = vmatpush1.bf16.msra.mxu0 %v3796
    %4457 = vmatprep.subr.bf16.mxu0 %v3799
    %4458 = vmatpush1.bf16.msra.mxu0 %v3798
    %4459 = vmatprep.subr.bf16.mxu0 %v3801
    %4460 = vmatpush1.bf16.msra.mxu0 %v3800
    %4461 = vmatprep.subr.bf16.mxu0 %v3803
    %4462 = vmatpush1.bf16.msra.mxu0 %v3802
    %4463 = vmatprep.subr.bf16.mxu0 %v3805
    %4464 = vmatpush1.bf16.msra.mxu0 %v3804
    %4465 = vmatprep.subr.bf16.mxu0 %v3807
    %4466 = vmatpush1.bf16.msra.mxu0 %v3806
    %4467 = vmatprep.subr.bf16.mxu0 %v3809
    %4468 = vmatpush1.bf16.msra.mxu0 %v3808
    %4469 = vmatprep.subr.bf16.mxu0 %v3811
    %4470 = vmatpush1.bf16.msra.mxu0 %v3810
    %4471 = vmatprep.subr.bf16.mxu0 %v3813
    %4472 = vmatpush1.bf16.msra.mxu0 %v3812
    %4473 = vmatprep.subr.bf16.mxu0 %v3815
    %4474 = vmatpush1.bf16.msra.mxu0 %v3814
    %4475 = vmatprep.subr.bf16.mxu0 %v3817
    %4476 = vmatpush1.bf16.msra.mxu0 %v3816
    %4477 = vmatprep.subr.bf16.mxu0 %v3819
    %4478 = vmatpush1.bf16.msra.mxu0 %v3818
    %4479 = vmatprep.subr.bf16.mxu0 %v3821
    %4480 = vmatpush1.bf16.msra.mxu0 %v3820
    %4481 = vmatprep.subr.bf16.mxu0 %v3823
    %4482 = vmatpush1.bf16.msra.mxu0 %v3822
    %4483 = vmatprep.mubr.bf16.mxu0 %v2515
    %4484 = vmatmul.mubr.bf16.gmra.mrb[0].mxu0 %v2514
    %v4485 = vpop.f32.mrb[0].mxu0
    %v4486 = vadd.f32 %v4433, %v4485
    %v4487 = vpop.f32.mrb[0].mxu0
    %v4488 = vadd.f32 %v4435, %v4487
    %v4489 = vpop.f32.mrb[0].mxu0
    %v4490 = vadd.f32 %v4437, %v4489
    %v4491 = vpop.f32.mrb[0].mxu0
    %v4492 = vadd.f32 %v4439, %v4491
    %4493 = vmatprep.mubr.bf16.mxu0 %v2531
    %4494 = vmatmul.mubr.bf16.gmra.mrb[0].mxu0 %v2530
    %v4495 = vpop.f32.mrb[0].mxu0
    %v4496 = vadd.f32 %v4443, %v4495
    %v4497 = vpop.f32.mrb[0].mxu0
    %v4498 = vadd.f32 %v4445, %v4497
    %v4499 = vpop.f32.mrb[0].mxu0
    %v4500 = vadd.f32 %v4447, %v4499
    %v4501 = vpop.f32.mrb[0].mxu0
    %v4502 = vadd.f32 %v4449, %v4501
    %4503 = vdwg.mxu0
    %v4504 = vmul.f32 %v4486, 0.70710677
    %v4505 = vmul.f32 %v4488, 0.70710677
    %v4506 = vmul.f32 %v4490, 0.70710677
    %v4507 = vmul.f32 %v4492, 0.70710677
    %v4508 = vmul.f32 %v4496, 0.70710677
    %v4509 = vmul.f32 %v4498, 0.70710677
    %v4510 = vmul.f32 %v4500, 0.70710677
    %v4511 = vmul.f32 %v4502, 0.70710677
    %v4512 = vand.u32 2147483647, %v4504
    %v4513 = vand.u32 2147483647, %v4505
    %v4514 = vand.u32 2147483647, %v4506
    %v4515 = vand.u32 2147483647, %v4507
    %v4516 = vand.u32 2147483647, %v4508
    %v4517 = vand.u32 2147483647, %v4509
    %v4518 = vand.u32 2147483647, %v4510
    %v4519 = vand.u32 2147483647, %v4511
    %v4520 = vmul.f32 %v4512, 0.3275911
    %v4521 = vmul.f32 %v4513, 0.3275911
    %v4522 = vmul.f32 %v4514, 0.3275911
    %v4523 = vmul.f32 %v4515, 0.3275911
    %v4524 = vmul.f32 %v4516, 0.3275911
    %v4525 = vmul.f32 %v4517, 0.3275911
    %v4526 = vmul.f32 %v4518, 0.3275911
    %v4527 = vmul.f32 %v4519, 0.3275911
    %v4528 = vadd.f32 %v4520, 1.0
    %v4529 = vadd.f32 %v4521, 1.0
    %v4530 = vadd.f32 %v4522, 1.0
    %v4531 = vadd.f32 %v4523, 1.0
    %v4532 = vadd.f32 %v4524, 1.0
    %v4533 = vadd.f32 %v4525, 1.0
    %v4534 = vadd.f32 %v4526, 1.0
    %v4535 = vadd.f32 %v4527, 1.0
    %v4536 = vrcp.pop %v4528
    %v4537 = vmul.f32 1.0, %v4536
    %v4538 = vrcp.pop %v4529
    %v4539 = vmul.f32 1.0, %v4538
    %v4540 = vrcp.pop %v4530
    %v4541 = vmul.f32 1.0, %v4540
    %v4542 = vrcp.pop %v4531
    %v4543 = vmul.f32 1.0, %v4542
    %v4544 = vrcp.pop %v4532
    %v4545 = vmul.f32 1.0, %v4544
    %v4546 = vrcp.pop %v4533
    %v4547 = vmul.f32 1.0, %v4546
    %v4548 = vrcp.pop %v4534
    %v4549 = vmul.f32 1.0, %v4548
    %v4550 = vrcp.pop %v4535
    %v4551 = vmul.f32 1.0, %v4550
    %v4552 = vmul.f32 %v4537, 1.0614054
    %v4553 = vmul.f32 %v4539, 1.0614054
    %v4554 = vmul.f32 %v4541, 1.0614054
    %v4555 = vmul.f32 %v4543, 1.0614054
    %v4556 = vmul.f32 %v4545, 1.0614054
    %v4557 = vmul.f32 %v4547, 1.0614054
    %v4558 = vmul.f32 %v4549, 1.0614054
    %v4559 = vmul.f32 %v4551, 1.0614054
    %v4560 = vadd.f32 %v4552, -1.4531521
    %v4561 = vadd.f32 %v4553, -1.4531521
    %v4562 = vadd.f32 %v4554, -1.4531521
    %v4563 = vadd.f32 %v4555, -1.4531521
    %v4564 = vadd.f32 %v4556, -1.4531521
    %v4565 = vadd.f32 %v4557, -1.4531521
    %v4566 = vadd.f32 %v4558, -1.4531521
    %v4567 = vadd.f32 %v4559, -1.4531521
    %v4568 = vmul.f32 %v4537, %v4560
    %v4569 = vmul.f32 %v4539, %v4561
    %v4570 = vmul.f32 %v4541, %v4562
    %v4571 = vmul.f32 %v4543, %v4563
    %v4572 = vmul.f32 %v4545, %v4564
    %v4573 = vmul.f32 %v4547, %v4565
    %v4574 = vmul.f32 %v4549, %v4566
    %v4575 = vmul.f32 %v4551, %v4567
    %v4576 = vadd.f32 %v4568, 1.4214138
    %v4577 = vadd.f32 %v4569, 1.4214138
    %v4578 = vadd.f32 %v4570, 1.4214138
    %v4579 = vadd.f32 %v4571, 1.4214138
    %v4580 = vadd.f32 %v4572, 1.4214138
    %v4581 = vadd.f32 %v4573, 1.4214138
    %v4582 = vadd.f32 %v4574, 1.4214138
    %v4583 = vadd.f32 %v4575, 1.4214138
    %v4584 = vmul.f32 %v4537, %v4576
    %v4585 = vmul.f32 %v4539, %v4577
    %v4586 = vmul.f32 %v4541, %v4578
    %v4587 = vmul.f32 %v4543, %v4579
    %v4588 = vmul.f32 %v4545, %v4580
    %v4589 = vmul.f32 %v4547, %v4581
    %v4590 = vmul.f32 %v4549, %v4582
    %v4591 = vmul.f32 %v4551, %v4583
    %v4592 = vadd.f32 %v4584, -0.28449672
    %v4593 = vadd.f32 %v4585, -0.28449672
    %v4594 = vadd.f32 %v4586, -0.28449672
    %v4595 = vadd.f32 %v4587, -0.28449672
    %v4596 = vadd.f32 %v4588, -0.28449672
    %v4597 = vadd.f32 %v4589, -0.28449672
    %v4598 = vadd.f32 %v4590, -0.28449672
    %v4599 = vadd.f32 %v4591, -0.28449672
    %v4600 = vmul.f32 %v4537, %v4592
    %v4601 = vmul.f32 %v4539, %v4593
    %v4602 = vmul.f32 %v4541, %v4594
    %v4603 = vmul.f32 %v4543, %v4595
    %v4604 = vmul.f32 %v4545, %v4596
    %v4605 = vmul.f32 %v4547, %v4597
    %v4606 = vmul.f32 %v4549, %v4598
    %v4607 = vmul.f32 %v4551, %v4599
    %v4608 = vadd.f32 %v4600, 0.2548296
    %v4609 = vadd.f32 %v4601, 0.2548296
    %v4610 = vadd.f32 %v4602, 0.2548296
    %v4611 = vadd.f32 %v4603, 0.2548296
    %v4612 = vadd.f32 %v4604, 0.2548296
    %v4613 = vadd.f32 %v4605, 0.2548296
    %v4614 = vadd.f32 %v4606, 0.2548296
    %v4615 = vadd.f32 %v4607, 0.2548296
    %v4616 = vmul.f32 %v4537, %v4608
    %v4617 = vmul.f32 %v4539, %v4609
    %v4618 = vmul.f32 %v4541, %v4610
    %v4619 = vmul.f32 %v4543, %v4611
    %v4620 = vmul.f32 %v4545, %v4612
    %v4621 = vmul.f32 %v4547, %v4613
    %v4622 = vmul.f32 %v4549, %v4614
    %v4623 = vmul.f32 %v4551, %v4615
    %v4624 = vsub.f32 0.0, %v4512
    %v4625 = vsub.f32 0.0, %v4513
    %v4626 = vsub.f32 0.0, %v4514
    %v4627 = vsub.f32 0.0, %v4515
    %v4628 = vsub.f32 0.0, %v4516
    %v4629 = vsub.f32 0.0, %v4517
    %v4630 = vsub.f32 0.0, %v4518
    %v4631 = vsub.f32 0.0, %v4519
    %v4632 = vmul.f32 %v4624, %v4512
    %v4633 = vmul.f32 %v4625, %v4513
    %v4634 = vmul.f32 %v4626, %v4514
    %v4635 = vmul.f32 %v4627, %v4515
    %v4636 = vmul.f32 %v4628, %v4516
    %v4637 = vmul.f32 %v4629, %v4517
    %v4638 = vmul.f32 %v4630, %v4518
    %v4639 = vmul.f32 %v4631, %v4519
    %v4640 = vmul.f32 %v4632, 1.442695
    %v4641 = vpow.pop %v4640
    %v4642 = vmul.f32 %v4633, 1.442695
    %v4643 = vpow.pop %v4642
    %v4644 = vmul.f32 %v4634, 1.442695
    %v4645 = vpow.pop %v4644
    %v4646 = vmul.f32 %v4635, 1.442695
    %v4647 = vpow.pop %v4646
    %v4648 = vmul.f32 %v4636, 1.442695
    %v4649 = vpow.pop %v4648
    %v4650 = vmul.f32 %v4637, 1.442695
    %v4651 = vpow.pop %v4650
    %v4652 = vmul.f32 %v4638, 1.442695
    %v4653 = vpow.pop %v4652
    %v4654 = vmul.f32 %v4639, 1.442695
    %v4655 = vpow.pop %v4654
    %v4656 = vmul.f32 %v4616, %v4641
    %v4657 = vmul.f32 %v4617, %v4643
    %v4658 = vmul.f32 %v4618, %v4645
    %v4659 = vmul.f32 %v4619, %v4647
    %v4660 = vmul.f32 %v4620, %v4649
    %v4661 = vmul.f32 %v4621, %v4651
    %v4662 = vmul.f32 %v4622, %v4653
    %v4663 = vmul.f32 %v4623, %v4655
    %v4664 = vsub.f32 1.0, %v4656
    %v4665 = vsub.f32 1.0, %v4657
    %v4666 = vsub.f32 1.0, %v4658
    %v4667 = vsub.f32 1.0, %v4659
    %v4668 = vsub.f32 1.0, %v4660
    %v4669 = vsub.f32 1.0, %v4661
    %v4670 = vsub.f32 1.0, %v4662
    %v4671 = vsub.f32 1.0, %v4663
    %vm4672 = vcmp.ge.f32.partialorder %v4504, 0.0
    %vm4673 = vcmp.ge.f32.partialorder %v4505, 0.0
    %vm4674 = vcmp.ge.f32.partialorder %v4506, 0.0
    %vm4675 = vcmp.ge.f32.partialorder %v4507, 0.0
    %vm4676 = vcmp.ge.f32.partialorder %v4508, 0.0
    %vm4677 = vcmp.ge.f32.partialorder %v4509, 0.0
    %vm4678 = vcmp.ge.f32.partialorder %v4510, 0.0
    %vm4679 = vcmp.ge.f32.partialorder %v4511, 0.0
    %v4680 = vsub.f32 0.0, %v4664
    %v4681 = vsub.f32 0.0, %v4665
    %v4682 = vsub.f32 0.0, %v4666
    %v4683 = vsub.f32 0.0, %v4667
    %v4684 = vsub.f32 0.0, %v4668
    %v4685 = vsub.f32 0.0, %v4669
    %v4686 = vsub.f32 0.0, %v4670
    %v4687 = vsub.f32 0.0, %v4671
    %v4688 = vsel %vm4672, %v4664, %v4680
    %v4689 = vsel %vm4673, %v4665, %v4681
    %v4690 = vsel %vm4674, %v4666, %v4682
    %v4691 = vsel %vm4675, %v4667, %v4683
    %v4692 = vsel %vm4676, %v4668, %v4684
    %v4693 = vsel %vm4677, %v4669, %v4685
    %v4694 = vsel %vm4678, %v4670, %v4686
    %v4695 = vsel %vm4679, %v4671, %v4687
    %v4696 = vmul.f32 %v4486, 0.5
    %v4697 = vmul.f32 %v4488, 0.5
    %v4698 = vmul.f32 %v4490, 0.5
    %v4699 = vmul.f32 %v4492, 0.5
    %v4700 = vmul.f32 %v4496, 0.5
    %v4701 = vmul.f32 %v4498, 0.5
    %v4702 = vmul.f32 %v4500, 0.5
    %v4703 = vmul.f32 %v4502, 0.5
    %v4704 = vadd.f32 %v4688, 1.0
    %v4705 = vadd.f32 %v4689, 1.0
    %v4706 = vadd.f32 %v4690, 1.0
    %v4707 = vadd.f32 %v4691, 1.0
    %v4708 = vadd.f32 %v4692, 1.0
    %v4709 = vadd.f32 %v4693, 1.0
    %v4710 = vadd.f32 %v4694, 1.0
    %v4711 = vadd.f32 %v4695, 1.0
    %v4712 = vmul.f32 %v4696, %v4704
    %v4713 = vmul.f32 %v4697, %v4705
    %v4714 = vmul.f32 %v4698, %v4706
    %v4715 = vmul.f32 %v4699, %v4707
    %v4716 = vmul.f32 %v4700, %v4708
    %v4717 = vmul.f32 %v4701, %v4709
    %v4718 = vmul.f32 %v4702, %v4710
    %v4719 = vmul.f32 %v4703, %v4711
    %vm4728 = vcmask 1040384
    %v4729 = vrot.slane %v4712, 7
    %v4730 = vrot.slane %v4713, 7
    %v4731 = vrot.slane %v4714, 7
    %v4732 = vsel %vm4728, %v4729, %v4731
    %v4733 = vrot.slane %v4715, 7
    %v4734 = vsel %vm4728, %v4730, %v4733
    %v4735 = vrot.slane %v4716, 7
    %v4736 = vsel %vm4728, %v4731, %v4735
    %v4737 = vrot.slane %v4717, 7
    %v4738 = vsel %vm4728, %v4733, %v4737
    %v4739 = vrot.slane %v4718, 7
    %v4740 = vsel %vm4728, %v4735, %v4739
    %v4741 = vrot.slane %v4719, 7
    %v4742 = vsel %vm4728, %v4737, %v4741
    %v4751 = vsel %vm4728, 0.0, %v4729
    %v4752 = vsel %vm4728, 0.0, %v4730
    %vm4753 = vcmask 1046528
    %v4754 = vrot.slane %v4712, 1
    %v4755 = vrot.slane %v4714, 1
    %v4756 = vsel %vm4753, %v4754, %v4755
    %v4757 = vrot.slane %v4713, 1
    %v4758 = vrot.slane %v4715, 1
    %v4759 = vsel %vm4753, %v4757, %v4758
    %v4760 = vrot.slane %v4716, 1
    %v4761 = vsel %vm4753, %v4755, %v4760
    %v4762 = vrot.slane %v4717, 1
    %v4763 = vsel %vm4753, %v4758, %v4762
    %v4764 = vrot.slane %v4718, 1
    %v4765 = vsel %vm4753, %v4760, %v4764
    %v4766 = vrot.slane %v4719, 1
    %v4767 = vsel %vm4753, %v4762, %v4766
    %v4776 = vsel %vm4753, %v4764, 0.0
    %v4777 = vsel %vm4753, %v4766, 0.0
    %v4778 = vlaneseq
    %v4779 = vshrl.u32 %v4778, 7
    %v4780 = vadd.s32 %v4779, 8
    %v4781 = vadd.s32 %v4779, 16
    %v4782 = vadd.s32 %v4779, 24
    %vm4783 = vcmp.eq.s32.totalorder %v4779, 0
    %vm4784 = vcmp.eq.s32.totalorder %v4780, 0
    %vm4785 = vcmp.eq.s32.totalorder %v4781, 0
    %vm4786 = vcmp.eq.s32.totalorder %v4782, 0
    %vm4787 = vcmp.eq.s32.totalorder %v4779, 15
    %vm4788 = vcmp.eq.s32.totalorder %v4780, 15
    %vm4789 = vcmp.eq.s32.totalorder %v4781, 15
    %vm4790 = vcmp.eq.s32.totalorder %v4782, 15
    %vm4791 = vcmp.eq.s32.totalorder %v4779, 16
    %vm4792 = vcmp.eq.s32.totalorder %v4780, 16
    %vm4793 = vcmp.eq.s32.totalorder %v4781, 16
    %vm4794 = vcmp.eq.s32.totalorder %v4782, 16
    %vm4795 = vmor %vm4783, %vm4791
    %vm4796 = vmor %vm4784, %vm4792
    %vm4797 = vmor %vm4785, %vm4793
    %vm4798 = vmor %vm4786, %vm4794
    %vm4799 = vcmp.eq.s32.totalorder %v4779, 31
    %vm4800 = vcmp.eq.s32.totalorder %v4780, 31
    %vm4801 = vcmp.eq.s32.totalorder %v4781, 31
    %vm4802 = vcmp.eq.s32.totalorder %v4782, 31
    %vm4803 = vmor %vm4787, %vm4799
    %vm4804 = vmor %vm4788, %vm4800
    %vm4805 = vmor %vm4789, %vm4801
    %vm4806 = vmor %vm4790, %vm4802
    %v4807 = vsel %vm4795, 1, 0
    %v4808 = vsel %vm4796, 1, 0
    %v4809 = vsel %vm4797, 1, 0
    %v4810 = vsel %vm4798, 1, 0
    %vm4811 = vcmp.eq.s32.totalorder %v4807, 1
    %vm4812 = vcmp.eq.s32.totalorder %v4808, 1
    %vm4813 = vcmp.eq.s32.totalorder %v4809, 1
    %vm4814 = vcmp.eq.s32.totalorder %v4810, 1
    %v4815 = vsel %vm4811, 0.0, %v4751
    %v4816 = vsel %vm4811, 0.0, %v4752
    %v4817 = vsel %vm4812, 0.0, %v4732
    %v4818 = vsel %vm4812, 0.0, %v4734
    %v4819 = vsel %vm4813, 0.0, %v4736
    %v4820 = vsel %vm4813, 0.0, %v4738
    %v4821 = vsel %vm4814, 0.0, %v4740
    %v4822 = vsel %vm4814, 0.0, %v4742
    %v4823 = vsel %vm4803, 1, 0
    %v4824 = vsel %vm4804, 1, 0
    %v4825 = vsel %vm4805, 1, 0
    %v4826 = vsel %vm4806, 1, 0
    %vm4827 = vcmp.eq.s32.totalorder %v4823, 1
    %vm4828 = vcmp.eq.s32.totalorder %v4824, 1
    %vm4829 = vcmp.eq.s32.totalorder %v4825, 1
    %vm4830 = vcmp.eq.s32.totalorder %v4826, 1
    %v4831 = vsel %vm4827, 0.0, %v4756
    %v4832 = vsel %vm4827, 0.0, %v4759
    %v4833 = vsel %vm4828, 0.0, %v4761
    %v4834 = vsel %vm4828, 0.0, %v4763
    %v4835 = vsel %vm4829, 0.0, %v4765
    %v4836 = vsel %vm4829, 0.0, %v4767
    %v4837 = vsel %vm4830, 0.0, %v4776
    %v4838 = vsel %vm4830, 0.0, %v4777
    %v4839 = vpack.c.bf16 %v4817, %v4815
    %v4840 = vpack.c.bf16 %v4818, %v4816
    %v4841 = vpack.c.bf16 %v4714, %v4712
    %v4842 = vpack.c.bf16 %v4715, %v4713
    %v4843 = vpack.c.bf16 %v4833, %v4831
    %v4844 = vpack.c.bf16 %v4834, %v4832
    %v4845 = vpack.c.bf16 %v4821, %v4819
    %v4846 = vpack.c.bf16 %v4822, %v4820
    %v4847 = vpack.c.bf16 %v4718, %v4716
    %v4848 = vpack.c.bf16 %v4719, %v4717
    %v4849 = vpack.c.bf16 %v4837, %v4835
    %v4850 = vpack.c.bf16 %v4838, %v4836
    %v4851 = vld [vmem:[#allocation8] sm:$0xff]
    %v4852 = vld [vmem:[#allocation8 + $0x8] sm:$0xff]
    %v4853 = vld [vmem:[#allocation8 + $0x10] sm:$0xff]
    %v4854 = vld [vmem:[#allocation8 + $0x18] sm:$0xff]
    %v4855 = vld [vmem:[#allocation8 + $0x20] sm:$0xff]
    %v4856 = vld [vmem:[#allocation8 + $0x28] sm:$0xff]
    %v4857 = vld [vmem:[#allocation8 + $0x30] sm:$0xff]
    %v4858 = vld [vmem:[#allocation8 + $0x38] sm:$0xff]
    %v4859 = vld [vmem:[#allocation8 + $0x40] sm:$0xff]
    %v4860 = vld [vmem:[#allocation8 + $0x48] sm:$0xff]
    %v4861 = vld [vmem:[#allocation8 + $0x50] sm:$0xff]
    %v4862 = vld [vmem:[#allocation8 + $0x58] sm:$0xff]
    %v4863 = vld [vmem:[#allocation8 + $0x60] sm:$0xff]
    %v4864 = vld [vmem:[#allocation8 + $0x68] sm:$0xff]
    %v4865 = vld [vmem:[#allocation8 + $0x70] sm:$0xff]
    %v4866 = vld [vmem:[#allocation8 + $0x78] sm:$0xff]
    %v4867 = vld [vmem:[#allocation8 + $0x80] sm:$0xff]
    %v4868 = vld [vmem:[#allocation8 + $0x88] sm:$0xff]
    %v4869 = vld [vmem:[#allocation8 + $0x90] sm:$0xff]
    %v4870 = vld [vmem:[#allocation8 + $0x98] sm:$0xff]
    %v4871 = vld [vmem:[#allocation8 + $0xa0] sm:$0xff]
    %v4872 = vld [vmem:[#allocation8 + $0xa8] sm:$0xff]
    %v4873 = vld [vmem:[#allocation8 + $0xb0] sm:$0xff]
    %v4874 = vld [vmem:[#allocation8 + $0xb8] sm:$0xff]
    %v4875 = vld [vmem:[#allocation8 + $0xc0] sm:$0xff]
    %v4876 = vld [vmem:[#allocation8 + $0xc8] sm:$0xff]
    %v4877 = vld [vmem:[#allocation8 + $0xd0] sm:$0xff]
    %v4878 = vld [vmem:[#allocation8 + $0xd8] sm:$0xff]
    %v4879 = vld [vmem:[#allocation8 + $0xe0] sm:$0xff]
    %v4880 = vld [vmem:[#allocation8 + $0xe8] sm:$0xff]
    %v4881 = vld [vmem:[#allocation8 + $0xf0] sm:$0xff]
    %v4882 = vld [vmem:[#allocation8 + $0xf8] sm:$0xff]
    %v4883 = vld [vmem:[#allocation8 + $0x100] sm:$0xff]
    %v4884 = vld [vmem:[#allocation8 + $0x108] sm:$0xff]
    %v4885 = vld [vmem:[#allocation8 + $0x110] sm:$0xff]
    %v4886 = vld [vmem:[#allocation8 + $0x118] sm:$0xff]
    %v4887 = vld [vmem:[#allocation8 + $0x120] sm:$0xff]
    %v4888 = vld [vmem:[#allocation8 + $0x128] sm:$0xff]
    %v4889 = vld [vmem:[#allocation8 + $0x130] sm:$0xff]
    %v4890 = vld [vmem:[#allocation8 + $0x138] sm:$0xff]
    %v4891 = vld [vmem:[#allocation8 + $0x140] sm:$0xff]
    %v4892 = vld [vmem:[#allocation8 + $0x148] sm:$0xff]
    %v4893 = vld [vmem:[#allocation8 + $0x150] sm:$0xff]
    %v4894 = vld [vmem:[#allocation8 + $0x158] sm:$0xff]
    %v4895 = vld [vmem:[#allocation8 + $0x160] sm:$0xff]
    %v4896 = vld [vmem:[#allocation8 + $0x168] sm:$0xff]
    %v4897 = vld [vmem:[#allocation8 + $0x170] sm:$0xff]
    %v4898 = vld [vmem:[#allocation8 + $0x178] sm:$0xff]
    %v4899 = vld [vmem:[#allocation8 + $0x180] sm:$0xff]
    %v4900 = vld [vmem:[#allocation8 + $0x188] sm:$0xff]
    %v4901 = vld [vmem:[#allocation8 + $0x190] sm:$0xff]
    %v4902 = vld [vmem:[#allocation8 + $0x198] sm:$0xff]
    %v4903 = vld [vmem:[#allocation8 + $0x1a0] sm:$0xff]
    %v4904 = vld [vmem:[#allocation8 + $0x1a8] sm:$0xff]
    %v4905 = vld [vmem:[#allocation8 + $0x1b0] sm:$0xff]
    %v4906 = vld [vmem:[#allocation8 + $0x1b8] sm:$0xff]
    %v4907 = vld [vmem:[#allocation8 + $0x1c0] sm:$0xff]
    %v4908 = vld [vmem:[#allocation8 + $0x1c8] sm:$0xff]
    %v4909 = vld [vmem:[#allocation8 + $0x1d0] sm:$0xff]
    %v4910 = vld [vmem:[#allocation8 + $0x1d8] sm:$0xff]
    %v4911 = vld [vmem:[#allocation8 + $0x1e0] sm:$0xff]
    %v4912 = vld [vmem:[#allocation8 + $0x1e8] sm:$0xff]
    %v4913 = vld [vmem:[#allocation8 + $0x1f0] sm:$0xff]
    %v4914 = vld [vmem:[#allocation8 + $0x1f8] sm:$0xff]
    %v4915 = vld [vmem:[#allocation8 + $0x200] sm:$0xff]
    %v4916 = vld [vmem:[#allocation8 + $0x208] sm:$0xff]
    %v4917 = vld [vmem:[#allocation8 + $0x210] sm:$0xff]
    %v4918 = vld [vmem:[#allocation8 + $0x218] sm:$0xff]
    %v4919 = vld [vmem:[#allocation8 + $0x220] sm:$0xff]
    %v4920 = vld [vmem:[#allocation8 + $0x228] sm:$0xff]
    %v4921 = vld [vmem:[#allocation8 + $0x230] sm:$0xff]
    %v4922 = vld [vmem:[#allocation8 + $0x238] sm:$0xff]
    %v4923 = vld [vmem:[#allocation8 + $0x240] sm:$0xff]
    %v4924 = vld [vmem:[#allocation8 + $0x248] sm:$0xff]
    %v4925 = vld [vmem:[#allocation8 + $0x250] sm:$0xff]
    %v4926 = vld [vmem:[#allocation8 + $0x258] sm:$0xff]
    %v4927 = vld [vmem:[#allocation8 + $0x260] sm:$0xff]
    %v4928 = vld [vmem:[#allocation8 + $0x268] sm:$0xff]
    %v4929 = vld [vmem:[#allocation8 + $0x270] sm:$0xff]
    %v4930 = vld [vmem:[#allocation8 + $0x278] sm:$0xff]
    %v4931 = vld [vmem:[#allocation8 + $0x280] sm:$0xff]
    %v4932 = vld [vmem:[#allocation8 + $0x288] sm:$0xff]
    %v4933 = vld [vmem:[#allocation8 + $0x290] sm:$0xff]
    %v4934 = vld [vmem:[#allocation8 + $0x298] sm:$0xff]
    %v4935 = vld [vmem:[#allocation8 + $0x2a0] sm:$0xff]
    %v4936 = vld [vmem:[#allocation8 + $0x2a8] sm:$0xff]
    %v4937 = vld [vmem:[#allocation8 + $0x2b0] sm:$0xff]
    %v4938 = vld [vmem:[#allocation8 + $0x2b8] sm:$0xff]
    %v4939 = vld [vmem:[#allocation8 + $0x2c0] sm:$0xff]
    %v4940 = vld [vmem:[#allocation8 + $0x2c8] sm:$0xff]
    %v4941 = vld [vmem:[#allocation8 + $0x2d0] sm:$0xff]
    %v4942 = vld [vmem:[#allocation8 + $0x2d8] sm:$0xff]
    %v4943 = vld [vmem:[#allocation8 + $0x2e0] sm:$0xff]
    %v4944 = vld [vmem:[#allocation8 + $0x2e8] sm:$0xff]
    %v4945 = vld [vmem:[#allocation8 + $0x2f0] sm:$0xff]
    %v4946 = vld [vmem:[#allocation8 + $0x2f8] sm:$0xff]
    %v4947 = vld [vmem:[#allocation8 + $0x300] sm:$0xff]
    %v4948 = vld [vmem:[#allocation8 + $0x308] sm:$0xff]
    %v4949 = vld [vmem:[#allocation8 + $0x310] sm:$0xff]
    %v4950 = vld [vmem:[#allocation8 + $0x318] sm:$0xff]
    %v4951 = vld [vmem:[#allocation8 + $0x320] sm:$0xff]
    %v4952 = vld [vmem:[#allocation8 + $0x328] sm:$0xff]
    %v4953 = vld [vmem:[#allocation8 + $0x330] sm:$0xff]
    %v4954 = vld [vmem:[#allocation8 + $0x338] sm:$0xff]
    %v4955 = vld [vmem:[#allocation8 + $0x340] sm:$0xff]
    %v4956 = vld [vmem:[#allocation8 + $0x348] sm:$0xff]
    %v4957 = vld [vmem:[#allocation8 + $0x350] sm:$0xff]
    %v4958 = vld [vmem:[#allocation8 + $0x358] sm:$0xff]
    %v4959 = vld [vmem:[#allocation8 + $0x360] sm:$0xff]
    %v4960 = vld [vmem:[#allocation8 + $0x368] sm:$0xff]
    %v4961 = vld [vmem:[#allocation8 + $0x370] sm:$0xff]
    %v4962 = vld [vmem:[#allocation8 + $0x378] sm:$0xff]
    %v4963 = vld [vmem:[#allocation8 + $0x380] sm:$0xff]
    %v4964 = vld [vmem:[#allocation8 + $0x388] sm:$0xff]
    %v4965 = vld [vmem:[#allocation8 + $0x390] sm:$0xff]
    %v4966 = vld [vmem:[#allocation8 + $0x398] sm:$0xff]
    %v4967 = vld [vmem:[#allocation8 + $0x3a0] sm:$0xff]
    %v4968 = vld [vmem:[#allocation8 + $0x3a8] sm:$0xff]
    %v4969 = vld [vmem:[#allocation8 + $0x3b0] sm:$0xff]
    %v4970 = vld [vmem:[#allocation8 + $0x3b8] sm:$0xff]
    %v4971 = vld [vmem:[#allocation8 + $0x3c0] sm:$0xff]
    %v4972 = vld [vmem:[#allocation8 + $0x3c8] sm:$0xff]
    %v4973 = vld [vmem:[#allocation8 + $0x3d0] sm:$0xff]
    %v4974 = vld [vmem:[#allocation8 + $0x3d8] sm:$0xff]
    %v4975 = vld [vmem:[#allocation8 + $0x3e0] sm:$0xff]
    %v4976 = vld [vmem:[#allocation8 + $0x3e8] sm:$0xff]
    %v4977 = vld [vmem:[#allocation8 + $0x3f0] sm:$0xff]
    %v4978 = vld [vmem:[#allocation8 + $0x3f8] sm:$0xff]
    %v4979 = vld [vmem:[#allocation8 + $0x400] sm:$0xff]
    %v4980 = vld [vmem:[#allocation8 + $0x408] sm:$0xff]
    %v4981 = vld [vmem:[#allocation8 + $0x410] sm:$0xff]
    %v4982 = vld [vmem:[#allocation8 + $0x418] sm:$0xff]
    %v4983 = vld [vmem:[#allocation8 + $0x420] sm:$0xff]
    %v4984 = vld [vmem:[#allocation8 + $0x428] sm:$0xff]
    %v4985 = vld [vmem:[#allocation8 + $0x430] sm:$0xff]
    %v4986 = vld [vmem:[#allocation8 + $0x438] sm:$0xff]
    %v4987 = vld [vmem:[#allocation8 + $0x440] sm:$0xff]
    %v4988 = vld [vmem:[#allocation8 + $0x448] sm:$0xff]
    %v4989 = vld [vmem:[#allocation8 + $0x450] sm:$0xff]
    %v4990 = vld [vmem:[#allocation8 + $0x458] sm:$0xff]
    %v4991 = vld [vmem:[#allocation8 + $0x460] sm:$0xff]
    %v4992 = vld [vmem:[#allocation8 + $0x468] sm:$0xff]
    %v4993 = vld [vmem:[#allocation8 + $0x470] sm:$0xff]
    %v4994 = vld [vmem:[#allocation8 + $0x478] sm:$0xff]
    %v4995 = vld [vmem:[#allocation8 + $0x480] sm:$0xff]
    %v4996 = vld [vmem:[#allocation8 + $0x488] sm:$0xff]
    %v4997 = vld [vmem:[#allocation8 + $0x490] sm:$0xff]
    %v4998 = vld [vmem:[#allocation8 + $0x498] sm:$0xff]
    %v4999 = vld [vmem:[#allocation8 + $0x4a0] sm:$0xff]
    %v5000 = vld [vmem:[#allocation8 + $0x4a8] sm:$0xff]
    %v5001 = vld [vmem:[#allocation8 + $0x4b0] sm:$0xff]
    %v5002 = vld [vmem:[#allocation8 + $0x4b8] sm:$0xff]
    %v5003 = vld [vmem:[#allocation8 + $0x4c0] sm:$0xff]
    %v5004 = vld [vmem:[#allocation8 + $0x4c8] sm:$0xff]
    %v5005 = vld [vmem:[#allocation8 + $0x4d0] sm:$0xff]
    %v5006 = vld [vmem:[#allocation8 + $0x4d8] sm:$0xff]
    %v5007 = vld [vmem:[#allocation8 + $0x4e0] sm:$0xff]
    %v5008 = vld [vmem:[#allocation8 + $0x4e8] sm:$0xff]
    %v5009 = vld [vmem:[#allocation8 + $0x4f0] sm:$0xff]
    %v5010 = vld [vmem:[#allocation8 + $0x4f8] sm:$0xff]
    %v5011 = vld [vmem:[#allocation8 + $0x500] sm:$0xff]
    %v5012 = vld [vmem:[#allocation8 + $0x508] sm:$0xff]
    %v5013 = vld [vmem:[#allocation8 + $0x510] sm:$0xff]
    %v5014 = vld [vmem:[#allocation8 + $0x518] sm:$0xff]
    %v5015 = vld [vmem:[#allocation8 + $0x520] sm:$0xff]
    %v5016 = vld [vmem:[#allocation8 + $0x528] sm:$0xff]
    %v5017 = vld [vmem:[#allocation8 + $0x530] sm:$0xff]
    %v5018 = vld [vmem:[#allocation8 + $0x538] sm:$0xff]
    %v5019 = vld [vmem:[#allocation8 + $0x540] sm:$0xff]
    %v5020 = vld [vmem:[#allocation8 + $0x548] sm:$0xff]
    %v5021 = vld [vmem:[#allocation8 + $0x550] sm:$0xff]
    %v5022 = vld [vmem:[#allocation8 + $0x558] sm:$0xff]
    %v5023 = vld [vmem:[#allocation8 + $0x560] sm:$0xff]
    %v5024 = vld [vmem:[#allocation8 + $0x568] sm:$0xff]
    %v5025 = vld [vmem:[#allocation8 + $0x570] sm:$0xff]
    %v5026 = vld [vmem:[#allocation8 + $0x578] sm:$0xff]
    %v5027 = vld [vmem:[#allocation8 + $0x580] sm:$0xff]
    %v5028 = vld [vmem:[#allocation8 + $0x588] sm:$0xff]
    %v5029 = vld [vmem:[#allocation8 + $0x590] sm:$0xff]
    %v5030 = vld [vmem:[#allocation8 + $0x598] sm:$0xff]
    %v5031 = vld [vmem:[#allocation8 + $0x5a0] sm:$0xff]
    %v5032 = vld [vmem:[#allocation8 + $0x5a8] sm:$0xff]
    %v5033 = vld [vmem:[#allocation8 + $0x5b0] sm:$0xff]
    %v5034 = vld [vmem:[#allocation8 + $0x5b8] sm:$0xff]
    %v5035 = vld [vmem:[#allocation8 + $0x5c0] sm:$0xff]
    %v5036 = vld [vmem:[#allocation8 + $0x5c8] sm:$0xff]
    %v5037 = vld [vmem:[#allocation8 + $0x5d0] sm:$0xff]
    %v5038 = vld [vmem:[#allocation8 + $0x5d8] sm:$0xff]
    %v5039 = vld [vmem:[#allocation8 + $0x5e0] sm:$0xff]
    %v5040 = vld [vmem:[#allocation8 + $0x5e8] sm:$0xff]
    %v5041 = vld [vmem:[#allocation8 + $0x5f0] sm:$0xff]
    %v5042 = vld [vmem:[#allocation8 + $0x5f8] sm:$0xff]
    %v5043 = vld [vmem:[%s10] sm:$0xf]
    %v5045 = vlaneseq
    %v5046 = vshrl.u32 %v5045, 7
    %v5047 = vsub.s32 0, %v5046
    %v5048 = vrot.slane %v5043, %v5047
    %v5049 = vlaneseq
    %v5050 = vshrl.u32 %v5049, 7
    %v5051 = vsub.s32 1, %v5050
    %v5052 = vrot.slane %v5043, %v5051
    %v5053 = vlaneseq
    %v5054 = vshrl.u32 %v5053, 7
    %v5055 = vsub.s32 2, %v5054
    %v5056 = vrot.slane %v5043, %v5055
    %v5057 = vlaneseq
    %v5058 = vshrl.u32 %v5057, 7
    %v5059 = vsub.s32 3, %v5058
    %v5060 = vrot.slane %v5043, %v5059
    %v5257 = vunpack.c.l.b16 %v4851
    %v5258 = vunpack.c.h.b16 %v4851
    %v5259 = vunpack.c.l.b16 %v4852
    %v5260 = vunpack.c.h.b16 %v4852
    %v5261 = vunpack.c.l.b16 %v4853
    %v5262 = vunpack.c.h.b16 %v4853
    %v5263 = vunpack.c.l.b16 %v4854
    %v5264 = vunpack.c.h.b16 %v4854
    %v5265 = vunpack.c.l.b16 %v4855
    %v5266 = vunpack.c.h.b16 %v4855
    %v5267 = vunpack.c.l.b16 %v4856
    %v5268 = vunpack.c.h.b16 %v4856
    %v5269 = vunpack.c.l.b16 %v4857
    %v5270 = vunpack.c.h.b16 %v4857
    %v5271 = vunpack.c.l.b16 %v4858
    %v5272 = vunpack.c.h.b16 %v4858
    %v5273 = vunpack.c.l.b16 %v4859
    %v5274 = vunpack.c.h.b16 %v4859
    %v5275 = vunpack.c.l.b16 %v4860
    %v5276 = vunpack.c.h.b16 %v4860
    %v5277 = vunpack.c.l.b16 %v4861
    %v5278 = vunpack.c.h.b16 %v4861
    %v5279 = vunpack.c.l.b16 %v4862
    %v5280 = vunpack.c.h.b16 %v4862
    %v5281 = vunpack.c.l.b16 %v4863
    %v5282 = vunpack.c.h.b16 %v4863
    %v5283 = vunpack.c.l.b16 %v4864
    %v5284 = vunpack.c.h.b16 %v4864
    %v5285 = vunpack.c.l.b16 %v4865
    %v5286 = vunpack.c.h.b16 %v4865
    %v5287 = vunpack.c.l.b16 %v4866
    %v5288 = vunpack.c.h.b16 %v4866
    %v5289 = vunpack.c.l.b16 %v4867
    %v5290 = vunpack.c.h.b16 %v4867
    %v5291 = vunpack.c.l.b16 %v4868
    %v5292 = vunpack.c.h.b16 %v4868
    %v5293 = vunpack.c.l.b16 %v4869
    %v5294 = vunpack.c.h.b16 %v4869
    %v5295 = vunpack.c.l.b16 %v4870
    %v5296 = vunpack.c.h.b16 %v4870
    %v5297 = vunpack.c.l.b16 %v4871
    %v5298 = vunpack.c.h.b16 %v4871
    %v5299 = vunpack.c.l.b16 %v4872
    %v5300 = vunpack.c.h.b16 %v4872
    %v5301 = vunpack.c.l.b16 %v4873
    %v5302 = vunpack.c.h.b16 %v4873
    %v5303 = vunpack.c.l.b16 %v4874
    %v5304 = vunpack.c.h.b16 %v4874
    %v5305 = vunpack.c.l.b16 %v4875
    %v5306 = vunpack.c.h.b16 %v4875
    %v5307 = vunpack.c.l.b16 %v4876
    %v5308 = vunpack.c.h.b16 %v4876
    %v5309 = vunpack.c.l.b16 %v4877
    %v5310 = vunpack.c.h.b16 %v4877
    %v5311 = vunpack.c.l.b16 %v4878
    %v5312 = vunpack.c.h.b16 %v4878
    %v5313 = vunpack.c.l.b16 %v4879
    %v5314 = vunpack.c.h.b16 %v4879
    %v5315 = vunpack.c.l.b16 %v4880
    %v5316 = vunpack.c.h.b16 %v4880
    %v5317 = vunpack.c.l.b16 %v4881
    %v5318 = vunpack.c.h.b16 %v4881
    %v5319 = vunpack.c.l.b16 %v4882
    %v5320 = vunpack.c.h.b16 %v4882
    %v5321 = vunpack.c.l.b16 %v4883
    %v5322 = vunpack.c.h.b16 %v4883
    %v5323 = vunpack.c.l.b16 %v4884
    %v5324 = vunpack.c.h.b16 %v4884
    %v5325 = vunpack.c.l.b16 %v4885
    %v5326 = vunpack.c.h.b16 %v4885
    %v5327 = vunpack.c.l.b16 %v4886
    %v5328 = vunpack.c.h.b16 %v4886
    %v5329 = vunpack.c.l.b16 %v4887
    %v5330 = vunpack.c.h.b16 %v4887
    %v5331 = vunpack.c.l.b16 %v4888
    %v5332 = vunpack.c.h.b16 %v4888
    %v5333 = vunpack.c.l.b16 %v4889
    %v5334 = vunpack.c.h.b16 %v4889
    %v5335 = vunpack.c.l.b16 %v4890
    %v5336 = vunpack.c.h.b16 %v4890
    %v5337 = vunpack.c.l.b16 %v4891
    %v5338 = vunpack.c.h.b16 %v4891
    %v5339 = vunpack.c.l.b16 %v4892
    %v5340 = vunpack.c.h.b16 %v4892
    %v5341 = vunpack.c.l.b16 %v4893
    %v5342 = vunpack.c.h.b16 %v4893
    %v5343 = vunpack.c.l.b16 %v4894
    %v5344 = vunpack.c.h.b16 %v4894
    %v5345 = vunpack.c.l.b16 %v4895
    %v5346 = vunpack.c.h.b16 %v4895
    %v5347 = vunpack.c.l.b16 %v4896
    %v5348 = vunpack.c.h.b16 %v4896
    %v5349 = vunpack.c.l.b16 %v4897
    %v5350 = vunpack.c.h.b16 %v4897
    %v5351 = vunpack.c.l.b16 %v4898
    %v5352 = vunpack.c.h.b16 %v4898
    %v5353 = vunpack.c.l.b16 %v4899
    %v5354 = vunpack.c.h.b16 %v4899
    %v5355 = vunpack.c.l.b16 %v4900
    %v5356 = vunpack.c.h.b16 %v4900
    %v5357 = vunpack.c.l.b16 %v4901
    %v5358 = vunpack.c.h.b16 %v4901
    %v5359 = vunpack.c.l.b16 %v4902
    %v5360 = vunpack.c.h.b16 %v4902
    %v5361 = vunpack.c.l.b16 %v4903
    %v5362 = vunpack.c.h.b16 %v4903
    %v5363 = vunpack.c.l.b16 %v4904
    %v5364 = vunpack.c.h.b16 %v4904
    %v5365 = vunpack.c.l.b16 %v4905
    %v5366 = vunpack.c.h.b16 %v4905
    %v5367 = vunpack.c.l.b16 %v4906
    %v5368 = vunpack.c.h.b16 %v4906
    %v5369 = vunpack.c.l.b16 %v4907
    %v5370 = vunpack.c.h.b16 %v4907
    %v5371 = vunpack.c.l.b16 %v4908
    %v5372 = vunpack.c.h.b16 %v4908
    %v5373 = vunpack.c.l.b16 %v4909
    %v5374 = vunpack.c.h.b16 %v4909
    %v5375 = vunpack.c.l.b16 %v4910
    %v5376 = vunpack.c.h.b16 %v4910
    %v5377 = vunpack.c.l.b16 %v4911
    %v5378 = vunpack.c.h.b16 %v4911
    %v5379 = vunpack.c.l.b16 %v4912
    %v5380 = vunpack.c.h.b16 %v4912
    %v5381 = vunpack.c.l.b16 %v4913
    %v5382 = vunpack.c.h.b16 %v4913
    %v5383 = vunpack.c.l.b16 %v4914
    %v5384 = vunpack.c.h.b16 %v4914
    %v5385 = vunpack.c.l.b16 %v4915
    %v5386 = vunpack.c.h.b16 %v4915
    %v5387 = vunpack.c.l.b16 %v4916
    %v5388 = vunpack.c.h.b16 %v4916
    %v5389 = vunpack.c.l.b16 %v4917
    %v5390 = vunpack.c.h.b16 %v4917
    %v5391 = vunpack.c.l.b16 %v4918
    %v5392 = vunpack.c.h.b16 %v4918
    %v5393 = vunpack.c.l.b16 %v4919
    %v5394 = vunpack.c.h.b16 %v4919
    %v5395 = vunpack.c.l.b16 %v4920
    %v5396 = vunpack.c.h.b16 %v4920
    %v5397 = vunpack.c.l.b16 %v4921
    %v5398 = vunpack.c.h.b16 %v4921
    %v5399 = vunpack.c.l.b16 %v4922
    %v5400 = vunpack.c.h.b16 %v4922
    %v5401 = vunpack.c.l.b16 %v4923
    %v5402 = vunpack.c.h.b16 %v4923
    %v5403 = vunpack.c.l.b16 %v4924
    %v5404 = vunpack.c.h.b16 %v4924
    %v5405 = vunpack.c.l.b16 %v4925
    %v5406 = vunpack.c.h.b16 %v4925
    %v5407 = vunpack.c.l.b16 %v4926
    %v5408 = vunpack.c.h.b16 %v4926
    %v5409 = vunpack.c.l.b16 %v4927
    %v5410 = vunpack.c.h.b16 %v4927
    %v5411 = vunpack.c.l.b16 %v4928
    %v5412 = vunpack.c.h.b16 %v4928
    %v5413 = vunpack.c.l.b16 %v4929
    %v5414 = vunpack.c.h.b16 %v4929
    %v5415 = vunpack.c.l.b16 %v4930
    %v5416 = vunpack.c.h.b16 %v4930
    %v5417 = vunpack.c.l.b16 %v4931
    %v5418 = vunpack.c.h.b16 %v4931
    %v5419 = vunpack.c.l.b16 %v4932
    %v5420 = vunpack.c.h.b16 %v4932
    %v5421 = vunpack.c.l.b16 %v4933
    %v5422 = vunpack.c.h.b16 %v4933
    %v5423 = vunpack.c.l.b16 %v4934
    %v5424 = vunpack.c.h.b16 %v4934
    %v5425 = vunpack.c.l.b16 %v4935
    %v5426 = vunpack.c.h.b16 %v4935
    %v5427 = vunpack.c.l.b16 %v4936
    %v5428 = vunpack.c.h.b16 %v4936
    %v5429 = vunpack.c.l.b16 %v4937
    %v5430 = vunpack.c.h.b16 %v4937
    %v5431 = vunpack.c.l.b16 %v4938
    %v5432 = vunpack.c.h.b16 %v4938
    %v5433 = vunpack.c.l.b16 %v4939
    %v5434 = vunpack.c.h.b16 %v4939
    %v5435 = vunpack.c.l.b16 %v4940
    %v5436 = vunpack.c.h.b16 %v4940
    %v5437 = vunpack.c.l.b16 %v4941
    %v5438 = vunpack.c.h.b16 %v4941
    %v5439 = vunpack.c.l.b16 %v4942
    %v5440 = vunpack.c.h.b16 %v4942
    %v5441 = vunpack.c.l.b16 %v4943
    %v5442 = vunpack.c.h.b16 %v4943
    %v5443 = vunpack.c.l.b16 %v4944
    %v5444 = vunpack.c.h.b16 %v4944
    %v5445 = vunpack.c.l.b16 %v4945
    %v5446 = vunpack.c.h.b16 %v4945
    %v5447 = vunpack.c.l.b16 %v4946
    %v5448 = vunpack.c.h.b16 %v4946
    %v5449 = vunpack.c.l.b16 %v4947
    %v5450 = vunpack.c.h.b16 %v4947
    %v5451 = vunpack.c.l.b16 %v4948
    %v5452 = vunpack.c.h.b16 %v4948
    %v5453 = vunpack.c.l.b16 %v4949
    %v5454 = vunpack.c.h.b16 %v4949
    %v5455 = vunpack.c.l.b16 %v4950
    %v5456 = vunpack.c.h.b16 %v4950
    %v5457 = vunpack.c.l.b16 %v4951
    %v5458 = vunpack.c.h.b16 %v4951
    %v5459 = vunpack.c.l.b16 %v4952
    %v5460 = vunpack.c.h.b16 %v4952
    %v5461 = vunpack.c.l.b16 %v4953
    %v5462 = vunpack.c.h.b16 %v4953
    %v5463 = vunpack.c.l.b16 %v4954
    %v5464 = vunpack.c.h.b16 %v4954
    %v5465 = vunpack.c.l.b16 %v4955
    %v5466 = vunpack.c.h.b16 %v4955
    %v5467 = vunpack.c.l.b16 %v4956
    %v5468 = vunpack.c.h.b16 %v4956
    %v5469 = vunpack.c.l.b16 %v4957
    %v5470 = vunpack.c.h.b16 %v4957
    %v5471 = vunpack.c.l.b16 %v4958
    %v5472 = vunpack.c.h.b16 %v4958
    %v5473 = vunpack.c.l.b16 %v4959
    %v5474 = vunpack.c.h.b16 %v4959
    %v5475 = vunpack.c.l.b16 %v4960
    %v5476 = vunpack.c.h.b16 %v4960
    %v5477 = vunpack.c.l.b16 %v4961
    %v5478 = vunpack.c.h.b16 %v4961
    %v5479 = vunpack.c.l.b16 %v4962
    %v5480 = vunpack.c.h.b16 %v4962
    %v5481 = vunpack.c.l.b16 %v4963
    %v5482 = vunpack.c.h.b16 %v4963
    %v5483 = vunpack.c.l.b16 %v4964
    %v5484 = vunpack.c.h.b16 %v4964
    %v5485 = vunpack.c.l.b16 %v4965
    %v5486 = vunpack.c.h.b16 %v4965
    %v5487 = vunpack.c.l.b16 %v4966
    %v5488 = vunpack.c.h.b16 %v4966
    %v5489 = vunpack.c.l.b16 %v4967
    %v5490 = vunpack.c.h.b16 %v4967
    %v5491 = vunpack.c.l.b16 %v4968
    %v5492 = vunpack.c.h.b16 %v4968
    %v5493 = vunpack.c.l.b16 %v4969
    %v5494 = vunpack.c.h.b16 %v4969
    %v5495 = vunpack.c.l.b16 %v4970
    %v5496 = vunpack.c.h.b16 %v4970
    %v5497 = vunpack.c.l.b16 %v4971
    %v5498 = vunpack.c.h.b16 %v4971
    %v5499 = vunpack.c.l.b16 %v4972
    %v5500 = vunpack.c.h.b16 %v4972
    %v5501 = vunpack.c.l.b16 %v4973
    %v5502 = vunpack.c.h.b16 %v4973
    %v5503 = vunpack.c.l.b16 %v4974
    %v5504 = vunpack.c.h.b16 %v4974
    %v5505 = vunpack.c.l.b16 %v4975
    %v5506 = vunpack.c.h.b16 %v4975
    %v5507 = vunpack.c.l.b16 %v4976
    %v5508 = vunpack.c.h.b16 %v4976
    %v5509 = vunpack.c.l.b16 %v4977
    %v5510 = vunpack.c.h.b16 %v4977
    %v5511 = vunpack.c.l.b16 %v4978
    %v5512 = vunpack.c.h.b16 %v4978
    %v5513 = vunpack.c.l.b16 %v4979
    %v5514 = vunpack.c.h.b16 %v4979
    %v5515 = vunpack.c.l.b16 %v4980
    %v5516 = vunpack.c.h.b16 %v4980
    %v5517 = vunpack.c.l.b16 %v4981
    %v5518 = vunpack.c.h.b16 %v4981
    %v5519 = vunpack.c.l.b16 %v4982
    %v5520 = vunpack.c.h.b16 %v4982
    %v5521 = vunpack.c.l.b16 %v4983
    %v5522 = vunpack.c.h.b16 %v4983
    %v5523 = vunpack.c.l.b16 %v4984
    %v5524 = vunpack.c.h.b16 %v4984
    %v5525 = vunpack.c.l.b16 %v4985
    %v5526 = vunpack.c.h.b16 %v4985
    %v5527 = vunpack.c.l.b16 %v4986
    %v5528 = vunpack.c.h.b16 %v4986
    %v5529 = vunpack.c.l.b16 %v4987
    %v5530 = vunpack.c.h.b16 %v4987
    %v5531 = vunpack.c.l.b16 %v4988
    %v5532 = vunpack.c.h.b16 %v4988
    %v5533 = vunpack.c.l.b16 %v4989
    %v5534 = vunpack.c.h.b16 %v4989
    %v5535 = vunpack.c.l.b16 %v4990
    %v5536 = vunpack.c.h.b16 %v4990
    %v5537 = vunpack.c.l.b16 %v4991
    %v5538 = vunpack.c.h.b16 %v4991
    %v5539 = vunpack.c.l.b16 %v4992
    %v5540 = vunpack.c.h.b16 %v4992
    %v5541 = vunpack.c.l.b16 %v4993
    %v5542 = vunpack.c.h.b16 %v4993
    %v5543 = vunpack.c.l.b16 %v4994
    %v5544 = vunpack.c.h.b16 %v4994
    %v5545 = vunpack.c.l.b16 %v4995
    %v5546 = vunpack.c.h.b16 %v4995
    %v5547 = vunpack.c.l.b16 %v4996
    %v5548 = vunpack.c.h.b16 %v4996
    %v5549 = vunpack.c.l.b16 %v4997
    %v5550 = vunpack.c.h.b16 %v4997
    %v5551 = vunpack.c.l.b16 %v4998
    %v5552 = vunpack.c.h.b16 %v4998
    %v5553 = vunpack.c.l.b16 %v4999
    %v5554 = vunpack.c.h.b16 %v4999
    %v5555 = vunpack.c.l.b16 %v5000
    %v5556 = vunpack.c.h.b16 %v5000
    %v5557 = vunpack.c.l.b16 %v5001
    %v5558 = vunpack.c.h.b16 %v5001
    %v5559 = vunpack.c.l.b16 %v5002
    %v5560 = vunpack.c.h.b16 %v5002
    %v5561 = vunpack.c.l.b16 %v5003
    %v5562 = vunpack.c.h.b16 %v5003
    %v5563 = vunpack.c.l.b16 %v5004
    %v5564 = vunpack.c.h.b16 %v5004
    %v5565 = vunpack.c.l.b16 %v5005
    %v5566 = vunpack.c.h.b16 %v5005
    %v5567 = vunpack.c.l.b16 %v5006
    %v5568 = vunpack.c.h.b16 %v5006
    %v5569 = vunpack.c.l.b16 %v5007
    %v5570 = vunpack.c.h.b16 %v5007
    %v5571 = vunpack.c.l.b16 %v5008
    %v5572 = vunpack.c.h.b16 %v5008
    %v5573 = vunpack.c.l.b16 %v5009
    %v5574 = vunpack.c.h.b16 %v5009
    %v5575 = vunpack.c.l.b16 %v5010
    %v5576 = vunpack.c.h.b16 %v5010
    %v5577 = vunpack.c.l.b16 %v5011
    %v5578 = vunpack.c.h.b16 %v5011
    %v5579 = vunpack.c.l.b16 %v5012
    %v5580 = vunpack.c.h.b16 %v5012
    %v5581 = vunpack.c.l.b16 %v5013
    %v5582 = vunpack.c.h.b16 %v5013
    %v5583 = vunpack.c.l.b16 %v5014
    %v5584 = vunpack.c.h.b16 %v5014
    %v5585 = vunpack.c.l.b16 %v5015
    %v5586 = vunpack.c.h.b16 %v5015
    %v5587 = vunpack.c.l.b16 %v5016
    %v5588 = vunpack.c.h.b16 %v5016
    %v5589 = vunpack.c.l.b16 %v5017
    %v5590 = vunpack.c.h.b16 %v5017
    %v5591 = vunpack.c.l.b16 %v5018
    %v5592 = vunpack.c.h.b16 %v5018
    %v5593 = vunpack.c.l.b16 %v5019
    %v5594 = vunpack.c.h.b16 %v5019
    %v5595 = vunpack.c.l.b16 %v5020
    %v5596 = vunpack.c.h.b16 %v5020
    %v5597 = vunpack.c.l.b16 %v5021
    %v5598 = vunpack.c.h.b16 %v5021
    %v5599 = vunpack.c.l.b16 %v5022
    %v5600 = vunpack.c.h.b16 %v5022
    %v5601 = vunpack.c.l.b16 %v5023
    %v5602 = vunpack.c.h.b16 %v5023
    %v5603 = vunpack.c.l.b16 %v5024
    %v5604 = vunpack.c.h.b16 %v5024
    %v5605 = vunpack.c.l.b16 %v5025
    %v5606 = vunpack.c.h.b16 %v5025
    %v5607 = vunpack.c.l.b16 %v5026
    %v5608 = vunpack.c.h.b16 %v5026
    %v5609 = vunpack.c.l.b16 %v5027
    %v5610 = vunpack.c.h.b16 %v5027
    %v5611 = vunpack.c.l.b16 %v5028
    %v5612 = vunpack.c.h.b16 %v5028
    %v5613 = vunpack.c.l.b16 %v5029
    %v5614 = vunpack.c.h.b16 %v5029
    %v5615 = vunpack.c.l.b16 %v5030
    %v5616 = vunpack.c.h.b16 %v5030
    %v5617 = vunpack.c.l.b16 %v5031
    %v5618 = vunpack.c.h.b16 %v5031
    %v5619 = vunpack.c.l.b16 %v5032
    %v5620 = vunpack.c.h.b16 %v5032
    %v5621 = vunpack.c.l.b16 %v5033
    %v5622 = vunpack.c.h.b16 %v5033
    %v5623 = vunpack.c.l.b16 %v5034
    %v5624 = vunpack.c.h.b16 %v5034
    %v5625 = vunpack.c.l.b16 %v5035
    %v5626 = vunpack.c.h.b16 %v5035
    %v5627 = vunpack.c.l.b16 %v5036
    %v5628 = vunpack.c.h.b16 %v5036
    %v5629 = vunpack.c.l.b16 %v5037
    %v5630 = vunpack.c.h.b16 %v5037
    %v5631 = vunpack.c.l.b16 %v5038
    %v5632 = vunpack.c.h.b16 %v5038
    %v5633 = vunpack.c.l.b16 %v5039
    %v5634 = vunpack.c.h.b16 %v5039
    %v5635 = vunpack.c.l.b16 %v5040
    %v5636 = vunpack.c.h.b16 %v5040
    %v5637 = vunpack.c.l.b16 %v5041
    %v5638 = vunpack.c.h.b16 %v5041
    %v5639 = vunpack.c.l.b16 %v5042
    %v5640 = vunpack.c.h.b16 %v5042
    %v5641 = vpack.c.b16 %v5261, %v5257
    %v5642 = vpack.c.b16 %v5262, %v5258
    %v5643 = vpack.c.b16 %v5263, %v5259
    %v5644 = vpack.c.b16 %v5264, %v5260
    %v5645 = vpack.c.b16 %v5269, %v5265
    %v5646 = vpack.c.b16 %v5270, %v5266
    %v5647 = vpack.c.b16 %v5271, %v5267
    %v5648 = vpack.c.b16 %v5272, %v5268
    %v5649 = vpack.c.b16 %v5277, %v5273
    %v5650 = vpack.c.b16 %v5278, %v5274
    %v5651 = vpack.c.b16 %v5279, %v5275
    %v5652 = vpack.c.b16 %v5280, %v5276
    %v5653 = vpack.c.b16 %v5285, %v5281
    %v5654 = vpack.c.b16 %v5286, %v5282
    %v5655 = vpack.c.b16 %v5287, %v5283
    %v5656 = vpack.c.b16 %v5288, %v5284
    %v5657 = vpack.c.b16 %v5293, %v5289
    %v5658 = vpack.c.b16 %v5294, %v5290
    %v5659 = vpack.c.b16 %v5295, %v5291
    %v5660 = vpack.c.b16 %v5296, %v5292
    %v5661 = vpack.c.b16 %v5301, %v5297
    %v5662 = vpack.c.b16 %v5302, %v5298
    %v5663 = vpack.c.b16 %v5303, %v5299
    %v5664 = vpack.c.b16 %v5304, %v5300
    %v5665 = vpack.c.b16 %v5309, %v5305
    %v5666 = vpack.c.b16 %v5310, %v5306
    %v5667 = vpack.c.b16 %v5311, %v5307
    %v5668 = vpack.c.b16 %v5312, %v5308
    %v5669 = vpack.c.b16 %v5317, %v5313
    %v5670 = vpack.c.b16 %v5318, %v5314
    %v5671 = vpack.c.b16 %v5319, %v5315
    %v5672 = vpack.c.b16 %v5320, %v5316
    %v5673 = vpack.c.b16 %v5325, %v5321
    %v5674 = vpack.c.b16 %v5326, %v5322
    %v5675 = vpack.c.b16 %v5327, %v5323
    %v5676 = vpack.c.b16 %v5328, %v5324
    %v5677 = vpack.c.b16 %v5333, %v5329
    %v5678 = vpack.c.b16 %v5334, %v5330
    %v5679 = vpack.c.b16 %v5335, %v5331
    %v5680 = vpack.c.b16 %v5336, %v5332
    %v5681 = vpack.c.b16 %v5341, %v5337
    %v5682 = vpack.c.b16 %v5342, %v5338
    %v5683 = vpack.c.b16 %v5343, %v5339
    %v5684 = vpack.c.b16 %v5344, %v5340
    %v5685 = vpack.c.b16 %v5349, %v5345
    %v5686 = vpack.c.b16 %v5350, %v5346
    %v5687 = vpack.c.b16 %v5351, %v5347
    %v5688 = vpack.c.b16 %v5352, %v5348
    %v5689 = vpack.c.b16 %v5357, %v5353
    %v5690 = vpack.c.b16 %v5358, %v5354
    %v5691 = vpack.c.b16 %v5359, %v5355
    %v5692 = vpack.c.b16 %v5360, %v5356
    %v5693 = vpack.c.b16 %v5365, %v5361
    %v5694 = vpack.c.b16 %v5366, %v5362
    %v5695 = vpack.c.b16 %v5367, %v5363
    %v5696 = vpack.c.b16 %v5368, %v5364
    %v5697 = vpack.c.b16 %v5373, %v5369
    %v5698 = vpack.c.b16 %v5374, %v5370
    %v5699 = vpack.c.b16 %v5375, %v5371
    %v5700 = vpack.c.b16 %v5376, %v5372
    %v5701 = vpack.c.b16 %v5381, %v5377
    %v5702 = vpack.c.b16 %v5382, %v5378
    %v5703 = vpack.c.b16 %v5383, %v5379
    %v5704 = vpack.c.b16 %v5384, %v5380
    %v5705 = vpack.c.b16 %v5389, %v5385
    %v5706 = vpack.c.b16 %v5390, %v5386
    %v5707 = vpack.c.b16 %v5391, %v5387
    %v5708 = vpack.c.b16 %v5392, %v5388
    %v5709 = vpack.c.b16 %v5397, %v5393
    %v5710 = vpack.c.b16 %v5398, %v5394
    %v5711 = vpack.c.b16 %v5399, %v5395
    %v5712 = vpack.c.b16 %v5400, %v5396
    %v5713 = vpack.c.b16 %v5405, %v5401
    %v5714 = vpack.c.b16 %v5406, %v5402
    %v5715 = vpack.c.b16 %v5407, %v5403
    %v5716 = vpack.c.b16 %v5408, %v5404
    %v5717 = vpack.c.b16 %v5413, %v5409
    %v5718 = vpack.c.b16 %v5414, %v5410
    %v5719 = vpack.c.b16 %v5415, %v5411
    %v5720 = vpack.c.b16 %v5416, %v5412
    %v5721 = vpack.c.b16 %v5421, %v5417
    %v5722 = vpack.c.b16 %v5422, %v5418
    %v5723 = vpack.c.b16 %v5423, %v5419
    %v5724 = vpack.c.b16 %v5424, %v5420
    %v5725 = vpack.c.b16 %v5429, %v5425
    %v5726 = vpack.c.b16 %v5430, %v5426
    %v5727 = vpack.c.b16 %v5431, %v5427
    %v5728 = vpack.c.b16 %v5432, %v5428
    %v5729 = vpack.c.b16 %v5437, %v5433
    %v5730 = vpack.c.b16 %v5438, %v5434
    %v5731 = vpack.c.b16 %v5439, %v5435
    %v5732 = vpack.c.b16 %v5440, %v5436
    %v5733 = vpack.c.b16 %v5445, %v5441
    %v5734 = vpack.c.b16 %v5446, %v5442
    %v5735 = vpack.c.b16 %v5447, %v5443
    %v5736 = vpack.c.b16 %v5448, %v5444
    %v5737 = vpack.c.b16 %v5453, %v5449
    %v5738 = vpack.c.b16 %v5454, %v5450
    %v5739 = vpack.c.b16 %v5455, %v5451
    %v5740 = vpack.c.b16 %v5456, %v5452
    %v5741 = vpack.c.b16 %v5461, %v5457
    %v5742 = vpack.c.b16 %v5462, %v5458
    %v5743 = vpack.c.b16 %v5463, %v5459
    %v5744 = vpack.c.b16 %v5464, %v5460
    %v5745 = vpack.c.b16 %v5469, %v5465
    %v5746 = vpack.c.b16 %v5470, %v5466
    %v5747 = vpack.c.b16 %v5471, %v5467
    %v5748 = vpack.c.b16 %v5472, %v5468
    %v5749 = vpack.c.b16 %v5477, %v5473
    %v5750 = vpack.c.b16 %v5478, %v5474
    %v5751 = vpack.c.b16 %v5479, %v5475
    %v5752 = vpack.c.b16 %v5480, %v5476
    %v5753 = vpack.c.b16 %v5485, %v5481
    %v5754 = vpack.c.b16 %v5486, %v5482
    %v5755 = vpack.c.b16 %v5487, %v5483
    %v5756 = vpack.c.b16 %v5488, %v5484
    %v5757 = vpack.c.b16 %v5493, %v5489
    %v5758 = vpack.c.b16 %v5494, %v5490
    %v5759 = vpack.c.b16 %v5495, %v5491
    %v5760 = vpack.c.b16 %v5496, %v5492
    %v5761 = vpack.c.b16 %v5501, %v5497
    %v5762 = vpack.c.b16 %v5502, %v5498
    %v5763 = vpack.c.b16 %v5503, %v5499
    %v5764 = vpack.c.b16 %v5504, %v5500
    %v5765 = vpack.c.b16 %v5509, %v5505
    %v5766 = vpack.c.b16 %v5510, %v5506
    %v5767 = vpack.c.b16 %v5511, %v5507
    %v5768 = vpack.c.b16 %v5512, %v5508
    %v5769 = vpack.c.b16 %v5517, %v5513
    %v5770 = vpack.c.b16 %v5518, %v5514
    %v5771 = vpack.c.b16 %v5519, %v5515
    %v5772 = vpack.c.b16 %v5520, %v5516
    %v5773 = vpack.c.b16 %v5525, %v5521
    %v5774 = vpack.c.b16 %v5526, %v5522
    %v5775 = vpack.c.b16 %v5527, %v5523
    %v5776 = vpack.c.b16 %v5528, %v5524
    %v5777 = vpack.c.b16 %v5533, %v5529
    %v5778 = vpack.c.b16 %v5534, %v5530
    %v5779 = vpack.c.b16 %v5535, %v5531
    %v5780 = vpack.c.b16 %v5536, %v5532
    %v5781 = vpack.c.b16 %v5541, %v5537
    %v5782 = vpack.c.b16 %v5542, %v5538
    %v5783 = vpack.c.b16 %v5543, %v5539
    %v5784 = vpack.c.b16 %v5544, %v5540
    %v5785 = vpack.c.b16 %v5549, %v5545
    %v5786 = vpack.c.b16 %v5550, %v5546
    %v5787 = vpack.c.b16 %v5551, %v5547
    %v5788 = vpack.c.b16 %v5552, %v5548
    %v5789 = vpack.c.b16 %v5557, %v5553
    %v5790 = vpack.c.b16 %v5558, %v5554
    %v5791 = vpack.c.b16 %v5559, %v5555
    %v5792 = vpack.c.b16 %v5560, %v5556
    %v5793 = vpack.c.b16 %v5565, %v5561
    %v5794 = vpack.c.b16 %v5566, %v5562
    %v5795 = vpack.c.b16 %v5567, %v5563
    %v5796 = vpack.c.b16 %v5568, %v5564
    %v5797 = vpack.c.b16 %v5573, %v5569
    %v5798 = vpack.c.b16 %v5574, %v5570
    %v5799 = vpack.c.b16 %v5575, %v5571
    %v5800 = vpack.c.b16 %v5576, %v5572
    %v5801 = vpack.c.b16 %v5581, %v5577
    %v5802 = vpack.c.b16 %v5582, %v5578
    %v5803 = vpack.c.b16 %v5583, %v5579
    %v5804 = vpack.c.b16 %v5584, %v5580
    %v5805 = vpack.c.b16 %v5589, %v5585
    %v5806 = vpack.c.b16 %v5590, %v5586
    %v5807 = vpack.c.b16 %v5591, %v5587
    %v5808 = vpack.c.b16 %v5592, %v5588
    %v5809 = vpack.c.b16 %v5597, %v5593
    %v5810 = vpack.c.b16 %v5598, %v5594
    %v5811 = vpack.c.b16 %v5599, %v5595
    %v5812 = vpack.c.b16 %v5600, %v5596
    %v5813 = vpack.c.b16 %v5605, %v5601
    %v5814 = vpack.c.b16 %v5606, %v5602
    %v5815 = vpack.c.b16 %v5607, %v5603
    %v5816 = vpack.c.b16 %v5608, %v5604
    %v5817 = vpack.c.b16 %v5613, %v5609
    %v5818 = vpack.c.b16 %v5614, %v5610
    %v5819 = vpack.c.b16 %v5615, %v5611
    %v5820 = vpack.c.b16 %v5616, %v5612
    %v5821 = vpack.c.b16 %v5621, %v5617
    %v5822 = vpack.c.b16 %v5622, %v5618
    %v5823 = vpack.c.b16 %v5623, %v5619
    %v5824 = vpack.c.b16 %v5624, %v5620
    %v5825 = vpack.c.b16 %v5629, %v5625
    %v5826 = vpack.c.b16 %v5630, %v5626
    %v5827 = vpack.c.b16 %v5631, %v5627
    %v5828 = vpack.c.b16 %v5632, %v5628
    %v5829 = vpack.c.b16 %v5637, %v5633
    %v5830 = vpack.c.b16 %v5638, %v5634
    %v5831 = vpack.c.b16 %v5639, %v5635
    %v5832 = vpack.c.b16 %v5640, %v5636
    %6025 = vmatprep.subr.bf16.mxu0 %v5642
    %6026 = vmatpush1.bf16.msra.mxu0 %v5641
    %6027 = vmatprep.subr.bf16.mxu0 %v5646
    %6028 = vmatpush1.bf16.msra.mxu0 %v5645
    %6029 = vmatprep.subr.bf16.mxu0 %v5650
    %6030 = vmatpush1.bf16.msra.mxu0 %v5649
    %6031 = vmatprep.subr.bf16.mxu0 %v5654
    %6032 = vmatpush1.bf16.msra.mxu0 %v5653
    %6033 = vmatprep.subr.bf16.mxu0 %v5658
    %6034 = vmatpush1.bf16.msra.mxu0 %v5657
    %6035 = vmatprep.subr.bf16.mxu0 %v5662
    %6036 = vmatpush1.bf16.msra.mxu0 %v5661
    %6037 = vmatprep.subr.bf16.mxu0 %v5666
    %6038 = vmatpush1.bf16.msra.mxu0 %v5665
    %6039 = vmatprep.subr.bf16.mxu0 %v5670
    %6040 = vmatpush1.bf16.msra.mxu0 %v5669
    %6041 = vmatprep.subr.bf16.mxu0 %v5674
    %6042 = vmatpush1.bf16.msra.mxu0 %v5673
    %6043 = vmatprep.subr.bf16.mxu0 %v5678
    %6044 = vmatpush1.bf16.msra.mxu0 %v5677
    %6045 = vmatprep.subr.bf16.mxu0 %v5682
    %6046 = vmatpush1.bf16.msra.mxu0 %v5681
    %6047 = vmatprep.subr.bf16.mxu0 %v5686
    %6048 = vmatpush1.bf16.msra.mxu0 %v5685
    %6049 = vmatprep.subr.bf16.mxu0 %v5690
    %6050 = vmatpush1.bf16.msra.mxu0 %v5689
    %6051 = vmatprep.subr.bf16.mxu0 %v5694
    %6052 = vmatpush1.bf16.msra.mxu0 %v5693
    %6053 = vmatprep.subr.bf16.mxu0 %v5698
    %6054 = vmatpush1.bf16.msra.mxu0 %v5697
    %6055 = vmatprep.subr.bf16.mxu0 %v5702
    %6056 = vmatpush1.bf16.msra.mxu0 %v5701
    %6057 = vmatprep.mubr.bf16.mxu0 %v4840
    %6058 = vmatmul.mubr.bf16.gmra.mrb[0].mxu0 %v4839
    %v6059 = vpop.f32.mrb[0].mxu0
    %v6060 = vadd.f32 %v5048, %v6059
    %v6061 = vpop.f32.mrb[0].mxu0
    %v6062 = vadd.f32 %v5052, %v6061
    %v6063 = vpop.f32.mrb[0].mxu0
    %v6064 = vadd.f32 %v5048, %v6063
    %v6065 = vpop.f32.mrb[0].mxu0
    %v6066 = vadd.f32 %v5052, %v6065
    %6067 = vmatprep.mubr.bf16.mxu0 %v4846
    %6068 = vmatmul.mubr.bf16.gmra.mrb[0].mxu0 %v4845
    %v6069 = vpop.f32.mrb[0].mxu0
    %v6070 = vadd.f32 %v5048, %v6069
    %v6071 = vpop.f32.mrb[0].mxu0
    %v6072 = vadd.f32 %v5052, %v6071
    %v6073 = vpop.f32.mrb[0].mxu0
    %v6074 = vadd.f32 %v5048, %v6073
    %v6075 = vpop.f32.mrb[0].mxu0
    %v6076 = vadd.f32 %v5052, %v6075
    %6077 = vdwg.mxu0
    %6078 = vmatprep.subr.bf16.mxu0 %v5706
    %6079 = vmatpush1.bf16.msra.mxu0 %v5705
    %6080 = vmatprep.subr.bf16.mxu0 %v5710
    %6081 = vmatpush1.bf16.msra.mxu0 %v5709
    %6082 = vmatprep.subr.bf16.mxu0 %v5714
    %6083 = vmatpush1.bf16.msra.mxu0 %v5713
    %6084 = vmatprep.subr.bf16.mxu0 %v5718
    %6085 = vmatpush1.bf16.msra.mxu0 %v5717
    %6086 = vmatprep.subr.bf16.mxu0 %v5722
    %6087 = vmatpush1.bf16.msra.mxu0 %v5721
    %6088 = vmatprep.subr.bf16.mxu0 %v5726
    %6089 = vmatpush1.bf16.msra.mxu0 %v5725
    %6090 = vmatprep.subr.bf16.mxu0 %v5730
    %6091 = vmatpush1.bf16.msra.mxu0 %v5729
    %6092 = vmatprep.subr.bf16.mxu0 %v5734
    %6093 = vmatpush1.bf16.msra.mxu0 %v5733
    %6094 = vmatprep.subr.bf16.mxu0 %v5738
    %6095 = vmatpush1.bf16.msra.mxu0 %v5737
    %6096 = vmatprep.subr.bf16.mxu0 %v5742
    %6097 = vmatpush1.bf16.msra.mxu0 %v5741
    %6098 = vmatprep.subr.bf16.mxu0 %v5746
    %6099 = vmatpush1.bf16.msra.mxu0 %v5745
    %6100 = vmatprep.subr.bf16.mxu0 %v5750
    %6101 = vmatpush1.bf16.msra.mxu0 %v5749
    %6102 = vmatprep.subr.bf16.mxu0 %v5754
    %6103 = vmatpush1.bf16.msra.mxu0 %v5753
    %6104 = vmatprep.subr.bf16.mxu0 %v5758
    %6105 = vmatpush1.bf16.msra.mxu0 %v5757
    %6106 = vmatprep.subr.bf16.mxu0 %v5762
    %6107 = vmatpush1.bf16.msra.mxu0 %v5761
    %6108 = vmatprep.subr.bf16.mxu0 %v5766
    %6109 = vmatpush1.bf16.msra.mxu0 %v5765
    %6110 = vmatprep.mubr.bf16.mxu0 %v4842
    %6111 = vmatmul.mubr.bf16.gmra.mrb[0].mxu0 %v4841
    %v6112 = vpop.f32.mrb[0].mxu0
    %v6113 = vadd.f32 %v6060, %v6112
    %v6114 = vpop.f32.mrb[0].mxu0
    %v6115 = vadd.f32 %v6062, %v6114
    %v6116 = vpop.f32.mrb[0].mxu0
    %v6117 = vadd.f32 %v6064, %v6116
    %v6118 = vpop.f32.mrb[0].mxu0
    %v6119 = vadd.f32 %v6066, %v6118
    %6120 = vmatprep.mubr.bf16.mxu0 %v4848
    %6121 = vmatmul.mubr.bf16.gmra.mrb[0].mxu0 %v4847
    %v6122 = vpop.f32.mrb[0].mxu0
    %v6123 = vadd.f32 %v6070, %v6122
    %v6124 = vpop.f32.mrb[0].mxu0
    %v6125 = vadd.f32 %v6072, %v6124
    %v6126 = vpop.f32.mrb[0].mxu0
    %v6127 = vadd.f32 %v6074, %v6126
    %v6128 = vpop.f32.mrb[0].mxu0
    %v6129 = vadd.f32 %v6076, %v6128
    %6130 = vdwg.mxu0
    %6131 = vmatprep.subr.bf16.mxu0 %v5770
    %6132 = vmatpush1.bf16.msra.mxu0 %v5769
    %6133 = vmatprep.subr.bf16.mxu0 %v5774
    %6134 = vmatpush1.bf16.msra.mxu0 %v5773
    %6135 = vmatprep.subr.bf16.mxu0 %v5778
    %6136 = vmatpush1.bf16.msra.mxu0 %v5777
    %6137 = vmatprep.subr.bf16.mxu0 %v5782
    %6138 = vmatpush1.bf16.msra.mxu0 %v5781
    %6139 = vmatprep.subr.bf16.mxu0 %v5786
    %6140 = vmatpush1.bf16.msra.mxu0 %v5785
    %6141 = vmatprep.subr.bf16.mxu0 %v5790
    %6142 = vmatpush1.bf16.msra.mxu0 %v5789
    %6143 = vmatprep.subr.bf16.mxu0 %v5794
    %6144 = vmatpush1.bf16.msra.mxu0 %v5793
    %6145 = vmatprep.subr.bf16.mxu0 %v5798
    %6146 = vmatpush1.bf16.msra.mxu0 %v5797
    %6147 = vmatprep.subr.bf16.mxu0 %v5802
    %6148 = vmatpush1.bf16.msra.mxu0 %v5801
    %6149 = vmatprep.subr.bf16.mxu0 %v5806
    %6150 = vmatpush1.bf16.msra.mxu0 %v5805
    %6151 = vmatprep.subr.bf16.mxu0 %v5810
    %6152 = vmatpush1.bf16.msra.mxu0 %v5809
    %6153 = vmatprep.subr.bf16.mxu0 %v5814
    %6154 = vmatpush1.bf16.msra.mxu0 %v5813
    %6155 = vmatprep.subr.bf16.mxu0 %v5818
    %6156 = vmatpush1.bf16.msra.mxu0 %v5817
    %6157 = vmatprep.subr.bf16.mxu0 %v5822
    %6158 = vmatpush1.bf16.msra.mxu0 %v5821
    %6159 = vmatprep.subr.bf16.mxu0 %v5826
    %6160 = vmatpush1.bf16.msra.mxu0 %v5825
    %6161 = vmatprep.subr.bf16.mxu0 %v5830
    %6162 = vmatpush1.bf16.msra.mxu0 %v5829
    %6163 = vmatprep.mubr.bf16.mxu0 %v4844
    %6164 = vmatmul.mubr.bf16.gmra.mrb[0].mxu0 %v4843
    %v6165 = vpop.f32.mrb[0].mxu0
    %v6166 = vadd.f32 %v6113, %v6165
    %v6167 = vpop.f32.mrb[0].mxu0
    %v6168 = vadd.f32 %v6115, %v6167
    %v6169 = vpop.f32.mrb[0].mxu0
    %v6170 = vadd.f32 %v6117, %v6169
    %v6171 = vpop.f32.mrb[0].mxu0
    %v6172 = vadd.f32 %v6119, %v6171
    %6173 = vmatprep.mubr.bf16.mxu0 %v4850
    %6174 = vmatmul.mubr.bf16.gmra.mrb[0].mxu0 %v4849
    %v6175 = vpop.f32.mrb[0].mxu0
    %v6176 = vadd.f32 %v6123, %v6175
    %v6177 = vpop.f32.mrb[0].mxu0
    %v6178 = vadd.f32 %v6125, %v6177
    %v6179 = vpop.f32.mrb[0].mxu0
    %v6180 = vadd.f32 %v6127, %v6179
    %v6181 = vpop.f32.mrb[0].mxu0
    %v6182 = vadd.f32 %v6129, %v6181
    %6183 = vdwg.mxu0
    %6184 = vmatprep.subr.bf16.mxu0 %v5644
    %6185 = vmatpush1.bf16.msra.mxu0 %v5643
    %6186 = vmatprep.subr.bf16.mxu0 %v5648
    %6187 = vmatpush1.bf16.msra.mxu0 %v5647
    %6188 = vmatprep.subr.bf16.mxu0 %v5652
    %6189 = vmatpush1.bf16.msra.mxu0 %v5651
    %6190 = vmatprep.subr.bf16.mxu0 %v5656
    %6191 = vmatpush1.bf16.msra.mxu0 %v5655
    %6192 = vmatprep.subr.bf16.mxu0 %v5660
    %6193 = vmatpush1.bf16.msra.mxu0 %v5659
    %6194 = vmatprep.subr.bf16.mxu0 %v5664
    %6195 = vmatpush1.bf16.msra.mxu0 %v5663
    %6196 = vmatprep.subr.bf16.mxu0 %v5668
    %6197 = vmatpush1.bf16.msra.mxu0 %v5667
    %6198 = vmatprep.subr.bf16.mxu0 %v5672
    %6199 = vmatpush1.bf16.msra.mxu0 %v5671
    %6200 = vmatprep.subr.bf16.mxu0 %v5676
    %6201 = vmatpush1.bf16.msra.mxu0 %v5675
    %6202 = vmatprep.subr.bf16.mxu0 %v5680
    %6203 = vmatpush1.bf16.msra.mxu0 %v5679
    %6204 = vmatprep.subr.bf16.mxu0 %v5684
    %6205 = vmatpush1.bf16.msra.mxu0 %v5683
    %6206 = vmatprep.subr.bf16.mxu0 %v5688
    %6207 = vmatpush1.bf16.msra.mxu0 %v5687
    %6208 = vmatprep.subr.bf16.mxu0 %v5692
    %6209 = vmatpush1.bf16.msra.mxu0 %v5691
    %6210 = vmatprep.subr.bf16.mxu0 %v5696
    %6211 = vmatpush1.bf16.msra.mxu0 %v5695
    %6212 = vmatprep.subr.bf16.mxu0 %v5700
    %6213 = vmatpush1.bf16.msra.mxu0 %v5699
    %6214 = vmatprep.subr.bf16.mxu0 %v5704
    %6215 = vmatpush1.bf16.msra.mxu0 %v5703
    %6216 = vmatprep.mubr.bf16.mxu0 %v4840
    %6217 = vmatmul.mubr.bf16.gmra.mrb[0].mxu0 %v4839
    %v6218 = vpop.f32.mrb[0].mxu0
    %v6219 = vadd.f32 %v5056, %v6218
    %v6220 = vpop.f32.mrb[0].mxu0
    %v6221 = vadd.f32 %v5060, %v6220
    %v6222 = vpop.f32.mrb[0].mxu0
    %v6223 = vadd.f32 %v5056, %v6222
    %v6224 = vpop.f32.mrb[0].mxu0
    %v6225 = vadd.f32 %v5060, %v6224
    %6226 = vmatprep.mubr.bf16.mxu0 %v4846
    %6227 = vmatmul.mubr.bf16.gmra.mrb[0].mxu0 %v4845
    %v6228 = vpop.f32.mrb[0].mxu0
    %v6229 = vadd.f32 %v5056, %v6228
    %v6230 = vpop.f32.mrb[0].mxu0
    %v6231 = vadd.f32 %v5060, %v6230
    %v6232 = vpop.f32.mrb[0].mxu0
    %v6233 = vadd.f32 %v5056, %v6232
    %v6234 = vpop.f32.mrb[0].mxu0
    %v6235 = vadd.f32 %v5060, %v6234
    %6236 = vdwg.mxu0
    %6237 = vmatprep.subr.bf16.mxu0 %v5708
    %6238 = vmatpush1.bf16.msra.mxu0 %v5707
    %6239 = vmatprep.subr.bf16.mxu0 %v5712
    %6240 = vmatpush1.bf16.msra.mxu0 %v5711
    %6241 = vmatprep.subr.bf16.mxu0 %v5716
    %6242 = vmatpush1.bf16.msra.mxu0 %v5715
    %6243 = vmatprep.subr.bf16.mxu0 %v5720
    %6244 = vmatpush1.bf16.msra.mxu0 %v5719
    %6245 = vmatprep.subr.bf16.mxu0 %v5724
    %6246 = vmatpush1.bf16.msra.mxu0 %v5723
    %6247 = vmatprep.subr.bf16.mxu0 %v5728
    %6248 = vmatpush1.bf16.msra.mxu0 %v5727
    %6249 = vmatprep.subr.bf16.mxu0 %v5732
    %6250 = vmatpush1.bf16.msra.mxu0 %v5731
    %6251 = vmatprep.subr.bf16.mxu0 %v5736
    %6252 = vmatpush1.bf16.msra.mxu0 %v5735
    %6253 = vmatprep.subr.bf16.mxu0 %v5740
    %6254 = vmatpush1.bf16.msra.mxu0 %v5739
    %6255 = vmatprep.subr.bf16.mxu0 %v5744
    %6256 = vmatpush1.bf16.msra.mxu0 %v5743
    %6257 = vmatprep.subr.bf16.mxu0 %v5748
    %6258 = vmatpush1.bf16.msra.mxu0 %v5747
    %6259 = vmatprep.subr.bf16.mxu0 %v5752
    %6260 = vmatpush1.bf16.msra.mxu0 %v5751
    %6261 = vmatprep.subr.bf16.mxu0 %v5756
    %6262 = vmatpush1.bf16.msra.mxu0 %v5755
    %6263 = vmatprep.subr.bf16.mxu0 %v5760
    %6264 = vmatpush1.bf16.msra.mxu0 %v5759
    %6265 = vmatprep.subr.bf16.mxu0 %v5764
    %6266 = vmatpush1.bf16.msra.mxu0 %v5763
    %6267 = vmatprep.subr.bf16.mxu0 %v5768
    %6268 = vmatpush1.bf16.msra.mxu0 %v5767
    %6269 = vmatprep.mubr.bf16.mxu0 %v4842
    %6270 = vmatmul.mubr.bf16.gmra.mrb[0].mxu0 %v4841
    %v6271 = vpop.f32.mrb[0].mxu0
    %v6272 = vadd.f32 %v6219, %v6271
    %v6273 = vpop.f32.mrb[0].mxu0
    %v6274 = vadd.f32 %v6221, %v6273
    %v6275 = vpop.f32.mrb[0].mxu0
    %v6276 = vadd.f32 %v6223, %v6275
    %v6277 = vpop.f32.mrb[0].mxu0
    %v6278 = vadd.f32 %v6225, %v6277
    %6279 = vmatprep.mubr.bf16.mxu0 %v4848
    %6280 = vmatmul.mubr.bf16.gmra.mrb[0].mxu0 %v4847
    %v6281 = vpop.f32.mrb[0].mxu0
    %v6282 = vadd.f32 %v6229, %v6281
    %v6283 = vpop.f32.mrb[0].mxu0
    %v6284 = vadd.f32 %v6231, %v6283
    %v6285 = vpop.f32.mrb[0].mxu0
    %v6286 = vadd.f32 %v6233, %v6285
    %v6287 = vpop.f32.mrb[0].mxu0
    %v6288 = vadd.f32 %v6235, %v6287
    %6289 = vdwg.mxu0
    %6290 = vmatprep.subr.bf16.mxu0 %v5772
    %6291 = vmatpush1.bf16.msra.mxu0 %v5771
    %6292 = vmatprep.subr.bf16.mxu0 %v5776
    %6293 = vmatpush1.bf16.msra.mxu0 %v5775
    %6294 = vmatprep.subr.bf16.mxu0 %v5780
    %6295 = vmatpush1.bf16.msra.mxu0 %v5779
    %6296 = vmatprep.subr.bf16.mxu0 %v5784
    %6297 = vmatpush1.bf16.msra.mxu0 %v5783
    %6298 = vmatprep.subr.bf16.mxu0 %v5788
    %6299 = vmatpush1.bf16.msra.mxu0 %v5787
    %6300 = vmatprep.subr.bf16.mxu0 %v5792
    %6301 = vmatpush1.bf16.msra.mxu0 %v5791
    %6302 = vmatprep.subr.bf16.mxu0 %v5796
    %6303 = vmatpush1.bf16.msra.mxu0 %v5795
    %6304 = vmatprep.subr.bf16.mxu0 %v5800
    %6305 = vmatpush1.bf16.msra.mxu0 %v5799
    %6306 = vmatprep.subr.bf16.mxu0 %v5804
    %6307 = vmatpush1.bf16.msra.mxu0 %v5803
    %6308 = vmatprep.subr.bf16.mxu0 %v5808
    %6309 = vmatpush1.bf16.msra.mxu0 %v5807
    %6310 = vmatprep.subr.bf16.mxu0 %v5812
    %6311 = vmatpush1.bf16.msra.mxu0 %v5811
    %6312 = vmatprep.subr.bf16.mxu0 %v5816
    %6313 = vmatpush1.bf16.msra.mxu0 %v5815
    %6314 = vmatprep.subr.bf16.mxu0 %v5820
    %6315 = vmatpush1.bf16.msra.mxu0 %v5819
    %6316 = vmatprep.subr.bf16.mxu0 %v5824
    %6317 = vmatpush1.bf16.msra.mxu0 %v5823
    %6318 = vmatprep.subr.bf16.mxu0 %v5828
    %6319 = vmatpush1.bf16.msra.mxu0 %v5827
    %6320 = vmatprep.subr.bf16.mxu0 %v5832
    %6321 = vmatpush1.bf16.msra.mxu0 %v5831
    %6322 = vmatprep.mubr.bf16.mxu0 %v4844
    %6323 = vmatmul.mubr.bf16.gmra.mrb[0].mxu0 %v4843
    %v6324 = vpop.f32.mrb[0].mxu0
    %v6325 = vadd.f32 %v6272, %v6324
    %v6326 = vpop.f32.mrb[0].mxu0
    %v6327 = vadd.f32 %v6274, %v6326
    %v6328 = vpop.f32.mrb[0].mxu0
    %v6329 = vadd.f32 %v6276, %v6328
    %v6330 = vpop.f32.mrb[0].mxu0
    %v6331 = vadd.f32 %v6278, %v6330
    %6332 = vmatprep.mubr.bf16.mxu0 %v4850
    %6333 = vmatmul.mubr.bf16.gmra.mrb[0].mxu0 %v4849
    %v6334 = vpop.f32.mrb[0].mxu0
    %v6335 = vadd.f32 %v6282, %v6334
    %v6336 = vpop.f32.mrb[0].mxu0
    %v6337 = vadd.f32 %v6284, %v6336
    %v6338 = vpop.f32.mrb[0].mxu0
    %v6339 = vadd.f32 %v6286, %v6338
    %v6340 = vpop.f32.mrb[0].mxu0
    %v6341 = vadd.f32 %v6288, %v6340
    %6342 = vdwg.mxu0
    %v6343 = vadd.f32 %v6166, %v6170
    %v6344 = vadd.f32 %v6343, %v6176
    %v6345 = vadd.f32 %v6344, %v6180
    %v6346 = vrot.slane %v6345, 4
    %v6347 = vadd.f32 %v6345, %v6346
    %v6348 = vrot.slane %v6347, 2
    %v6349 = vadd.f32 %v6347, %v6348
    %v6350 = vrot.slane %v6349, 1
    %v6351 = vadd.f32 %v6349, %v6350
    %v6352 = vadd.f32 %v6168, %v6172
    %v6353 = vadd.f32 %v6352, %v6178
    %v6354 = vadd.f32 %v6353, %v6182
    %v6355 = vrot.slane %v6354, 4
    %v6356 = vadd.f32 %v6354, %v6355
    %v6357 = vrot.slane %v6356, 2
    %v6358 = vadd.f32 %v6356, %v6357
    %v6359 = vrot.slane %v6358, 1
    %v6360 = vadd.f32 %v6358, %v6359
    %v6361 = vadd.f32 %v6325, %v6329
    %v6362 = vadd.f32 %v6361, %v6335
    %v6363 = vadd.f32 %v6362, %v6339
    %v6364 = vrot.slane %v6363, 4
    %v6365 = vadd.f32 %v6363, %v6364
    %v6366 = vrot.slane %v6365, 2
    %v6367 = vadd.f32 %v6365, %v6366
    %v6368 = vrot.slane %v6367, 1
    %v6369 = vadd.f32 %v6367, %v6368
    %v6370 = vadd.f32 %v6327, %v6331
    %v6371 = vadd.f32 %v6370, %v6337
    %v6372 = vadd.f32 %v6371, %v6341
    %v6373 = vrot.slane %v6372, 4
    %v6374 = vadd.f32 %v6372, %v6373
    %v6375 = vrot.slane %v6374, 2
    %v6376 = vadd.f32 %v6374, %v6375
    %v6377 = vrot.slane %v6376, 1
    %v6378 = vadd.f32 %v6376, %v6377
    %v6379 = vrcp.pop 32.0
    %v6380 = vmul.f32 %v6351, %v6379
    %v6381 = vmul.f32 %v6360, %v6379
    %v6382 = vmul.f32 %v6369, %v6379
    %v6383 = vmul.f32 %v6378, %v6379
    %v6384 = vsub.f32 %v6166, %v6380
    %v6385 = vsub.f32 %v6168, %v6381
    %v6386 = vsub.f32 %v6325, %v6382
    %v6387 = vsub.f32 %v6327, %v6383
    %v6388 = vsub.f32 %v6170, %v6380
    %v6389 = vsub.f32 %v6172, %v6381
    %v6390 = vsub.f32 %v6329, %v6382
    %v6391 = vsub.f32 %v6331, %v6383
    %v6392 = vsub.f32 %v6176, %v6380
    %v6393 = vsub.f32 %v6178, %v6381
    %v6394 = vsub.f32 %v6335, %v6382
    %v6395 = vsub.f32 %v6337, %v6383
    %v6396 = vsub.f32 %v6180, %v6380
    %v6397 = vsub.f32 %v6182, %v6381
    %v6398 = vsub.f32 %v6339, %v6382
    %v6399 = vsub.f32 %v6341, %v6383
    %v6400 = vmul.f32 %v6384, %v6384
    %v6401 = vmul.f32 %v6385, %v6385
    %v6402 = vmul.f32 %v6386, %v6386
    %v6403 = vmul.f32 %v6387, %v6387
    %v6404 = vmul.f32 %v6388, %v6388
    %v6405 = vmul.f32 %v6389, %v6389
    %v6406 = vmul.f32 %v6390, %v6390
    %v6407 = vmul.f32 %v6391, %v6391
    %v6408 = vmul.f32 %v6392, %v6392
    %v6409 = vmul.f32 %v6393, %v6393
    %v6410 = vmul.f32 %v6394, %v6394
    %v6411 = vmul.f32 %v6395, %v6395
    %v6412 = vmul.f32 %v6396, %v6396
    %v6413 = vmul.f32 %v6397, %v6397
    %v6414 = vmul.f32 %v6398, %v6398
    %v6415 = vmul.f32 %v6399, %v6399
    %v6416 = vadd.f32 %v6400, %v6404
    %v6417 = vadd.f32 %v6416, %v6408
    %v6418 = vadd.f32 %v6417, %v6412
    %v6419 = vrot.slane %v6418, 4
    %v6420 = vadd.f32 %v6418, %v6419
    %v6421 = vrot.slane %v6420, 2
    %v6422 = vadd.f32 %v6420, %v6421
    %v6423 = vrot.slane %v6422, 1
    %v6424 = vadd.f32 %v6422, %v6423
    %v6425 = vadd.f32 %v6401, %v6405
    %v6426 = vadd.f32 %v6425, %v6409
    %v6427 = vadd.f32 %v6426, %v6413
    %v6428 = vrot.slane %v6427, 4
    %v6429 = vadd.f32 %v6427, %v6428
    %v6430 = vrot.slane %v6429, 2
    %v6431 = vadd.f32 %v6429, %v6430
    %v6432 = vrot.slane %v6431, 1
    %v6433 = vadd.f32 %v6431, %v6432
    %v6434 = vadd.f32 %v6402, %v6406
    %v6435 = vadd.f32 %v6434, %v6410
    %v6436 = vadd.f32 %v6435, %v6414
    %v6437 = vrot.slane %v6436, 4
    %v6438 = vadd.f32 %v6436, %v6437
    %v6439 = vrot.slane %v6438, 2
    %v6440 = vadd.f32 %v6438, %v6439
    %v6441 = vrot.slane %v6440, 1
    %v6442 = vadd.f32 %v6440, %v6441
    %v6443 = vadd.f32 %v6403, %v6407
    %v6444 = vadd.f32 %v6443, %v6411
    %v6445 = vadd.f32 %v6444, %v6415
    %v6446 = vrot.slane %v6445, 4
    %v6447 = vadd.f32 %v6445, %v6446
    %v6448 = vrot.slane %v6447, 2
    %v6449 = vadd.f32 %v6447, %v6448
    %v6450 = vrot.slane %v6449, 1
    %v6451 = vadd.f32 %v6449, %v6450
    %v6452 = vmul.f32 %v6424, %v6379
    %v6453 = vmul.f32 %v6433, %v6379
    %v6454 = vmul.f32 %v6442, %v6379
    %v6455 = vmul.f32 %v6451, %v6379
    %v6456 = vld [vmem:[%s11] sm:$0xf]
    %v6457 = vadd.f32 %v6452, 1e-05
    %v6458 = vadd.f32 %v6453, 1e-05
    %v6459 = vadd.f32 %v6454, 1e-05
    %v6460 = vadd.f32 %v6455, 1e-05
    %v6461 = vrsqrt.pop %v6457
    %v6462 = vrsqrt.pop %v6458
    %v6463 = vrsqrt.pop %v6459
    %v6464 = vrsqrt.pop %v6460
    %v6469 = vcombine.low %v6461, %v6462
    %v6470 = vcombine.low %v6463, %v6464
    %v6472 = vunpack.c.l.s4 1966171168
    %v6473 = vunpack.c.0.s8 %v6472
    %v6474 = vlaneseq
    %v6475 = vshrl.u32 %v6474, 7
    %v6476 = vsub.s32 %v6473, %v6475
    %v6477 = vrot.slane %v6469, %v6476
    %v6479 = vunpack.c.l.s4 1966171168
    %v6480 = vunpack.c.0.s8 %v6479
    %v6481 = vlaneseq
    %v6482 = vshrl.u32 %v6481, 7
    %v6483 = vsub.s32 %v6480, %v6482
    %v6484 = vrot.slane %v6470, %v6483
    %v6485 = vcombine.low %v6477, %v6484
    %v6487 = vunpack.c.l.s4 1966171168
    %v6488 = vunpack.c.0.s8 %v6487
    %v6489 = vlaneseq
    %v6490 = vshrl.u32 %v6489, 7
    %v6491 = vsub.s32 %v6488, %v6490
    %v6492 = vrot.slane %v6485, %v6491
    %v6494 = vmul.f32 %v6456, %v6492
    %v6495 = vld [vmem:[%s12] sm:$0xf]
    %v6497 = vlaneseq
    %v6498 = vshrl.u32 %v6497, 7
    %v6499 = vsub.s32 0, %v6498
    %v6500 = vrot.slane %v6494, %v6499
    %v6501 = vlaneseq
    %v6502 = vshrl.u32 %v6501, 7
    %v6503 = vsub.s32 1, %v6502
    %v6504 = vrot.slane %v6494, %v6503
    %v6505 = vlaneseq
    %v6506 = vshrl.u32 %v6505, 7
    %v6507 = vsub.s32 2, %v6506
    %v6508 = vrot.slane %v6494, %v6507
    %v6509 = vlaneseq
    %v6510 = vshrl.u32 %v6509, 7
    %v6511 = vsub.s32 3, %v6510
    %v6512 = vrot.slane %v6494, %v6511
    %v6517 = vmul.f32 %v6380, %v6500
    %v6518 = vmul.f32 %v6381, %v6504
    %v6519 = vmul.f32 %v6382, %v6508
    %v6520 = vmul.f32 %v6383, %v6512
    %v6525 = vcombine.low %v6517, %v6518
    %v6526 = vcombine.low %v6519, %v6520
    %v6528 = vunpack.c.l.s4 1966171168
    %v6529 = vunpack.c.0.s8 %v6528
    %v6530 = vlaneseq
    %v6531 = vshrl.u32 %v6530, 7
    %v6532 = vsub.s32 %v6529, %v6531
    %v6533 = vrot.slane %v6525, %v6532
    %v6535 = vunpack.c.l.s4 1966171168
    %v6536 = vunpack.c.0.s8 %v6535
    %v6537 = vlaneseq
    %v6538 = vshrl.u32 %v6537, 7
    %v6539 = vsub.s32 %v6536, %v6538
    %v6540 = vrot.slane %v6526, %v6539
    %v6541 = vcombine.low %v6533, %v6540
    %v6543 = vunpack.c.l.s4 1966171168
    %v6544 = vunpack.c.0.s8 %v6543
    %v6545 = vlaneseq
    %v6546 = vshrl.u32 %v6545, 7
    %v6547 = vsub.s32 %v6544, %v6546
    %v6548 = vrot.slane %v6541, %v6547
    %v6550 = vsub.f32 %v6495, %v6548
    %v6551 = vmul.f32 %v6166, %v6500
    %v6552 = vmul.f32 %v6168, %v6504
    %v6553 = vmul.f32 %v6325, %v6508
    %v6554 = vmul.f32 %v6327, %v6512
    %v6555 = vmul.f32 %v6170, %v6500
    %v6556 = vmul.f32 %v6172, %v6504
    %v6557 = vmul.f32 %v6329, %v6508
    %v6558 = vmul.f32 %v6331, %v6512
    %v6559 = vmul.f32 %v6176, %v6500
    %v6560 = vmul.f32 %v6178, %v6504
    %v6561 = vmul.f32 %v6335, %v6508
    %v6562 = vmul.f32 %v6337, %v6512
    %v6563 = vmul.f32 %v6180, %v6500
    %v6564 = vmul.f32 %v6182, %v6504
    %v6565 = vmul.f32 %v6339, %v6508
    %v6566 = vmul.f32 %v6341, %v6512
    %v6568 = vlaneseq
    %v6569 = vshrl.u32 %v6568, 7
    %v6570 = vsub.s32 0, %v6569
    %v6571 = vrot.slane %v6550, %v6570
    %v6572 = vlaneseq
    %v6573 = vshrl.u32 %v6572, 7
    %v6574 = vsub.s32 1, %v6573
    %v6575 = vrot.slane %v6550, %v6574
    %v6576 = vlaneseq
    %v6577 = vshrl.u32 %v6576, 7
    %v6578 = vsub.s32 2, %v6577
    %v6579 = vrot.slane %v6550, %v6578
    %v6580 = vlaneseq
    %v6581 = vshrl.u32 %v6580, 7
    %v6582 = vsub.s32 3, %v6581
    %v6583 = vrot.slane %v6550, %v6582
    %v6588 = vadd.f32 %v6551, %v6571
    %v6589 = vadd.f32 %v6552, %v6575
    %v6590 = vadd.f32 %v6553, %v6579
    %v6591 = vadd.f32 %v6554, %v6583
    %v6592 = vadd.f32 %v6555, %v6571
    %v6593 = vadd.f32 %v6556, %v6575
    %v6594 = vadd.f32 %v6557, %v6579
    %v6595 = vadd.f32 %v6558, %v6583
    %v6596 = vadd.f32 %v6559, %v6571
    %v6597 = vadd.f32 %v6560, %v6575
    %v6598 = vadd.f32 %v6561, %v6579
    %v6599 = vadd.f32 %v6562, %v6583
    %v6600 = vadd.f32 %v6563, %v6571
    %v6601 = vadd.f32 %v6564, %v6575
    %v6602 = vadd.f32 %v6565, %v6579
    %v6603 = vadd.f32 %v6566, %v6583
    %vm6604 = vcmp.ge.f32.partialorder %v6588, 0.0
    %vm6605 = vcmp.ge.f32.partialorder %v6589, 0.0
    %vm6606 = vcmp.ge.f32.partialorder %v6590, 0.0
    %vm6607 = vcmp.ge.f32.partialorder %v6591, 0.0
    %vm6608 = vcmp.ge.f32.partialorder %v6592, 0.0
    %vm6609 = vcmp.ge.f32.partialorder %v6593, 0.0
    %vm6610 = vcmp.ge.f32.partialorder %v6594, 0.0
    %vm6611 = vcmp.ge.f32.partialorder %v6595, 0.0
    %vm6612 = vcmp.ge.f32.partialorder %v6596, 0.0
    %vm6613 = vcmp.ge.f32.partialorder %v6597, 0.0
    %vm6614 = vcmp.ge.f32.partialorder %v6598, 0.0
    %vm6615 = vcmp.ge.f32.partialorder %v6599, 0.0
    %vm6616 = vcmp.ge.f32.partialorder %v6600, 0.0
    %vm6617 = vcmp.ge.f32.partialorder %v6601, 0.0
    %vm6618 = vcmp.ge.f32.partialorder %v6602, 0.0
    %vm6619 = vcmp.ge.f32.partialorder %v6603, 0.0
    %v6620 = vmul.f32 %v6588, 0.01
    %v6621 = vmul.f32 %v6589, 0.01
    %v6622 = vmul.f32 %v6590, 0.01
    %v6623 = vmul.f32 %v6591, 0.01
    %v6624 = vmul.f32 %v6592, 0.01
    %v6625 = vmul.f32 %v6593, 0.01
    %v6626 = vmul.f32 %v6594, 0.01
    %v6627 = vmul.f32 %v6595, 0.01
    %v6628 = vmul.f32 %v6596, 0.01
    %v6629 = vmul.f32 %v6597, 0.01
    %v6630 = vmul.f32 %v6598, 0.01
    %v6631 = vmul.f32 %v6599, 0.01
    %v6632 = vmul.f32 %v6600, 0.01
    %v6633 = vmul.f32 %v6601, 0.01
    %v6634 = vmul.f32 %v6602, 0.01
    %v6635 = vmul.f32 %v6603, 0.01
    %v6636 = vsel %vm6604, %v6588, %v6620
    %v6637 = vsel %vm6605, %v6589, %v6621
    %v6638 = vsel %vm6606, %v6590, %v6622
    %v6639 = vsel %vm6607, %v6591, %v6623
    %v6640 = vsel %vm6608, %v6592, %v6624
    %v6641 = vsel %vm6609, %v6593, %v6625
    %v6642 = vsel %vm6610, %v6594, %v6626
    %v6643 = vsel %vm6611, %v6595, %v6627
    %v6644 = vsel %vm6612, %v6596, %v6628
    %v6645 = vsel %vm6613, %v6597, %v6629
    %v6646 = vsel %vm6614, %v6598, %v6630
    %v6647 = vsel %vm6615, %v6599, %v6631
    %v6648 = vsel %vm6616, %v6600, %v6632
    %v6649 = vsel %vm6617, %v6601, %v6633
    %v6650 = vsel %vm6618, %v6602, %v6634
    %v6651 = vsel %vm6619, %v6603, %v6635
    %v6652 = vld [vmem:[%s13] sm:$0xff]
    %v6653 = vld [vmem:[%s13 + $0x8] sm:$0xff]
    %v6654 = vld [vmem:[%s13 + $0x10] sm:$0xff]
    %v6655 = vld [vmem:[%s13 + $0x18] sm:$0xff]
    %v6656 = vld [vmem:[%s13 + $0x20] sm:$0xff]
    %v6657 = vld [vmem:[%s13 + $0x28] sm:$0xff]
    %vm6658 = vcmask 261120
    %v6660 = vsel %vm6658, %v6652, 0
    %v6663 = vsel %vm6658, %v6653, 0
    %v6666 = vsel %vm6658, %v6654, 0
    %v6669 = vsel %vm6658, %v6655, 0
    %v6672 = vsel %vm6658, %v6656, 0
    %v6675 = vsel %vm6658, %v6657, 0
    %6677 = vmatprep.subr.mxu0 %v6637
    %6678 = vmatpush1.msra.mxu0 %v6636
    %6679 = vmatprep.subr.mxu0 %v6641
    %6680 = vmatpush1.msra.mxu0 %v6640
    %6681 = vmatprep.subr.mxu0 %v6645
    %6682 = vmatpush1.msra.mxu0 %v6644
    %6683 = vmatprep.subr.mxu0 %v6649
    %6684 = vmatpush1.msra.mxu0 %v6648
    %6685 = vmatprep.subr.mxu0 0.0
    %6686 = vmatpush1.msra.mxu0 0.0
    %6687 = vmatprep.subr.mxu0 0.0
    %6688 = vmatpush1.msra.mxu0 0.0
    %6689 = vmatprep.subr.mxu0 0.0
    %6690 = vmatpush1.msra.mxu0 0.0
    %6691 = vmatprep.subr.mxu0 0.0
    %6692 = vmatpush1.msra.mxu0 0.0
    %6693 = vmatprep.subr.mxu0 0.0
    %6694 = vmatpush1.msra.mxu0 0.0
    %6695 = vmatprep.subr.mxu0 0.0
    %6696 = vmatpush1.msra.mxu0 0.0
    %6697 = vmatprep.subr.mxu0 0.0
    %6698 = vmatpush1.msra.mxu0 0.0
    %6699 = vmatprep.subr.mxu0 0.0
    %6700 = vmatpush1.msra.mxu0 0.0
    %6701 = vmatprep.subr.mxu0 0.0
    %6702 = vmatpush1.msra.mxu0 0.0
    %6703 = vmatprep.subr.mxu0 0.0
    %6704 = vmatpush1.msra.mxu0 0.0
    %6705 = vmatprep.subr.mxu0 0.0
    %6706 = vmatpush1.msra.mxu0 0.0
    %6707 = vmatprep.subr.mxu0 0.0
    %6708 = vmatpush1.msra.mxu0 0.0
    %6709 = vmatprep.subr.mxu0 0.0
    %6710 = vmatpush1.msra.mxu0 0.0
    %6711 = vmatprep.subr.mxu0 0.0
    %6712 = vmatpush1.msra.mxu0 0.0
    %6713 = vmatprep.subr.mxu0 0.0
    %6714 = vmatpush1.msra.mxu0 0.0
    %6715 = vmatprep.subr.mxu0 0.0
    %6716 = vmatpush1.msra.mxu0 0.0
    %6717 = vmatprep.subr.mxu0 0.0
    %6718 = vmatpush1.msra.mxu0 0.0
    %6719 = vmatprep.subr.mxu0 0.0
    %6720 = vmatpush1.msra.mxu0 0.0
    %6721 = vmatprep.subr.mxu0 0.0
    %6722 = vmatpush1.msra.mxu0 0.0
    %6723 = vmatprep.subr.mxu0 0.0
    %6724 = vmatpush1.msra.mxu0 0.0
    %6725 = vmatprep.subr.mxu0 0.0
    %6726 = vmatpush1.msra.mxu0 0.0
    %6727 = vmatprep.subr.mxu0 0.0
    %6728 = vmatpush1.msra.mxu0 0.0
    %6729 = vmatprep.subr.mxu0 0.0
    %6730 = vmatpush1.msra.mxu0 0.0
    %6731 = vmatprep.subr.mxu0 0.0
    %6732 = vmatpush1.msra.mxu0 0.0
    %6733 = vmatprep.subr.mxu0 0.0
    %6734 = vmatpush1.msra.mxu0 0.0
    %6735 = vmatprep.subr.mxu0 0.0
    %6736 = vmatpush1.msra.mxu0 0.0
    %6737 = vmatprep.subr.mxu0 0.0
    %6738 = vmatpush1.msra.mxu0 0.0
    %6739 = vmatprep.subr.mxu0 0.0
    %6740 = vmatpush1.msra.mxu0 0.0
    %6741 = vmatprep.mubr.f32.mxu0 0.0
    %6742 = vmatmul.mubr.f32.gmra.mrb[0].mxu0 %v6660
    %v6743 = vpop.f32.mrb[0].mxu0
    %v6744 = vadd.f32 0.0, %v6743
    %v6745 = vpop.f32.mrb[0].mxu0
    %v6746 = vadd.f32 0.0, %v6745
    %6747 = vmatprep.mubr.f32.mxu0 0.0
    %6748 = vmatmul.mubr.f32.gmra.mrb[0].mxu0 %v6663
    %v6749 = vpop.f32.mrb[0].mxu0
    %v6750 = vadd.f32 0.0, %v6749
    %v6751 = vpop.f32.mrb[0].mxu0
    %v6752 = vadd.f32 0.0, %v6751
    %6753 = vmatprep.mubr.f32.mxu0 0.0
    %6754 = vmatmul.mubr.f32.gmra.mrb[0].mxu0 %v6666
    %v6755 = vpop.f32.mrb[0].mxu0
    %v6756 = vadd.f32 0.0, %v6755
    %v6757 = vpop.f32.mrb[0].mxu0
    %v6758 = vadd.f32 0.0, %v6757
    %6759 = vmatprep.mubr.f32.mxu0 0.0
    %6760 = vmatmul.mubr.f32.gmra.mrb[0].mxu0 %v6669
    %v6761 = vpop.f32.mrb[0].mxu0
    %v6762 = vadd.f32 0.0, %v6761
    %v6763 = vpop.f32.mrb[0].mxu0
    %v6764 = vadd.f32 0.0, %v6763
    %6765 = vmatprep.mubr.f32.mxu0 0.0
    %6766 = vmatmul.mubr.f32.gmra.mrb[0].mxu0 %v6672
    %v6767 = vpop.f32.mrb[0].mxu0
    %v6768 = vadd.f32 0.0, %v6767
    %v6769 = vpop.f32.mrb[0].mxu0
    %v6770 = vadd.f32 0.0, %v6769
    %6771 = vmatprep.mubr.f32.mxu0 0.0
    %6772 = vmatmul.mubr.f32.gmra.mrb[0].mxu0 %v6675
    %v6773 = vpop.f32.mrb[0].mxu0
    %v6774 = vadd.f32 0.0, %v6773
    %v6775 = vpop.f32.mrb[0].mxu0
    %v6776 = vadd.f32 0.0, %v6775
    %6777 = vdwg.mxu0
    %6778 = vmatprep.subr.mxu0 %v6639
    %6779 = vmatpush1.msra.mxu0 %v6638
    %6780 = vmatprep.subr.mxu0 %v6643
    %6781 = vmatpush1.msra.mxu0 %v6642
    %6782 = vmatprep.subr.mxu0 %v6647
    %6783 = vmatpush1.msra.mxu0 %v6646
    %6784 = vmatprep.subr.mxu0 %v6651
    %6785 = vmatpush1.msra.mxu0 %v6650
    %6786 = vmatprep.subr.mxu0 0.0
    %6787 = vmatpush1.msra.mxu0 0.0
    %6788 = vmatprep.subr.mxu0 0.0
    %6789 = vmatpush1.msra.mxu0 0.0
    %6790 = vmatprep.subr.mxu0 0.0
    %6791 = vmatpush1.msra.mxu0 0.0
    %6792 = vmatprep.subr.mxu0 0.0
    %6793 = vmatpush1.msra.mxu0 0.0
    %6794 = vmatprep.subr.mxu0 0.0
    %6795 = vmatpush1.msra.mxu0 0.0
    %6796 = vmatprep.subr.mxu0 0.0
    %6797 = vmatpush1.msra.mxu0 0.0
    %6798 = vmatprep.subr.mxu0 0.0
    %6799 = vmatpush1.msra.mxu0 0.0
    %6800 = vmatprep.subr.mxu0 0.0
    %6801 = vmatpush1.msra.mxu0 0.0
    %6802 = vmatprep.subr.mxu0 0.0
    %6803 = vmatpush1.msra.mxu0 0.0
    %6804 = vmatprep.subr.mxu0 0.0
    %6805 = vmatpush1.msra.mxu0 0.0
    %6806 = vmatprep.subr.mxu0 0.0
    %6807 = vmatpush1.msra.mxu0 0.0
    %6808 = vmatprep.subr.mxu0 0.0
    %6809 = vmatpush1.msra.mxu0 0.0
    %6810 = vmatprep.subr.mxu0 0.0
    %6811 = vmatpush1.msra.mxu0 0.0
    %6812 = vmatprep.subr.mxu0 0.0
    %6813 = vmatpush1.msra.mxu0 0.0
    %6814 = vmatprep.subr.mxu0 0.0
    %6815 = vmatpush1.msra.mxu0 0.0
    %6816 = vmatprep.subr.mxu0 0.0
    %6817 = vmatpush1.msra.mxu0 0.0
    %6818 = vmatprep.subr.mxu0 0.0
    %6819 = vmatpush1.msra.mxu0 0.0
    %6820 = vmatprep.subr.mxu0 0.0
    %6821 = vmatpush1.msra.mxu0 0.0
    %6822 = vmatprep.subr.mxu0 0.0
    %6823 = vmatpush1.msra.mxu0 0.0
    %6824 = vmatprep.subr.mxu0 0.0
    %6825 = vmatpush1.msra.mxu0 0.0
    %6826 = vmatprep.subr.mxu0 0.0
    %6827 = vmatpush1.msra.mxu0 0.0
    %6828 = vmatprep.subr.mxu0 0.0
    %6829 = vmatpush1.msra.mxu0 0.0
    %6830 = vmatprep.subr.mxu0 0.0
    %6831 = vmatpush1.msra.mxu0 0.0
    %6832 = vmatprep.subr.mxu0 0.0
    %6833 = vmatpush1.msra.mxu0 0.0
    %6834 = vmatprep.subr.mxu0 0.0
    %6835 = vmatpush1.msra.mxu0 0.0
    %6836 = vmatprep.subr.mxu0 0.0
    %6837 = vmatpush1.msra.mxu0 0.0
    %6838 = vmatprep.subr.mxu0 0.0
    %6839 = vmatpush1.msra.mxu0 0.0
    %6840 = vmatprep.subr.mxu0 0.0
    %6841 = vmatpush1.msra.mxu0 0.0
    %6842 = vmatprep.mubr.f32.mxu0 0.0
    %6843 = vmatmul.mubr.f32.gmra.mrb[0].mxu0 %v6660
    %v6844 = vpop.f32.mrb[0].mxu0
    %v6845 = vadd.f32 0.0, %v6844
    %v6846 = vpop.f32.mrb[0].mxu0
    %v6847 = vadd.f32 0.0, %v6846
    %6848 = vmatprep.mubr.f32.mxu0 0.0
    %6849 = vmatmul.mubr.f32.gmra.mrb[0].mxu0 %v6663
    %v6850 = vpop.f32.mrb[0].mxu0
    %v6851 = vadd.f32 0.0, %v6850
    %v6852 = vpop.f32.mrb[0].mxu0
    %v6853 = vadd.f32 0.0, %v6852
    %6854 = vmatprep.mubr.f32.mxu0 0.0
    %6855 = vmatmul.mubr.f32.gmra.mrb[0].mxu0 %v6666
    %v6856 = vpop.f32.mrb[0].mxu0
    %v6857 = vadd.f32 0.0, %v6856
    %v6858 = vpop.f32.mrb[0].mxu0
    %v6859 = vadd.f32 0.0, %v6858
    %6860 = vmatprep.mubr.f32.mxu0 0.0
    %6861 = vmatmul.mubr.f32.gmra.mrb[0].mxu0 %v6669
    %v6862 = vpop.f32.mrb[0].mxu0
    %v6863 = vadd.f32 0.0, %v6862
    %v6864 = vpop.f32.mrb[0].mxu0
    %v6865 = vadd.f32 0.0, %v6864
    %6866 = vmatprep.mubr.f32.mxu0 0.0
    %6867 = vmatmul.mubr.f32.gmra.mrb[0].mxu0 %v6672
    %v6868 = vpop.f32.mrb[0].mxu0
    %v6869 = vadd.f32 0.0, %v6868
    %v6870 = vpop.f32.mrb[0].mxu0
    %v6871 = vadd.f32 0.0, %v6870
    %6872 = vmatprep.mubr.f32.mxu0 0.0
    %6873 = vmatmul.mubr.f32.gmra.mrb[0].mxu0 %v6675
    %v6874 = vpop.f32.mrb[0].mxu0
    %v6875 = vadd.f32 0.0, %v6874
    %v6876 = vpop.f32.mrb[0].mxu0
    %v6877 = vadd.f32 0.0, %v6876
    %6878 = vdwg.mxu0
    %vm6879 = vcmp.eq.s32.totalorder %v4779, 8
    %vm6880 = vcmp.eq.s32.totalorder %v4780, 8
    %vm6881 = vmor %vm4783, %vm6879
    %vm6882 = vmor %vm4784, %vm6880
    %v6883 = vsel %vm6881, 1, 0
    %v6884 = vsel %vm6882, 1, 0
    %vm6885 = vcmp.eq.s32.totalorder %v6883, 1
    %vm6886 = vcmp.eq.s32.totalorder %v6884, 1
    %v6887 = vsel %vm6885, -1e+30, %v6756
    %v6888 = vsel %vm6885, -1e+30, %v6758
    %v6889 = vsel %vm6885, -1e+30, %v6857
    %v6890 = vsel %vm6885, -1e+30, %v6859
    %v6891 = vsel %vm6886, -1e+30, %v6762
    %v6892 = vsel %vm6886, -1e+30, %v6764
    %v6893 = vsel %vm6886, -1e+30, %v6863
    %v6894 = vsel %vm6886, -1e+30, %v6865
    %v6895 = vmax.f32 %v6744, %v6887
    %v6896 = vmax.f32 %v6746, %v6888
    %v6897 = vmax.f32 %v6845, %v6889
    %v6898 = vmax.f32 %v6847, %v6890
    %v6899 = vmax.f32 %v6750, %v6891
    %v6900 = vmax.f32 %v6752, %v6892
    %v6901 = vmax.f32 %v6851, %v6893
    %v6902 = vmax.f32 %v6853, %v6894
    %v6903 = vmax.f32 %v6895, %v6768
    %v6904 = vmax.f32 %v6896, %v6770
    %v6905 = vmax.f32 %v6897, %v6869
    %v6906 = vmax.f32 %v6898, %v6871
    %v6907 = vmax.f32 %v6899, %v6774
    %v6908 = vmax.f32 %v6900, %v6776
    %v6909 = vmax.f32 %v6901, %v6875
    %v6910 = vmax.f32 %v6902, %v6877
    %v6911 = vpack.c.bf16 %v6907, %v6903
    %v6912 = vpack.c.bf16 %v6908, %v6904
    %v6913 = vpack.c.bf16 %v6909, %v6905
    %v6914 = vpack.c.bf16 %v6910, %v6906
    %v6915 = vld [vmem:[%s14] sm:$0xff]
    %v6916 = vld [vmem:[%s14 + $0x8] sm:$0xff]
    %v6917 = vld [vmem:[%s14 + $0x10] sm:$0xff]
    %v6918 = vld [vmem:[%s14 + $0x18] sm:$0xff]
    %v6919 = vld [vmem:[%s14 + $0x20] sm:$0xff]
    %v6920 = vld [vmem:[%s14 + $0x28] sm:$0xff]
    %v6921 = vld [vmem:[%s14 + $0x30] sm:$0xff]
    %v6922 = vld [vmem:[%s14 + $0x38] sm:$0xff]
    %v6923 = vld [vmem:[%s14 + $0x40] sm:$0xff]
    %v6924 = vld [vmem:[%s14 + $0x48] sm:$0xff]
    %v6925 = vld [vmem:[%s14 + $0x50] sm:$0xff]
    %v6926 = vld [vmem:[%s14 + $0x58] sm:$0xff]
    %v6927 = vld [vmem:[%s14 + $0x60] sm:$0xff]
    %v6928 = vld [vmem:[%s14 + $0x68] sm:$0xff]
    %v6929 = vld [vmem:[%s14 + $0x70] sm:$0xff]
    %v6930 = vld [vmem:[%s14 + $0x78] sm:$0xff]
    %v6931 = vld [vmem:[%s14 + $0x80] sm:$0xff]
    %v6932 = vld [vmem:[%s14 + $0x88] sm:$0xff]
    %v6933 = vld [vmem:[%s14 + $0x90] sm:$0xff]
    %v6934 = vld [vmem:[%s14 + $0x98] sm:$0xff]
    %v6935 = vld [vmem:[%s14 + $0xa0] sm:$0xff]
    %v6936 = vld [vmem:[%s14 + $0xa8] sm:$0xff]
    %v6937 = vld [vmem:[%s14 + $0xb0] sm:$0xff]
    %v6938 = vld [vmem:[%s14 + $0xb8] sm:$0xff]
    %v6939 = vld [vmem:[%s14 + $0xc0] sm:$0xff]
    %v6940 = vld [vmem:[%s14 + $0xc8] sm:$0xff]
    %v6941 = vld [vmem:[%s14 + $0xd0] sm:$0xff]
    %v6942 = vld [vmem:[%s14 + $0xd8] sm:$0xff]
    %v6943 = vld [vmem:[%s14 + $0xe0] sm:$0xff]
    %v6944 = vld [vmem:[%s14 + $0xe8] sm:$0xff]
    %v6945 = vld [vmem:[%s14 + $0xf0] sm:$0xff]
    %v6946 = vld [vmem:[%s14 + $0xf8] sm:$0xff]
    %v6947 = vld [vmem:[%s14 + $0x100] sm:$0xff]
    %v6948 = vld [vmem:[%s14 + $0x108] sm:$0xff]
    %v6949 = vld [vmem:[%s14 + $0x110] sm:$0xff]
    %v6950 = vld [vmem:[%s14 + $0x118] sm:$0xff]
    %v6951 = vld [vmem:[%s14 + $0x120] sm:$0xff]
    %v6952 = vld [vmem:[%s14 + $0x128] sm:$0xff]
    %v6953 = vld [vmem:[%s14 + $0x130] sm:$0xff]
    %v6954 = vld [vmem:[%s14 + $0x138] sm:$0xff]
    %v6955 = vld [vmem:[%s14 + $0x140] sm:$0xff]
    %v6956 = vld [vmem:[%s14 + $0x148] sm:$0xff]
    %v6957 = vld [vmem:[%s14 + $0x150] sm:$0xff]
    %v6958 = vld [vmem:[%s14 + $0x158] sm:$0xff]
    %v6959 = vld [vmem:[%s14 + $0x160] sm:$0xff]
    %v6960 = vld [vmem:[%s14 + $0x168] sm:$0xff]
    %v6961 = vld [vmem:[%s14 + $0x170] sm:$0xff]
    %v6962 = vld [vmem:[%s14 + $0x178] sm:$0xff]
    %v6963 = vld [vmem:[%s14 + $0x180] sm:$0xff]
    %v6964 = vld [vmem:[%s14 + $0x188] sm:$0xff]
    %v6965 = vld [vmem:[%s14 + $0x190] sm:$0xff]
    %v6966 = vld [vmem:[%s14 + $0x198] sm:$0xff]
    %v6967 = vld [vmem:[%s14 + $0x1a0] sm:$0xff]
    %v6968 = vld [vmem:[%s14 + $0x1a8] sm:$0xff]
    %v6969 = vld [vmem:[%s14 + $0x1b0] sm:$0xff]
    %v6970 = vld [vmem:[%s14 + $0x1b8] sm:$0xff]
    %v6971 = vld [vmem:[%s14 + $0x1c0] sm:$0xff]
    %v6972 = vld [vmem:[%s14 + $0x1c8] sm:$0xff]
    %v6973 = vld [vmem:[%s14 + $0x1d0] sm:$0xff]
    %v6974 = vld [vmem:[%s14 + $0x1d8] sm:$0xff]
    %v6975 = vld [vmem:[%s14 + $0x1e0] sm:$0xff]
    %v6976 = vld [vmem:[%s14 + $0x1e8] sm:$0xff]
    %v6977 = vld [vmem:[%s14 + $0x1f0] sm:$0xff]
    %v6978 = vld [vmem:[%s14 + $0x1f8] sm:$0xff]
    %v6979 = vld [vmem:[%s14 + $0x200] sm:$0xff]
    %v6980 = vld [vmem:[%s14 + $0x208] sm:$0xff]
    %v6981 = vld [vmem:[%s14 + $0x210] sm:$0xff]
    %v6982 = vld [vmem:[%s14 + $0x218] sm:$0xff]
    %v6983 = vld [vmem:[%s14 + $0x220] sm:$0xff]
    %v6984 = vld [vmem:[%s14 + $0x228] sm:$0xff]
    %v6985 = vld [vmem:[%s14 + $0x230] sm:$0xff]
    %v6986 = vld [vmem:[%s14 + $0x238] sm:$0xff]
    %v6987 = vld [vmem:[%s14 + $0x240] sm:$0xff]
    %v6988 = vld [vmem:[%s14 + $0x248] sm:$0xff]
    %v6989 = vld [vmem:[%s14 + $0x250] sm:$0xff]
    %v6990 = vld [vmem:[%s14 + $0x258] sm:$0xff]
    %v6991 = vld [vmem:[%s14 + $0x260] sm:$0xff]
    %v6992 = vld [vmem:[%s14 + $0x268] sm:$0xff]
    %v6993 = vld [vmem:[%s14 + $0x270] sm:$0xff]
    %v6994 = vld [vmem:[%s14 + $0x278] sm:$0xff]
    %v6995 = vld [vmem:[%s14 + $0x280] sm:$0xff]
    %v6996 = vld [vmem:[%s14 + $0x288] sm:$0xff]
    %v6997 = vld [vmem:[%s14 + $0x290] sm:$0xff]
    %v6998 = vld [vmem:[%s14 + $0x298] sm:$0xff]
    %v6999 = vld [vmem:[%s14 + $0x2a0] sm:$0xff]
    %v7000 = vld [vmem:[%s14 + $0x2a8] sm:$0xff]
    %v7001 = vld [vmem:[%s14 + $0x2b0] sm:$0xff]
    %v7002 = vld [vmem:[%s14 + $0x2b8] sm:$0xff]
    %v7003 = vld [vmem:[%s14 + $0x2c0] sm:$0xff]
    %v7004 = vld [vmem:[%s14 + $0x2c8] sm:$0xff]
    %v7005 = vld [vmem:[%s14 + $0x2d0] sm:$0xff]
    %v7006 = vld [vmem:[%s14 + $0x2d8] sm:$0xff]
    %v7007 = vld [vmem:[%s14 + $0x2e0] sm:$0xff]
    %v7008 = vld [vmem:[%s14 + $0x2e8] sm:$0xff]
    %v7009 = vld [vmem:[%s14 + $0x2f0] sm:$0xff]
    %v7010 = vld [vmem:[%s14 + $0x2f8] sm:$0xff]
    %v7011 = vld [vmem:[%s14 + $0x300] sm:$0xff]
    %v7012 = vld [vmem:[%s14 + $0x308] sm:$0xff]
    %v7013 = vld [vmem:[%s14 + $0x310] sm:$0xff]
    %v7014 = vld [vmem:[%s14 + $0x318] sm:$0xff]
    %v7015 = vld [vmem:[%s14 + $0x320] sm:$0xff]
    %v7016 = vld [vmem:[%s14 + $0x328] sm:$0xff]
    %v7017 = vld [vmem:[%s14 + $0x330] sm:$0xff]
    %v7018 = vld [vmem:[%s14 + $0x338] sm:$0xff]
    %v7019 = vld [vmem:[%s14 + $0x340] sm:$0xff]
    %v7020 = vld [vmem:[%s14 + $0x348] sm:$0xff]
    %v7021 = vld [vmem:[%s14 + $0x350] sm:$0xff]
    %v7022 = vld [vmem:[%s14 + $0x358] sm:$0xff]
    %v7023 = vld [vmem:[%s14 + $0x360] sm:$0xff]
    %v7024 = vld [vmem:[%s14 + $0x368] sm:$0xff]
    %v7025 = vld [vmem:[%s14 + $0x370] sm:$0xff]
    %v7026 = vld [vmem:[%s14 + $0x378] sm:$0xff]
    %v7027 = vld [vmem:[%s14 + $0x380] sm:$0xff]
    %v7028 = vld [vmem:[%s14 + $0x388] sm:$0xff]
    %v7029 = vld [vmem:[%s14 + $0x390] sm:$0xff]
    %v7030 = vld [vmem:[%s14 + $0x398] sm:$0xff]
    %v7031 = vld [vmem:[%s14 + $0x3a0] sm:$0xff]
    %v7032 = vld [vmem:[%s14 + $0x3a8] sm:$0xff]
    %v7033 = vld [vmem:[%s14 + $0x3b0] sm:$0xff]
    %v7034 = vld [vmem:[%s14 + $0x3b8] sm:$0xff]
    %v7035 = vld [vmem:[%s14 + $0x3c0] sm:$0xff]
    %v7036 = vld [vmem:[%s14 + $0x3c8] sm:$0xff]
    %v7037 = vld [vmem:[%s14 + $0x3d0] sm:$0xff]
    %v7038 = vld [vmem:[%s14 + $0x3d8] sm:$0xff]
    %v7039 = vld [vmem:[%s14 + $0x3e0] sm:$0xff]
    %v7040 = vld [vmem:[%s14 + $0x3e8] sm:$0xff]
    %v7041 = vld [vmem:[%s14 + $0x3f0] sm:$0xff]
    %v7042 = vld [vmem:[%s14 + $0x3f8] sm:$0xff]
    %v7043 = vld [vmem:[%s14 + $0x400] sm:$0xff]
    %v7044 = vld [vmem:[%s14 + $0x408] sm:$0xff]
    %v7045 = vld [vmem:[%s14 + $0x410] sm:$0xff]
    %v7046 = vld [vmem:[%s14 + $0x418] sm:$0xff]
    %v7047 = vld [vmem:[%s14 + $0x420] sm:$0xff]
    %v7048 = vld [vmem:[%s14 + $0x428] sm:$0xff]
    %v7049 = vld [vmem:[%s14 + $0x430] sm:$0xff]
    %v7050 = vld [vmem:[%s14 + $0x438] sm:$0xff]
    %v7051 = vld [vmem:[%s14 + $0x440] sm:$0xff]
    %v7052 = vld [vmem:[%s14 + $0x448] sm:$0xff]
    %v7053 = vld [vmem:[%s14 + $0x450] sm:$0xff]
    %v7054 = vld [vmem:[%s14 + $0x458] sm:$0xff]
    %v7055 = vld [vmem:[%s14 + $0x460] sm:$0xff]
    %v7056 = vld [vmem:[%s14 + $0x468] sm:$0xff]
    %v7057 = vld [vmem:[%s14 + $0x470] sm:$0xff]
    %v7058 = vld [vmem:[%s14 + $0x478] sm:$0xff]
    %v7059 = vld [vmem:[%s14 + $0x480] sm:$0xff]
    %v7060 = vld [vmem:[%s14 + $0x488] sm:$0xff]
    %v7061 = vld [vmem:[%s14 + $0x490] sm:$0xff]
    %v7062 = vld [vmem:[%s14 + $0x498] sm:$0xff]
    %v7063 = vld [vmem:[%s14 + $0x4a0] sm:$0xff]
    %v7064 = vld [vmem:[%s14 + $0x4a8] sm:$0xff]
    %v7065 = vld [vmem:[%s14 + $0x4b0] sm:$0xff]
    %v7066 = vld [vmem:[%s14 + $0x4b8] sm:$0xff]
    %v7067 = vld [vmem:[%s14 + $0x4c0] sm:$0xff]
    %v7068 = vld [vmem:[%s14 + $0x4c8] sm:$0xff]
    %v7069 = vld [vmem:[%s14 + $0x4d0] sm:$0xff]
    %v7070 = vld [vmem:[%s14 + $0x4d8] sm:$0xff]
    %v7071 = vld [vmem:[%s14 + $0x4e0] sm:$0xff]
    %v7072 = vld [vmem:[%s14 + $0x4e8] sm:$0xff]
    %v7073 = vld [vmem:[%s14 + $0x4f0] sm:$0xff]
    %v7074 = vld [vmem:[%s14 + $0x4f8] sm:$0xff]
    %v7075 = vld [vmem:[%s14 + $0x500] sm:$0xff]
    %v7076 = vld [vmem:[%s14 + $0x508] sm:$0xff]
    %v7077 = vld [vmem:[%s14 + $0x510] sm:$0xff]
    %v7078 = vld [vmem:[%s14 + $0x518] sm:$0xff]
    %v7079 = vld [vmem:[%s14 + $0x520] sm:$0xff]
    %v7080 = vld [vmem:[%s14 + $0x528] sm:$0xff]
    %v7081 = vld [vmem:[%s14 + $0x530] sm:$0xff]
    %v7082 = vld [vmem:[%s14 + $0x538] sm:$0xff]
    %v7083 = vld [vmem:[%s14 + $0x540] sm:$0xff]
    %v7084 = vld [vmem:[%s14 + $0x548] sm:$0xff]
    %v7085 = vld [vmem:[%s14 + $0x550] sm:$0xff]
    %v7086 = vld [vmem:[%s14 + $0x558] sm:$0xff]
    %v7087 = vld [vmem:[%s14 + $0x560] sm:$0xff]
    %v7088 = vld [vmem:[%s14 + $0x568] sm:$0xff]
    %v7089 = vld [vmem:[%s14 + $0x570] sm:$0xff]
    %v7090 = vld [vmem:[%s14 + $0x578] sm:$0xff]
    %v7091 = vld [vmem:[%s14 + $0x580] sm:$0xff]
    %v7092 = vld [vmem:[%s14 + $0x588] sm:$0xff]
    %v7093 = vld [vmem:[%s14 + $0x590] sm:$0xff]
    %v7094 = vld [vmem:[%s14 + $0x598] sm:$0xff]
    %v7095 = vld [vmem:[%s14 + $0x5a0] sm:$0xff]
    %v7096 = vld [vmem:[%s14 + $0x5a8] sm:$0xff]
    %v7097 = vld [vmem:[%s14 + $0x5b0] sm:$0xff]
    %v7098 = vld [vmem:[%s14 + $0x5b8] sm:$0xff]
    %v7099 = vld [vmem:[%s14 + $0x5c0] sm:$0xff]
    %v7100 = vld [vmem:[%s14 + $0x5c8] sm:$0xff]
    %v7101 = vld [vmem:[%s14 + $0x5d0] sm:$0xff]
    %v7102 = vld [vmem:[%s14 + $0x5d8] sm:$0xff]
    %v7103 = vld [vmem:[%s14 + $0x5e0] sm:$0xff]
    %v7104 = vld [vmem:[%s14 + $0x5e8] sm:$0xff]
    %v7105 = vld [vmem:[%s14 + $0x5f0] sm:$0xff]
    %v7106 = vld [vmem:[%s14 + $0x5f8] sm:$0xff]
    %v7299 = vunpack.c.l.b16 %v6915
    %v7300 = vunpack.c.h.b16 %v6915
    %v7301 = vunpack.c.l.b16 %v6916
    %v7302 = vunpack.c.h.b16 %v6916
    %v7303 = vunpack.c.l.b16 %v6917
    %v7304 = vunpack.c.h.b16 %v6917
    %v7305 = vunpack.c.l.b16 %v6918
    %v7306 = vunpack.c.h.b16 %v6918
    %v7307 = vunpack.c.l.b16 %v6919
    %v7308 = vunpack.c.h.b16 %v6919
    %v7309 = vunpack.c.l.b16 %v6920
    %v7310 = vunpack.c.h.b16 %v6920
    %v7311 = vunpack.c.l.b16 %v6921
    %v7312 = vunpack.c.h.b16 %v6921
    %v7313 = vunpack.c.l.b16 %v6922
    %v7314 = vunpack.c.h.b16 %v6922
    %v7315 = vunpack.c.l.b16 %v6923
    %v7316 = vunpack.c.h.b16 %v6923
    %v7317 = vunpack.c.l.b16 %v6924
    %v7318 = vunpack.c.h.b16 %v6924
    %v7319 = vunpack.c.l.b16 %v6925
    %v7320 = vunpack.c.h.b16 %v6925
    %v7321 = vunpack.c.l.b16 %v6926
    %v7322 = vunpack.c.h.b16 %v6926
    %v7323 = vunpack.c.l.b16 %v6927
    %v7324 = vunpack.c.h.b16 %v6927
    %v7325 = vunpack.c.l.b16 %v6928
    %v7326 = vunpack.c.h.b16 %v6928
    %v7327 = vunpack.c.l.b16 %v6929
    %v7328 = vunpack.c.h.b16 %v6929
    %v7329 = vunpack.c.l.b16 %v6930
    %v7330 = vunpack.c.h.b16 %v6930
    %v7331 = vunpack.c.l.b16 %v6931
    %v7332 = vunpack.c.h.b16 %v6931
    %v7333 = vunpack.c.l.b16 %v6932
    %v7334 = vunpack.c.h.b16 %v6932
    %v7335 = vunpack.c.l.b16 %v6933
    %v7336 = vunpack.c.h.b16 %v6933
    %v7337 = vunpack.c.l.b16 %v6934
    %v7338 = vunpack.c.h.b16 %v6934
    %v7339 = vunpack.c.l.b16 %v6935
    %v7340 = vunpack.c.h.b16 %v6935
    %v7341 = vunpack.c.l.b16 %v6936
    %v7342 = vunpack.c.h.b16 %v6936
    %v7343 = vunpack.c.l.b16 %v6937
    %v7344 = vunpack.c.h.b16 %v6937
    %v7345 = vunpack.c.l.b16 %v6938
    %v7346 = vunpack.c.h.b16 %v6938
    %v7347 = vunpack.c.l.b16 %v6939
    %v7348 = vunpack.c.h.b16 %v6939
    %v7349 = vunpack.c.l.b16 %v6940
    %v7350 = vunpack.c.h.b16 %v6940
    %v7351 = vunpack.c.l.b16 %v6941
    %v7352 = vunpack.c.h.b16 %v6941
    %v7353 = vunpack.c.l.b16 %v6942
    %v7354 = vunpack.c.h.b16 %v6942
    %v7355 = vunpack.c.l.b16 %v6943
    %v7356 = vunpack.c.h.b16 %v6943
    %v7357 = vunpack.c.l.b16 %v6944
    %v7358 = vunpack.c.h.b16 %v6944
    %v7359 = vunpack.c.l.b16 %v6945
    %v7360 = vunpack.c.h.b16 %v6945
    %v7361 = vunpack.c.l.b16 %v6946
    %v7362 = vunpack.c.h.b16 %v6946
    %v7363 = vunpack.c.l.b16 %v6947
    %v7364 = vunpack.c.h.b16 %v6947
    %v7365 = vunpack.c.l.b16 %v6948
    %v7366 = vunpack.c.h.b16 %v6948
    %v7367 = vunpack.c.l.b16 %v6949
    %v7368 = vunpack.c.h.b16 %v6949
    %v7369 = vunpack.c.l.b16 %v6950
    %v7370 = vunpack.c.h.b16 %v6950
    %v7371 = vunpack.c.l.b16 %v6951
    %v7372 = vunpack.c.h.b16 %v6951
    %v7373 = vunpack.c.l.b16 %v6952
    %v7374 = vunpack.c.h.b16 %v6952
    %v7375 = vunpack.c.l.b16 %v6953
    %v7376 = vunpack.c.h.b16 %v6953
    %v7377 = vunpack.c.l.b16 %v6954
    %v7378 = vunpack.c.h.b16 %v6954
    %v7379 = vunpack.c.l.b16 %v6955
    %v7380 = vunpack.c.h.b16 %v6955
    %v7381 = vunpack.c.l.b16 %v6956
    %v7382 = vunpack.c.h.b16 %v6956
    %v7383 = vunpack.c.l.b16 %v6957
    %v7384 = vunpack.c.h.b16 %v6957
    %v7385 = vunpack.c.l.b16 %v6958
    %v7386 = vunpack.c.h.b16 %v6958
    %v7387 = vunpack.c.l.b16 %v6959
    %v7388 = vunpack.c.h.b16 %v6959
    %v7389 = vunpack.c.l.b16 %v6960
    %v7390 = vunpack.c.h.b16 %v6960
    %v7391 = vunpack.c.l.b16 %v6961
    %v7392 = vunpack.c.h.b16 %v6961
    %v7393 = vunpack.c.l.b16 %v6962
    %v7394 = vunpack.c.h.b16 %v6962
    %v7395 = vunpack.c.l.b16 %v6963
    %v7396 = vunpack.c.h.b16 %v6963
    %v7397 = vunpack.c.l.b16 %v6964
    %v7398 = vunpack.c.h.b16 %v6964
    %v7399 = vunpack.c.l.b16 %v6965
    %v7400 = vunpack.c.h.b16 %v6965
    %v7401 = vunpack.c.l.b16 %v6966
    %v7402 = vunpack.c.h.b16 %v6966
    %v7403 = vunpack.c.l.b16 %v6967
    %v7404 = vunpack.c.h.b16 %v6967
    %v7405 = vunpack.c.l.b16 %v6968
    %v7406 = vunpack.c.h.b16 %v6968
    %v7407 = vunpack.c.l.b16 %v6969
    %v7408 = vunpack.c.h.b16 %v6969
    %v7409 = vunpack.c.l.b16 %v6970
    %v7410 = vunpack.c.h.b16 %v6970
    %v7411 = vunpack.c.l.b16 %v6971
    %v7412 = vunpack.c.h.b16 %v6971
    %v7413 = vunpack.c.l.b16 %v6972
    %v7414 = vunpack.c.h.b16 %v6972
    %v7415 = vunpack.c.l.b16 %v6973
    %v7416 = vunpack.c.h.b16 %v6973
    %v7417 = vunpack.c.l.b16 %v6974
    %v7418 = vunpack.c.h.b16 %v6974
    %v7419 = vunpack.c.l.b16 %v6975
    %v7420 = vunpack.c.h.b16 %v6975
    %v7421 = vunpack.c.l.b16 %v6976
    %v7422 = vunpack.c.h.b16 %v6976
    %v7423 = vunpack.c.l.b16 %v6977
    %v7424 = vunpack.c.h.b16 %v6977
    %v7425 = vunpack.c.l.b16 %v6978
    %v7426 = vunpack.c.h.b16 %v6978
    %v7427 = vunpack.c.l.b16 %v6979
    %v7428 = vunpack.c.h.b16 %v6979
    %v7429 = vunpack.c.l.b16 %v6980
    %v7430 = vunpack.c.h.b16 %v6980
    %v7431 = vunpack.c.l.b16 %v6981
    %v7432 = vunpack.c.h.b16 %v6981
    %v7433 = vunpack.c.l.b16 %v6982
    %v7434 = vunpack.c.h.b16 %v6982
    %v7435 = vunpack.c.l.b16 %v6983
    %v7436 = vunpack.c.h.b16 %v6983
    %v7437 = vunpack.c.l.b16 %v6984
    %v7438 = vunpack.c.h.b16 %v6984
    %v7439 = vunpack.c.l.b16 %v6985
    %v7440 = vunpack.c.h.b16 %v6985
    %v7441 = vunpack.c.l.b16 %v6986
    %v7442 = vunpack.c.h.b16 %v6986
    %v7443 = vunpack.c.l.b16 %v6987
    %v7444 = vunpack.c.h.b16 %v6987
    %v7445 = vunpack.c.l.b16 %v6988
    %v7446 = vunpack.c.h.b16 %v6988
    %v7447 = vunpack.c.l.b16 %v6989
    %v7448 = vunpack.c.h.b16 %v6989
    %v7449 = vunpack.c.l.b16 %v6990
    %v7450 = vunpack.c.h.b16 %v6990
    %v7451 = vunpack.c.l.b16 %v6991
    %v7452 = vunpack.c.h.b16 %v6991
    %v7453 = vunpack.c.l.b16 %v6992
    %v7454 = vunpack.c.h.b16 %v6992
    %v7455 = vunpack.c.l.b16 %v6993
    %v7456 = vunpack.c.h.b16 %v6993
    %v7457 = vunpack.c.l.b16 %v6994
    %v7458 = vunpack.c.h.b16 %v6994
    %v7459 = vunpack.c.l.b16 %v6995
    %v7460 = vunpack.c.h.b16 %v6995
    %v7461 = vunpack.c.l.b16 %v6996
    %v7462 = vunpack.c.h.b16 %v6996
    %v7463 = vunpack.c.l.b16 %v6997
    %v7464 = vunpack.c.h.b16 %v6997
    %v7465 = vunpack.c.l.b16 %v6998
    %v7466 = vunpack.c.h.b16 %v6998
    %v7467 = vunpack.c.l.b16 %v6999
    %v7468 = vunpack.c.h.b16 %v6999
    %v7469 = vunpack.c.l.b16 %v7000
    %v7470 = vunpack.c.h.b16 %v7000
    %v7471 = vunpack.c.l.b16 %v7001
    %v7472 = vunpack.c.h.b16 %v7001
    %v7473 = vunpack.c.l.b16 %v7002
    %v7474 = vunpack.c.h.b16 %v7002
    %v7475 = vunpack.c.l.b16 %v7003
    %v7476 = vunpack.c.h.b16 %v7003
    %v7477 = vunpack.c.l.b16 %v7004
    %v7478 = vunpack.c.h.b16 %v7004
    %v7479 = vunpack.c.l.b16 %v7005
    %v7480 = vunpack.c.h.b16 %v7005
    %v7481 = vunpack.c.l.b16 %v7006
    %v7482 = vunpack.c.h.b16 %v7006
    %v7483 = vunpack.c.l.b16 %v7007
    %v7484 = vunpack.c.h.b16 %v7007
    %v7485 = vunpack.c.l.b16 %v7008
    %v7486 = vunpack.c.h.b16 %v7008
    %v7487 = vunpack.c.l.b16 %v7009
    %v7488 = vunpack.c.h.b16 %v7009
    %v7489 = vunpack.c.l.b16 %v7010
    %v7490 = vunpack.c.h.b16 %v7010
    %v7491 = vunpack.c.l.b16 %v7011
    %v7492 = vunpack.c.h.b16 %v7011
    %v7493 = vunpack.c.l.b16 %v7012
    %v7494 = vunpack.c.h.b16 %v7012
    %v7495 = vunpack.c.l.b16 %v7013
    %v7496 = vunpack.c.h.b16 %v7013
    %v7497 = vunpack.c.l.b16 %v7014
    %v7498 = vunpack.c.h.b16 %v7014
    %v7499 = vunpack.c.l.b16 %v7015
    %v7500 = vunpack.c.h.b16 %v7015
    %v7501 = vunpack.c.l.b16 %v7016
    %v7502 = vunpack.c.h.b16 %v7016
    %v7503 = vunpack.c.l.b16 %v7017
    %v7504 = vunpack.c.h.b16 %v7017
    %v7505 = vunpack.c.l.b16 %v7018
    %v7506 = vunpack.c.h.b16 %v7018
    %v7507 = vunpack.c.l.b16 %v7019
    %v7508 = vunpack.c.h.b16 %v7019
    %v7509 = vunpack.c.l.b16 %v7020
    %v7510 = vunpack.c.h.b16 %v7020
    %v7511 = vunpack.c.l.b16 %v7021
    %v7512 = vunpack.c.h.b16 %v7021
    %v7513 = vunpack.c.l.b16 %v7022
    %v7514 = vunpack.c.h.b16 %v7022
    %v7515 = vunpack.c.l.b16 %v7023
    %v7516 = vunpack.c.h.b16 %v7023
    %v7517 = vunpack.c.l.b16 %v7024
    %v7518 = vunpack.c.h.b16 %v7024
    %v7519 = vunpack.c.l.b16 %v7025
    %v7520 = vunpack.c.h.b16 %v7025
    %v7521 = vunpack.c.l.b16 %v7026
    %v7522 = vunpack.c.h.b16 %v7026
    %v7523 = vunpack.c.l.b16 %v7027
    %v7524 = vunpack.c.h.b16 %v7027
    %v7525 = vunpack.c.l.b16 %v7028
    %v7526 = vunpack.c.h.b16 %v7028
    %v7527 = vunpack.c.l.b16 %v7029
    %v7528 = vunpack.c.h.b16 %v7029
    %v7529 = vunpack.c.l.b16 %v7030
    %v7530 = vunpack.c.h.b16 %v7030
    %v7531 = vunpack.c.l.b16 %v7031
    %v7532 = vunpack.c.h.b16 %v7031
    %v7533 = vunpack.c.l.b16 %v7032
    %v7534 = vunpack.c.h.b16 %v7032
    %v7535 = vunpack.c.l.b16 %v7033
    %v7536 = vunpack.c.h.b16 %v7033
    %v7537 = vunpack.c.l.b16 %v7034
    %v7538 = vunpack.c.h.b16 %v7034
    %v7539 = vunpack.c.l.b16 %v7035
    %v7540 = vunpack.c.h.b16 %v7035
    %v7541 = vunpack.c.l.b16 %v7036
    %v7542 = vunpack.c.h.b16 %v7036
    %v7543 = vunpack.c.l.b16 %v7037
    %v7544 = vunpack.c.h.b16 %v7037
    %v7545 = vunpack.c.l.b16 %v7038
    %v7546 = vunpack.c.h.b16 %v7038
    %v7547 = vunpack.c.l.b16 %v7039
    %v7548 = vunpack.c.h.b16 %v7039
    %v7549 = vunpack.c.l.b16 %v7040
    %v7550 = vunpack.c.h.b16 %v7040
    %v7551 = vunpack.c.l.b16 %v7041
    %v7552 = vunpack.c.h.b16 %v7041
    %v7553 = vunpack.c.l.b16 %v7042
    %v7554 = vunpack.c.h.b16 %v7042
    %v7555 = vunpack.c.l.b16 %v7043
    %v7556 = vunpack.c.h.b16 %v7043
    %v7557 = vunpack.c.l.b16 %v7044
    %v7558 = vunpack.c.h.b16 %v7044
    %v7559 = vunpack.c.l.b16 %v7045
    %v7560 = vunpack.c.h.b16 %v7045
    %v7561 = vunpack.c.l.b16 %v7046
    %v7562 = vunpack.c.h.b16 %v7046
    %v7563 = vunpack.c.l.b16 %v7047
    %v7564 = vunpack.c.h.b16 %v7047
    %v7565 = vunpack.c.l.b16 %v7048
    %v7566 = vunpack.c.h.b16 %v7048
    %v7567 = vunpack.c.l.b16 %v7049
    %v7568 = vunpack.c.h.b16 %v7049
    %v7569 = vunpack.c.l.b16 %v7050
    %v7570 = vunpack.c.h.b16 %v7050
    %v7571 = vunpack.c.l.b16 %v7051
    %v7572 = vunpack.c.h.b16 %v7051
    %v7573 = vunpack.c.l.b16 %v7052
    %v7574 = vunpack.c.h.b16 %v7052
    %v7575 = vunpack.c.l.b16 %v7053
    %v7576 = vunpack.c.h.b16 %v7053
    %v7577 = vunpack.c.l.b16 %v7054
    %v7578 = vunpack.c.h.b16 %v7054
    %v7579 = vunpack.c.l.b16 %v7055
    %v7580 = vunpack.c.h.b16 %v7055
    %v7581 = vunpack.c.l.b16 %v7056
    %v7582 = vunpack.c.h.b16 %v7056
    %v7583 = vunpack.c.l.b16 %v7057
    %v7584 = vunpack.c.h.b16 %v7057
    %v7585 = vunpack.c.l.b16 %v7058
    %v7586 = vunpack.c.h.b16 %v7058
    %v7587 = vunpack.c.l.b16 %v7059
    %v7588 = vunpack.c.h.b16 %v7059
    %v7589 = vunpack.c.l.b16 %v7060
    %v7590 = vunpack.c.h.b16 %v7060
    %v7591 = vunpack.c.l.b16 %v7061
    %v7592 = vunpack.c.h.b16 %v7061
    %v7593 = vunpack.c.l.b16 %v7062
    %v7594 = vunpack.c.h.b16 %v7062
    %v7595 = vunpack.c.l.b16 %v7063
    %v7596 = vunpack.c.h.b16 %v7063
    %v7597 = vunpack.c.l.b16 %v7064
    %v7598 = vunpack.c.h.b16 %v7064
    %v7599 = vunpack.c.l.b16 %v7065
    %v7600 = vunpack.c.h.b16 %v7065
    %v7601 = vunpack.c.l.b16 %v7066
    %v7602 = vunpack.c.h.b16 %v7066
    %v7603 = vunpack.c.l.b16 %v7067
    %v7604 = vunpack.c.h.b16 %v7067
    %v7605 = vunpack.c.l.b16 %v7068
    %v7606 = vunpack.c.h.b16 %v7068
    %v7607 = vunpack.c.l.b16 %v7069
    %v7608 = vunpack.c.h.b16 %v7069
    %v7609 = vunpack.c.l.b16 %v7070
    %v7610 = vunpack.c.h.b16 %v7070
    %v7611 = vunpack.c.l.b16 %v7071
    %v7612 = vunpack.c.h.b16 %v7071
    %v7613 = vunpack.c.l.b16 %v7072
    %v7614 = vunpack.c.h.b16 %v7072
    %v7615 = vunpack.c.l.b16 %v7073
    %v7616 = vunpack.c.h.b16 %v7073
    %v7617 = vunpack.c.l.b16 %v7074
    %v7618 = vunpack.c.h.b16 %v7074
    %v7619 = vunpack.c.l.b16 %v7075
    %v7620 = vunpack.c.h.b16 %v7075
    %v7621 = vunpack.c.l.b16 %v7076
    %v7622 = vunpack.c.h.b16 %v7076
    %v7623 = vunpack.c.l.b16 %v7077
    %v7624 = vunpack.c.h.b16 %v7077
    %v7625 = vunpack.c.l.b16 %v7078
    %v7626 = vunpack.c.h.b16 %v7078
    %v7627 = vunpack.c.l.b16 %v7079
    %v7628 = vunpack.c.h.b16 %v7079
    %v7629 = vunpack.c.l.b16 %v7080
    %v7630 = vunpack.c.h.b16 %v7080
    %v7631 = vunpack.c.l.b16 %v7081
    %v7632 = vunpack.c.h.b16 %v7081
    %v7633 = vunpack.c.l.b16 %v7082
    %v7634 = vunpack.c.h.b16 %v7082
    %v7635 = vunpack.c.l.b16 %v7083
    %v7636 = vunpack.c.h.b16 %v7083
    %v7637 = vunpack.c.l.b16 %v7084
    %v7638 = vunpack.c.h.b16 %v7084
    %v7639 = vunpack.c.l.b16 %v7085
    %v7640 = vunpack.c.h.b16 %v7085
    %v7641 = vunpack.c.l.b16 %v7086
    %v7642 = vunpack.c.h.b16 %v7086
    %v7643 = vunpack.c.l.b16 %v7087
    %v7644 = vunpack.c.h.b16 %v7087
    %v7645 = vunpack.c.l.b16 %v7088
    %v7646 = vunpack.c.h.b16 %v7088
    %v7647 = vunpack.c.l.b16 %v7089
    %v7648 = vunpack.c.h.b16 %v7089
    %v7649 = vunpack.c.l.b16 %v7090
    %v7650 = vunpack.c.h.b16 %v7090
    %v7651 = vunpack.c.l.b16 %v7091
    %v7652 = vunpack.c.h.b16 %v7091
    %v7653 = vunpack.c.l.b16 %v7092
    %v7654 = vunpack.c.h.b16 %v7092
    %v7655 = vunpack.c.l.b16 %v7093
    %v7656 = vunpack.c.h.b16 %v7093
    %v7657 = vunpack.c.l.b16 %v7094
    %v7658 = vunpack.c.h.b16 %v7094
    %v7659 = vunpack.c.l.b16 %v7095
    %v7660 = vunpack.c.h.b16 %v7095
    %v7661 = vunpack.c.l.b16 %v7096
    %v7662 = vunpack.c.h.b16 %v7096
    %v7663 = vunpack.c.l.b16 %v7097
    %v7664 = vunpack.c.h.b16 %v7097
    %v7665 = vunpack.c.l.b16 %v7098
    %v7666 = vunpack.c.h.b16 %v7098
    %v7667 = vunpack.c.l.b16 %v7099
    %v7668 = vunpack.c.h.b16 %v7099
    %v7669 = vunpack.c.l.b16 %v7100
    %v7670 = vunpack.c.h.b16 %v7100
    %v7671 = vunpack.c.l.b16 %v7101
    %v7672 = vunpack.c.h.b16 %v7101
    %v7673 = vunpack.c.l.b16 %v7102
    %v7674 = vunpack.c.h.b16 %v7102
    %v7675 = vunpack.c.l.b16 %v7103
    %v7676 = vunpack.c.h.b16 %v7103
    %v7677 = vunpack.c.l.b16 %v7104
    %v7678 = vunpack.c.h.b16 %v7104
    %v7679 = vunpack.c.l.b16 %v7105
    %v7680 = vunpack.c.h.b16 %v7105
    %v7681 = vunpack.c.l.b16 %v7106
    %v7682 = vunpack.c.h.b16 %v7106
    %v7683 = vpack.c.b16 %v7305, %v7299
    %v7684 = vpack.c.b16 %v7306, %v7300
    %v7685 = vpack.c.b16 %v7307, %v7301
    %v7686 = vpack.c.b16 %v7308, %v7302
    %v7687 = vpack.c.b16 %v7309, %v7303
    %v7688 = vpack.c.b16 %v7310, %v7304
    %v7689 = vpack.c.b16 %v7317, %v7311
    %v7690 = vpack.c.b16 %v7318, %v7312
    %v7691 = vpack.c.b16 %v7319, %v7313
    %v7692 = vpack.c.b16 %v7320, %v7314
    %v7693 = vpack.c.b16 %v7321, %v7315
    %v7694 = vpack.c.b16 %v7322, %v7316
    %v7695 = vpack.c.b16 %v7329, %v7323
    %v7696 = vpack.c.b16 %v7330, %v7324
    %v7697 = vpack.c.b16 %v7331, %v7325
    %v7698 = vpack.c.b16 %v7332, %v7326
    %v7699 = vpack.c.b16 %v7333, %v7327
    %v7700 = vpack.c.b16 %v7334, %v7328
    %v7701 = vpack.c.b16 %v7341, %v7335
    %v7702 = vpack.c.b16 %v7342, %v7336
    %v7703 = vpack.c.b16 %v7343, %v7337
    %v7704 = vpack.c.b16 %v7344, %v7338
    %v7705 = vpack.c.b16 %v7345, %v7339
    %v7706 = vpack.c.b16 %v7346, %v7340
    %v7707 = vpack.c.b16 %v7353, %v7347
    %v7708 = vpack.c.b16 %v7354, %v7348
    %v7709 = vpack.c.b16 %v7355, %v7349
    %v7710 = vpack.c.b16 %v7356, %v7350
    %v7711 = vpack.c.b16 %v7357, %v7351
    %v7712 = vpack.c.b16 %v7358, %v7352
    %v7713 = vpack.c.b16 %v7365, %v7359
    %v7714 = vpack.c.b16 %v7366, %v7360
    %v7715 = vpack.c.b16 %v7367, %v7361
    %v7716 = vpack.c.b16 %v7368, %v7362
    %v7717 = vpack.c.b16 %v7369, %v7363
    %v7718 = vpack.c.b16 %v7370, %v7364
    %v7719 = vpack.c.b16 %v7377, %v7371
    %v7720 = vpack.c.b16 %v7378, %v7372
    %v7721 = vpack.c.b16 %v7379, %v7373
    %v7722 = vpack.c.b16 %v7380, %v7374
    %v7723 = vpack.c.b16 %v7381, %v7375
    %v7724 = vpack.c.b16 %v7382, %v7376
    %v7725 = vpack.c.b16 %v7389, %v7383
    %v7726 = vpack.c.b16 %v7390, %v7384
    %v7727 = vpack.c.b16 %v7391, %v7385
    %v7728 = vpack.c.b16 %v7392, %v7386
    %v7729 = vpack.c.b16 %v7393, %v7387
    %v7730 = vpack.c.b16 %v7394, %v7388
    %v7731 = vpack.c.b16 %v7401, %v7395
    %v7732 = vpack.c.b16 %v7402, %v7396
    %v7733 = vpack.c.b16 %v7403, %v7397
    %v7734 = vpack.c.b16 %v7404, %v7398
    %v7735 = vpack.c.b16 %v7405, %v7399
    %v7736 = vpack.c.b16 %v7406, %v7400
    %v7737 = vpack.c.b16 %v7413, %v7407
    %v7738 = vpack.c.b16 %v7414, %v7408
    %v7739 = vpack.c.b16 %v7415, %v7409
    %v7740 = vpack.c.b16 %v7416, %v7410
    %v7741 = vpack.c.b16 %v7417, %v7411
    %v7742 = vpack.c.b16 %v7418, %v7412
    %v7743 = vpack.c.b16 %v7425, %v7419
    %v7744 = vpack.c.b16 %v7426, %v7420
    %v7745 = vpack.c.b16 %v7427, %v7421
    %v7746 = vpack.c.b16 %v7428, %v7422
    %v7747 = vpack.c.b16 %v7429, %v7423
    %v7748 = vpack.c.b16 %v7430, %v7424
    %v7749 = vpack.c.b16 %v7437, %v7431
    %v7750 = vpack.c.b16 %v7438, %v7432
    %v7751 = vpack.c.b16 %v7439, %v7433
    %v7752 = vpack.c.b16 %v7440, %v7434
    %v7753 = vpack.c.b16 %v7441, %v7435
    %v7754 = vpack.c.b16 %v7442, %v7436
    %v7755 = vpack.c.b16 %v7449, %v7443
    %v7756 = vpack.c.b16 %v7450, %v7444
    %v7757 = vpack.c.b16 %v7451, %v7445
    %v7758 = vpack.c.b16 %v7452, %v7446
    %v7759 = vpack.c.b16 %v7453, %v7447
    %v7760 = vpack.c.b16 %v7454, %v7448
    %v7761 = vpack.c.b16 %v7461, %v7455
    %v7762 = vpack.c.b16 %v7462, %v7456
    %v7763 = vpack.c.b16 %v7463, %v7457
    %v7764 = vpack.c.b16 %v7464, %v7458
    %v7765 = vpack.c.b16 %v7465, %v7459
    %v7766 = vpack.c.b16 %v7466, %v7460
    %v7767 = vpack.c.b16 %v7473, %v7467
    %v7768 = vpack.c.b16 %v7474, %v7468
    %v7769 = vpack.c.b16 %v7475, %v7469
    %v7770 = vpack.c.b16 %v7476, %v7470
    %v7771 = vpack.c.b16 %v7477, %v7471
    %v7772 = vpack.c.b16 %v7478, %v7472
    %v7773 = vpack.c.b16 %v7485, %v7479
    %v7774 = vpack.c.b16 %v7486, %v7480
    %v7775 = vpack.c.b16 %v7487, %v7481
    %v7776 = vpack.c.b16 %v7488, %v7482
    %v7777 = vpack.c.b16 %v7489, %v7483
    %v7778 = vpack.c.b16 %v7490, %v7484
    %v7779 = vpack.c.b16 %v7497, %v7491
    %v7780 = vpack.c.b16 %v7498, %v7492
    %v7781 = vpack.c.b16 %v7499, %v7493
    %v7782 = vpack.c.b16 %v7500, %v7494
    %v7783 = vpack.c.b16 %v7501, %v7495
    %v7784 = vpack.c.b16 %v7502, %v7496
    %v7785 = vpack.c.b16 %v7509, %v7503
    %v7786 = vpack.c.b16 %v7510, %v7504
    %v7787 = vpack.c.b16 %v7511, %v7505
    %v7788 = vpack.c.b16 %v7512, %v7506
    %v7789 = vpack.c.b16 %v7513, %v7507
    %v7790 = vpack.c.b16 %v7514, %v7508
    %v7791 = vpack.c.b16 %v7521, %v7515
    %v7792 = vpack.c.b16 %v7522, %v7516
    %v7793 = vpack.c.b16 %v7523, %v7517
    %v7794 = vpack.c.b16 %v7524, %v7518
    %v7795 = vpack.c.b16 %v7525, %v7519
    %v7796 = vpack.c.b16 %v7526, %v7520
    %v7797 = vpack.c.b16 %v7533, %v7527
    %v7798 = vpack.c.b16 %v7534, %v7528
    %v7799 = vpack.c.b16 %v7535, %v7529
    %v7800 = vpack.c.b16 %v7536, %v7530
    %v7801 = vpack.c.b16 %v7537, %v7531
    %v7802 = vpack.c.b16 %v7538, %v7532
    %v7803 = vpack.c.b16 %v7545, %v7539
    %v7804 = vpack.c.b16 %v7546, %v7540
    %v7805 = vpack.c.b16 %v7547, %v7541
    %v7806 = vpack.c.b16 %v7548, %v7542
    %v7807 = vpack.c.b16 %v7549, %v7543
    %v7808 = vpack.c.b16 %v7550, %v7544
    %v7809 = vpack.c.b16 %v7557, %v7551
    %v7810 = vpack.c.b16 %v7558, %v7552
    %v7811 = vpack.c.b16 %v7559, %v7553
    %v7812 = vpack.c.b16 %v7560, %v7554
    %v7813 = vpack.c.b16 %v7561, %v7555
    %v7814 = vpack.c.b16 %v7562, %v7556
    %v7815 = vpack.c.b16 %v7569, %v7563
    %v7816 = vpack.c.b16 %v7570, %v7564
    %v7817 = vpack.c.b16 %v7571, %v7565
    %v7818 = vpack.c.b16 %v7572, %v7566
    %v7819 = vpack.c.b16 %v7573, %v7567
    %v7820 = vpack.c.b16 %v7574, %v7568
    %v7821 = vpack.c.b16 %v7581, %v7575
    %v7822 = vpack.c.b16 %v7582, %v7576
    %v7823 = vpack.c.b16 %v7583, %v7577
    %v7824 = vpack.c.b16 %v7584, %v7578
    %v7825 = vpack.c.b16 %v7585, %v7579
    %v7826 = vpack.c.b16 %v7586, %v7580
    %v7827 = vpack.c.b16 %v7593, %v7587
    %v7828 = vpack.c.b16 %v7594, %v7588
    %v7829 = vpack.c.b16 %v7595, %v7589
    %v7830 = vpack.c.b16 %v7596, %v7590
    %v7831 = vpack.c.b16 %v7597, %v7591
    %v7832 = vpack.c.b16 %v7598, %v7592
    %v7833 = vpack.c.b16 %v7605, %v7599
    %v7834 = vpack.c.b16 %v7606, %v7600
    %v7835 = vpack.c.b16 %v7607, %v7601
    %v7836 = vpack.c.b16 %v7608, %v7602
    %v7837 = vpack.c.b16 %v7609, %v7603
    %v7838 = vpack.c.b16 %v7610, %v7604
    %v7839 = vpack.c.b16 %v7617, %v7611
    %v7840 = vpack.c.b16 %v7618, %v7612
    %v7841 = vpack.c.b16 %v7619, %v7613
    %v7842 = vpack.c.b16 %v7620, %v7614
    %v7843 = vpack.c.b16 %v7621, %v7615
    %v7844 = vpack.c.b16 %v7622, %v7616
    %v7845 = vpack.c.b16 %v7629, %v7623
    %v7846 = vpack.c.b16 %v7630, %v7624
    %v7847 = vpack.c.b16 %v7631, %v7625
    %v7848 = vpack.c.b16 %v7632, %v7626
    %v7849 = vpack.c.b16 %v7633, %v7627
    %v7850 = vpack.c.b16 %v7634, %v7628
    %v7851 = vpack.c.b16 %v7641, %v7635
    %v7852 = vpack.c.b16 %v7642, %v7636
    %v7853 = vpack.c.b16 %v7643, %v7637
    %v7854 = vpack.c.b16 %v7644, %v7638
    %v7855 = vpack.c.b16 %v7645, %v7639
    %v7856 = vpack.c.b16 %v7646, %v7640
    %v7857 = vpack.c.b16 %v7653, %v7647
    %v7858 = vpack.c.b16 %v7654, %v7648
    %v7859 = vpack.c.b16 %v7655, %v7649
    %v7860 = vpack.c.b16 %v7656, %v7650
    %v7861 = vpack.c.b16 %v7657, %v7651
    %v7862 = vpack.c.b16 %v7658, %v7652
    %v7863 = vpack.c.b16 %v7665, %v7659
    %v7864 = vpack.c.b16 %v7666, %v7660
    %v7865 = vpack.c.b16 %v7667, %v7661
    %v7866 = vpack.c.b16 %v7668, %v7662
    %v7867 = vpack.c.b16 %v7669, %v7663
    %v7868 = vpack.c.b16 %v7670, %v7664
    %v7869 = vpack.c.b16 %v7677, %v7671
    %v7870 = vpack.c.b16 %v7678, %v7672
    %v7871 = vpack.c.b16 %v7679, %v7673
    %v7872 = vpack.c.b16 %v7680, %v7674
    %v7873 = vpack.c.b16 %v7681, %v7675
    %v7874 = vpack.c.b16 %v7682, %v7676
    %8067 = vmatprep.subr.bf16.mxu0 %v7684
    %8068 = vmatpush1.bf16.msra.mxu0 %v7683
    %8069 = vmatprep.subr.bf16.mxu0 %v7690
    %8070 = vmatpush1.bf16.msra.mxu0 %v7689
    %8071 = vmatprep.subr.bf16.mxu0 %v7696
    %8072 = vmatpush1.bf16.msra.mxu0 %v7695
    %8073 = vmatprep.subr.bf16.mxu0 %v7702
    %8074 = vmatpush1.bf16.msra.mxu0 %v7701
    %8075 = vmatprep.subr.bf16.mxu0 %v7708
    %8076 = vmatpush1.bf16.msra.mxu0 %v7707
    %8077 = vmatprep.subr.bf16.mxu0 %v7714
    %8078 = vmatpush1.bf16.msra.mxu0 %v7713
    %8079 = vmatprep.subr.bf16.mxu0 %v7720
    %8080 = vmatpush1.bf16.msra.mxu0 %v7719
    %8081 = vmatprep.subr.bf16.mxu0 %v7726
    %8082 = vmatpush1.bf16.msra.mxu0 %v7725
    %8083 = vmatprep.subr.bf16.mxu0 %v7732
    %8084 = vmatpush1.bf16.msra.mxu0 %v7731
    %8085 = vmatprep.subr.bf16.mxu0 %v7738
    %8086 = vmatpush1.bf16.msra.mxu0 %v7737
    %8087 = vmatprep.subr.bf16.mxu0 %v7744
    %8088 = vmatpush1.bf16.msra.mxu0 %v7743
    %8089 = vmatprep.subr.bf16.mxu0 %v7750
    %8090 = vmatpush1.bf16.msra.mxu0 %v7749
    %8091 = vmatprep.subr.bf16.mxu0 %v7756
    %8092 = vmatpush1.bf16.msra.mxu0 %v7755
    %8093 = vmatprep.subr.bf16.mxu0 %v7762
    %8094 = vmatpush1.bf16.msra.mxu0 %v7761
    %8095 = vmatprep.subr.bf16.mxu0 %v7768
    %8096 = vmatpush1.bf16.msra.mxu0 %v7767
    %8097 = vmatprep.subr.bf16.mxu0 %v7774
    %8098 = vmatpush1.bf16.msra.mxu0 %v7773
    %8099 = vmatprep.mubr.bf16.mxu0 %v6912
    %8100 = vmatmul.mubr.bf16.gmra.mrb[0].mxu0 %v6911
    %v8101 = vpop.f32.mrb[0].mxu0
    %v8102 = vadd.f32 0.0, %v8101
    %v8103 = vpop.f32.mrb[0].mxu0
    %v8104 = vadd.f32 0.0, %v8103
    %v8105 = vpop.f32.mrb[0].mxu0
    %v8106 = vadd.f32 0.0, %v8105
    %v8107 = vpop.f32.mrb[0].mxu0
    %v8108 = vadd.f32 0.0, %v8107
    %8109 = vdwg.mxu0
    %8110 = vmatprep.subr.bf16.mxu0 %v7780
    %8111 = vmatpush1.bf16.msra.mxu0 %v7779
    %8112 = vmatprep.subr.bf16.mxu0 %v7786
    %8113 = vmatpush1.bf16.msra.mxu0 %v7785
    %8114 = vmatprep.subr.bf16.mxu0 %v7792
    %8115 = vmatpush1.bf16.msra.mxu0 %v7791
    %8116 = vmatprep.subr.bf16.mxu0 %v7798
    %8117 = vmatpush1.bf16.msra.mxu0 %v7797
    %8118 = vmatprep.subr.bf16.mxu0 %v7804
    %8119 = vmatpush1.bf16.msra.mxu0 %v7803
    %8120 = vmatprep.subr.bf16.mxu0 %v7810
    %8121 = vmatpush1.bf16.msra.mxu0 %v7809
    %8122 = vmatprep.subr.bf16.mxu0 %v7816
    %8123 = vmatpush1.bf16.msra.mxu0 %v7815
    %8124 = vmatprep.subr.bf16.mxu0 %v7822
    %8125 = vmatpush1.bf16.msra.mxu0 %v7821
    %8126 = vmatprep.subr.bf16.mxu0 %v7828
    %8127 = vmatpush1.bf16.msra.mxu0 %v7827
    %8128 = vmatprep.subr.bf16.mxu0 %v7834
    %8129 = vmatpush1.bf16.msra.mxu0 %v7833
    %8130 = vmatprep.subr.bf16.mxu0 %v7840
    %8131 = vmatpush1.bf16.msra.mxu0 %v7839
    %8132 = vmatprep.subr.bf16.mxu0 %v7846
    %8133 = vmatpush1.bf16.msra.mxu0 %v7845
    %8134 = vmatprep.subr.bf16.mxu0 %v7852
    %8135 = vmatpush1.bf16.msra.mxu0 %v7851
    %8136 = vmatprep.subr.bf16.mxu0 %v7858
    %8137 = vmatpush1.bf16.msra.mxu0 %v7857
    %8138 = vmatprep.subr.bf16.mxu0 %v7864
    %8139 = vmatpush1.bf16.msra.mxu0 %v7863
    %8140 = vmatprep.subr.bf16.mxu0 %v7870
    %8141 = vmatpush1.bf16.msra.mxu0 %v7869
    %8142 = vmatprep.mubr.bf16.mxu0 %v6914
    %8143 = vmatmul.mubr.bf16.gmra.mrb[0].mxu0 %v6913
    %v8144 = vpop.f32.mrb[0].mxu0
    %v8145 = vadd.f32 %v8102, %v8144
    %v8146 = vpop.f32.mrb[0].mxu0
    %v8147 = vadd.f32 %v8104, %v8146
    %v8148 = vpop.f32.mrb[0].mxu0
    %v8149 = vadd.f32 %v8106, %v8148
    %v8150 = vpop.f32.mrb[0].mxu0
    %v8151 = vadd.f32 %v8108, %v8150
    %8152 = vdwg.mxu0
    %8153 = vmatprep.subr.bf16.mxu0 %v7686
    %8154 = vmatpush1.bf16.msra.mxu0 %v7685
    %8155 = vmatprep.subr.bf16.mxu0 %v7692
    %8156 = vmatpush1.bf16.msra.mxu0 %v7691
    %8157 = vmatprep.subr.bf16.mxu0 %v7698
    %8158 = vmatpush1.bf16.msra.mxu0 %v7697
    %8159 = vmatprep.subr.bf16.mxu0 %v7704
    %8160 = vmatpush1.bf16.msra.mxu0 %v7703
    %8161 = vmatprep.subr.bf16.mxu0 %v7710
    %8162 = vmatpush1.bf16.msra.mxu0 %v7709
    %8163 = vmatprep.subr.bf16.mxu0 %v7716
    %8164 = vmatpush1.bf16.msra.mxu0 %v7715
    %8165 = vmatprep.subr.bf16.mxu0 %v7722
    %8166 = vmatpush1.bf16.msra.mxu0 %v7721
    %8167 = vmatprep.subr.bf16.mxu0 %v7728
    %8168 = vmatpush1.bf16.msra.mxu0 %v7727
    %8169 = vmatprep.subr.bf16.mxu0 %v7734
    %8170 = vmatpush1.bf16.msra.mxu0 %v7733
    %8171 = vmatprep.subr.bf16.mxu0 %v7740
    %8172 = vmatpush1.bf16.msra.mxu0 %v7739
    %8173 = vmatprep.subr.bf16.mxu0 %v7746
    %8174 = vmatpush1.bf16.msra.mxu0 %v7745
    %8175 = vmatprep.subr.bf16.mxu0 %v7752
    %8176 = vmatpush1.bf16.msra.mxu0 %v7751
    %8177 = vmatprep.subr.bf16.mxu0 %v7758
    %8178 = vmatpush1.bf16.msra.mxu0 %v7757
    %8179 = vmatprep.subr.bf16.mxu0 %v7764
    %8180 = vmatpush1.bf16.msra.mxu0 %v7763
    %8181 = vmatprep.subr.bf16.mxu0 %v7770
    %8182 = vmatpush1.bf16.msra.mxu0 %v7769
    %8183 = vmatprep.subr.bf16.mxu0 %v7776
    %8184 = vmatpush1.bf16.msra.mxu0 %v7775
    %8185 = vmatprep.mubr.bf16.mxu0 %v6912
    %8186 = vmatmul.mubr.bf16.gmra.mrb[0].mxu0 %v6911
    %v8187 = vpop.f32.mrb[0].mxu0
    %v8188 = vadd.f32 0.0, %v8187
    %v8189 = vpop.f32.mrb[0].mxu0
    %v8190 = vadd.f32 0.0, %v8189
    %v8191 = vpop.f32.mrb[0].mxu0
    %v8192 = vadd.f32 0.0, %v8191
    %v8193 = vpop.f32.mrb[0].mxu0
    %v8194 = vadd.f32 0.0, %v8193
    %8195 = vdwg.mxu0
    %8196 = vmatprep.subr.bf16.mxu0 %v7782
    %8197 = vmatpush1.bf16.msra.mxu0 %v7781
    %8198 = vmatprep.subr.bf16.mxu0 %v7788
    %8199 = vmatpush1.bf16.msra.mxu0 %v7787
    %8200 = vmatprep.subr.bf16.mxu0 %v7794
    %8201 = vmatpush1.bf16.msra.mxu0 %v7793
    %8202 = vmatprep.subr.bf16.mxu0 %v7800
    %8203 = vmatpush1.bf16.msra.mxu0 %v7799
    %8204 = vmatprep.subr.bf16.mxu0 %v7806
    %8205 = vmatpush1.bf16.msra.mxu0 %v7805
    %8206 = vmatprep.subr.bf16.mxu0 %v7812
    %8207 = vmatpush1.bf16.msra.mxu0 %v7811
    %8208 = vmatprep.subr.bf16.mxu0 %v7818
    %8209 = vmatpush1.bf16.msra.mxu0 %v7817
    %8210 = vmatprep.subr.bf16.mxu0 %v7824
    %8211 = vmatpush1.bf16.msra.mxu0 %v7823
    %8212 = vmatprep.subr.bf16.mxu0 %v7830
    %8213 = vmatpush1.bf16.msra.mxu0 %v7829
    %8214 = vmatprep.subr.bf16.mxu0 %v7836
    %8215 = vmatpush1.bf16.msra.mxu0 %v7835
    %8216 = vmatprep.subr.bf16.mxu0 %v7842
    %8217 = vmatpush1.bf16.msra.mxu0 %v7841
    %8218 = vmatprep.subr.bf16.mxu0 %v7848
    %8219 = vmatpush1.bf16.msra.mxu0 %v7847
    %8220 = vmatprep.subr.bf16.mxu0 %v7854
    %8221 = vmatpush1.bf16.msra.mxu0 %v7853
    %8222 = vmatprep.subr.bf16.mxu0 %v7860
    %8223 = vmatpush1.bf16.msra.mxu0 %v7859
    %8224 = vmatprep.subr.bf16.mxu0 %v7866
    %8225 = vmatpush1.bf16.msra.mxu0 %v7865
    %8226 = vmatprep.subr.bf16.mxu0 %v7872
    %8227 = vmatpush1.bf16.msra.mxu0 %v7871
    %8228 = vmatprep.mubr.bf16.mxu0 %v6914
    %8229 = vmatmul.mubr.bf16.gmra.mrb[0].mxu0 %v6913
    %v8230 = vpop.f32.mrb[0].mxu0
    %v8231 = vadd.f32 %v8188, %v8230
    %v8232 = vpop.f32.mrb[0].mxu0
    %v8233 = vadd.f32 %v8190, %v8232
    %v8234 = vpop.f32.mrb[0].mxu0
    %v8235 = vadd.f32 %v8192, %v8234
    %v8236 = vpop.f32.mrb[0].mxu0
    %v8237 = vadd.f32 %v8194, %v8236
    %8238 = vdwg.mxu0
    %8239 = vmatprep.subr.bf16.mxu0 %v7688
    %8240 = vmatpush1.bf16.msra.mxu0 %v7687
    %8241 = vmatprep.subr.bf16.mxu0 %v7694
    %8242 = vmatpush1.bf16.msra.mxu0 %v7693
    %8243 = vmatprep.subr.bf16.mxu0 %v7700
    %8244 = vmatpush1.bf16.msra.mxu0 %v7699
    %8245 = vmatprep.subr.bf16.mxu0 %v7706
    %8246 = vmatpush1.bf16.msra.mxu0 %v7705
    %8247 = vmatprep.subr.bf16.mxu0 %v7712
    %8248 = vmatpush1.bf16.msra.mxu0 %v7711
    %8249 = vmatprep.subr.bf16.mxu0 %v7718
    %8250 = vmatpush1.bf16.msra.mxu0 %v7717
    %8251 = vmatprep.subr.bf16.mxu0 %v7724
    %8252 = vmatpush1.bf16.msra.mxu0 %v7723
    %8253 = vmatprep.subr.bf16.mxu0 %v7730
    %8254 = vmatpush1.bf16.msra.mxu0 %v7729
    %8255 = vmatprep.subr.bf16.mxu0 %v7736
    %8256 = vmatpush1.bf16.msra.mxu0 %v7735
    %8257 = vmatprep.subr.bf16.mxu0 %v7742
    %8258 = vmatpush1.bf16.msra.mxu0 %v7741
    %8259 = vmatprep.subr.bf16.mxu0 %v7748
    %8260 = vmatpush1.bf16.msra.mxu0 %v7747
    %8261 = vmatprep.subr.bf16.mxu0 %v7754
    %8262 = vmatpush1.bf16.msra.mxu0 %v7753
    %8263 = vmatprep.subr.bf16.mxu0 %v7760
    %8264 = vmatpush1.bf16.msra.mxu0 %v7759
    %8265 = vmatprep.subr.bf16.mxu0 %v7766
    %8266 = vmatpush1.bf16.msra.mxu0 %v7765
    %8267 = vmatprep.subr.bf16.mxu0 %v7772
    %8268 = vmatpush1.bf16.msra.mxu0 %v7771
    %8269 = vmatprep.subr.bf16.mxu0 %v7778
    %8270 = vmatpush1.bf16.msra.mxu0 %v7777
    %8271 = vmatprep.mubr.bf16.mxu0 %v6912
    %8272 = vmatmul.mubr.bf16.gmra.mrb[0].mxu0 %v6911
    %v8273 = vpop.f32.mrb[0].mxu0
    %v8274 = vadd.f32 0.0, %v8273
    %v8275 = vpop.f32.mrb[0].mxu0
    %v8276 = vadd.f32 0.0, %v8275
    %v8277 = vpop.f32.mrb[0].mxu0
    %v8278 = vadd.f32 0.0, %v8277
    %v8279 = vpop.f32.mrb[0].mxu0
    %v8280 = vadd.f32 0.0, %v8279
    %8281 = vdwg.mxu0
    %8282 = vmatprep.subr.bf16.mxu0 %v7784
    %8283 = vmatpush1.bf16.msra.mxu0 %v7783
    %8284 = vmatprep.subr.bf16.mxu0 %v7790
    %8285 = vmatpush1.bf16.msra.mxu0 %v7789
    %8286 = vmatprep.subr.bf16.mxu0 %v7796
    %8287 = vmatpush1.bf16.msra.mxu0 %v7795
    %8288 = vmatprep.subr.bf16.mxu0 %v7802
    %8289 = vmatpush1.bf16.msra.mxu0 %v7801
    %8290 = vmatprep.subr.bf16.mxu0 %v7808
    %8291 = vmatpush1.bf16.msra.mxu0 %v7807
    %8292 = vmatprep.subr.bf16.mxu0 %v7814
    %8293 = vmatpush1.bf16.msra.mxu0 %v7813
    %8294 = vmatprep.subr.bf16.mxu0 %v7820
    %8295 = vmatpush1.bf16.msra.mxu0 %v7819
    %8296 = vmatprep.subr.bf16.mxu0 %v7826
    %8297 = vmatpush1.bf16.msra.mxu0 %v7825
    %8298 = vmatprep.subr.bf16.mxu0 %v7832
    %8299 = vmatpush1.bf16.msra.mxu0 %v7831
    %8300 = vmatprep.subr.bf16.mxu0 %v7838
    %8301 = vmatpush1.bf16.msra.mxu0 %v7837
    %8302 = vmatprep.subr.bf16.mxu0 %v7844
    %8303 = vmatpush1.bf16.msra.mxu0 %v7843
    %8304 = vmatprep.subr.bf16.mxu0 %v7850
    %8305 = vmatpush1.bf16.msra.mxu0 %v7849
    %8306 = vmatprep.subr.bf16.mxu0 %v7856
    %8307 = vmatpush1.bf16.msra.mxu0 %v7855
    %8308 = vmatprep.subr.bf16.mxu0 %v7862
    %8309 = vmatpush1.bf16.msra.mxu0 %v7861
    %8310 = vmatprep.subr.bf16.mxu0 %v7868
    %8311 = vmatpush1.bf16.msra.mxu0 %v7867
    %8312 = vmatprep.subr.bf16.mxu0 %v7874
    %8313 = vmatpush1.bf16.msra.mxu0 %v7873
    %8314 = vmatprep.mubr.bf16.mxu0 %v6914
    %8315 = vmatmul.mubr.bf16.gmra.mrb[0].mxu0 %v6913
    %v8316 = vpop.f32.mrb[0].mxu0
    %v8317 = vadd.f32 %v8274, %v8316
    %v8318 = vpop.f32.mrb[0].mxu0
    %v8319 = vadd.f32 %v8276, %v8318
    %v8320 = vpop.f32.mrb[0].mxu0
    %v8321 = vadd.f32 %v8278, %v8320
    %v8322 = vpop.f32.mrb[0].mxu0
    %v8323 = vadd.f32 %v8280, %v8322
    %8324 = vdwg.mxu0
    %v8325 = vlaneseq
    %v8326 = vand.u32 %v8325, 127
    %v8327 = vadd.s32 %v8326, 128
    %vm8328 = vcmp.eq.s32.totalorder %v8326, 0
    %vm8329 = vcmp.eq.s32.totalorder %v8327, 0
    %v8330 = vsel %vm8328, -1e+30, %v8231
    %v8331 = vsel %vm8329, -1e+30, %v8233
    %v8332 = vsel %vm8328, -1e+30, %v8235
    %v8333 = vsel %vm8329, -1e+30, %v8237
    %v8334 = vmax.f32 %v8145, %v8330
    %v8335 = vmax.f32 %v8147, %v8331
    %v8336 = vmax.f32 %v8149, %v8332
    %v8337 = vmax.f32 %v8151, %v8333
    %v8338 = vmax.f32 %v8334, %v8317
    %v8339 = vmax.f32 %v8335, %v8319
    %v8340 = vmax.f32 %v8336, %v8321
    %v8341 = vmax.f32 %v8337, %v8323
    %v8342 = vpack.c.bf16 %v967, %v965
    %v8343 = vpack.c.bf16 %v968, %v966
    %v8344 = vpack.c.bf16 %v8340, %v8338
    %v8345 = vpack.c.bf16 %v8341, %v8339
    %v8346 = vpack.c.bf16 %v2418, %v2416
    %v8347 = vpack.c.bf16 %v2419, %v2417
    %v8348 = vpack.c.bf16 %v2422, %v2420
    %v8349 = vpack.c.bf16 %v2423, %v2421
    %v8350 = vpack.c.bf16 %v2426, %v2424
    %v8351 = vpack.c.bf16 %v2427, %v2425
    %v8352 = vpack.c.bf16 %v2430, %v2428
    %v8353 = vpack.c.bf16 %v2431, %v2429
    %v8354 = vpack.c.bf16 %v2434, %v2432
    %v8355 = vpack.c.bf16 %v2435, %v2433
    %v8356 = vld [vmem:[%s15] sm:$0xf]
    %v8357 = vld [vmem:[%s15 + $0x4] sm:$0xf]
    %v8358 = vld [vmem:[%s15 + $0x8] sm:$0xf]
    %v8359 = vld [vmem:[%s15 + $0xc] sm:$0xf]
    %v8360 = vld [vmem:[%s15 + $0x10] sm:$0xf]
    %v8361 = vld [vmem:[%s15 + $0x14] sm:$0xf]
    %v8362 = vld [vmem:[%s15 + $0x18] sm:$0xf]
    %v8363 = vld [vmem:[%s15 + $0x1c] sm:$0xf]
    %v8364 = vld [vmem:[%s15 + $0x20] sm:$0xf]
    %v8365 = vld [vmem:[%s15 + $0x24] sm:$0xf]
    %v8366 = vld [vmem:[%s15 + $0x28] sm:$0xf]
    %v8367 = vld [vmem:[%s15 + $0x2c] sm:$0xf]
    %v8368 = vld [vmem:[%s15 + $0x30] sm:$0xf]
    %v8369 = vld [vmem:[%s15 + $0x34] sm:$0xf]
    %v8370 = vld [vmem:[%s15 + $0x38] sm:$0xf]
    %v8371 = vld [vmem:[%s15 + $0x3c] sm:$0xf]
    %v8372 = vld [vmem:[%s15 + $0x40] sm:$0xf]
    %v8373 = vld [vmem:[%s15 + $0x44] sm:$0xf]
    %v8374 = vld [vmem:[%s15 + $0x48] sm:$0xf]
    %v8375 = vld [vmem:[%s15 + $0x4c] sm:$0xf]
    %v8376 = vld [vmem:[%s15 + $0x50] sm:$0xf]
    %v8377 = vld [vmem:[%s15 + $0x54] sm:$0xf]
    %v8378 = vld [vmem:[%s15 + $0x58] sm:$0xf]
    %v8379 = vld [vmem:[%s15 + $0x5c] sm:$0xf]
    %v8380 = vld [vmem:[%s15 + $0x60] sm:$0xf]
    %v8381 = vld [vmem:[%s15 + $0x64] sm:$0xf]
    %v8382 = vld [vmem:[%s15 + $0x68] sm:$0xf]
    %v8383 = vld [vmem:[%s15 + $0x6c] sm:$0xf]
    %v8384 = vld [vmem:[%s15 + $0x70] sm:$0xf]
    %v8385 = vld [vmem:[%s15 + $0x74] sm:$0xf]
    %v8386 = vld [vmem:[%s15 + $0x78] sm:$0xf]
    %v8387 = vld [vmem:[%s15 + $0x7c] sm:$0xf]
    %v8388 = vld [vmem:[%s16] sm:$0x1]
    %v8390 = vlaneseq
    %v8391 = vshrl.u32 %v8390, 7
    %v8392 = vsub.s32 0, %v8391
    %v8393 = vrot.slane %v8388, %v8392
    %v8427 = vunpack.c.l.b16 %v8356
    %v8428 = vunpack.c.l.b16 %v8357
    %v8429 = vunpack.c.l.b16 %v8358
    %v8430 = vunpack.c.l.b16 %v8359
    %v8431 = vunpack.c.l.b16 %v8360
    %v8432 = vunpack.c.l.b16 %v8361
    %v8433 = vunpack.c.l.b16 %v8362
    %v8434 = vunpack.c.l.b16 %v8363
    %v8435 = vunpack.c.l.b16 %v8364
    %v8436 = vunpack.c.l.b16 %v8365
    %v8437 = vunpack.c.l.b16 %v8366
    %v8438 = vunpack.c.l.b16 %v8367
    %v8439 = vunpack.c.l.b16 %v8368
    %v8440 = vunpack.c.l.b16 %v8369
    %v8441 = vunpack.c.l.b16 %v8370
    %v8442 = vunpack.c.l.b16 %v8371
    %v8443 = vunpack.c.l.b16 %v8372
    %v8444 = vunpack.c.l.b16 %v8373
    %v8445 = vunpack.c.l.b16 %v8374
    %v8446 = vunpack.c.l.b16 %v8375
    %v8447 = vunpack.c.l.b16 %v8376
    %v8448 = vunpack.c.l.b16 %v8377
    %v8449 = vunpack.c.l.b16 %v8378
    %v8450 = vunpack.c.l.b16 %v8379
    %v8451 = vunpack.c.l.b16 %v8380
    %v8452 = vunpack.c.l.b16 %v8381
    %v8453 = vunpack.c.l.b16 %v8382
    %v8454 = vunpack.c.l.b16 %v8383
    %v8455 = vunpack.c.l.b16 %v8384
    %v8456 = vunpack.c.l.b16 %v8385
    %v8457 = vunpack.c.l.b16 %v8386
    %v8458 = vunpack.c.l.b16 %v8387
    %v8459 = vpack.c.b16 %v8428, %v8427
    %v8460 = vpack.c.b16 %v8430, %v8429
    %v8461 = vpack.c.b16 %v8432, %v8431
    %v8462 = vpack.c.b16 %v8434, %v8433
    %v8463 = vpack.c.b16 %v8436, %v8435
    %v8464 = vpack.c.b16 %v8438, %v8437
    %v8465 = vpack.c.b16 %v8440, %v8439
    %v8466 = vpack.c.b16 %v8442, %v8441
    %v8467 = vpack.c.b16 %v8444, %v8443
    %v8468 = vpack.c.b16 %v8446, %v8445
    %v8469 = vpack.c.b16 %v8448, %v8447
    %v8470 = vpack.c.b16 %v8450, %v8449
    %v8471 = vpack.c.b16 %v8452, %v8451
    %v8472 = vpack.c.b16 %v8454, %v8453
    %v8473 = vpack.c.b16 %v8456, %v8455
    %v8474 = vpack.c.b16 %v8458, %v8457
    %8491 = vmatprep.subr.bf16.mxu0 0
    %8492 = vmatpush1.bf16.msra.mxu0 %v8459
    %8493 = vmatprep.subr.bf16.mxu0 0
    %8494 = vmatpush1.bf16.msra.mxu0 %v8460
    %8495 = vmatprep.subr.bf16.mxu0 0
    %8496 = vmatpush1.bf16.msra.mxu0 %v8461
    %8497 = vmatprep.subr.bf16.mxu0 0
    %8498 = vmatpush1.bf16.msra.mxu0 %v8462
    %8499 = vmatprep.subr.bf16.mxu0 0
    %8500 = vmatpush1.bf16.msra.mxu0 %v8463
    %8501 = vmatprep.subr.bf16.mxu0 0
    %8502 = vmatpush1.bf16.msra.mxu0 %v8464
    %8503 = vmatprep.subr.bf16.mxu0 0
    %8504 = vmatpush1.bf16.msra.mxu0 %v8465
    %8505 = vmatprep.subr.bf16.mxu0 0
    %8506 = vmatpush1.bf16.msra.mxu0 %v8466
    %8507 = vmatprep.subr.bf16.mxu0 0
    %8508 = vmatpush1.bf16.msra.mxu0 %v8467
    %8509 = vmatprep.subr.bf16.mxu0 0
    %8510 = vmatpush1.bf16.msra.mxu0 %v8468
    %8511 = vmatprep.subr.bf16.mxu0 0
    %8512 = vmatpush1.bf16.msra.mxu0 %v8469
    %8513 = vmatprep.subr.bf16.mxu0 0
    %8514 = vmatpush1.bf16.msra.mxu0 %v8470
    %8515 = vmatprep.subr.bf16.mxu0 0
    %8516 = vmatpush1.bf16.msra.mxu0 %v8471
    %8517 = vmatprep.subr.bf16.mxu0 0
    %8518 = vmatpush1.bf16.msra.mxu0 %v8472
    %8519 = vmatprep.subr.bf16.mxu0 0
    %8520 = vmatpush1.bf16.msra.mxu0 %v8473
    %8521 = vmatprep.subr.bf16.mxu0 0
    %8522 = vmatpush1.bf16.msra.mxu0 %v8474
    %8523 = vmatprep.mubr.bf16.mxu0 %v8343
    %8524 = vmatmul.mubr.bf16.gmra.mrb[0].mxu0 %v8342
    %v8525 = vpop.f32.mrb[0].mxu0
    %v8526 = vadd.f32 %v8393, %v8525
    %v8527 = vpop.f32.mrb[0].mxu0
    %v8528 = vpop.f32.mrb[0].mxu0
    %v8529 = vadd.f32 %v8393, %v8528
    %v8530 = vpop.f32.mrb[0].mxu0
    %8531 = vmatprep.mubr.bf16.mxu0 %v8345
    %8532 = vmatmul.mubr.bf16.gmra.mrb[0].mxu0 %v8344
    %v8533 = vpop.f32.mrb[0].mxu0
    %v8534 = vadd.f32 %v8393, %v8533
    %v8535 = vpop.f32.mrb[0].mxu0
    %v8536 = vpop.f32.mrb[0].mxu0
    %v8537 = vadd.f32 %v8393, %v8536
    %v8538 = vpop.f32.mrb[0].mxu0
    %8539 = vmatprep.mubr.bf16.mxu0 %v8347
    %8540 = vmatmul.mubr.bf16.gmra.mrb[0].mxu0 %v8346
    %v8541 = vpop.f32.mrb[0].mxu0
    %v8542 = vadd.f32 %v8393, %v8541
    %v8543 = vpop.f32.mrb[0].mxu0
    %v8544 = vpop.f32.mrb[0].mxu0
    %v8545 = vadd.f32 %v8393, %v8544
    %v8546 = vpop.f32.mrb[0].mxu0
    %8547 = vmatprep.mubr.bf16.mxu0 %v8349
    %8548 = vmatmul.mubr.bf16.gmra.mrb[0].mxu0 %v8348
    %v8549 = vpop.f32.mrb[0].mxu0
    %v8550 = vadd.f32 %v8393, %v8549
    %v8551 = vpop.f32.mrb[0].mxu0
    %v8552 = vpop.f32.mrb[0].mxu0
    %v8553 = vadd.f32 %v8393, %v8552
    %v8554 = vpop.f32.mrb[0].mxu0
    %8555 = vmatprep.mubr.bf16.mxu0 %v8351
    %8556 = vmatmul.mubr.bf16.gmra.mrb[0].mxu0 %v8350
    %v8557 = vpop.f32.mrb[0].mxu0
    %v8558 = vadd.f32 %v8393, %v8557
    %v8559 = vpop.f32.mrb[0].mxu0
    %v8560 = vpop.f32.mrb[0].mxu0
    %v8561 = vadd.f32 %v8393, %v8560
    %v8562 = vpop.f32.mrb[0].mxu0
    %8563 = vmatprep.mubr.bf16.mxu0 %v8353
    %8564 = vmatmul.mubr.bf16.gmra.mrb[0].mxu0 %v8352
    %v8565 = vpop.f32.mrb[0].mxu0
    %v8566 = vadd.f32 %v8393, %v8565
    %v8567 = vpop.f32.mrb[0].mxu0
    %v8568 = vpop.f32.mrb[0].mxu0
    %v8569 = vadd.f32 %v8393, %v8568
    %v8570 = vpop.f32.mrb[0].mxu0
    %8571 = vmatprep.mubr.bf16.mxu0 %v8355
    %8572 = vmatmul.mubr.bf16.gmra.mrb[0].mxu0 %v8354
    %v8573 = vpop.f32.mrb[0].mxu0
    %v8574 = vadd.f32 %v8393, %v8573
    %v8575 = vpop.f32.mrb[0].mxu0
    %v8576 = vpop.f32.mrb[0].mxu0
    %v8577 = vadd.f32 %v8393, %v8576
    %v8578 = vpop.f32.mrb[0].mxu0
    %8579 = vdwg.mxu0
    %v8580 = vmul.f32 %v8526, 0.70710677
    %v8581 = vmul.f32 %v8529, 0.70710677
    %v8582 = vmul.f32 %v8534, 0.70710677
    %v8583 = vmul.f32 %v8537, 0.70710677
    %v8584 = vmul.f32 %v8542, 0.70710677
    %v8585 = vmul.f32 %v8545, 0.70710677
    %v8586 = vmul.f32 %v8550, 0.70710677
    %v8587 = vmul.f32 %v8553, 0.70710677
    %v8588 = vmul.f32 %v8558, 0.70710677
    %v8589 = vmul.f32 %v8561, 0.70710677
    %v8590 = vmul.f32 %v8566, 0.70710677
    %v8591 = vmul.f32 %v8569, 0.70710677
    %v8592 = vmul.f32 %v8574, 0.70710677
    %v8593 = vmul.f32 %v8577, 0.70710677
    %v8594 = vand.u32 2147483647, %v8580
    %v8595 = vand.u32 2147483647, %v8581
    %v8596 = vand.u32 2147483647, %v8582
    %v8597 = vand.u32 2147483647, %v8583
    %v8598 = vand.u32 2147483647, %v8584
    %v8599 = vand.u32 2147483647, %v8585
    %v8600 = vand.u32 2147483647, %v8586
    %v8601 = vand.u32 2147483647, %v8587
    %v8602 = vand.u32 2147483647, %v8588
    %v8603 = vand.u32 2147483647, %v8589
    %v8604 = vand.u32 2147483647, %v8590
    %v8605 = vand.u32 2147483647, %v8591
    %v8606 = vand.u32 2147483647, %v8592
    %v8607 = vand.u32 2147483647, %v8593
    %v8608 = vmul.f32 %v8594, 0.3275911
    %v8609 = vmul.f32 %v8595, 0.3275911
    %v8610 = vmul.f32 %v8596, 0.3275911
    %v8611 = vmul.f32 %v8597, 0.3275911
    %v8612 = vmul.f32 %v8598, 0.3275911
    %v8613 = vmul.f32 %v8599, 0.3275911
    %v8614 = vmul.f32 %v8600, 0.3275911
    %v8615 = vmul.f32 %v8601, 0.3275911
    %v8616 = vmul.f32 %v8602, 0.3275911
    %v8617 = vmul.f32 %v8603, 0.3275911
    %v8618 = vmul.f32 %v8604, 0.3275911
    %v8619 = vmul.f32 %v8605, 0.3275911
    %v8620 = vmul.f32 %v8606, 0.3275911
    %v8621 = vmul.f32 %v8607, 0.3275911
    %v8622 = vadd.f32 %v8608, 1.0
    %v8623 = vadd.f32 %v8609, 1.0
    %v8624 = vadd.f32 %v8610, 1.0
    %v8625 = vadd.f32 %v8611, 1.0
    %v8626 = vadd.f32 %v8612, 1.0
    %v8627 = vadd.f32 %v8613, 1.0
    %v8628 = vadd.f32 %v8614, 1.0
    %v8629 = vadd.f32 %v8615, 1.0
    %v8630 = vadd.f32 %v8616, 1.0
    %v8631 = vadd.f32 %v8617, 1.0
    %v8632 = vadd.f32 %v8618, 1.0
    %v8633 = vadd.f32 %v8619, 1.0
    %v8634 = vadd.f32 %v8620, 1.0
    %v8635 = vadd.f32 %v8621, 1.0
    %v8636 = vrcp.pop %v8622
    %v8637 = vmul.f32 1.0, %v8636
    %v8638 = vrcp.pop %v8623
    %v8639 = vmul.f32 1.0, %v8638
    %v8640 = vrcp.pop %v8624
    %v8641 = vmul.f32 1.0, %v8640
    %v8642 = vrcp.pop %v8625
    %v8643 = vmul.f32 1.0, %v8642
    %v8644 = vrcp.pop %v8626
    %v8645 = vmul.f32 1.0, %v8644
    %v8646 = vrcp.pop %v8627
    %v8647 = vmul.f32 1.0, %v8646
    %v8648 = vrcp.pop %v8628
    %v8649 = vmul.f32 1.0, %v8648
    %v8650 = vrcp.pop %v8629
    %v8651 = vmul.f32 1.0, %v8650
    %v8652 = vrcp.pop %v8630
    %v8653 = vmul.f32 1.0, %v8652
    %v8654 = vrcp.pop %v8631
    %v8655 = vmul.f32 1.0, %v8654
    %v8656 = vrcp.pop %v8632
    %v8657 = vmul.f32 1.0, %v8656
    %v8658 = vrcp.pop %v8633
    %v8659 = vmul.f32 1.0, %v8658
    %v8660 = vrcp.pop %v8634
    %v8661 = vmul.f32 1.0, %v8660
    %v8662 = vrcp.pop %v8635
    %v8663 = vmul.f32 1.0, %v8662
    %v8664 = vmul.f32 %v8637, 1.0614054
    %v8665 = vmul.f32 %v8639, 1.0614054
    %v8666 = vmul.f32 %v8641, 1.0614054
    %v8667 = vmul.f32 %v8643, 1.0614054
    %v8668 = vmul.f32 %v8645, 1.0614054
    %v8669 = vmul.f32 %v8647, 1.0614054
    %v8670 = vmul.f32 %v8649, 1.0614054
    %v8671 = vmul.f32 %v8651, 1.0614054
    %v8672 = vmul.f32 %v8653, 1.0614054
    %v8673 = vmul.f32 %v8655, 1.0614054
    %v8674 = vmul.f32 %v8657, 1.0614054
    %v8675 = vmul.f32 %v8659, 1.0614054
    %v8676 = vmul.f32 %v8661, 1.0614054
    %v8677 = vmul.f32 %v8663, 1.0614054
    %v8678 = vadd.f32 %v8664, -1.4531521
    %v8679 = vadd.f32 %v8665, -1.4531521
    %v8680 = vadd.f32 %v8666, -1.4531521
    %v8681 = vadd.f32 %v8667, -1.4531521
    %v8682 = vadd.f32 %v8668, -1.4531521
    %v8683 = vadd.f32 %v8669, -1.4531521
    %v8684 = vadd.f32 %v8670, -1.4531521
    %v8685 = vadd.f32 %v8671, -1.4531521
    %v8686 = vadd.f32 %v8672, -1.4531521
    %v8687 = vadd.f32 %v8673, -1.4531521
    %v8688 = vadd.f32 %v8674, -1.4531521
    %v8689 = vadd.f32 %v8675, -1.4531521
    %v8690 = vadd.f32 %v8676, -1.4531521
    %v8691 = vadd.f32 %v8677, -1.4531521
    %v8692 = vmul.f32 %v8637, %v8678
    %v8693 = vmul.f32 %v8639, %v8679
    %v8694 = vmul.f32 %v8641, %v8680
    %v8695 = vmul.f32 %v8643, %v8681
    %v8696 = vmul.f32 %v8645, %v8682
    %v8697 = vmul.f32 %v8647, %v8683
    %v8698 = vmul.f32 %v8649, %v8684
    %v8699 = vmul.f32 %v8651, %v8685
    %v8700 = vmul.f32 %v8653, %v8686
    %v8701 = vmul.f32 %v8655, %v8687
    %v8702 = vmul.f32 %v8657, %v8688
    %v8703 = vmul.f32 %v8659, %v8689
    %v8704 = vmul.f32 %v8661, %v8690
    %v8705 = vmul.f32 %v8663, %v8691
    %v8706 = vadd.f32 %v8692, 1.4214138
    %v8707 = vadd.f32 %v8693, 1.4214138
    %v8708 = vadd.f32 %v8694, 1.4214138
    %v8709 = vadd.f32 %v8695, 1.4214138
    %v8710 = vadd.f32 %v8696, 1.4214138
    %v8711 = vadd.f32 %v8697, 1.4214138
    %v8712 = vadd.f32 %v8698, 1.4214138
    %v8713 = vadd.f32 %v8699, 1.4214138
    %v8714 = vadd.f32 %v8700, 1.4214138
    %v8715 = vadd.f32 %v8701, 1.4214138
    %v8716 = vadd.f32 %v8702, 1.4214138
    %v8717 = vadd.f32 %v8703, 1.4214138
    %v8718 = vadd.f32 %v8704, 1.4214138
    %v8719 = vadd.f32 %v8705, 1.4214138
    %v8720 = vmul.f32 %v8637, %v8706
    %v8721 = vmul.f32 %v8639, %v8707
    %v8722 = vmul.f32 %v8641, %v8708
    %v8723 = vmul.f32 %v8643, %v8709
    %v8724 = vmul.f32 %v8645, %v8710
    %v8725 = vmul.f32 %v8647, %v8711
    %v8726 = vmul.f32 %v8649, %v8712
    %v8727 = vmul.f32 %v8651, %v8713
    %v8728 = vmul.f32 %v8653, %v8714
    %v8729 = vmul.f32 %v8655, %v8715
    %v8730 = vmul.f32 %v8657, %v8716
    %v8731 = vmul.f32 %v8659, %v8717
    %v8732 = vmul.f32 %v8661, %v8718
    %v8733 = vmul.f32 %v8663, %v8719
    %v8734 = vadd.f32 %v8720, -0.28449672
    %v8735 = vadd.f32 %v8721, -0.28449672
    %v8736 = vadd.f32 %v8722, -0.28449672
    %v8737 = vadd.f32 %v8723, -0.28449672
    %v8738 = vadd.f32 %v8724, -0.28449672
    %v8739 = vadd.f32 %v8725, -0.28449672
    %v8740 = vadd.f32 %v8726, -0.28449672
    %v8741 = vadd.f32 %v8727, -0.28449672
    %v8742 = vadd.f32 %v8728, -0.28449672
    %v8743 = vadd.f32 %v8729, -0.28449672
    %v8744 = vadd.f32 %v8730, -0.28449672
    %v8745 = vadd.f32 %v8731, -0.28449672
    %v8746 = vadd.f32 %v8732, -0.28449672
    %v8747 = vadd.f32 %v8733, -0.28449672
    %v8748 = vmul.f32 %v8637, %v8734
    %v8749 = vmul.f32 %v8639, %v8735
    %v8750 = vmul.f32 %v8641, %v8736
    %v8751 = vmul.f32 %v8643, %v8737
    %v8752 = vmul.f32 %v8645, %v8738
    %v8753 = vmul.f32 %v8647, %v8739
    %v8754 = vmul.f32 %v8649, %v8740
    %v8755 = vmul.f32 %v8651, %v8741
    %v8756 = vmul.f32 %v8653, %v8742
    %v8757 = vmul.f32 %v8655, %v8743
    %v8758 = vmul.f32 %v8657, %v8744
    %v8759 = vmul.f32 %v8659, %v8745
    %v8760 = vmul.f32 %v8661, %v8746
    %v8761 = vmul.f32 %v8663, %v8747
    %v8762 = vadd.f32 %v8748, 0.2548296
    %v8763 = vadd.f32 %v8749, 0.2548296
    %v8764 = vadd.f32 %v8750, 0.2548296
    %v8765 = vadd.f32 %v8751, 0.2548296
    %v8766 = vadd.f32 %v8752, 0.2548296
    %v8767 = vadd.f32 %v8753, 0.2548296
    %v8768 = vadd.f32 %v8754, 0.2548296
    %v8769 = vadd.f32 %v8755, 0.2548296
    %v8770 = vadd.f32 %v8756, 0.2548296
    %v8771 = vadd.f32 %v8757, 0.2548296
    %v8772 = vadd.f32 %v8758, 0.2548296
    %v8773 = vadd.f32 %v8759, 0.2548296
    %v8774 = vadd.f32 %v8760, 0.2548296
    %v8775 = vadd.f32 %v8761, 0.2548296
    %v8776 = vmul.f32 %v8637, %v8762
    %v8777 = vmul.f32 %v8639, %v8763
    %v8778 = vmul.f32 %v8641, %v8764
    %v8779 = vmul.f32 %v8643, %v8765
    %v8780 = vmul.f32 %v8645, %v8766
    %v8781 = vmul.f32 %v8647, %v8767
    %v8782 = vmul.f32 %v8649, %v8768
    %v8783 = vmul.f32 %v8651, %v8769
    %v8784 = vmul.f32 %v8653, %v8770
    %v8785 = vmul.f32 %v8655, %v8771
    %v8786 = vmul.f32 %v8657, %v8772
    %v8787 = vmul.f32 %v8659, %v8773
    %v8788 = vmul.f32 %v8661, %v8774
    %v8789 = vmul.f32 %v8663, %v8775
    %v8790 = vsub.f32 0.0, %v8594
    %v8791 = vsub.f32 0.0, %v8595
    %v8792 = vsub.f32 0.0, %v8596
    %v8793 = vsub.f32 0.0, %v8597
    %v8794 = vsub.f32 0.0, %v8598
    %v8795 = vsub.f32 0.0, %v8599
    %v8796 = vsub.f32 0.0, %v8600
    %v8797 = vsub.f32 0.0, %v8601
    %v8798 = vsub.f32 0.0, %v8602
    %v8799 = vsub.f32 0.0, %v8603
    %v8800 = vsub.f32 0.0, %v8604
    %v8801 = vsub.f32 0.0, %v8605
    %v8802 = vsub.f32 0.0, %v8606
    %v8803 = vsub.f32 0.0, %v8607
    %v8804 = vmul.f32 %v8790, %v8594
    %v8805 = vmul.f32 %v8791, %v8595
    %v8806 = vmul.f32 %v8792, %v8596
    %v8807 = vmul.f32 %v8793, %v8597
    %v8808 = vmul.f32 %v8794, %v8598
    %v8809 = vmul.f32 %v8795, %v8599
    %v8810 = vmul.f32 %v8796, %v8600
    %v8811 = vmul.f32 %v8797, %v8601
    %v8812 = vmul.f32 %v8798, %v8602
    %v8813 = vmul.f32 %v8799, %v8603
    %v8814 = vmul.f32 %v8800, %v8604
    %v8815 = vmul.f32 %v8801, %v8605
    %v8816 = vmul.f32 %v8802, %v8606
    %v8817 = vmul.f32 %v8803, %v8607
    %v8818 = vmul.f32 %v8804, 1.442695
    %v8819 = vpow.pop %v8818
    %v8820 = vmul.f32 %v8805, 1.442695
    %v8821 = vpow.pop %v8820
    %v8822 = vmul.f32 %v8806, 1.442695
    %v8823 = vpow.pop %v8822
    %v8824 = vmul.f32 %v8807, 1.442695
    %v8825 = vpow.pop %v8824
    %v8826 = vmul.f32 %v8808, 1.442695
    %v8827 = vpow.pop %v8826
    %v8828 = vmul.f32 %v8809, 1.442695
    %v8829 = vpow.pop %v8828
    %v8830 = vmul.f32 %v8810, 1.442695
    %v8831 = vpow.pop %v8830
    %v8832 = vmul.f32 %v8811, 1.442695
    %v8833 = vpow.pop %v8832
    %v8834 = vmul.f32 %v8812, 1.442695
    %v8835 = vpow.pop %v8834
    %v8836 = vmul.f32 %v8813, 1.442695
    %v8837 = vpow.pop %v8836
    %v8838 = vmul.f32 %v8814, 1.442695
    %v8839 = vpow.pop %v8838
    %v8840 = vmul.f32 %v8815, 1.442695
    %v8841 = vpow.pop %v8840
    %v8842 = vmul.f32 %v8816, 1.442695
    %v8843 = vpow.pop %v8842
    %v8844 = vmul.f32 %v8817, 1.442695
    %v8845 = vpow.pop %v8844
    %v8846 = vmul.f32 %v8776, %v8819
    %v8847 = vmul.f32 %v8777, %v8821
    %v8848 = vmul.f32 %v8778, %v8823
    %v8849 = vmul.f32 %v8779, %v8825
    %v8850 = vmul.f32 %v8780, %v8827
    %v8851 = vmul.f32 %v8781, %v8829
    %v8852 = vmul.f32 %v8782, %v8831
    %v8853 = vmul.f32 %v8783, %v8833
    %v8854 = vmul.f32 %v8784, %v8835
    %v8855 = vmul.f32 %v8785, %v8837
    %v8856 = vmul.f32 %v8786, %v8839
    %v8857 = vmul.f32 %v8787, %v8841
    %v8858 = vmul.f32 %v8788, %v8843
    %v8859 = vmul.f32 %v8789, %v8845
    %v8860 = vsub.f32 1.0, %v8846
    %v8861 = vsub.f32 1.0, %v8847
    %v8862 = vsub.f32 1.0, %v8848
    %v8863 = vsub.f32 1.0, %v8849
    %v8864 = vsub.f32 1.0, %v8850
    %v8865 = vsub.f32 1.0, %v8851
    %v8866 = vsub.f32 1.0, %v8852
    %v8867 = vsub.f32 1.0, %v8853
    %v8868 = vsub.f32 1.0, %v8854
    %v8869 = vsub.f32 1.0, %v8855
    %v8870 = vsub.f32 1.0, %v8856
    %v8871 = vsub.f32 1.0, %v8857
    %v8872 = vsub.f32 1.0, %v8858
    %v8873 = vsub.f32 1.0, %v8859
    %vm8874 = vcmp.ge.f32.partialorder %v8580, 0.0
    %vm8875 = vcmp.ge.f32.partialorder %v8581, 0.0
    %vm8876 = vcmp.ge.f32.partialorder %v8582, 0.0
    %vm8877 = vcmp.ge.f32.partialorder %v8583, 0.0
    %vm8878 = vcmp.ge.f32.partialorder %v8584, 0.0
    %vm8879 = vcmp.ge.f32.partialorder %v8585, 0.0
    %vm8880 = vcmp.ge.f32.partialorder %v8586, 0.0
    %vm8881 = vcmp.ge.f32.partialorder %v8587, 0.0
    %vm8882 = vcmp.ge.f32.partialorder %v8588, 0.0
    %vm8883 = vcmp.ge.f32.partialorder %v8589, 0.0
    %vm8884 = vcmp.ge.f32.partialorder %v8590, 0.0
    %vm8885 = vcmp.ge.f32.partialorder %v8591, 0.0
    %vm8886 = vcmp.ge.f32.partialorder %v8592, 0.0
    %vm8887 = vcmp.ge.f32.partialorder %v8593, 0.0
    %v8888 = vsub.f32 0.0, %v8860
    %v8889 = vsub.f32 0.0, %v8861
    %v8890 = vsub.f32 0.0, %v8862
    %v8891 = vsub.f32 0.0, %v8863
    %v8892 = vsub.f32 0.0, %v8864
    %v8893 = vsub.f32 0.0, %v8865
    %v8894 = vsub.f32 0.0, %v8866
    %v8895 = vsub.f32 0.0, %v8867
    %v8896 = vsub.f32 0.0, %v8868
    %v8897 = vsub.f32 0.0, %v8869
    %v8898 = vsub.f32 0.0, %v8870
    %v8899 = vsub.f32 0.0, %v8871
    %v8900 = vsub.f32 0.0, %v8872
    %v8901 = vsub.f32 0.0, %v8873
    %v8902 = vsel %vm8874, %v8860, %v8888
    %v8903 = vsel %vm8875, %v8861, %v8889
    %v8904 = vsel %vm8876, %v8862, %v8890
    %v8905 = vsel %vm8877, %v8863, %v8891
    %v8906 = vsel %vm8878, %v8864, %v8892
    %v8907 = vsel %vm8879, %v8865, %v8893
    %v8908 = vsel %vm8880, %v8866, %v8894
    %v8909 = vsel %vm8881, %v8867, %v8895
    %v8910 = vsel %vm8882, %v8868, %v8896
    %v8911 = vsel %vm8883, %v8869, %v8897
    %v8912 = vsel %vm8884, %v8870, %v8898
    %v8913 = vsel %vm8885, %v8871, %v8899
    %v8914 = vsel %vm8886, %v8872, %v8900
    %v8915 = vsel %vm8887, %v8873, %v8901
    %v8916 = vmul.f32 %v8526, 0.5
    %v8917 = vmul.f32 %v8529, 0.5
    %v8918 = vmul.f32 %v8534, 0.5
    %v8919 = vmul.f32 %v8537, 0.5
    %v8920 = vmul.f32 %v8542, 0.5
    %v8921 = vmul.f32 %v8545, 0.5
    %v8922 = vmul.f32 %v8550, 0.5
    %v8923 = vmul.f32 %v8553, 0.5
    %v8924 = vmul.f32 %v8558, 0.5
    %v8925 = vmul.f32 %v8561, 0.5
    %v8926 = vmul.f32 %v8566, 0.5
    %v8927 = vmul.f32 %v8569, 0.5
    %v8928 = vmul.f32 %v8574, 0.5
    %v8929 = vmul.f32 %v8577, 0.5
    %v8930 = vadd.f32 %v8902, 1.0
    %v8931 = vadd.f32 %v8903, 1.0
    %v8932 = vadd.f32 %v8904, 1.0
    %v8933 = vadd.f32 %v8905, 1.0
    %v8934 = vadd.f32 %v8906, 1.0
    %v8935 = vadd.f32 %v8907, 1.0
    %v8936 = vadd.f32 %v8908, 1.0
    %v8937 = vadd.f32 %v8909, 1.0
    %v8938 = vadd.f32 %v8910, 1.0
    %v8939 = vadd.f32 %v8911, 1.0
    %v8940 = vadd.f32 %v8912, 1.0
    %v8941 = vadd.f32 %v8913, 1.0
    %v8942 = vadd.f32 %v8914, 1.0
    %v8943 = vadd.f32 %v8915, 1.0
    %v8944 = vmul.f32 %v8916, %v8930
    %v8945 = vmul.f32 %v8917, %v8931
    %v8946 = vmul.f32 %v8918, %v8932
    %v8947 = vmul.f32 %v8919, %v8933
    %v8948 = vmul.f32 %v8920, %v8934
    %v8949 = vmul.f32 %v8921, %v8935
    %v8950 = vmul.f32 %v8922, %v8936
    %v8951 = vmul.f32 %v8923, %v8937
    %v8952 = vmul.f32 %v8924, %v8938
    %v8953 = vmul.f32 %v8925, %v8939
    %v8954 = vmul.f32 %v8926, %v8940
    %v8955 = vmul.f32 %v8927, %v8941
    %v8956 = vmul.f32 %v8928, %v8942
    %v8957 = vmul.f32 %v8929, %v8943
    %v8958 = vpack.c.bf16 %v8945, %v8944
    %v8959 = vpack.c.bf16 %v8947, %v8946
    %v8960 = vpack.c.bf16 %v8949, %v8948
    %v8961 = vpack.c.bf16 %v8951, %v8950
    %v8962 = vpack.c.bf16 %v8953, %v8952
    %v8963 = vpack.c.bf16 %v8955, %v8954
    %v8964 = vpack.c.bf16 %v8957, %v8956
    %v8965 = vld [vmem:[%s17] sm:$0xf]
    %v8966 = vld [vmem:[%s17 + $0x4] sm:$0xf]
    %v8967 = vld [vmem:[%s17 + $0x8] sm:$0xf]
    %v8968 = vld [vmem:[%s17 + $0xc] sm:$0xf]
    %v8969 = vld [vmem:[%s17 + $0x10] sm:$0xf]
    %v8970 = vld [vmem:[%s17 + $0x14] sm:$0xf]
    %v8971 = vld [vmem:[%s17 + $0x18] sm:$0xf]
    %v8972 = vld [vmem:[%s17 + $0x1c] sm:$0xf]
    %v8973 = vld [vmem:[%s17 + $0x20] sm:$0xf]
    %v8974 = vld [vmem:[%s17 + $0x24] sm:$0xf]
    %v8975 = vld [vmem:[%s17 + $0x28] sm:$0xf]
    %v8976 = vld [vmem:[%s17 + $0x2c] sm:$0xf]
    %v8977 = vld [vmem:[%s17 + $0x30] sm:$0xf]
    %v8978 = vld [vmem:[%s17 + $0x34] sm:$0xf]
    %v8979 = vld [vmem:[%s17 + $0x38] sm:$0xf]
    %v8980 = vld [vmem:[%s17 + $0x3c] sm:$0xf]
    %v8981 = vld [vmem:[%s18] sm:$0x1]
    %v8983 = vlaneseq
    %v8984 = vshrl.u32 %v8983, 7
    %v8985 = vsub.s32 0, %v8984
    %v8986 = vrot.slane %v8981, %v8985
    %v9004 = vunpack.c.l.b16 %v8965
    %v9005 = vunpack.c.l.b16 %v8966
    %v9006 = vunpack.c.l.b16 %v8967
    %v9007 = vunpack.c.l.b16 %v8968
    %v9008 = vunpack.c.l.b16 %v8969
    %v9009 = vunpack.c.l.b16 %v8970
    %v9010 = vunpack.c.l.b16 %v8971
    %v9011 = vunpack.c.l.b16 %v8972
    %v9012 = vunpack.c.l.b16 %v8973
    %v9013 = vunpack.c.l.b16 %v8974
    %v9014 = vunpack.c.l.b16 %v8975
    %v9015 = vunpack.c.l.b16 %v8976
    %v9016 = vunpack.c.l.b16 %v8977
    %v9017 = vunpack.c.l.b16 %v8978
    %v9018 = vunpack.c.l.b16 %v8979
    %v9019 = vunpack.c.l.b16 %v8980
    %v9020 = vpack.c.b16 %v9005, %v9004
    %v9021 = vpack.c.b16 %v9007, %v9006
    %v9022 = vpack.c.b16 %v9009, %v9008
    %v9023 = vpack.c.b16 %v9011, %v9010
    %v9024 = vpack.c.b16 %v9013, %v9012
    %v9025 = vpack.c.b16 %v9015, %v9014
    %v9026 = vpack.c.b16 %v9017, %v9016
    %v9027 = vpack.c.b16 %v9019, %v9018
    %9036 = vmatprep.subr.bf16.mxu0 0
    %9037 = vmatpush1.bf16.msra.mxu0 %v9020
    %9038 = vmatprep.subr.bf16.mxu0 0
    %9039 = vmatpush1.bf16.msra.mxu0 %v9021
    %9040 = vmatprep.subr.bf16.mxu0 0
    %9041 = vmatpush1.bf16.msra.mxu0 %v9022
    %9042 = vmatprep.subr.bf16.mxu0 0
    %9043 = vmatpush1.bf16.msra.mxu0 %v9023
    %9044 = vmatprep.subr.bf16.mxu0 0
    %9045 = vmatpush1.bf16.msra.mxu0 %v9024
    %9046 = vmatprep.subr.bf16.mxu0 0
    %9047 = vmatpush1.bf16.msra.mxu0 %v9025
    %9048 = vmatprep.subr.bf16.mxu0 0
    %9049 = vmatpush1.bf16.msra.mxu0 %v9026
    %9050 = vmatprep.subr.bf16.mxu0 0
    %9051 = vmatpush1.bf16.msra.mxu0 %v9027
    %9052 = vmatprep.subr.bf16.mxu0 0
    %9053 = vmatpush1.bf16.msra.mxu0 0
    %9054 = vmatprep.subr.bf16.mxu0 0
    %9055 = vmatpush1.bf16.msra.mxu0 0
    %9056 = vmatprep.subr.bf16.mxu0 0
    %9057 = vmatpush1.bf16.msra.mxu0 0
    %9058 = vmatprep.subr.bf16.mxu0 0
    %9059 = vmatpush1.bf16.msra.mxu0 0
    %9060 = vmatprep.subr.bf16.mxu0 0
    %9061 = vmatpush1.bf16.msra.mxu0 0
    %9062 = vmatprep.subr.bf16.mxu0 0
    %9063 = vmatpush1.bf16.msra.mxu0 0
    %9064 = vmatprep.subr.bf16.mxu0 0
    %9065 = vmatpush1.bf16.msra.mxu0 0
    %9066 = vmatprep.subr.bf16.mxu0 0
    %9067 = vmatpush1.bf16.msra.mxu0 0
    %9068 = vmatprep.mubr.bf16.mxu0 0
    %9069 = vmatmul.mubr.bf16.gmra.mrb[0].mxu0 %v8958
    %v9070 = vpop.f32.mrb[0].mxu0
    %v9071 = vadd.f32 %v8986, %v9070
    %v9072 = vpop.f32.mrb[0].mxu0
    %v9073 = vpop.f32.mrb[0].mxu0
    %v9074 = vadd.f32 %v8986, %v9073
    %v9075 = vpop.f32.mrb[0].mxu0
    %9076 = vmatprep.mubr.bf16.mxu0 0
    %9077 = vmatmul.mubr.bf16.gmra.mrb[0].mxu0 %v8959
    %v9078 = vpop.f32.mrb[0].mxu0
    %v9079 = vadd.f32 %v8986, %v9078
    %v9080 = vpop.f32.mrb[0].mxu0
    %v9081 = vpop.f32.mrb[0].mxu0
    %v9082 = vadd.f32 %v8986, %v9081
    %v9083 = vpop.f32.mrb[0].mxu0
    %9084 = vmatprep.mubr.bf16.mxu0 0
    %9085 = vmatmul.mubr.bf16.gmra.mrb[0].mxu0 %v8960
    %v9086 = vpop.f32.mrb[0].mxu0
    %v9087 = vadd.f32 %v8986, %v9086
    %v9088 = vpop.f32.mrb[0].mxu0
    %v9089 = vpop.f32.mrb[0].mxu0
    %v9090 = vadd.f32 %v8986, %v9089
    %v9091 = vpop.f32.mrb[0].mxu0
    %9092 = vmatprep.mubr.bf16.mxu0 0
    %9093 = vmatmul.mubr.bf16.gmra.mrb[0].mxu0 %v8961
    %v9094 = vpop.f32.mrb[0].mxu0
    %v9095 = vadd.f32 %v8986, %v9094
    %v9096 = vpop.f32.mrb[0].mxu0
    %v9097 = vpop.f32.mrb[0].mxu0
    %v9098 = vadd.f32 %v8986, %v9097
    %v9099 = vpop.f32.mrb[0].mxu0
    %9100 = vmatprep.mubr.bf16.mxu0 0
    %9101 = vmatmul.mubr.bf16.gmra.mrb[0].mxu0 %v8962
    %v9102 = vpop.f32.mrb[0].mxu0
    %v9103 = vadd.f32 %v8986, %v9102
    %v9104 = vpop.f32.mrb[0].mxu0
    %v9105 = vpop.f32.mrb[0].mxu0
    %v9106 = vadd.f32 %v8986, %v9105
    %v9107 = vpop.f32.mrb[0].mxu0
    %9108 = vmatprep.mubr.bf16.mxu0 0
    %9109 = vmatmul.mubr.bf16.gmra.mrb[0].mxu0 %v8963
    %v9110 = vpop.f32.mrb[0].mxu0
    %v9111 = vadd.f32 %v8986, %v9110
    %v9112 = vpop.f32.mrb[0].mxu0
    %v9113 = vpop.f32.mrb[0].mxu0
    %v9114 = vadd.f32 %v8986, %v9113
    %v9115 = vpop.f32.mrb[0].mxu0
    %9116 = vmatprep.mubr.bf16.mxu0 0
    %9117 = vmatmul.mubr.bf16.gmra.mrb[0].mxu0 %v8964
    %v9118 = vpop.f32.mrb[0].mxu0
    %v9119 = vadd.f32 %v8986, %v9118
    %v9120 = vpop.f32.mrb[0].mxu0
    %v9121 = vpop.f32.mrb[0].mxu0
    %v9122 = vadd.f32 %v8986, %v9121
    %v9123 = vpop.f32.mrb[0].mxu0
    %9124 = vdwg.mxu0
    %v9125 = vmul.f32 %v9071, 0.70710677
    %v9126 = vmul.f32 %v9074, 0.70710677
    %v9127 = vmul.f32 %v9079, 0.70710677
    %v9128 = vmul.f32 %v9082, 0.70710677
    %v9129 = vmul.f32 %v9087, 0.70710677
    %v9130 = vmul.f32 %v9090, 0.70710677
    %v9131 = vmul.f32 %v9095, 0.70710677
    %v9132 = vmul.f32 %v9098, 0.70710677
    %v9133 = vmul.f32 %v9103, 0.70710677
    %v9134 = vmul.f32 %v9106, 0.70710677
    %v9135 = vmul.f32 %v9111, 0.70710677
    %v9136 = vmul.f32 %v9114, 0.70710677
    %v9137 = vmul.f32 %v9119, 0.70710677
    %v9138 = vmul.f32 %v9122, 0.70710677
    %v9139 = vand.u32 2147483647, %v9125
    %v9140 = vand.u32 2147483647, %v9126
    %v9141 = vand.u32 2147483647, %v9127
    %v9142 = vand.u32 2147483647, %v9128
    %v9143 = vand.u32 2147483647, %v9129
    %v9144 = vand.u32 2147483647, %v9130
    %v9145 = vand.u32 2147483647, %v9131
    %v9146 = vand.u32 2147483647, %v9132
    %v9147 = vand.u32 2147483647, %v9133
    %v9148 = vand.u32 2147483647, %v9134
    %v9149 = vand.u32 2147483647, %v9135
    %v9150 = vand.u32 2147483647, %v9136
    %v9151 = vand.u32 2147483647, %v9137
    %v9152 = vand.u32 2147483647, %v9138
    %v9153 = vmul.f32 %v9139, 0.3275911
    %v9154 = vmul.f32 %v9140, 0.3275911
    %v9155 = vmul.f32 %v9141, 0.3275911
    %v9156 = vmul.f32 %v9142, 0.3275911
    %v9157 = vmul.f32 %v9143, 0.3275911
    %v9158 = vmul.f32 %v9144, 0.3275911
    %v9159 = vmul.f32 %v9145, 0.3275911
    %v9160 = vmul.f32 %v9146, 0.3275911
    %v9161 = vmul.f32 %v9147, 0.3275911
    %v9162 = vmul.f32 %v9148, 0.3275911
    %v9163 = vmul.f32 %v9149, 0.3275911
    %v9164 = vmul.f32 %v9150, 0.3275911
    %v9165 = vmul.f32 %v9151, 0.3275911
    %v9166 = vmul.f32 %v9152, 0.3275911
    %v9167 = vadd.f32 %v9153, 1.0
    %v9168 = vadd.f32 %v9154, 1.0
    %v9169 = vadd.f32 %v9155, 1.0
    %v9170 = vadd.f32 %v9156, 1.0
    %v9171 = vadd.f32 %v9157, 1.0
    %v9172 = vadd.f32 %v9158, 1.0
    %v9173 = vadd.f32 %v9159, 1.0
    %v9174 = vadd.f32 %v9160, 1.0
    %v9175 = vadd.f32 %v9161, 1.0
    %v9176 = vadd.f32 %v9162, 1.0
    %v9177 = vadd.f32 %v9163, 1.0
    %v9178 = vadd.f32 %v9164, 1.0
    %v9179 = vadd.f32 %v9165, 1.0
    %v9180 = vadd.f32 %v9166, 1.0
    %v9181 = vrcp.pop %v9167
    %v9182 = vmul.f32 1.0, %v9181
    %v9183 = vrcp.pop %v9168
    %v9184 = vmul.f32 1.0, %v9183
    %v9185 = vrcp.pop %v9169
    %v9186 = vmul.f32 1.0, %v9185
    %v9187 = vrcp.pop %v9170
    %v9188 = vmul.f32 1.0, %v9187
    %v9189 = vrcp.pop %v9171
    %v9190 = vmul.f32 1.0, %v9189
    %v9191 = vrcp.pop %v9172
    %v9192 = vmul.f32 1.0, %v9191
    %v9193 = vrcp.pop %v9173
    %v9194 = vmul.f32 1.0, %v9193
    %v9195 = vrcp.pop %v9174
    %v9196 = vmul.f32 1.0, %v9195
    %v9197 = vrcp.pop %v9175
    %v9198 = vmul.f32 1.0, %v9197
    %v9199 = vrcp.pop %v9176
    %v9200 = vmul.f32 1.0, %v9199
    %v9201 = vrcp.pop %v9177
    %v9202 = vmul.f32 1.0, %v9201
    %v9203 = vrcp.pop %v9178
    %v9204 = vmul.f32 1.0, %v9203
    %v9205 = vrcp.pop %v9179
    %v9206 = vmul.f32 1.0, %v9205
    %v9207 = vrcp.pop %v9180
    %v9208 = vmul.f32 1.0, %v9207
    %v9209 = vmul.f32 %v9182, 1.0614054
    %v9210 = vmul.f32 %v9184, 1.0614054
    %v9211 = vmul.f32 %v9186, 1.0614054
    %v9212 = vmul.f32 %v9188, 1.0614054
    %v9213 = vmul.f32 %v9190, 1.0614054
    %v9214 = vmul.f32 %v9192, 1.0614054
    %v9215 = vmul.f32 %v9194, 1.0614054
    %v9216 = vmul.f32 %v9196, 1.0614054
    %v9217 = vmul.f32 %v9198, 1.0614054
    %v9218 = vmul.f32 %v9200, 1.0614054
    %v9219 = vmul.f32 %v9202, 1.0614054
    %v9220 = vmul.f32 %v9204, 1.0614054
    %v9221 = vmul.f32 %v9206, 1.0614054
    %v9222 = vmul.f32 %v9208, 1.0614054
    %v9223 = vadd.f32 %v9209, -1.4531521
    %v9224 = vadd.f32 %v9210, -1.4531521
    %v9225 = vadd.f32 %v9211, -1.4531521
    %v9226 = vadd.f32 %v9212, -1.4531521
    %v9227 = vadd.f32 %v9213, -1.4531521
    %v9228 = vadd.f32 %v9214, -1.4531521
    %v9229 = vadd.f32 %v9215, -1.4531521
    %v9230 = vadd.f32 %v9216, -1.4531521
    %v9231 = vadd.f32 %v9217, -1.4531521
    %v9232 = vadd.f32 %v9218, -1.4531521
    %v9233 = vadd.f32 %v9219, -1.4531521
    %v9234 = vadd.f32 %v9220, -1.4531521
    %v9235 = vadd.f32 %v9221, -1.4531521
    %v9236 = vadd.f32 %v9222, -1.4531521
    %v9237 = vmul.f32 %v9182, %v9223
    %v9238 = vmul.f32 %v9184, %v9224
    %v9239 = vmul.f32 %v9186, %v9225
    %v9240 = vmul.f32 %v9188, %v9226
    %v9241 = vmul.f32 %v9190, %v9227
    %v9242 = vmul.f32 %v9192, %v9228
    %v9243 = vmul.f32 %v9194, %v9229
    %v9244 = vmul.f32 %v9196, %v9230
    %v9245 = vmul.f32 %v9198, %v9231
    %v9246 = vmul.f32 %v9200, %v9232
    %v9247 = vmul.f32 %v9202, %v9233
    %v9248 = vmul.f32 %v9204, %v9234
    %v9249 = vmul.f32 %v9206, %v9235
    %v9250 = vmul.f32 %v9208, %v9236
    %v9251 = vadd.f32 %v9237, 1.4214138
    %v9252 = vadd.f32 %v9238, 1.4214138
    %v9253 = vadd.f32 %v9239, 1.4214138
    %v9254 = vadd.f32 %v9240, 1.4214138
    %v9255 = vadd.f32 %v9241, 1.4214138
    %v9256 = vadd.f32 %v9242, 1.4214138
    %v9257 = vadd.f32 %v9243, 1.4214138
    %v9258 = vadd.f32 %v9244, 1.4214138
    %v9259 = vadd.f32 %v9245, 1.4214138
    %v9260 = vadd.f32 %v9246, 1.4214138
    %v9261 = vadd.f32 %v9247, 1.4214138
    %v9262 = vadd.f32 %v9248, 1.4214138
    %v9263 = vadd.f32 %v9249, 1.4214138
    %v9264 = vadd.f32 %v9250, 1.4214138
    %v9265 = vmul.f32 %v9182, %v9251
    %v9266 = vmul.f32 %v9184, %v9252
    %v9267 = vmul.f32 %v9186, %v9253
    %v9268 = vmul.f32 %v9188, %v9254
    %v9269 = vmul.f32 %v9190, %v9255
    %v9270 = vmul.f32 %v9192, %v9256
    %v9271 = vmul.f32 %v9194, %v9257
    %v9272 = vmul.f32 %v9196, %v9258
    %v9273 = vmul.f32 %v9198, %v9259
    %v9274 = vmul.f32 %v9200, %v9260
    %v9275 = vmul.f32 %v9202, %v9261
    %v9276 = vmul.f32 %v9204, %v9262
    %v9277 = vmul.f32 %v9206, %v9263
    %v9278 = vmul.f32 %v9208, %v9264
    %v9279 = vadd.f32 %v9265, -0.28449672
    %v9280 = vadd.f32 %v9266, -0.28449672
    %v9281 = vadd.f32 %v9267, -0.28449672
    %v9282 = vadd.f32 %v9268, -0.28449672
    %v9283 = vadd.f32 %v9269, -0.28449672
    %v9284 = vadd.f32 %v9270, -0.28449672
    %v9285 = vadd.f32 %v9271, -0.28449672
    %v9286 = vadd.f32 %v9272, -0.28449672
    %v9287 = vadd.f32 %v9273, -0.28449672
    %v9288 = vadd.f32 %v9274, -0.28449672
    %v9289 = vadd.f32 %v9275, -0.28449672
    %v9290 = vadd.f32 %v9276, -0.28449672
    %v9291 = vadd.f32 %v9277, -0.28449672
    %v9292 = vadd.f32 %v9278, -0.28449672
    %v9293 = vmul.f32 %v9182, %v9279
    %v9294 = vmul.f32 %v9184, %v9280
    %v9295 = vmul.f32 %v9186, %v9281
    %v9296 = vmul.f32 %v9188, %v9282
    %v9297 = vmul.f32 %v9190, %v9283
    %v9298 = vmul.f32 %v9192, %v9284
    %v9299 = vmul.f32 %v9194, %v9285
    %v9300 = vmul.f32 %v9196, %v9286
    %v9301 = vmul.f32 %v9198, %v9287
    %v9302 = vmul.f32 %v9200, %v9288
    %v9303 = vmul.f32 %v9202, %v9289
    %v9304 = vmul.f32 %v9204, %v9290
    %v9305 = vmul.f32 %v9206, %v9291
    %v9306 = vmul.f32 %v9208, %v9292
    %v9307 = vadd.f32 %v9293, 0.2548296
    %v9308 = vadd.f32 %v9294, 0.2548296
    %v9309 = vadd.f32 %v9295, 0.2548296
    %v9310 = vadd.f32 %v9296, 0.2548296
    %v9311 = vadd.f32 %v9297, 0.2548296
    %v9312 = vadd.f32 %v9298, 0.2548296
    %v9313 = vadd.f32 %v9299, 0.2548296
    %v9314 = vadd.f32 %v9300, 0.2548296
    %v9315 = vadd.f32 %v9301, 0.2548296
    %v9316 = vadd.f32 %v9302, 0.2548296
    %v9317 = vadd.f32 %v9303, 0.2548296
    %v9318 = vadd.f32 %v9304, 0.2548296
    %v9319 = vadd.f32 %v9305, 0.2548296
    %v9320 = vadd.f32 %v9306, 0.2548296
    %v9321 = vmul.f32 %v9182, %v9307
    %v9322 = vmul.f32 %v9184, %v9308
    %v9323 = vmul.f32 %v9186, %v9309
    %v9324 = vmul.f32 %v9188, %v9310
    %v9325 = vmul.f32 %v9190, %v9311
    %v9326 = vmul.f32 %v9192, %v9312
    %v9327 = vmul.f32 %v9194, %v9313
    %v9328 = vmul.f32 %v9196, %v9314
    %v9329 = vmul.f32 %v9198, %v9315
    %v9330 = vmul.f32 %v9200, %v9316
    %v9331 = vmul.f32 %v9202, %v9317
    %v9332 = vmul.f32 %v9204, %v9318
    %v9333 = vmul.f32 %v9206, %v9319
    %v9334 = vmul.f32 %v9208, %v9320
    %v9335 = vsub.f32 0.0, %v9139
    %v9336 = vsub.f32 0.0, %v9140
    %v9337 = vsub.f32 0.0, %v9141
    %v9338 = vsub.f32 0.0, %v9142
    %v9339 = vsub.f32 0.0, %v9143
    %v9340 = vsub.f32 0.0, %v9144
    %v9341 = vsub.f32 0.0, %v9145
    %v9342 = vsub.f32 0.0, %v9146
    %v9343 = vsub.f32 0.0, %v9147
    %v9344 = vsub.f32 0.0, %v9148
    %v9345 = vsub.f32 0.0, %v9149
    %v9346 = vsub.f32 0.0, %v9150
    %v9347 = vsub.f32 0.0, %v9151
    %v9348 = vsub.f32 0.0, %v9152
    %v9349 = vmul.f32 %v9335, %v9139
    %v9350 = vmul.f32 %v9336, %v9140
    %v9351 = vmul.f32 %v9337, %v9141
    %v9352 = vmul.f32 %v9338, %v9142
    %v9353 = vmul.f32 %v9339, %v9143
    %v9354 = vmul.f32 %v9340, %v9144
    %v9355 = vmul.f32 %v9341, %v9145
    %v9356 = vmul.f32 %v9342, %v9146
    %v9357 = vmul.f32 %v9343, %v9147
    %v9358 = vmul.f32 %v9344, %v9148
    %v9359 = vmul.f32 %v9345, %v9149
    %v9360 = vmul.f32 %v9346, %v9150
    %v9361 = vmul.f32 %v9347, %v9151
    %v9362 = vmul.f32 %v9348, %v9152
    %v9363 = vmul.f32 %v9349, 1.442695
    %v9364 = vpow.pop %v9363
    %v9365 = vmul.f32 %v9350, 1.442695
    %v9366 = vpow.pop %v9365
    %v9367 = vmul.f32 %v9351, 1.442695
    %v9368 = vpow.pop %v9367
    %v9369 = vmul.f32 %v9352, 1.442695
    %v9370 = vpow.pop %v9369
    %v9371 = vmul.f32 %v9353, 1.442695
    %v9372 = vpow.pop %v9371
    %v9373 = vmul.f32 %v9354, 1.442695
    %v9374 = vpow.pop %v9373
    %v9375 = vmul.f32 %v9355, 1.442695
    %v9376 = vpow.pop %v9375
    %v9377 = vmul.f32 %v9356, 1.442695
    %v9378 = vpow.pop %v9377
    %v9379 = vmul.f32 %v9357, 1.442695
    %v9380 = vpow.pop %v9379
    %v9381 = vmul.f32 %v9358, 1.442695
    %v9382 = vpow.pop %v9381
    %v9383 = vmul.f32 %v9359, 1.442695
    %v9384 = vpow.pop %v9383
    %v9385 = vmul.f32 %v9360, 1.442695
    %v9386 = vpow.pop %v9385
    %v9387 = vmul.f32 %v9361, 1.442695
    %v9388 = vpow.pop %v9387
    %v9389 = vmul.f32 %v9362, 1.442695
    %v9390 = vpow.pop %v9389
    %v9391 = vmul.f32 %v9321, %v9364
    %v9392 = vmul.f32 %v9322, %v9366
    %v9393 = vmul.f32 %v9323, %v9368
    %v9394 = vmul.f32 %v9324, %v9370
    %v9395 = vmul.f32 %v9325, %v9372
    %v9396 = vmul.f32 %v9326, %v9374
    %v9397 = vmul.f32 %v9327, %v9376
    %v9398 = vmul.f32 %v9328, %v9378
    %v9399 = vmul.f32 %v9329, %v9380
    %v9400 = vmul.f32 %v9330, %v9382
    %v9401 = vmul.f32 %v9331, %v9384
    %v9402 = vmul.f32 %v9332, %v9386
    %v9403 = vmul.f32 %v9333, %v9388
    %v9404 = vmul.f32 %v9334, %v9390
    %v9405 = vsub.f32 1.0, %v9391
    %v9406 = vsub.f32 1.0, %v9392
    %v9407 = vsub.f32 1.0, %v9393
    %v9408 = vsub.f32 1.0, %v9394
    %v9409 = vsub.f32 1.0, %v9395
    %v9410 = vsub.f32 1.0, %v9396
    %v9411 = vsub.f32 1.0, %v9397
    %v9412 = vsub.f32 1.0, %v9398
    %v9413 = vsub.f32 1.0, %v9399
    %v9414 = vsub.f32 1.0, %v9400
    %v9415 = vsub.f32 1.0, %v9401
    %v9416 = vsub.f32 1.0, %v9402
    %v9417 = vsub.f32 1.0, %v9403
    %v9418 = vsub.f32 1.0, %v9404
    %vm9419 = vcmp.ge.f32.partialorder %v9125, 0.0
    %vm9420 = vcmp.ge.f32.partialorder %v9126, 0.0
    %vm9421 = vcmp.ge.f32.partialorder %v9127, 0.0
    %vm9422 = vcmp.ge.f32.partialorder %v9128, 0.0
    %vm9423 = vcmp.ge.f32.partialorder %v9129, 0.0
    %vm9424 = vcmp.ge.f32.partialorder %v9130, 0.0
    %vm9425 = vcmp.ge.f32.partialorder %v9131, 0.0
    %vm9426 = vcmp.ge.f32.partialorder %v9132, 0.0
    %vm9427 = vcmp.ge.f32.partialorder %v9133, 0.0
    %vm9428 = vcmp.ge.f32.partialorder %v9134, 0.0
    %vm9429 = vcmp.ge.f32.partialorder %v9135, 0.0
    %vm9430 = vcmp.ge.f32.partialorder %v9136, 0.0
    %vm9431 = vcmp.ge.f32.partialorder %v9137, 0.0
    %vm9432 = vcmp.ge.f32.partialorder %v9138, 0.0
    %v9433 = vsub.f32 0.0, %v9405
    %v9434 = vsub.f32 0.0, %v9406
    %v9435 = vsub.f32 0.0, %v9407
    %v9436 = vsub.f32 0.0, %v9408
    %v9437 = vsub.f32 0.0, %v9409
    %v9438 = vsub.f32 0.0, %v9410
    %v9439 = vsub.f32 0.0, %v9411
    %v9440 = vsub.f32 0.0, %v9412
    %v9441 = vsub.f32 0.0, %v9413
    %v9442 = vsub.f32 0.0, %v9414
    %v9443 = vsub.f32 0.0, %v9415
    %v9444 = vsub.f32 0.0, %v9416
    %v9445 = vsub.f32 0.0, %v9417
    %v9446 = vsub.f32 0.0, %v9418
    %v9447 = vsel %vm9419, %v9405, %v9433
    %v9448 = vsel %vm9420, %v9406, %v9434
    %v9449 = vsel %vm9421, %v9407, %v9435
    %v9450 = vsel %vm9422, %v9408, %v9436
    %v9451 = vsel %vm9423, %v9409, %v9437
    %v9452 = vsel %vm9424, %v9410, %v9438
    %v9453 = vsel %vm9425, %v9411, %v9439
    %v9454 = vsel %vm9426, %v9412, %v9440
    %v9455 = vsel %vm9427, %v9413, %v9441
    %v9456 = vsel %vm9428, %v9414, %v9442
    %v9457 = vsel %vm9429, %v9415, %v9443
    %v9458 = vsel %vm9430, %v9416, %v9444
    %v9459 = vsel %vm9431, %v9417, %v9445
    %v9460 = vsel %vm9432, %v9418, %v9446
    %v9461 = vmul.f32 %v9071, 0.5
    %v9462 = vmul.f32 %v9074, 0.5
    %v9463 = vmul.f32 %v9079, 0.5
    %v9464 = vmul.f32 %v9082, 0.5
    %v9465 = vmul.f32 %v9087, 0.5
    %v9466 = vmul.f32 %v9090, 0.5
    %v9467 = vmul.f32 %v9095, 0.5
    %v9468 = vmul.f32 %v9098, 0.5
    %v9469 = vmul.f32 %v9103, 0.5
    %v9470 = vmul.f32 %v9106, 0.5
    %v9471 = vmul.f32 %v9111, 0.5
    %v9472 = vmul.f32 %v9114, 0.5
    %v9473 = vmul.f32 %v9119, 0.5
    %v9474 = vmul.f32 %v9122, 0.5
    %v9475 = vadd.f32 %v9447, 1.0
    %v9476 = vadd.f32 %v9448, 1.0
    %v9477 = vadd.f32 %v9449, 1.0
    %v9478 = vadd.f32 %v9450, 1.0
    %v9479 = vadd.f32 %v9451, 1.0
    %v9480 = vadd.f32 %v9452, 1.0
    %v9481 = vadd.f32 %v9453, 1.0
    %v9482 = vadd.f32 %v9454, 1.0
    %v9483 = vadd.f32 %v9455, 1.0
    %v9484 = vadd.f32 %v9456, 1.0
    %v9485 = vadd.f32 %v9457, 1.0
    %v9486 = vadd.f32 %v9458, 1.0
    %v9487 = vadd.f32 %v9459, 1.0
    %v9488 = vadd.f32 %v9460, 1.0
    %v9489 = vmul.f32 %v9461, %v9475
    %v9490 = vmul.f32 %v9462, %v9476
    %v9491 = vmul.f32 %v9463, %v9477
    %v9492 = vmul.f32 %v9464, %v9478
    %v9493 = vmul.f32 %v9465, %v9479
    %v9494 = vmul.f32 %v9466, %v9480
    %v9495 = vmul.f32 %v9467, %v9481
    %v9496 = vmul.f32 %v9468, %v9482
    %v9497 = vmul.f32 %v9469, %v9483
    %v9498 = vmul.f32 %v9470, %v9484
    %v9499 = vmul.f32 %v9471, %v9485
    %v9500 = vmul.f32 %v9472, %v9486
    %v9501 = vmul.f32 %v9473, %v9487
    %v9502 = vmul.f32 %v9474, %v9488
    %vm9503 = vcmask 523264
    %v9504 = vsel %vm9503, %v9489, -inf
    %v9505 = vrot.slane %v9504, 4
    %v9506 = vmax.f32 %v9504, %v9505
    %v9507 = vrot.slane %v9506, 2
    %v9508 = vmax.f32 %v9506, %v9507
    %v9509 = vrot.slane %v9508, 1
    %v9510 = vmax.f32 %v9508, %v9509
    %v9511 = vsel %vm9503, %v9491, -inf
    %v9512 = vrot.slane %v9511, 4
    %v9513 = vmax.f32 %v9511, %v9512
    %v9514 = vrot.slane %v9513, 2
    %v9515 = vmax.f32 %v9513, %v9514
    %v9516 = vrot.slane %v9515, 1
    %v9517 = vmax.f32 %v9515, %v9516
    %v9518 = vmax.f32 %v9510, %v9517
    %v9519 = vsel %vm9503, %v9490, -inf
    %v9520 = vrot.slane %v9519, 4
    %v9521 = vmax.f32 %v9519, %v9520
    %v9522 = vrot.slane %v9521, 2
    %v9523 = vmax.f32 %v9521, %v9522
    %v9524 = vrot.slane %v9523, 1
    %v9525 = vmax.f32 %v9523, %v9524
    %v9526 = vsel %vm9503, %v9492, -inf
    %v9527 = vrot.slane %v9526, 4
    %v9528 = vmax.f32 %v9526, %v9527
    %v9529 = vrot.slane %v9528, 2
    %v9530 = vmax.f32 %v9528, %v9529
    %v9531 = vrot.slane %v9530, 1
    %v9532 = vmax.f32 %v9530, %v9531
    %v9533 = vmax.f32 %v9525, %v9532
    %v9534 = vsel %vm9503, %v9493, -inf
    %v9535 = vrot.slane %v9534, 4
    %v9536 = vmax.f32 %v9534, %v9535
    %v9537 = vrot.slane %v9536, 2
    %v9538 = vmax.f32 %v9536, %v9537
    %v9539 = vrot.slane %v9538, 1
    %v9540 = vmax.f32 %v9538, %v9539
    %v9541 = vmax.f32 %v9518, %v9540
    %v9542 = vsel %vm9503, %v9494, -inf
    %v9543 = vrot.slane %v9542, 4
    %v9544 = vmax.f32 %v9542, %v9543
    %v9545 = vrot.slane %v9544, 2
    %v9546 = vmax.f32 %v9544, %v9545
    %v9547 = vrot.slane %v9546, 1
    %v9548 = vmax.f32 %v9546, %v9547
    %v9549 = vmax.f32 %v9533, %v9548
    %v9550 = vsel %vm9503, %v9495, -inf
    %v9551 = vrot.slane %v9550, 4
    %v9552 = vmax.f32 %v9550, %v9551
    %v9553 = vrot.slane %v9552, 2
    %v9554 = vmax.f32 %v9552, %v9553
    %v9555 = vrot.slane %v9554, 1
    %v9556 = vmax.f32 %v9554, %v9555
    %v9557 = vmax.f32 %v9518, %v9556
    %v9558 = vsel %vm9503, %v9496, -inf
    %v9559 = vrot.slane %v9558, 4
    %v9560 = vmax.f32 %v9558, %v9559
    %v9561 = vrot.slane %v9560, 2
    %v9562 = vmax.f32 %v9560, %v9561
    %v9563 = vrot.slane %v9562, 1
    %v9564 = vmax.f32 %v9562, %v9563
    %v9565 = vmax.f32 %v9533, %v9564
    %v9566 = vsel %vm9503, %v9497, -inf
    %v9567 = vrot.slane %v9566, 4
    %v9568 = vmax.f32 %v9566, %v9567
    %v9569 = vrot.slane %v9568, 2
    %v9570 = vmax.f32 %v9568, %v9569
    %v9571 = vrot.slane %v9570, 1
    %v9572 = vmax.f32 %v9570, %v9571
    %v9573 = vmax.f32 %v9518, %v9572
    %v9574 = vsel %vm9503, %v9498, -inf
    %v9575 = vrot.slane %v9574, 4
    %v9576 = vmax.f32 %v9574, %v9575
    %v9577 = vrot.slane %v9576, 2
    %v9578 = vmax.f32 %v9576, %v9577
    %v9579 = vrot.slane %v9578, 1
    %v9580 = vmax.f32 %v9578, %v9579
    %v9581 = vmax.f32 %v9533, %v9580
    %v9582 = vsel %vm9503, %v9499, -inf
    %v9583 = vrot.slane %v9582, 4
    %v9584 = vmax.f32 %v9582, %v9583
    %v9585 = vrot.slane %v9584, 2
    %v9586 = vmax.f32 %v9584, %v9585
    %v9587 = vrot.slane %v9586, 1
    %v9588 = vmax.f32 %v9586, %v9587
    %v9589 = vmax.f32 %v9518, %v9588
    %v9590 = vsel %vm9503, %v9500, -inf
    %v9591 = vrot.slane %v9590, 4
    %v9592 = vmax.f32 %v9590, %v9591
    %v9593 = vrot.slane %v9592, 2
    %v9594 = vmax.f32 %v9592, %v9593
    %v9595 = vrot.slane %v9594, 1
    %v9596 = vmax.f32 %v9594, %v9595
    %v9597 = vmax.f32 %v9533, %v9596
    %v9598 = vsel %vm9503, %v9501, -inf
    %v9599 = vrot.slane %v9598, 4
    %v9600 = vmax.f32 %v9598, %v9599
    %v9601 = vrot.slane %v9600, 2
    %v9602 = vmax.f32 %v9600, %v9601
    %v9603 = vrot.slane %v9602, 1
    %v9604 = vmax.f32 %v9602, %v9603
    %v9605 = vmax.f32 %v9518, %v9604
    %v9606 = vsel %vm9503, %v9502, -inf
    %v9607 = vrot.slane %v9606, 4
    %v9608 = vmax.f32 %v9606, %v9607
    %v9609 = vrot.slane %v9608, 2
    %v9610 = vmax.f32 %v9608, %v9609
    %v9611 = vrot.slane %v9610, 1
    %v9612 = vmax.f32 %v9610, %v9611
    %v9613 = vmax.f32 %v9533, %v9612
    %v9614 = vsel %vm4728, %v9541, %v9549
    %vm9615 = vcmask 1041408
    %v9616 = vsel %vm9615, %v9614, %v9557
    %vm9617 = vcmask 1042432
    %v9618 = vsel %vm9617, %v9616, %v9565
    %vm9619 = vcmask 1043456
    %v9620 = vsel %vm9619, %v9618, %v9573
    %vm9621 = vcmask 1044480
    %v9622 = vsel %vm9621, %v9620, %v9581
    %vm9623 = vcmask 1045504
    %v9624 = vsel %vm9623, %v9622, %v9589
    %v9625 = vsel %vm4753, %v9624, %v9597
    %v9626 = vsel %vm4728, %v9605, %v9613
    %v9627 = vld [vmem:[%s19] sm:$0x1]
    %v9629 = vlaneseq
    %v9630 = vshrl.u32 %v9629, 7
    %v9631 = vsub.s32 0, %v9630
    %v9632 = vrot.slane %v9627, %v9631
    %v9634 = vmul.f32 %v9625, %v9632
    %v9635 = vmul.f32 %v9626, %v9632
    %v9636 = vsel %vm9503, %v9634, 0.0
    %9637 = vadd.xlane.f32.xlu0 %v9636
    %v9638 = vpop.xlane.xlu0 %9637
    %vm9639 = vcmask 517120
    %v9640 = vsel %vm9639, %v9635, 0.0
    %9641 = vadd.xlane.f32.xlu0 %v9640
    %v9642 = vpop.xlane.xlu0 %9641
    %v9643 = vld [vmem:[#allocation2] sm:$0x1]
    %v9645 = vlaneseq
    %v9646 = vshrl.u32 %v9645, 7
    %v9647 = vsub.s32 0, %v9646
    %v9648 = vrot.slane %v9643, %v9647
    %v9650 = vadd.f32 %v9638, %v9648
    %v9651 = vadd.f32 %v9642, %v9648
    %vm9652 = vcmask 7168
    %9653 = vst.msk [vmem:[%s21] sm:$0xff] %vm9652, %v9650
    %vm9654 = vcmask 1024
    %9655 = vst.msk [vmem:[%s21 + $0x8] sm:$0x3] %vm9654, %v9651
    // Predicated region
    $region102: #{tvqa_forward.1} parent=1 // pred_check
      _
    $region103: #{tvqa_forward.1} parent=1 // pred_check_branch
      %9657 = sbr.rel (0) target = $region105
    $region104: #{tvqa_forward.1} parent=1 // pred_region
      _
    $region105: #{tvqa_forward.1} parent=1 // pred_fallthru
      _
    // Predicated region
    $region106: #{tvqa_forward.1} parent=1 // pred_check
      _
    $region107: #{tvqa_forward.1} parent=1 // pred_check_branch
      %9659 = sbr.rel (0) target = $region109
    $region108: #{tvqa_forward.1} parent=1 // pred_region
      _
    $region109: #{tvqa_forward.1} parent=1 // pred_fallthru
      _
    %9660 = vsyncpa [#allocation4], 1
    %9661 = vsyncpa [#allocation6], 1
    %9662 = vsyncpa [#allocation9], 1

</llo_original>
